<compile_context>
chip_gen: v6e
topology: v6e:2x2x1
jax: 0.10.0
libtpu: 0.0.40
codegen_flags: <defaults>
</compile_context>

<pallas_src>
import functools

import jax
import jax.numpy as jnp
from jax.experimental import pallas as pl
from jax.experimental.pallas import tpu as pltpu


# ----------------------------------------------------------------------------
# Fused InceptionA Pallas kernel (per batch element)
# ----------------------------------------------------------------------------
def _conv3x3_branch(y, w_ref, b_ref, pad_ref, col_ref, H, W):
    """3x3 'same' conv + bias + ReLU in (C, H*W) layout via one im2col matmul.

    y:       (cin, H*W) activation value (spatial flattened into lanes)
    w_ref:   (cout, 9*cin) folded weight, tap-major: index (dy*3+dx)*cin + c
    b_ref:   (cout, 1) bias
    pad_ref: VMEM scratch (>= cin, H+2, W+2); border cells are zero
    col_ref: VMEM scratch (>= 9*cin, H*W); fully rewritten before the read
    """
    cout, kc = w_ref.shape
    cin = kc // 9
    HW = H * W

    # Zero-padded spatial window lives in VMEM (no HBM jnp.pad round trip).
    pad_ref[0:cin, 1:H + 1, 1:W + 1] = y.reshape(cin, H, W)

    # im2col: stack the 9 shifted windows on the contraction axis.
    for dy in range(3):
        for dx in range(3):
            t = dy * 3 + dx
            win = pad_ref[0:cin, dy:dy + H, dx:dx + W]           # (cin, H, W)
            col_ref[t * cin:(t + 1) * cin, :] = win.reshape(cin, HW)

    # Single deep MXU contraction: (cout, 9*cin) @ (9*cin, H*W).
    out = jnp.dot(w_ref[...], col_ref[0:9 * cin, :],
                  preferred_element_type=jnp.float32)
    return jnp.maximum(out + b_ref[...], 0.0)


def _inception_a_kernel(x_ref, w1_ref, b1_ref, w52_ref, b52_ref,
                        w32_ref, b32_ref, w33_ref, b33_ref,
                        o_ref, pad_ref, col_ref, *, splits, H, W):
    # x_ref: (1, Cin, H*W)   NCHW-flat block for one batch element
    # w1_ref/b1_ref: fused 1x1 weights (C1x1_total, Cin) / bias (C1x1_total, 1)
    # w5x/w3x refs: (Cout, 9*Cin) folded 3x3 weights, biases (Cout, 1)
    # o_ref: (1, Ctotal, H*W)  NCHW-flat channel-concat output slab
    c1, c51, c31, cp = splits
    c52 = w52_ref.shape[0]
    c33 = w33_ref.shape[0]

    # Zero the padded-window scratch once per grid step; each 3x3 conv below
    # rewrites the full interior it reads and the border is never written.
    pad_ref[...] = jnp.zeros_like(pad_ref)

    x2 = x_ref[0]                                                # (Cin, H*W)

    # --- all four 1x1 BasicConv2d branches fused into ONE matmul -------------
    # (BN scale is folded into the weights host-side; only bias + ReLU remain.)
    y1 = jnp.dot(w1_ref[...], x2, preferred_element_type=jnp.float32)
    y1 = jnp.maximum(y1 + b1_ref[...], 0.0)             # (c1+c51+c31+cp, H*W)

    o1 = c1
    o2 = o1 + c51
    o3 = o2 + c31
    b1x1 = y1[0:o1]            # branch1x1
    b5 = y1[o1:o2]             # branch5x5_1
    b3 = y1[o2:o3]             # branch3x3dbl_1
    bpool = y1[o3:o3 + cp]     # branch_pool (avg_pool2d k=1 == identity)

    # --- branch 5x5: 1x1 -> 3x3, intermediate stays in VMEM/vregs ------------
    b5 = _conv3x3_branch(b5, w52_ref, b52_ref, pad_ref, col_ref, H, W)
    # --- branch 3x3dbl: 1x1 -> 3x3 -> 3x3 -------------------------------------
    b3 = _conv3x3_branch(b3, w32_ref, b32_ref, pad_ref, col_ref, H, W)
    b3 = _conv3x3_branch(b3, w33_ref, b33_ref, pad_ref, col_ref, H, W)

    # --- channel concat written straight into the NCHW-flat output slab ------
    # (each store is (8, 256): sublane-aligned, fully lane-dense)
    o_ref[0, 0:c1, :] = b1x1.astype(o_ref.dtype)
    o_ref[0, c1:c1 + c52, :] = b5.astype(o_ref.dtype)
    o_ref[0, c1 + c52:c1 + c52 + c33, :] = b3.astype(o_ref.dtype)
    o_ref[0, c1 + c52 + c33:c1 + c52 + c33 + cp, :] = bpool.astype(o_ref.dtype)


# ----------------------------------------------------------------------------
# Parameter construction (deterministic, synthetic) + BN folding
# ----------------------------------------------------------------------------
def _fold_bn(gamma, beta, eps=0.001):
    # Eval-mode BN with default running stats (mean=0, var=1).
    scale = gamma / jnp.sqrt(1.0 + eps)
    bias = beta
    return scale, bias


def make_basic_conv_params(key, cin, cout, ksize):
    k_w, k_g, k_b = jax.random.split(key, 3)
    if ksize == 1:
        w = 0.1 * jax.random.normal(k_w, (cin, cout), jnp.float32)
    else:
        w = 0.1 * jax.random.normal(k_w, (ksize, ksize, cin, cout), jnp.float32)
    gamma = 1.0 + 0.1 * jax.random.normal(k_g, (cout,), jnp.float32)
    beta = 0.1 * jax.random.normal(k_b, (cout,), jnp.float32)
    scale, bias = _fold_bn(gamma, beta)
    return {"w": w, "scale": scale, "bias": bias}


def make_inception_a_params(key, in_channels, b_1x1_out, b_5x5_1_out,
                            b_5x5_2_out, b_3x3_1_out, b_3x3_2_out,
                            b_3x3_3_out, b_pool_out):
    keys = jax.random.split(key, 7)
    return {
        "branch1x1":      make_basic_conv_params(keys[0], in_channels, b_1x1_out, 1),
        "branch5x5_1":    make_basic_conv_params(keys[1], in_channels, b_5x5_1_out, 1),
        "branch5x5_2":    make_basic_conv_params(keys[2], b_5x5_1_out, b_5x5_2_out, 3),
        "branch3x3dbl_1": make_basic_conv_params(keys[3], in_channels, b_3x3_1_out, 1),
        "branch3x3dbl_2": make_basic_conv_params(keys[4], b_3x3_1_out, b_3x3_2_out, 3),
        "branch3x3dbl_3": make_basic_conv_params(keys[5], b_3x3_2_out, b_3x3_3_out, 3),
        "branch_pool":    make_basic_conv_params(keys[6], in_channels, b_pool_out, 1),
    }


def _fold_1x1(p):
    # (Cin, Cout) * scale  -> transposed to (Cout, Cin); bias (Cout, 1)
    w = (p["w"] * p["scale"][None, :]).T
    return w, p["bias"].reshape(-1, 1)


def _fold_3x3(p):
    # (3, 3, Cin, Cout) * scale -> (Cout, 9*Cin) tap-major; bias (Cout, 1)
    w = p["w"] * p["scale"][None, None, None, :]
    cout = w.shape[3]
    w = jnp.transpose(w, (3, 0, 1, 2)).reshape(cout, -1)
    return w, p["bias"].reshape(-1, 1)


def fuse_inception_a_params(params):
    """Host-side: fold BN scale into weights and lay them out for the kernel."""
    w_b1, b_b1 = _fold_1x1(params["branch1x1"])
    w_b5, b_b5 = _fold_1x1(params["branch5x5_1"])
    w_b3, b_b3 = _fold_1x1(params["branch3x3dbl_1"])
    w_bp, b_bp = _fold_1x1(params["branch_pool"])
    w52, b52 = _fold_3x3(params["branch5x5_2"])
    w32, b32 = _fold_3x3(params["branch3x3dbl_2"])
    w33, b33 = _fold_3x3(params["branch3x3dbl_3"])
    return {
        "w1x1_b1": w_b1, "b1x1_b1": b_b1,
        "w1x1_b5": w_b5, "b1x1_b5": b_b5,
        "w1x1_b3": w_b3, "b1x1_b3": b_b3,
        "w1x1_bp": w_bp, "b1x1_bp": b_bp,
        "w52": w52, "b52": b52,
        "w32": w32, "b32": b32,
        "w33": w33, "b33": b33,
    }


# ----------------------------------------------------------------------------
# InceptionA forward (single fused pallas_call) -- NCHW in / NCHW out
# ----------------------------------------------------------------------------
@jax.jit
def inception_a_forward(fused, x_nchw):
    N, Cin, H, W = x_nchw.shape
    HW = H * W

    # Fuse the four 1x1 branch weights along Cout (torch.cat branch order is
    # preserved by the split/concat offsets inside the kernel).
    w1 = jnp.concatenate([fused["w1x1_b1"], fused["w1x1_b5"],
                          fused["w1x1_b3"], fused["w1x1_bp"]], axis=0)
    b1 = jnp.concatenate([fused["b1x1_b1"], fused["b1x1_b5"],
                          fused["b1x1_b3"], fused["b1x1_bp"]], axis=0)
    splits = (fused["w1x1_b1"].shape[0], fused["w1x1_b5"].shape[0],
              fused["w1x1_b3"].shape[0], fused["w1x1_bp"].shape[0])
    c52 = fused["w52"].shape[0]
    c33 = fused["w33"].shape[0]
    c_total = splits[0] + c52 + c33 + splits[3]
    c_mid_max = max(fused["w52"].shape[1] // 9,
                    fused["w32"].shape[1] // 9,
                    fused["w33"].shape[1] // 9)

    # NCHW consumed directly as (N, Cin, H*W): spatial-in-lanes, no transpose.
    x_flat = x_nchw.reshape(N, Cin, HW)

    kernel = functools.partial(_inception_a_kernel, splits=splits, H=H, W=W)

    def _rep(a):  # replicated (full-array) block, broadcast to every grid step
        return pl.BlockSpec(a.shape, lambda n, _nd=a.ndim: (0,) * _nd)

    out_flat = pl.pallas_call(
        kernel,
        out_shape=jax.ShapeDtypeStruct((N, c_total, HW), x_nchw.dtype),
        grid_spec=pltpu.PrefetchScalarGridSpec(
            num_scalar_prefetch=0,
            grid=(N,),
            in_specs=[
                pl.BlockSpec((1, Cin, HW), lambda n: (n, 0, 0)),
                _rep(w1), _rep(b1),
                _rep(fused["w52"]), _rep(fused["b52"]),
                _rep(fused["w32"]), _rep(fused["b32"]),
                _rep(fused["w33"]), _rep(fused["b33"]),
            ],
            out_specs=pl.BlockSpec((1, c_total, HW), lambda n: (n, 0, 0)),
            scratch_shapes=[
                pltpu.VMEM((c_mid_max, H + 2, W + 2), jnp.float32),  # pad window
                pltpu.VMEM((9 * c_mid_max, HW), jnp.float32),        # im2col
            ],
        ),
        compiler_params=pltpu.CompilerParams(
            dimension_semantics=("parallel",)),
    )(x_flat, w1, b1, fused["w52"], fused["b52"],
      fused["w32"], fused["b32"], fused["w33"], fused["b33"])

    # (N, Ctotal, H*W) is already NCHW channel-concat order; just un-flatten.
    return out_flat.reshape(N, c_total, H, W)


# ----------------------------------------------------------------------------
# Pure-JAX reference (for verification; uses un-folded params)
# ----------------------------------------------------------------------------
def _ref_conv(x_nhwc, w, scale, bias, ksize):
    if ksize == 1:
        w4 = w.reshape(1, 1, *w.shape)
        pad = "VALID"
    else:
        w4 = w
        pad = "SAME"
    y = jax.lax.conv_general_dilated(
        x_nhwc, w4, window_strides=(1, 1), padding=pad,
        dimension_numbers=("NHWC", "HWIO", "NHWC"))
    y = y * scale + bias
    return jnp.maximum(y, 0.0)


def inception_a_reference(params, x_nchw):
    x = jnp.transpose(x_nchw, (0, 2, 3, 1))
    p = params["branch1x1"]
    b1 = _ref_conv(x, p["w"], p["scale"], p["bias"], 1)
    p = params["branch5x5_1"]
    b5 = _ref_conv(x, p["w"], p["scale"], p["bias"], 1)
    p = params["branch5x5_2"]
    b5 = _ref_conv(b5, p["w"], p["scale"], p["bias"], 3)
    p = params["branch3x3dbl_1"]
    b3 = _ref_conv(x, p["w"], p["scale"], p["bias"], 1)
    p = params["branch3x3dbl_2"]
    b3 = _ref_conv(b3, p["w"], p["scale"], p["bias"], 3)
    p = params["branch3x3dbl_3"]
    b3 = _ref_conv(b3, p["w"], p["scale"], p["bias"], 3)
    p = params["branch_pool"]
    bp = _ref_conv(x, p["w"], p["scale"], p["bias"], 1)
    out = jnp.concatenate([b1, b5, b3, bp], axis=-1)
    return jnp.transpose(out, (0, 3, 1, 2))


# ----------------------------------------------------------------------------
if __name__ == "__main__":
    key = jax.random.PRNGKey(0)
    k_x, k_p = jax.random.split(key)

    N, C, H, W = 2, 4, 16, 16
    x = jax.random.normal(k_x, (N, C, H, W), jnp.float32)

    params = make_inception_a_params(
        k_p, in_channels=C,
        b_1x1_out=8, b_5x5_1_out=6, b_5x5_2_out=8,
        b_3x3_1_out=6, b_3x3_2_out=8, b_3x3_3_out=8,
        b_pool_out=8)
    fused = fuse_inception_a_params(params)

    out = inception_a_forward(fused, x)
    out = jax.block_until_ready(out)

    ref = inception_a_reference(params, x)
    assert out.shape == (N, 8 + 8 + 8 + 8, H, W), out.shape
    assert jnp.allclose(out, ref, atol=1e-4, rtol=1e-4), (
        float(jnp.max(jnp.abs(out - ref))))

    print("KERNEL_OK")
</pallas_src>

<mosaic_0001>
module attributes {stable_mosaic.version = 11 : i64} {
  func.func @_inception_a_kernel(%arg0: i32, %arg1: memref<1x4x256xf32, #tpu.memory_space<vmem>>, %arg2: memref<28x4xf32, #tpu.memory_space<vmem>>, %arg3: memref<28x1xf32, #tpu.memory_space<vmem>>, %arg4: memref<8x54xf32, #tpu.memory_space<vmem>>, %arg5: memref<8x1xf32, #tpu.memory_space<vmem>>, %arg6: memref<8x54xf32, #tpu.memory_space<vmem>>, %arg7: memref<8x1xf32, #tpu.memory_space<vmem>>, %arg8: memref<8x72xf32, #tpu.memory_space<vmem>>, %arg9: memref<8x1xf32, #tpu.memory_space<vmem>>, %arg10: memref<1x32x256xf32, #tpu.memory_space<vmem>>, %arg11: memref<8x18x18xf32, #tpu.memory_space<vmem>>, %arg12: memref<72x256xf32, #tpu.memory_space<vmem>>) attributes {dimension_semantics = [#tpu.dimension_semantics<parallel>], iteration_bounds = array<i64: 2>, scalar_prefetch = 0 : i64, scratch_operands = 2 : i64, tpu.core_type = #tpu.core_type<tc>, window_params = [{transform_indices = @transform_0, window_bounds = array<i64: 1, 4, 256>}, {pipeline_mode = #tpu.pipeline_mode<synchronous>, transform_indices = @transform_1, window_bounds = array<i64: 28, 4>}, {pipeline_mode = #tpu.pipeline_mode<synchronous>, transform_indices = @transform_2, window_bounds = array<i64: 28, 1>}, {pipeline_mode = #tpu.pipeline_mode<synchronous>, transform_indices = @transform_3, window_bounds = array<i64: 8, 54>}, {pipeline_mode = #tpu.pipeline_mode<synchronous>, transform_indices = @transform_4, window_bounds = array<i64: 8, 1>}, {pipeline_mode = #tpu.pipeline_mode<synchronous>, transform_indices = @transform_5, window_bounds = array<i64: 8, 54>}, {pipeline_mode = #tpu.pipeline_mode<synchronous>, transform_indices = @transform_6, window_bounds = array<i64: 8, 1>}, {pipeline_mode = #tpu.pipeline_mode<synchronous>, transform_indices = @transform_7, window_bounds = array<i64: 8, 72>}, {pipeline_mode = #tpu.pipeline_mode<synchronous>, transform_indices = @transform_8, window_bounds = array<i64: 8, 1>}, {transform_indices = @transform_9, window_bounds = array<i64: 1, 32, 256>}]} {
    %cst = arith.constant 0.000000e+00 : f32
    %0 = vector.broadcast %cst : f32 to vector<8x18x18xf32>
    %c0 = arith.constant 0 : index
    %c0_0 = arith.constant 0 : index
    %c0_1 = arith.constant 0 : index
    %1 = vector.load %arg11[%c0, %c0_0, %c0_1] : memref<8x18x18xf32, #tpu.memory_space<vmem>>, vector<8x18x18xf32>
    tpu.vector_store %arg11[%c0, %c0_0, %c0_1], %0 {strides = array<i32>} : memref<8x18x18xf32, #tpu.memory_space<vmem>>, vector<8x18x18xf32>,
    %c0_2 = arith.constant 0 : index
    %c0_3 = arith.constant 0 : index
    %c0_4 = arith.constant 0 : index
    %2 = vector.load %arg1[%c0_2, %c0_3, %c0_4] : memref<1x4x256xf32, #tpu.memory_space<vmem>>, vector<1x4x256xf32>
    %3 = vector.shape_cast %2 : vector<1x4x256xf32> to vector<4x256xf32>
    %c0_5 = arith.constant 0 : index
    %c0_6 = arith.constant 0 : index
    %4 = vector.load %arg2[%c0_5, %c0_6] : memref<28x4xf32, #tpu.memory_space<vmem>>, vector<28x4xf32>
    %cst_7 = arith.constant dense<0.000000e+00> : vector<28x256xf32>
    %5 = tpu.matmul %4, %3, %cst_7 {dimension_numbers = #tpu.dot_dimension_numbers<[1], [0], [0], [1], [0, 0, 1, 1], [], []>} : vector<28x4xf32>, vector<4x256xf32>, vector<28x256xf32> -> vector<28x256xf32>
    %c0_8 = arith.constant 0 : index
    %c0_9 = arith.constant 0 : index
    %6 = vector.load %arg3[%c0_8, %c0_9] : memref<28x1xf32, #tpu.memory_space<vmem>>, vector<28x1xf32>
    %7 = vector.broadcast %6 : vector<28x1xf32> to vector<28x256xf32>
    %8 = arith.addf %5, %7 : vector<28x256xf32>
    %cst_10 = arith.constant 0.000000e+00 : f32
    %9 = vector.broadcast %cst_10 : f32 to vector<28x256xf32>
    %10 = arith.maximumf %8, %9 : vector<28x256xf32>
    %11 = vector.extract_strided_slice %10 {offsets = [0, 0], sizes = [8, 256], strides = [1, 1]} : vector<28x256xf32> to vector<8x256xf32>
    %12 = vector.extract_strided_slice %10 {offsets = [8, 0], sizes = [6, 256], strides = [1, 1]} : vector<28x256xf32> to vector<6x256xf32>
    %13 = vector.extract_strided_slice %10 {offsets = [14, 0], sizes = [6, 256], strides = [1, 1]} : vector<28x256xf32> to vector<6x256xf32>
    %14 = vector.extract_strided_slice %10 {offsets = [20, 0], sizes = [8, 256], strides = [1, 1]} : vector<28x256xf32> to vector<8x256xf32>
    %15 = vector.shape_cast %12 : vector<6x256xf32> to vector<6x16x16xf32>
    %c0_11 = arith.constant 0 : index
    %c1 = arith.constant 1 : index
    %c1_12 = arith.constant 1 : index
    %16 = vector.load %arg11[%c0_11, %c1, %c1_12] : memref<8x18x18xf32, #tpu.memory_space<vmem>>, vector<6x16x16xf32>
    tpu.vector_store %arg11[%c0_11, %c1, %c1_12], %15 {strides = array<i32>} : memref<8x18x18xf32, #tpu.memory_space<vmem>>, vector<6x16x16xf32>,
    %c0_13 = arith.constant 0 : index
    %c0_14 = arith.constant 0 : index
    %c0_15 = arith.constant 0 : index
    %17 = vector.load %arg11[%c0_13, %c0_14, %c0_15] : memref<8x18x18xf32, #tpu.memory_space<vmem>>, vector<6x16x16xf32>
    %18 = vector.shape_cast %17 : vector<6x16x16xf32> to vector<6x256xf32>
    %c0_16 = arith.constant 0 : index
    %c0_17 = arith.constant 0 : index
    %19 = vector.load %arg12[%c0_16, %c0_17] : memref<72x256xf32, #tpu.memory_space<vmem>>, vector<6x256xf32>
    tpu.vector_store %arg12[%c0_16, %c0_17], %18 {strides = array<i32>} : memref<72x256xf32, #tpu.memory_space<vmem>>, vector<6x256xf32>,
    %c0_18 = arith.constant 0 : index
    %c0_19 = arith.constant 0 : index
    %c1_20 = arith.constant 1 : index
    %20 = vector.load %arg11[%c0_18, %c0_19, %c1_20] : memref<8x18x18xf32, #tpu.memory_space<vmem>>, vector<6x16x16xf32>
    %21 = vector.shape_cast %20 : vector<6x16x16xf32> to vector<6x256xf32>
    %c6 = arith.constant 6 : index
    %c0_21 = arith.constant 0 : index
    %22 = vector.load %arg12[%c6, %c0_21] : memref<72x256xf32, #tpu.memory_space<vmem>>, vector<6x256xf32>
    tpu.vector_store %arg12[%c6, %c0_21], %21 {strides = array<i32>} : memref<72x256xf32, #tpu.memory_space<vmem>>, vector<6x256xf32>,
    %c0_22 = arith.constant 0 : index
    %c0_23 = arith.constant 0 : index
    %c2 = arith.constant 2 : index
    %23 = vector.load %arg11[%c0_22, %c0_23, %c2] : memref<8x18x18xf32, #tpu.memory_space<vmem>>, vector<6x16x16xf32>
    %24 = vector.shape_cast %23 : vector<6x16x16xf32> to vector<6x256xf32>
    %c12 = arith.constant 12 : index
    %c0_24 = arith.constant 0 : index
    %25 = vector.load %arg12[%c12, %c0_24] : memref<72x256xf32, #tpu.memory_space<vmem>>, vector<6x256xf32>
    tpu.vector_store %arg12[%c12, %c0_24], %24 {strides = array<i32>} : memref<72x256xf32, #tpu.memory_space<vmem>>, vector<6x256xf32>,
    %c0_25 = arith.constant 0 : index
    %c1_26 = arith.constant 1 : index
    %c0_27 = arith.constant 0 : index
    %26 = vector.load %arg11[%c0_25, %c1_26, %c0_27] : memref<8x18x18xf32, #tpu.memory_space<vmem>>, vector<6x16x16xf32>
    %27 = vector.shape_cast %26 : vector<6x16x16xf32> to vector<6x256xf32>
    %c18 = arith.constant 18 : index
    %c0_28 = arith.constant 0 : index
    %28 = vector.load %arg12[%c18, %c0_28] : memref<72x256xf32, #tpu.memory_space<vmem>>, vector<6x256xf32>
    tpu.vector_store %arg12[%c18, %c0_28], %27 {strides = array<i32>} : memref<72x256xf32, #tpu.memory_space<vmem>>, vector<6x256xf32>,
    %c0_29 = arith.constant 0 : index
    %c1_30 = arith.constant 1 : index
    %c1_31 = arith.constant 1 : index
    %29 = vector.load %arg11[%c0_29, %c1_30, %c1_31] : memref<8x18x18xf32, #tpu.memory_space<vmem>>, vector<6x16x16xf32>
    %30 = vector.shape_cast %29 : vector<6x16x16xf32> to vector<6x256xf32>
    %c24 = arith.constant 24 : index
    %c0_32 = arith.constant 0 : index
    %31 = vector.load %arg12[%c24, %c0_32] : memref<72x256xf32, #tpu.memory_space<vmem>>, vector<6x256xf32>
    tpu.vector_store %arg12[%c24, %c0_32], %30 {strides = array<i32>} : memref<72x256xf32, #tpu.memory_space<vmem>>, vector<6x256xf32>,
    %c0_33 = arith.constant 0 : index
    %c1_34 = arith.constant 1 : index
    %c2_35 = arith.constant 2 : index
    %32 = vector.load %arg11[%c0_33, %c1_34, %c2_35] : memref<8x18x18xf32, #tpu.memory_space<vmem>>, vector<6x16x16xf32>
    %33 = vector.shape_cast %32 : vector<6x16x16xf32> to vector<6x256xf32>
    %c30 = arith.constant 30 : index
    %c0_36 = arith.constant 0 : index
    %34 = vector.load %arg12[%c30, %c0_36] : memref<72x256xf32, #tpu.memory_space<vmem>>, vector<6x256xf32>
    tpu.vector_store %arg12[%c30, %c0_36], %33 {strides = array<i32>} : memref<72x256xf32, #tpu.memory_space<vmem>>, vector<6x256xf32>,
    %c0_37 = arith.constant 0 : index
    %c2_38 = arith.constant 2 : index
    %c0_39 = arith.constant 0 : index
    %35 = vector.load %arg11[%c0_37, %c2_38, %c0_39] : memref<8x18x18xf32, #tpu.memory_space<vmem>>, vector<6x16x16xf32>
    %36 = vector.shape_cast %35 : vector<6x16x16xf32> to vector<6x256xf32>
    %c36 = arith.constant 36 : index
    %c0_40 = arith.constant 0 : index
    %37 = vector.load %arg12[%c36, %c0_40] : memref<72x256xf32, #tpu.memory_space<vmem>>, vector<6x256xf32>
    tpu.vector_store %arg12[%c36, %c0_40], %36 {strides = array<i32>} : memref<72x256xf32, #tpu.memory_space<vmem>>, vector<6x256xf32>,
    %c0_41 = arith.constant 0 : index
    %c2_42 = arith.constant 2 : index
    %c1_43 = arith.constant 1 : index
    %38 = vector.load %arg11[%c0_41, %c2_42, %c1_43] : memref<8x18x18xf32, #tpu.memory_space<vmem>>, vector<6x16x16xf32>
    %39 = vector.shape_cast %38 : vector<6x16x16xf32> to vector<6x256xf32>
    %c42 = arith.constant 42 : index
    %c0_44 = arith.constant 0 : index
    %40 = vector.load %arg12[%c42, %c0_44] : memref<72x256xf32, #tpu.memory_space<vmem>>, vector<6x256xf32>
    tpu.vector_store %arg12[%c42, %c0_44], %39 {strides = array<i32>} : memref<72x256xf32, #tpu.memory_space<vmem>>, vector<6x256xf32>,
    %c0_45 = arith.constant 0 : index
    %c2_46 = arith.constant 2 : index
    %c2_47 = arith.constant 2 : index
    %41 = vector.load %arg11[%c0_45, %c2_46, %c2_47] : memref<8x18x18xf32, #tpu.memory_space<vmem>>, vector<6x16x16xf32>
    %42 = vector.shape_cast %41 : vector<6x16x16xf32> to vector<6x256xf32>
    %c48 = arith.constant 48 : index
    %c0_48 = arith.constant 0 : index
    %43 = vector.load %arg12[%c48, %c0_48] : memref<72x256xf32, #tpu.memory_space<vmem>>, vector<6x256xf32>
    tpu.vector_store %arg12[%c48, %c0_48], %42 {strides = array<i32>} : memref<72x256xf32, #tpu.memory_space<vmem>>, vector<6x256xf32>,
    %c0_49 = arith.constant 0 : index
    %c0_50 = arith.constant 0 : index
    %44 = vector.load %arg4[%c0_49, %c0_50] : memref<8x54xf32, #tpu.memory_space<vmem>>, vector<8x54xf32>
    %c0_51 = arith.constant 0 : index
    %c0_52 = arith.constant 0 : index
    %45 = vector.load %arg12[%c0_51, %c0_52] : memref<72x256xf32, #tpu.memory_space<vmem>>, vector<54x256xf32>
    %cst_53 = arith.constant dense<0.000000e+00> : vector<8x256xf32>
    %46 = tpu.matmul %44, %45, %cst_53 {dimension_numbers = #tpu.dot_dimension_numbers<[1], [0], [0], [1], [0, 0, 1, 1], [], []>} : vector<8x54xf32>, vector<54x256xf32>, vector<8x256xf32> -> vector<8x256xf32>
    %c0_54 = arith.constant 0 : index
    %c0_55 = arith.constant 0 : index
    %47 = vector.load %arg5[%c0_54, %c0_55] : memref<8x1xf32, #tpu.memory_space<vmem>>, vector<8x1xf32>
    %48 = vector.broadcast %47 : vector<8x1xf32> to vector<8x256xf32>
    %49 = arith.addf %46, %48 : vector<8x256xf32>
    %cst_56 = arith.constant 0.000000e+00 : f32
    %50 = vector.broadcast %cst_56 : f32 to vector<8x256xf32>
    %51 = arith.maximumf %49, %50 : vector<8x256xf32>
    %52 = vector.shape_cast %13 : vector<6x256xf32> to vector<6x16x16xf32>
    %c0_57 = arith.constant 0 : index
    %c1_58 = arith.constant 1 : index
    %c1_59 = arith.constant 1 : index
    %53 = vector.load %arg11[%c0_57, %c1_58, %c1_59] : memref<8x18x18xf32, #tpu.memory_space<vmem>>, vector<6x16x16xf32>
    tpu.vector_store %arg11[%c0_57, %c1_58, %c1_59], %52 {strides = array<i32>} : memref<8x18x18xf32, #tpu.memory_space<vmem>>, vector<6x16x16xf32>,
    %c0_60 = arith.constant 0 : index
    %c0_61 = arith.constant 0 : index
    %c0_62 = arith.constant 0 : index
    %54 = vector.load %arg11[%c0_60, %c0_61, %c0_62] : memref<8x18x18xf32, #tpu.memory_space<vmem>>, vector<6x16x16xf32>
    %55 = vector.shape_cast %54 : vector<6x16x16xf32> to vector<6x256xf32>
    %c0_63 = arith.constant 0 : index
    %c0_64 = arith.constant 0 : index
    %56 = vector.load %arg12[%c0_63, %c0_64] : memref<72x256xf32, #tpu.memory_space<vmem>>, vector<6x256xf32>
    tpu.vector_store %arg12[%c0_63, %c0_64], %55 {strides = array<i32>} : memref<72x256xf32, #tpu.memory_space<vmem>>, vector<6x256xf32>,
    %c0_65 = arith.constant 0 : index
    %c0_66 = arith.constant 0 : index
    %c1_67 = arith.constant 1 : index
    %57 = vector.load %arg11[%c0_65, %c0_66, %c1_67] : memref<8x18x18xf32, #tpu.memory_space<vmem>>, vector<6x16x16xf32>
    %58 = vector.shape_cast %57 : vector<6x16x16xf32> to vector<6x256xf32>
    %c6_68 = arith.constant 6 : index
    %c0_69 = arith.constant 0 : index
    %59 = vector.load %arg12[%c6_68, %c0_69] : memref<72x256xf32, #tpu.memory_space<vmem>>, vector<6x256xf32>
    tpu.vector_store %arg12[%c6_68, %c0_69], %58 {strides = array<i32>} : memref<72x256xf32, #tpu.memory_space<vmem>>, vector<6x256xf32>,
    %c0_70 = arith.constant 0 : index
    %c0_71 = arith.constant 0 : index
    %c2_72 = arith.constant 2 : index
    %60 = vector.load %arg11[%c0_70, %c0_71, %c2_72] : memref<8x18x18xf32, #tpu.memory_space<vmem>>, vector<6x16x16xf32>
    %61 = vector.shape_cast %60 : vector<6x16x16xf32> to vector<6x256xf32>
    %c12_73 = arith.constant 12 : index
    %c0_74 = arith.constant 0 : index
    %62 = vector.load %arg12[%c12_73, %c0_74] : memref<72x256xf32, #tpu.memory_space<vmem>>, vector<6x256xf32>
    tpu.vector_store %arg12[%c12_73, %c0_74], %61 {strides = array<i32>} : memref<72x256xf32, #tpu.memory_space<vmem>>, vector<6x256xf32>,
    %c0_75 = arith.constant 0 : index
    %c1_76 = arith.constant 1 : index
    %c0_77 = arith.constant 0 : index
    %63 = vector.load %arg11[%c0_75, %c1_76, %c0_77] : memref<8x18x18xf32, #tpu.memory_space<vmem>>, vector<6x16x16xf32>
    %64 = vector.shape_cast %63 : vector<6x16x16xf32> to vector<6x256xf32>
    %c18_78 = arith.constant 18 : index
    %c0_79 = arith.constant 0 : index
    %65 = vector.load %arg12[%c18_78, %c0_79] : memref<72x256xf32, #tpu.memory_space<vmem>>, vector<6x256xf32>
    tpu.vector_store %arg12[%c18_78, %c0_79], %64 {strides = array<i32>} : memref<72x256xf32, #tpu.memory_space<vmem>>, vector<6x256xf32>,
    %c0_80 = arith.constant 0 : index
    %c1_81 = arith.constant 1 : index
    %c1_82 = arith.constant 1 : index
    %66 = vector.load %arg11[%c0_80, %c1_81, %c1_82] : memref<8x18x18xf32, #tpu.memory_space<vmem>>, vector<6x16x16xf32>
    %67 = vector.shape_cast %66 : vector<6x16x16xf32> to vector<6x256xf32>
    %c24_83 = arith.constant 24 : index
    %c0_84 = arith.constant 0 : index
    %68 = vector.load %arg12[%c24_83, %c0_84] : memref<72x256xf32, #tpu.memory_space<vmem>>, vector<6x256xf32>
    tpu.vector_store %arg12[%c24_83, %c0_84], %67 {strides = array<i32>} : memref<72x256xf32, #tpu.memory_space<vmem>>, vector<6x256xf32>,
    %c0_85 = arith.constant 0 : index
    %c1_86 = arith.constant 1 : index
    %c2_87 = arith.constant 2 : index
    %69 = vector.load %arg11[%c0_85, %c1_86, %c2_87] : memref<8x18x18xf32, #tpu.memory_space<vmem>>, vector<6x16x16xf32>
    %70 = vector.shape_cast %69 : vector<6x16x16xf32> to vector<6x256xf32>
    %c30_88 = arith.constant 30 : index
    %c0_89 = arith.constant 0 : index
    %71 = vector.load %arg12[%c30_88, %c0_89] : memref<72x256xf32, #tpu.memory_space<vmem>>, vector<6x256xf32>
    tpu.vector_store %arg12[%c30_88, %c0_89], %70 {strides = array<i32>} : memref<72x256xf32, #tpu.memory_space<vmem>>, vector<6x256xf32>,
    %c0_90 = arith.constant 0 : index
    %c2_91 = arith.constant 2 : index
    %c0_92 = arith.constant 0 : index
    %72 = vector.load %arg11[%c0_90, %c2_91, %c0_92] : memref<8x18x18xf32, #tpu.memory_space<vmem>>, vector<6x16x16xf32>
    %73 = vector.shape_cast %72 : vector<6x16x16xf32> to vector<6x256xf32>
    %c36_93 = arith.constant 36 : index
    %c0_94 = arith.constant 0 : index
    %74 = vector.load %arg12[%c36_93, %c0_94] : memref<72x256xf32, #tpu.memory_space<vmem>>, vector<6x256xf32>
    tpu.vector_store %arg12[%c36_93, %c0_94], %73 {strides = array<i32>} : memref<72x256xf32, #tpu.memory_space<vmem>>, vector<6x256xf32>,
    %c0_95 = arith.constant 0 : index
    %c2_96 = arith.constant 2 : index
    %c1_97 = arith.constant 1 : index
    %75 = vector.load %arg11[%c0_95, %c2_96, %c1_97] : memref<8x18x18xf32, #tpu.memory_space<vmem>>, vector<6x16x16xf32>
    %76 = vector.shape_cast %75 : vector<6x16x16xf32> to vector<6x256xf32>
    %c42_98 = arith.constant 42 : index
    %c0_99 = arith.constant 0 : index
    %77 = vector.load %arg12[%c42_98, %c0_99] : memref<72x256xf32, #tpu.memory_space<vmem>>, vector<6x256xf32>
    tpu.vector_store %arg12[%c42_98, %c0_99], %76 {strides = array<i32>} : memref<72x256xf32, #tpu.memory_space<vmem>>, vector<6x256xf32>,
    %c0_100 = arith.constant 0 : index
    %c2_101 = arith.constant 2 : index
    %c2_102 = arith.constant 2 : index
    %78 = vector.load %arg11[%c0_100, %c2_101, %c2_102] : memref<8x18x18xf32, #tpu.memory_space<vmem>>, vector<6x16x16xf32>
    %79 = vector.shape_cast %78 : vector<6x16x16xf32> to vector<6x256xf32>
    %c48_103 = arith.constant 48 : index
    %c0_104 = arith.constant 0 : index
    %80 = vector.load %arg12[%c48_103, %c0_104] : memref<72x256xf32, #tpu.memory_space<vmem>>, vector<6x256xf32>
    tpu.vector_store %arg12[%c48_103, %c0_104], %79 {strides = array<i32>} : memref<72x256xf32, #tpu.memory_space<vmem>>, vector<6x256xf32>,
    %c0_105 = arith.constant 0 : index
    %c0_106 = arith.constant 0 : index
    %81 = vector.load %arg6[%c0_105, %c0_106] : memref<8x54xf32, #tpu.memory_space<vmem>>, vector<8x54xf32>
    %c0_107 = arith.constant 0 : index
    %c0_108 = arith.constant 0 : index
    %82 = vector.load %arg12[%c0_107, %c0_108] : memref<72x256xf32, #tpu.memory_space<vmem>>, vector<54x256xf32>
    %cst_109 = arith.constant dense<0.000000e+00> : vector<8x256xf32>
    %83 = tpu.matmul %81, %82, %cst_109 {dimension_numbers = #tpu.dot_dimension_numbers<[1], [0], [0], [1], [0, 0, 1, 1], [], []>} : vector<8x54xf32>, vector<54x256xf32>, vector<8x256xf32> -> vector<8x256xf32>
    %c0_110 = arith.constant 0 : index
    %c0_111 = arith.constant 0 : index
    %84 = vector.load %arg7[%c0_110, %c0_111] : memref<8x1xf32, #tpu.memory_space<vmem>>, vector<8x1xf32>
    %85 = vector.broadcast %84 : vector<8x1xf32> to vector<8x256xf32>
    %86 = arith.addf %83, %85 : vector<8x256xf32>
    %cst_112 = arith.constant 0.000000e+00 : f32
    %87 = vector.broadcast %cst_112 : f32 to vector<8x256xf32>
    %88 = arith.maximumf %86, %87 : vector<8x256xf32>
    %89 = vector.shape_cast %88 : vector<8x256xf32> to vector<8x16x16xf32>
    %c0_113 = arith.constant 0 : index
    %c1_114 = arith.constant 1 : index
    %c1_115 = arith.constant 1 : index
    %90 = vector.load %arg11[%c0_113, %c1_114, %c1_115] : memref<8x18x18xf32, #tpu.memory_space<vmem>>, vector<8x16x16xf32>
    tpu.vector_store %arg11[%c0_113, %c1_114, %c1_115], %89 {strides = array<i32>} : memref<8x18x18xf32, #tpu.memory_space<vmem>>, vector<8x16x16xf32>,
    %c0_116 = arith.constant 0 : index
    %c0_117 = arith.constant 0 : index
    %c0_118 = arith.constant 0 : index
    %91 = vector.load %arg11[%c0_116, %c0_117, %c0_118] : memref<8x18x18xf32, #tpu.memory_space<vmem>>, vector<8x16x16xf32>
    %92 = vector.shape_cast %91 : vector<8x16x16xf32> to vector<8x256xf32>
    %c0_119 = arith.constant 0 : index
    %c0_120 = arith.constant 0 : index
    %93 = vector.load %arg12[%c0_119, %c0_120] : memref<72x256xf32, #tpu.memory_space<vmem>>, vector<8x256xf32>
    tpu.vector_store %arg12[%c0_119, %c0_120], %92 {strides = array<i32>} : memref<72x256xf32, #tpu.memory_space<vmem>>, vector<8x256xf32>,
    %c0_121 = arith.constant 0 : index
    %c0_122 = arith.constant 0 : index
    %c1_123 = arith.constant 1 : index
    %94 = vector.load %arg11[%c0_121, %c0_122, %c1_123] : memref<8x18x18xf32, #tpu.memory_space<vmem>>, vector<8x16x16xf32>
    %95 = vector.shape_cast %94 : vector<8x16x16xf32> to vector<8x256xf32>
    %c8 = arith.constant 8 : index
    %c0_124 = arith.constant 0 : index
    %96 = vector.load %arg12[%c8, %c0_124] : memref<72x256xf32, #tpu.memory_space<vmem>>, vector<8x256xf32>
    tpu.vector_store %arg12[%c8, %c0_124], %95 {strides = array<i32>} : memref<72x256xf32, #tpu.memory_space<vmem>>, vector<8x256xf32>,
    %c0_125 = arith.constant 0 : index
    %c0_126 = arith.constant 0 : index
    %c2_127 = arith.constant 2 : index
    %97 = vector.load %arg11[%c0_125, %c0_126, %c2_127] : memref<8x18x18xf32, #tpu.memory_space<vmem>>, vector<8x16x16xf32>
    %98 = vector.shape_cast %97 : vector<8x16x16xf32> to vector<8x256xf32>
    %c16 = arith.constant 16 : index
    %c0_128 = arith.constant 0 : index
    %99 = vector.load %arg12[%c16, %c0_128] : memref<72x256xf32, #tpu.memory_space<vmem>>, vector<8x256xf32>
    tpu.vector_store %arg12[%c16, %c0_128], %98 {strides = array<i32>} : memref<72x256xf32, #tpu.memory_space<vmem>>, vector<8x256xf32>,
    %c0_129 = arith.constant 0 : index
    %c1_130 = arith.constant 1 : index
    %c0_131 = arith.constant 0 : index
    %100 = vector.load %arg11[%c0_129, %c1_130, %c0_131] : memref<8x18x18xf32, #tpu.memory_space<vmem>>, vector<8x16x16xf32>
    %101 = vector.shape_cast %100 : vector<8x16x16xf32> to vector<8x256xf32>
    %c24_132 = arith.constant 24 : index
    %c0_133 = arith.constant 0 : index
    %102 = vector.load %arg12[%c24_132, %c0_133] : memref<72x256xf32, #tpu.memory_space<vmem>>, vector<8x256xf32>
    tpu.vector_store %arg12[%c24_132, %c0_133], %101 {strides = array<i32>} : memref<72x256xf32, #tpu.memory_space<vmem>>, vector<8x256xf32>,
    %c0_134 = arith.constant 0 : index
    %c1_135 = arith.constant 1 : index
    %c1_136 = arith.constant 1 : index
    %103 = vector.load %arg11[%c0_134, %c1_135, %c1_136] : memref<8x18x18xf32, #tpu.memory_space<vmem>>, vector<8x16x16xf32>
    %104 = vector.shape_cast %103 : vector<8x16x16xf32> to vector<8x256xf32>
    %c32 = arith.constant 32 : index
    %c0_137 = arith.constant 0 : index
    %105 = vector.load %arg12[%c32, %c0_137] : memref<72x256xf32, #tpu.memory_space<vmem>>, vector<8x256xf32>
    tpu.vector_store %arg12[%c32, %c0_137], %104 {strides = array<i32>} : memref<72x256xf32, #tpu.memory_space<vmem>>, vector<8x256xf32>,
    %c0_138 = arith.constant 0 : index
    %c1_139 = arith.constant 1 : index
    %c2_140 = arith.constant 2 : index
    %106 = vector.load %arg11[%c0_138, %c1_139, %c2_140] : memref<8x18x18xf32, #tpu.memory_space<vmem>>, vector<8x16x16xf32>
    %107 = vector.shape_cast %106 : vector<8x16x16xf32> to vector<8x256xf32>
    %c40 = arith.constant 40 : index
    %c0_141 = arith.constant 0 : index
    %108 = vector.load %arg12[%c40, %c0_141] : memref<72x256xf32, #tpu.memory_space<vmem>>, vector<8x256xf32>
    tpu.vector_store %arg12[%c40, %c0_141], %107 {strides = array<i32>} : memref<72x256xf32, #tpu.memory_space<vmem>>, vector<8x256xf32>,
    %c0_142 = arith.constant 0 : index
    %c2_143 = arith.constant 2 : index
    %c0_144 = arith.constant 0 : index
    %109 = vector.load %arg11[%c0_142, %c2_143, %c0_144] : memref<8x18x18xf32, #tpu.memory_space<vmem>>, vector<8x16x16xf32>
    %110 = vector.shape_cast %109 : vector<8x16x16xf32> to vector<8x256xf32>
    %c48_145 = arith.constant 48 : index
    %c0_146 = arith.constant 0 : index
    %111 = vector.load %arg12[%c48_145, %c0_146] : memref<72x256xf32, #tpu.memory_space<vmem>>, vector<8x256xf32>
    tpu.vector_store %arg12[%c48_145, %c0_146], %110 {strides = array<i32>} : memref<72x256xf32, #tpu.memory_space<vmem>>, vector<8x256xf32>,
    %c0_147 = arith.constant 0 : index
    %c2_148 = arith.constant 2 : index
    %c1_149 = arith.constant 1 : index
    %112 = vector.load %arg11[%c0_147, %c2_148, %c1_149] : memref<8x18x18xf32, #tpu.memory_space<vmem>>, vector<8x16x16xf32>
    %113 = vector.shape_cast %112 : vector<8x16x16xf32> to vector<8x256xf32>
    %c56 = arith.constant 56 : index
    %c0_150 = arith.constant 0 : index
    %114 = vector.load %arg12[%c56, %c0_150] : memref<72x256xf32, #tpu.memory_space<vmem>>, vector<8x256xf32>
    tpu.vector_store %arg12[%c56, %c0_150], %113 {strides = array<i32>} : memref<72x256xf32, #tpu.memory_space<vmem>>, vector<8x256xf32>,
    %c0_151 = arith.constant 0 : index
    %c2_152 = arith.constant 2 : index
    %c2_153 = arith.constant 2 : index
    %115 = vector.load %arg11[%c0_151, %c2_152, %c2_153] : memref<8x18x18xf32, #tpu.memory_space<vmem>>, vector<8x16x16xf32>
    %116 = vector.shape_cast %115 : vector<8x16x16xf32> to vector<8x256xf32>
    %c64 = arith.constant 64 : index
    %c0_154 = arith.constant 0 : index
    %117 = vector.load %arg12[%c64, %c0_154] : memref<72x256xf32, #tpu.memory_space<vmem>>, vector<8x256xf32>
    tpu.vector_store %arg12[%c64, %c0_154], %116 {strides = array<i32>} : memref<72x256xf32, #tpu.memory_space<vmem>>, vector<8x256xf32>,
    %c0_155 = arith.constant 0 : index
    %c0_156 = arith.constant 0 : index
    %118 = vector.load %arg8[%c0_155, %c0_156] : memref<8x72xf32, #tpu.memory_space<vmem>>, vector<8x72xf32>
    %c0_157 = arith.constant 0 : index
    %c0_158 = arith.constant 0 : index
    %119 = vector.load %arg12[%c0_157, %c0_158] : memref<72x256xf32, #tpu.memory_space<vmem>>, vector<72x256xf32>
    %cst_159 = arith.constant dense<0.000000e+00> : vector<8x256xf32>
    %120 = tpu.matmul %118, %119, %cst_159 {dimension_numbers = #tpu.dot_dimension_numbers<[1], [0], [0], [1], [0, 0, 1, 1], [], []>} : vector<8x72xf32>, vector<72x256xf32>, vector<8x256xf32> -> vector<8x256xf32>
    %c0_160 = arith.constant 0 : index
    %c0_161 = arith.constant 0 : index
    %121 = vector.load %arg9[%c0_160, %c0_161] : memref<8x1xf32, #tpu.memory_space<vmem>>, vector<8x1xf32>
    %122 = vector.broadcast %121 : vector<8x1xf32> to vector<8x256xf32>
    %123 = arith.addf %120, %122 : vector<8x256xf32>
    %cst_162 = arith.constant 0.000000e+00 : f32
    %124 = vector.broadcast %cst_162 : f32 to vector<8x256xf32>
    %125 = arith.maximumf %123, %124 : vector<8x256xf32>
    %c0_163 = arith.constant 0 : index
    %c0_164 = arith.constant 0 : index
    %c0_165 = arith.constant 0 : index
    %126 = vector.load %arg10[%c0_163, %c0_164, %c0_165] : memref<1x32x256xf32, #tpu.memory_space<vmem>>, vector<1x8x256xf32>
    %127 = vector.shape_cast %126 : vector<1x8x256xf32> to vector<8x256xf32>
    %128 = vector.shape_cast %11 : vector<8x256xf32> to vector<1x8x256xf32>
    tpu.vector_store %arg10[%c0_163, %c0_164, %c0_165], %128 {strides = array<i32>} : memref<1x32x256xf32, #tpu.memory_space<vmem>>, vector<1x8x256xf32>,
    %c0_166 = arith.constant 0 : index
    %c8_167 = arith.constant 8 : index
    %c0_168 = arith.constant 0 : index
    %129 = vector.load %arg10[%c0_166, %c8_167, %c0_168] : memref<1x32x256xf32, #tpu.memory_space<vmem>>, vector<1x8x256xf32>
    %130 = vector.shape_cast %129 : vector<1x8x256xf32> to vector<8x256xf32>
    %131 = vector.shape_cast %51 : vector<8x256xf32> to vector<1x8x256xf32>
    tpu.vector_store %arg10[%c0_166, %c8_167, %c0_168], %131 {strides = array<i32>} : memref<1x32x256xf32, #tpu.memory_space<vmem>>, vector<1x8x256xf32>,
    %c0_169 = arith.constant 0 : index
    %c16_170 = arith.constant 16 : index
    %c0_171 = arith.constant 0 : index
    %132 = vector.load %arg10[%c0_169, %c16_170, %c0_171] : memref<1x32x256xf32, #tpu.memory_space<vmem>>, vector<1x8x256xf32>
    %133 = vector.shape_cast %132 : vector<1x8x256xf32> to vector<8x256xf32>
    %134 = vector.shape_cast %125 : vector<8x256xf32> to vector<1x8x256xf32>
    tpu.vector_store %arg10[%c0_169, %c16_170, %c0_171], %134 {strides = array<i32>} : memref<1x32x256xf32, #tpu.memory_space<vmem>>, vector<1x8x256xf32>,
    %c0_172 = arith.constant 0 : index
    %c24_173 = arith.constant 24 : index
    %c0_174 = arith.constant 0 : index
    %135 = vector.load %arg10[%c0_172, %c24_173, %c0_174] : memref<1x32x256xf32, #tpu.memory_space<vmem>>, vector<1x8x256xf32>
    %136 = vector.shape_cast %135 : vector<1x8x256xf32> to vector<8x256xf32>
    %137 = vector.shape_cast %14 : vector<8x256xf32> to vector<1x8x256xf32>
    tpu.vector_store %arg10[%c0_172, %c24_173, %c0_174], %137 {strides = array<i32>} : memref<1x32x256xf32, #tpu.memory_space<vmem>>, vector<1x8x256xf32>,
    return
  }
  func.func @transform_0(%arg0: i32) -> (i32, i32, i32) {
    %c0_i32 = arith.constant 0 : i32
    %c0_i32_0 = arith.constant 0 : i32
    %c0_i32_1 = arith.constant 0 : i32
    return %arg0, %c0_i32, %c0_i32_0 : i32, i32, i32
  }
  func.func @transform_1(%arg0: i32) -> (i32, i32) {
    %c0_i32 = arith.constant 0 : i32
    %c0_i32_0 = arith.constant 0 : i32
    %c0_i32_1 = arith.constant 0 : i32
    return %c0_i32, %c0_i32_0 : i32, i32
  }
  func.func @transform_2(%arg0: i32) -> (i32, i32) {
    %c0_i32 = arith.constant 0 : i32
    %c0_i32_0 = arith.constant 0 : i32
    %c0_i32_1 = arith.constant 0 : i32
    return %c0_i32, %c0_i32_0 : i32, i32
  }
  func.func @transform_3(%arg0: i32) -> (i32, i32) {
    %c0_i32 = arith.constant 0 : i32
    %c0_i32_0 = arith.constant 0 : i32
    %c0_i32_1 = arith.constant 0 : i32
    return %c0_i32, %c0_i32_0 : i32, i32
  }
  func.func @transform_4(%arg0: i32) -> (i32, i32) {
    %c0_i32 = arith.constant 0 : i32
    %c0_i32_0 = arith.constant 0 : i32
    %c0_i32_1 = arith.constant 0 : i32
    return %c0_i32, %c0_i32_0 : i32, i32
  }
  func.func @transform_5(%arg0: i32) -> (i32, i32) {
    %c0_i32 = arith.constant 0 : i32
    %c0_i32_0 = arith.constant 0 : i32
    %c0_i32_1 = arith.constant 0 : i32
    return %c0_i32, %c0_i32_0 : i32, i32
  }
  func.func @transform_6(%arg0: i32) -> (i32, i32) {
    %c0_i32 = arith.constant 0 : i32
    %c0_i32_0 = arith.constant 0 : i32
    %c0_i32_1 = arith.constant 0 : i32
    return %c0_i32, %c0_i32_0 : i32, i32
  }
  func.func @transform_7(%arg0: i32) -> (i32, i32) {
    %c0_i32 = arith.constant 0 : i32
    %c0_i32_0 = arith.constant 0 : i32
    %c0_i32_1 = arith.constant 0 : i32
    return %c0_i32, %c0_i32_0 : i32, i32
  }
  func.func @transform_8(%arg0: i32) -> (i32, i32) {
    %c0_i32 = arith.constant 0 : i32
    %c0_i32_0 = arith.constant 0 : i32
    %c0_i32_1 = arith.constant 0 : i32
    return %c0_i32, %c0_i32_0 : i32, i32
  }
  func.func @transform_9(%arg0: i32) -> (i32, i32, i32) {
    %c0_i32 = arith.constant 0 : i32
    %c0_i32_0 = arith.constant 0 : i32
    %c0_i32_1 = arith.constant 0 : i32
    return %arg0, %c0_i32, %c0_i32_0 : i32, i32, i32
  }
}

</mosaic_0001>

<llo_original>
// kernel: inception_a_forward.1
$region0: #{inception_a_forward.1}
  #allocation0 [shape = 'u32[]', space=smem, size = 0x4, offset = 0x4, fixed_abs, tag = 'smem constant byte address 0x4 - core index']
  #allocation1 [shape = 'u32[144,128]{1,0:T(1,128)}', space=vmem, size = 0x12000, scoped, tag = 'internal scratch']
  #allocation2 [shape = 'f32[8,18,18]{2,1,0:T(8,128)}', space=vmem, size = 0x18000, scoped, tag = 'scratch operand']
  #allocation3 [shape = 'f32[72,256]{1,0:T(8,128)}', space=vmem, size = 0x12000, scoped, tag = 'scratch operand']
  %s0 = inlined_call_operand.vmem [shape: f32[2,4,256], index: 0, kind: input, shape index: {}]
  %s1 = inlined_call_operand.vmem [shape: f32[28,4], index: 1, kind: input, shape index: {}]
  %s2 = inlined_call_operand.vmem [shape: f32[28,1], index: 2, kind: input, shape index: {}]
  %s3 = inlined_call_operand.vmem [shape: f32[8,54], index: 3, kind: input, shape index: {}]
  %s4 = inlined_call_operand.vmem [shape: f32[8,1], index: 4, kind: input, shape index: {}]
  %s5 = inlined_call_operand.vmem [shape: f32[8,54], index: 5, kind: input, shape index: {}]
  %s6 = inlined_call_operand.vmem [shape: f32[8,1], index: 6, kind: input, shape index: {}]
  %s7 = inlined_call_operand.vmem [shape: f32[8,72], index: 7, kind: input, shape index: {}]
  %s8 = inlined_call_operand.vmem [shape: f32[8,1], index: 8, kind: input, shape index: {}]
  %s9 = inlined_call_operand.vmem [shape: f32[2,32,256], index: 9, kind: output, shape index: {}]
  %s10 = sld [smem:[#allocation0]]
  $region69: #{inception_a_forward.1} parent=0
    _
  %s12 = ssub.s32 1, %s10
  %s13 = scalar_select 0, %s12, %s10
  loop: start=0, step=1, limit=4
  $region2: #{inception_a_forward.1} parent=0 // loop_pre_header
    _
  $region3: #{inception_a_forward.1} parent=0 // loop_header
    %s15 = sphi 0, %s19
    %p16 = scmp.ge.s32.totalorder %s15, 4
    %s25 = sphi 0, %s27
    %s28 = sphi 0, %s25
    %s29 = sphi 0, %s28
    %s45 = sphi 0, %s29
    %s49 = sphi 0, %s49
    %s51 = sphi 0, %s49
    %s52 = sphi 0, %s51
    %s66 = sphi 0, %s52
    %s70 = sphi 0, %s70
    %s72 = sphi 0, %s70
    %s73 = sphi 0, %s72
    %s87 = sphi 0, %s73
    %s91 = sphi 0, %s91
    %s93 = sphi 0, %s91
    %s94 = sphi 0, %s93
    %s108 = sphi 0, %s94
    %s112 = sphi 0, %s112
    %s114 = sphi 0, %s112
    %s115 = sphi 0, %s114
    %s129 = sphi 0, %s115
    %s133 = sphi 0, %s133
    %s135 = sphi 0, %s133
    %s136 = sphi 0, %s135
    %s150 = sphi 0, %s136
    %s154 = sphi 0, %s154
    %s156 = sphi 0, %s154
    %s157 = sphi 0, %s156
    %s171 = sphi 0, %s157
    %s175 = sphi 0, %s175
    %s177 = sphi 0, %s175
    %s178 = sphi 0, %s177
    %s192 = sphi 0, %s178
    %s196 = sphi 0, %s196
    %s198 = sphi 0, %s196
    %s199 = sphi 0, %s198
    %s213 = sphi 0, %s199
    %s219 = sphi 0, %s221
    %s222 = sphi 0, %s219
    %s223 = sphi 0, %s222
    %s239 = sphi 0, %s223
  $region4: #{inception_a_forward.1} parent=0 // loop_header_branch
    %18 = sbr.rel (%p16) target = $region8
  $region5: #{inception_a_forward.1} parent=0 // loop_body
    %s20 = ssub.s32 %s15, 1
    %s21 = ssub.s32 %s15, 2
    %s22 = sadd.s32 %s15, 1
    %s23 = ssub.s32 %s15, %s22
    %p24 = scmp.eq.s32.totalorder %s23, 0
    %s26 = sadd.s32 %s25, 1
    %s27 = scalar_select %p24, %s25, %s26
    %p30 = pneg %p24
    %p31 = scmp.eq.s32.totalorder %s15, 1
    %p32 = por %p30, %p31
    %p33 = scmp.ne.s32.totalorder %s25, %s28
    %p34 = scmp.eq.s32.totalorder %s15, 0
    %p35 = por %p33, %p34
    %p36 = scmp.ne.s32.totalorder %s25, %s28
    %p37 = scmp.eq.s32.totalorder %s20, 1
    %p38 = por %p36, %p37
    %p39 = scmp.ne.s32.totalorder %s28, %s29
    %p40 = scmp.eq.s32.totalorder %s20, 0
    %p41 = por %p39, %p40
    %p42 = scmp.ne.s32.totalorder %s28, %s29
    %p43 = scmp.eq.s32.totalorder %s21, 1
    %p44 = por %p42, %p43
    %p46 = scmp.ne.s32.totalorder %s29, %s45
    %p47 = scmp.eq.s32.totalorder %s21, 0
    %p48 = por %p46, %p47
    %s50 = sadd.s32 %s49, 1
    %p53 = scmp.eq.s32.totalorder %s15, 1
    %p54 = scmp.ne.s32.totalorder %s49, %s51
    %p55 = scmp.eq.s32.totalorder %s15, 0
    %p56 = por %p54, %p55
    %p57 = scmp.ne.s32.totalorder %s49, %s51
    %p58 = scmp.eq.s32.totalorder %s20, 1
    %p59 = por %p57, %p58
    %p60 = scmp.ne.s32.totalorder %s51, %s52
    %p61 = scmp.eq.s32.totalorder %s20, 0
    %p62 = por %p60, %p61
    %p63 = scmp.ne.s32.totalorder %s51, %s52
    %p64 = scmp.eq.s32.totalorder %s21, 1
    %p65 = por %p63, %p64
    %p67 = scmp.ne.s32.totalorder %s52, %s66
    %p68 = scmp.eq.s32.totalorder %s21, 0
    %p69 = por %p67, %p68
    %s71 = sadd.s32 %s70, 1
    %p74 = scmp.eq.s32.totalorder %s15, 1
    %p75 = scmp.ne.s32.totalorder %s70, %s72
    %p76 = scmp.eq.s32.totalorder %s15, 0
    %p77 = por %p75, %p76
    %p78 = scmp.ne.s32.totalorder %s70, %s72
    %p79 = scmp.eq.s32.totalorder %s20, 1
    %p80 = por %p78, %p79
    %p81 = scmp.ne.s32.totalorder %s72, %s73
    %p82 = scmp.eq.s32.totalorder %s20, 0
    %p83 = por %p81, %p82
    %p84 = scmp.ne.s32.totalorder %s72, %s73
    %p85 = scmp.eq.s32.totalorder %s21, 1
    %p86 = por %p84, %p85
    %p88 = scmp.ne.s32.totalorder %s73, %s87
    %p89 = scmp.eq.s32.totalorder %s21, 0
    %p90 = por %p88, %p89
    %s92 = sadd.s32 %s91, 1
    %p95 = scmp.eq.s32.totalorder %s15, 1
    %p96 = scmp.ne.s32.totalorder %s91, %s93
    %p97 = scmp.eq.s32.totalorder %s15, 0
    %p98 = por %p96, %p97
    %p99 = scmp.ne.s32.totalorder %s91, %s93
    %p100 = scmp.eq.s32.totalorder %s20, 1
    %p101 = por %p99, %p100
    %p102 = scmp.ne.s32.totalorder %s93, %s94
    %p103 = scmp.eq.s32.totalorder %s20, 0
    %p104 = por %p102, %p103
    %p105 = scmp.ne.s32.totalorder %s93, %s94
    %p106 = scmp.eq.s32.totalorder %s21, 1
    %p107 = por %p105, %p106
    %p109 = scmp.ne.s32.totalorder %s94, %s108
    %p110 = scmp.eq.s32.totalorder %s21, 0
    %p111 = por %p109, %p110
    %s113 = sadd.s32 %s112, 1
    %p116 = scmp.eq.s32.totalorder %s15, 1
    %p117 = scmp.ne.s32.totalorder %s112, %s114
    %p118 = scmp.eq.s32.totalorder %s15, 0
    %p119 = por %p117, %p118
    %p120 = scmp.ne.s32.totalorder %s112, %s114
    %p121 = scmp.eq.s32.totalorder %s20, 1
    %p122 = por %p120, %p121
    %p123 = scmp.ne.s32.totalorder %s114, %s115
    %p124 = scmp.eq.s32.totalorder %s20, 0
    %p125 = por %p123, %p124
    %p126 = scmp.ne.s32.totalorder %s114, %s115
    %p127 = scmp.eq.s32.totalorder %s21, 1
    %p128 = por %p126, %p127
    %p130 = scmp.ne.s32.totalorder %s115, %s129
    %p131 = scmp.eq.s32.totalorder %s21, 0
    %p132 = por %p130, %p131
    %s134 = sadd.s32 %s133, 1
    %p137 = scmp.eq.s32.totalorder %s15, 1
    %p138 = scmp.ne.s32.totalorder %s133, %s135
    %p139 = scmp.eq.s32.totalorder %s15, 0
    %p140 = por %p138, %p139
    %p141 = scmp.ne.s32.totalorder %s133, %s135
    %p142 = scmp.eq.s32.totalorder %s20, 1
    %p143 = por %p141, %p142
    %p144 = scmp.ne.s32.totalorder %s135, %s136
    %p145 = scmp.eq.s32.totalorder %s20, 0
    %p146 = por %p144, %p145
    %p147 = scmp.ne.s32.totalorder %s135, %s136
    %p148 = scmp.eq.s32.totalorder %s21, 1
    %p149 = por %p147, %p148
    %p151 = scmp.ne.s32.totalorder %s136, %s150
    %p152 = scmp.eq.s32.totalorder %s21, 0
    %p153 = por %p151, %p152
    %s155 = sadd.s32 %s154, 1
    %p158 = scmp.eq.s32.totalorder %s15, 1
    %p159 = scmp.ne.s32.totalorder %s154, %s156
    %p160 = scmp.eq.s32.totalorder %s15, 0
    %p161 = por %p159, %p160
    %p162 = scmp.ne.s32.totalorder %s154, %s156
    %p163 = scmp.eq.s32.totalorder %s20, 1
    %p164 = por %p162, %p163
    %p165 = scmp.ne.s32.totalorder %s156, %s157
    %p166 = scmp.eq.s32.totalorder %s20, 0
    %p167 = por %p165, %p166
    %p168 = scmp.ne.s32.totalorder %s156, %s157
    %p169 = scmp.eq.s32.totalorder %s21, 1
    %p170 = por %p168, %p169
    %p172 = scmp.ne.s32.totalorder %s157, %s171
    %p173 = scmp.eq.s32.totalorder %s21, 0
    %p174 = por %p172, %p173
    %s176 = sadd.s32 %s175, 1
    %p179 = scmp.eq.s32.totalorder %s15, 1
    %p180 = scmp.ne.s32.totalorder %s175, %s177
    %p181 = scmp.eq.s32.totalorder %s15, 0
    %p182 = por %p180, %p181
    %p183 = scmp.ne.s32.totalorder %s175, %s177
    %p184 = scmp.eq.s32.totalorder %s20, 1
    %p185 = por %p183, %p184
    %p186 = scmp.ne.s32.totalorder %s177, %s178
    %p187 = scmp.eq.s32.totalorder %s20, 0
    %p188 = por %p186, %p187
    %p189 = scmp.ne.s32.totalorder %s177, %s178
    %p190 = scmp.eq.s32.totalorder %s21, 1
    %p191 = por %p189, %p190
    %p193 = scmp.ne.s32.totalorder %s178, %s192
    %p194 = scmp.eq.s32.totalorder %s21, 0
    %p195 = por %p193, %p194
    %s197 = sadd.s32 %s196, 1
    %p200 = scmp.eq.s32.totalorder %s15, 1
    %p201 = scmp.ne.s32.totalorder %s196, %s198
    %p202 = scmp.eq.s32.totalorder %s15, 0
    %p203 = por %p201, %p202
    %p204 = scmp.ne.s32.totalorder %s196, %s198
    %p205 = scmp.eq.s32.totalorder %s20, 1
    %p206 = por %p204, %p205
    %p207 = scmp.ne.s32.totalorder %s198, %s199
    %p208 = scmp.eq.s32.totalorder %s20, 0
    %p209 = por %p207, %p208
    %p210 = scmp.ne.s32.totalorder %s198, %s199
    %p211 = scmp.eq.s32.totalorder %s21, 1
    %p212 = por %p210, %p211
    %p214 = scmp.ne.s32.totalorder %s199, %s213
    %p215 = scmp.eq.s32.totalorder %s21, 0
    %p216 = por %p214, %p215
    %s217 = ssub.s32 %s15, %s22
    %p218 = scmp.eq.s32.totalorder %s217, 0
    %s220 = sadd.s32 %s219, 1
    %s221 = scalar_select %p218, %s219, %s220
    %p224 = pneg %p218
    %p225 = scmp.eq.s32.totalorder %s15, 1
    %p226 = por %p224, %p225
    %p227 = scmp.ne.s32.totalorder %s219, %s222
    %p228 = scmp.eq.s32.totalorder %s15, 0
    %p229 = por %p227, %p228
    %p230 = scmp.ne.s32.totalorder %s219, %s222
    %p231 = scmp.eq.s32.totalorder %s20, 1
    %p232 = por %p230, %p231
    %p233 = scmp.ne.s32.totalorder %s222, %s223
    %p234 = scmp.eq.s32.totalorder %s20, 0
    %p235 = por %p233, %p234
    %p236 = scmp.ne.s32.totalorder %s222, %s223
    %p237 = scmp.eq.s32.totalorder %s21, 1
    %p238 = por %p236, %p237
    %p240 = scmp.ne.s32.totalorder %s223, %s239
    %p241 = scmp.eq.s32.totalorder %s21, 0
    %p242 = por %p240, %p241
    %p243 = scmp.le.s32.totalorder 1, %s15
    %p244 = scmp.lt.s32.totalorder %s15, 3
    %p245 = pnand %p243, %p244
    %p246 = pneg %p245
    // Predicated region
    $region9: #{inception_a_forward.1} parent=5 // pred_check
      _
    $region10: #{inception_a_forward.1} parent=5 // pred_check_branch
      %248 = sbr.rel (%p245) target = $region12
    $region11: #{inception_a_forward.1} parent=5 // pred_region
      %s249 = ssub.s32 %s15, 1
      // Predicated region
      $region13: #{inception_a_forward.1} parent=11 // pred_check
        %p250 = pneg %p62
      $region14: #{inception_a_forward.1} parent=11 // pred_check_branch
        %252 = sbr.rel (%p250) target = $region16
      $region15: #{inception_a_forward.1} parent=11 // pred_region
        _
      $region16: #{inception_a_forward.1} parent=11 // pred_fallthru
        _
      // Predicated region
      $region17: #{inception_a_forward.1} parent=11 // pred_check
        %p253 = pneg %p83
      $region18: #{inception_a_forward.1} parent=11 // pred_check_branch
        %255 = sbr.rel (%p253) target = $region20
      $region19: #{inception_a_forward.1} parent=11 // pred_region
        _
      $region20: #{inception_a_forward.1} parent=11 // pred_fallthru
        _
      // Predicated region
      $region21: #{inception_a_forward.1} parent=11 // pred_check
        %p256 = pneg %p104
      $region22: #{inception_a_forward.1} parent=11 // pred_check_branch
        %258 = sbr.rel (%p256) target = $region24
      $region23: #{inception_a_forward.1} parent=11 // pred_region
        _
      $region24: #{inception_a_forward.1} parent=11 // pred_fallthru
        _
      // Predicated region
      $region25: #{inception_a_forward.1} parent=11 // pred_check
        %p259 = pneg %p125
      $region26: #{inception_a_forward.1} parent=11 // pred_check_branch
        %261 = sbr.rel (%p259) target = $region28
      $region27: #{inception_a_forward.1} parent=11 // pred_region
        _
      $region28: #{inception_a_forward.1} parent=11 // pred_fallthru
        _
      // Predicated region
      $region29: #{inception_a_forward.1} parent=11 // pred_check
        %p262 = pneg %p146
      $region30: #{inception_a_forward.1} parent=11 // pred_check_branch
        %264 = sbr.rel (%p262) target = $region32
      $region31: #{inception_a_forward.1} parent=11 // pred_region
        _
      $region32: #{inception_a_forward.1} parent=11 // pred_fallthru
        _
      // Predicated region
      $region33: #{inception_a_forward.1} parent=11 // pred_check
        %p265 = pneg %p167
      $region34: #{inception_a_forward.1} parent=11 // pred_check_branch
        %267 = sbr.rel (%p265) target = $region36
      $region35: #{inception_a_forward.1} parent=11 // pred_region
        _
      $region36: #{inception_a_forward.1} parent=11 // pred_fallthru
        _
      // Predicated region
      $region37: #{inception_a_forward.1} parent=11 // pred_check
        %p268 = pneg %p188
      $region38: #{inception_a_forward.1} parent=11 // pred_check_branch
        %270 = sbr.rel (%p268) target = $region40
      $region39: #{inception_a_forward.1} parent=11 // pred_region
        _
      $region40: #{inception_a_forward.1} parent=11 // pred_fallthru
        _
      // Predicated region
      $region41: #{inception_a_forward.1} parent=11 // pred_check
        %p271 = pneg %p209
      $region42: #{inception_a_forward.1} parent=11 // pred_check_branch
        %273 = sbr.rel (%p271) target = $region44
      $region43: #{inception_a_forward.1} parent=11 // pred_region
        _
      $region44: #{inception_a_forward.1} parent=11 // pred_fallthru
        _
    $region12: #{inception_a_forward.1} parent=5 // pred_fallthru
      _
    %p274 = scmp.lt.s32.totalorder %s15, 2
    // Predicated region
    $region45: #{inception_a_forward.1} parent=5 // pred_check
      %p275 = pneg %p274
    $region46: #{inception_a_forward.1} parent=5 // pred_check_branch
      %277 = sbr.rel (%p275) target = $region48
    $region47: #{inception_a_forward.1} parent=5 // pred_region
      // Predicated region
      $region49: #{inception_a_forward.1} parent=47 // pred_check
        %p278 = pneg %p35
      $region50: #{inception_a_forward.1} parent=47 // pred_check_branch
        %280 = sbr.rel (%p278) target = $region52
      $region51: #{inception_a_forward.1} parent=47 // pred_region
        %p281 = scmp.lt.s32.totalorder %s15, 1
        %s282 = scalar_select %p281, %s15, 1
        %s283 = smul.addr %s282, 2
        %s284 = smul.addr %s283, 4
        %s285 = scalar_lea.vmem %s0, %s284
      $region52: #{inception_a_forward.1} parent=47 // pred_fallthru
        _
    $region48: #{inception_a_forward.1} parent=5 // pred_fallthru
      _
    %p286 = scmp.le.s32.totalorder 1, %s15
    %p287 = scmp.lt.s32.totalorder %s15, 3
    %p288 = pnand %p286, %p287
    %p289 = pneg %p288
    // Predicated region
    $region53: #{inception_a_forward.1} parent=5 // pred_check
      _
    $region54: #{inception_a_forward.1} parent=5 // pred_check_branch
      %291 = sbr.rel (%p288) target = $region56
    $region55: #{inception_a_forward.1} parent=5 // pred_region
      %s292 = ssub.s32 %s15, 1
      %p293 = scmp.lt.s32.totalorder %s20, 1
      %s294 = scalar_select %p293, %s20, 1
      %s295 = smul.addr %s294, 2
      %s296 = smul.addr %s295, 4
      %s297 = scalar_lea.vmem %s0, %s296
      %p298 = pneg %p41
      %p299 = pneg %p38
      %p300 = pneg %p62
      %p301 = pneg %p59
      %p302 = pneg %p83
      %p303 = pneg %p80
      %p304 = pneg %p104
      %p305 = pneg %p101
      %p306 = pneg %p125
      %p307 = pneg %p122
      %p308 = pneg %p146
      %p309 = pneg %p143
      %p310 = pneg %p167
      %p311 = pneg %p164
      %p312 = pneg %p188
      %p313 = pneg %p185
      %p314 = pneg %p209
      %p315 = pneg %p206
      %p316 = pneg %p235
      %p317 = pneg %p232
      %p318 = scmp.lt.s32.totalorder %s20, 1
      %s319 = scalar_select %p318, %s20, 1
      %s320 = smul.addr %s319, 8
      %s321 = smul.addr %s320, 8
      %s322 = scalar_lea.vmem %s9, %s321
      %p323 = scmp.lt.s32.totalorder %s20, 1
      %s324 = scalar_select %p323, %s20, 1
      %s325 = smul.addr %s324, 2
      %s326 = smul.addr %s325, 4
      %s327 = scalar_lea.vmem %s0, %s326
      %p328 = scmp.lt.s32.totalorder %s20, 1
      %s329 = scalar_select %p328, %s20, 1
      %s330 = smul.addr %s329, 8
      %s331 = smul.addr %s330, 8
      %s332 = scalar_lea.vmem %s9, %s331
      %vm333 = vcmask 146432
      %334 = vst.msk [vmem:[#allocation2] sm:$0xff] %vm333, 0.0
      %335 = vst.msk [vmem:[#allocation2 + $0x8] sm:$0xff] %vm333, 0.0
      %vm336 = vcmask 140288
      %337 = vst.msk [vmem:[#allocation2 + $0x10] sm:$0x3] %vm336, 0.0
      %338 = vst.msk [vmem:[#allocation2 + $0x18] sm:$0xff] %vm333, 0.0
      %339 = vst.msk [vmem:[#allocation2 + $0x20] sm:$0xff] %vm333, 0.0
      %340 = vst.msk [vmem:[#allocation2 + $0x28] sm:$0x3] %vm336, 0.0
      %341 = vst.msk [vmem:[#allocation2 + $0x30] sm:$0xff] %vm333, 0.0
      %342 = vst.msk [vmem:[#allocation2 + $0x38] sm:$0xff] %vm333, 0.0
      %343 = vst.msk [vmem:[#allocation2 + $0x40] sm:$0x3] %vm336, 0.0
      %344 = vst.msk [vmem:[#allocation2 + $0x48] sm:$0xff] %vm333, 0.0
      %345 = vst.msk [vmem:[#allocation2 + $0x50] sm:$0xff] %vm333, 0.0
      %346 = vst.msk [vmem:[#allocation2 + $0x58] sm:$0x3] %vm336, 0.0
      %347 = vst.msk [vmem:[#allocation2 + $0x60] sm:$0xff] %vm333, 0.0
      %348 = vst.msk [vmem:[#allocation2 + $0x68] sm:$0xff] %vm333, 0.0
      %349 = vst.msk [vmem:[#allocation2 + $0x70] sm:$0x3] %vm336, 0.0
      %350 = vst.msk [vmem:[#allocation2 + $0x78] sm:$0xff] %vm333, 0.0
      %351 = vst.msk [vmem:[#allocation2 + $0x80] sm:$0xff] %vm333, 0.0
      %352 = vst.msk [vmem:[#allocation2 + $0x88] sm:$0x3] %vm336, 0.0
      %353 = vst.msk [vmem:[#allocation2 + $0x90] sm:$0xff] %vm333, 0.0
      %354 = vst.msk [vmem:[#allocation2 + $0x98] sm:$0xff] %vm333, 0.0
      %355 = vst.msk [vmem:[#allocation2 + $0xa0] sm:$0x3] %vm336, 0.0
      %356 = vst.msk [vmem:[#allocation2 + $0xa8] sm:$0xff] %vm333, 0.0
      %357 = vst.msk [vmem:[#allocation2 + $0xb0] sm:$0xff] %vm333, 0.0
      %358 = vst.msk [vmem:[#allocation2 + $0xb8] sm:$0x3] %vm336, 0.0
      %v359 = vld [vmem:[%s327] sm:$0xff]
      %v360 = vld [vmem:[%s1] sm:$0xff]
      %v361 = vld [vmem:[%s1 + $0x8] sm:$0xff]
      %v362 = vld [vmem:[%s1 + $0x10] sm:$0xff]
      %v363 = vld [vmem:[%s1 + $0x18] sm:$0xf]
      %v364 = vld [vmem:[%s2] sm:$0xff]
      %v365 = vld [vmem:[%s2 + $0x8] sm:$0xff]
      %v366 = vld [vmem:[%s2 + $0x10] sm:$0xff]
      %v367 = vld [vmem:[%s2 + $0x18] sm:$0xf]
      %369 = vset.pattern.permute.xlu0 0
      %370 = vperm.xlu0 %369, %v364
      %v371 = vpop.permute.xlu0 %370
      %374 = vset.pattern.permute.xlu0 0
      %375 = vperm.xlu0 %374, %v365
      %v376 = vpop.permute.xlu0 %375
      %379 = vset.pattern.permute.xlu0 0
      %380 = vperm.xlu0 %379, %v366
      %v381 = vpop.permute.xlu0 %380
      %384 = vset.pattern.permute.xlu0 0
      %385 = vperm.xlu0 %384, %v367
      %v386 = vpop.permute.xlu0 %385
      %v389 = vcombine.high %v359, %v359
      %vm390 = vcmask 31744
      %v392 = vsel %vm390, %v360, 0
      %v395 = vsel %vm390, %v361, 0
      %v398 = vsel %vm390, %v362, 0
      %v401 = vsel %vm390, %v363, 0
      %vm403 = vcmask 1043456
      %v404 = vsel %vm403, %v359, 0
      %v406 = vsel %vm403, %v389, 0
      %408 = vmatprep.subr.mxu0 0.0
      %409 = vmatpush1.msra.mxu0 0.0
      %410 = vmatprep.subr.mxu0 0.0
      %411 = vmatpush1.msra.mxu0 0.0
      %412 = vmatprep.subr.mxu0 0.0
      %413 = vmatpush1.msra.mxu0 0.0
      %414 = vmatprep.subr.mxu0 0.0
      %415 = vmatpush1.msra.mxu0 0.0
      %416 = vmatprep.subr.mxu0 0.0
      %417 = vmatpush1.msra.mxu0 0.0
      %418 = vmatprep.subr.mxu0 0.0
      %419 = vmatpush1.msra.mxu0 0.0
      %420 = vmatprep.subr.mxu0 0.0
      %421 = vmatpush1.msra.mxu0 0.0
      %422 = vmatprep.subr.mxu0 0.0
      %423 = vmatpush1.msra.mxu0 0.0
      %424 = vmatprep.subr.mxu0 0.0
      %425 = vmatpush1.msra.mxu0 0.0
      %426 = vmatprep.subr.mxu0 0.0
      %427 = vmatpush1.msra.mxu0 0.0
      %428 = vmatprep.subr.mxu0 0.0
      %429 = vmatpush1.msra.mxu0 0.0
      %430 = vmatprep.subr.mxu0 0.0
      %431 = vmatpush1.msra.mxu0 0.0
      %432 = vmatprep.subr.mxu0 0.0
      %433 = vmatpush1.msra.mxu0 0.0
      %434 = vmatprep.subr.mxu0 0.0
      %435 = vmatpush1.msra.mxu0 0.0
      %436 = vmatprep.subr.mxu0 0.0
      %437 = vmatpush1.msra.mxu0 0.0
      %438 = vmatprep.subr.mxu0 %v406
      %439 = vmatpush1.msra.mxu0 %v404
      %440 = vmatprep.subr.mxu0 0.0
      %441 = vmatpush2.msra.mxu0 0.0
      %442 = vmatprep.subr.mxu0 0.0
      %443 = vmatpush2.msra.mxu0 0.0
      %444 = vmatprep.subr.mxu0 0.0
      %445 = vmatpush2.msra.mxu0 0.0
      %446 = vmatprep.subr.mxu0 0.0
      %447 = vmatpush2.msra.mxu0 0.0
      %448 = vmatprep.subr.mxu0 0.0
      %449 = vmatpush2.msra.mxu0 0.0
      %450 = vmatprep.subr.mxu0 0.0
      %451 = vmatpush2.msra.mxu0 0.0
      %452 = vmatprep.subr.mxu0 0.0
      %453 = vmatpush2.msra.mxu0 0.0
      %454 = vmatprep.subr.mxu0 0.0
      %455 = vmatpush2.msra.mxu0 0.0
      %456 = vmatprep.subr.mxu0 0.0
      %457 = vmatpush2.msra.mxu0 0.0
      %458 = vmatprep.subr.mxu0 0.0
      %459 = vmatpush2.msra.mxu0 0.0
      %460 = vmatprep.subr.mxu0 0.0
      %461 = vmatpush2.msra.mxu0 0.0
      %462 = vmatprep.subr.mxu0 0.0
      %463 = vmatpush2.msra.mxu0 0.0
      %464 = vmatprep.subr.mxu0 0.0
      %465 = vmatpush2.msra.mxu0 0.0
      %466 = vmatprep.subr.mxu0 0.0
      %467 = vmatpush2.msra.mxu0 0.0
      %468 = vmatprep.subr.mxu0 0.0
      %469 = vmatpush2.msra.mxu0 0.0
      %470 = vmatprep.subr.mxu0 0.0
      %471 = vmatpush2.msra.mxu0 0.0
      %472 = vmatprep.mubr.f32.mxu0 0.0
      %473 = vmatmul.mubr.f32.gmra.mxu0 %v392
      %v474 = vpop.f32.mrf.mxu0
      %v475 = vadd.f32 %v371, %v474
      %v476 = vpop.f32.mrf.mxu0
      %v477 = vadd.f32 %v371, %v476
      %478 = vmatprep.mubr.f32.mxu0 0.0
      %479 = vmatmul.mubr.f32.gmra.mxu0 %v395
      %v480 = vpop.f32.mrf.mxu0
      %v481 = vadd.f32 %v376, %v480
      %v482 = vpop.f32.mrf.mxu0
      %v483 = vadd.f32 %v376, %v482
      %484 = vmatprep.mubr.f32.mxu0 0.0
      %485 = vmatmul.mubr.f32.gmra.mxu0 %v398
      %v486 = vpop.f32.mrf.mxu0
      %v487 = vadd.f32 %v381, %v486
      %v488 = vpop.f32.mrf.mxu0
      %v489 = vadd.f32 %v381, %v488
      %490 = vmatprep.mubr.f32.mxu0 0.0
      %491 = vmatmul.mubr.f32.gmra.mxu0 %v401
      %v492 = vpop.f32.mrf.mxu0
      %v493 = vadd.f32 %v386, %v492
      %v494 = vpop.f32.mrf.mxu0
      %v495 = vadd.f32 %v386, %v494
      %496 = vdwg.mxu0
      %v497 = vmax.f32 %v475, 0.0
      %v498 = vmax.f32 %v477, 0.0
      %v499 = vmax.f32 %v481, 0.0
      %v500 = vmax.f32 %v483, 0.0
      %v501 = vmax.f32 %v487, 0.0
      %v502 = vmax.f32 %v489, 0.0
      %v503 = vmax.f32 %v493, 0.0
      %v504 = vmax.f32 %v495, 0.0
      %506 = vrot.lane.b32.xlu0 %v499, 112
      %v507 = vpop.permute.xlu0 %506
      %509 = vrot.lane.b32.xlu0 %v499, 96
      %v510 = vpop.permute.xlu0 %509
      %512 = vrot.lane.b32.xlu0 %v499, 80
      %v513 = vpop.permute.xlu0 %512
      %515 = vrot.lane.b32.xlu0 %v499, 64
      %v516 = vpop.permute.xlu0 %515
      %518 = vrot.lane.b32.xlu0 %v499, 48
      %v519 = vpop.permute.xlu0 %518
      %521 = vrot.lane.b32.xlu0 %v499, 32
      %v522 = vpop.permute.xlu0 %521
      %524 = vrot.lane.b32.xlu0 %v499, 16
      %v525 = vpop.permute.xlu0 %524
      %528 = vrot.lane.b32.xlu0 %v500, 112
      %v529 = vpop.permute.xlu0 %528
      %531 = vrot.lane.b32.xlu0 %v500, 96
      %v532 = vpop.permute.xlu0 %531
      %534 = vrot.lane.b32.xlu0 %v500, 80
      %v535 = vpop.permute.xlu0 %534
      %537 = vrot.lane.b32.xlu0 %v500, 64
      %v538 = vpop.permute.xlu0 %537
      %540 = vrot.lane.b32.xlu0 %v500, 48
      %v541 = vpop.permute.xlu0 %540
      %543 = vrot.lane.b32.xlu0 %v500, 32
      %v544 = vpop.permute.xlu0 %543
      %546 = vrot.lane.b32.xlu0 %v500, 16
      %v547 = vpop.permute.xlu0 %546
      %v549 = vcombine.low %v499, %v510
      %v550 = vcombine.high %v499, %v510
      %v552 = vunpack.c.l.s4 1983009808
      %v553 = vunpack.c.0.s8 %v552
      %v554 = vlaneseq
      %v555 = vshrl.u32 %v554, 7
      %v556 = vsub.s32 %v553, %v555
      %v557 = vrot.slane %v549, %v556
      %v559 = vunpack.c.l.s4 1983009808
      %v560 = vunpack.c.0.s8 %v559
      %v561 = vlaneseq
      %v562 = vshrl.u32 %v561, 7
      %v563 = vsub.s32 %v560, %v562
      %v564 = vrot.slane %v550, %v563
      %v565 = vcombine.low %v507, %v513
      %v566 = vcombine.high %v507, %v513
      %v568 = vunpack.c.l.s4 1983009808
      %v569 = vunpack.c.0.s8 %v568
      %v570 = vlaneseq
      %v571 = vshrl.u32 %v570, 7
      %v572 = vsub.s32 %v569, %v571
      %v573 = vrot.slane %v565, %v572
      %v575 = vunpack.c.l.s4 1983009808
      %v576 = vunpack.c.0.s8 %v575
      %v577 = vlaneseq
      %v578 = vshrl.u32 %v577, 7
      %v579 = vsub.s32 %v576, %v578
      %v580 = vrot.slane %v566, %v579
      %v581 = vcombine.low %v516, %v522
      %v582 = vcombine.high %v516, %v522
      %v584 = vunpack.c.l.s4 1983009808
      %v585 = vunpack.c.0.s8 %v584
      %v586 = vlaneseq
      %v587 = vshrl.u32 %v586, 7
      %v588 = vsub.s32 %v585, %v587
      %v589 = vrot.slane %v581, %v588
      %v591 = vunpack.c.l.s4 1983009808
      %v592 = vunpack.c.0.s8 %v591
      %v593 = vlaneseq
      %v594 = vshrl.u32 %v593, 7
      %v595 = vsub.s32 %v592, %v594
      %v596 = vrot.slane %v582, %v595
      %v597 = vcombine.low %v519, %v525
      %v598 = vcombine.high %v519, %v525
      %v600 = vunpack.c.l.s4 1983009808
      %v601 = vunpack.c.0.s8 %v600
      %v602 = vlaneseq
      %v603 = vshrl.u32 %v602, 7
      %v604 = vsub.s32 %v601, %v603
      %v605 = vrot.slane %v597, %v604
      %v607 = vunpack.c.l.s4 1983009808
      %v608 = vunpack.c.0.s8 %v607
      %v609 = vlaneseq
      %v610 = vshrl.u32 %v609, 7
      %v611 = vsub.s32 %v608, %v610
      %v612 = vrot.slane %v598, %v611
      %v613 = vcombine.low %v557, %v573
      %v614 = vcombine.high %v557, %v573
      %v616 = vunpack.c.l.s4 1934713408
      %v617 = vunpack.c.0.s8 %v616
      %v618 = vlaneseq
      %v619 = vshrl.u32 %v618, 7
      %v620 = vsub.s32 %v617, %v619
      %v621 = vrot.slane %v613, %v620
      %v623 = vunpack.c.l.s4 1934713408
      %v624 = vunpack.c.0.s8 %v623
      %v625 = vlaneseq
      %v626 = vshrl.u32 %v625, 7
      %v627 = vsub.s32 %v624, %v626
      %v628 = vrot.slane %v614, %v627
      %v629 = vcombine.low %v564, %v580
      %v631 = vunpack.c.l.s4 1934713408
      %v632 = vunpack.c.0.s8 %v631
      %v633 = vlaneseq
      %v634 = vshrl.u32 %v633, 7
      %v635 = vsub.s32 %v632, %v634
      %v636 = vrot.slane %v629, %v635
      %v637 = vcombine.low %v589, %v605
      %v638 = vcombine.high %v589, %v605
      %v640 = vunpack.c.l.s4 1934713408
      %v641 = vunpack.c.0.s8 %v640
      %v642 = vlaneseq
      %v643 = vshrl.u32 %v642, 7
      %v644 = vsub.s32 %v641, %v643
      %v645 = vrot.slane %v637, %v644
      %v647 = vunpack.c.l.s4 1934713408
      %v648 = vunpack.c.0.s8 %v647
      %v649 = vlaneseq
      %v650 = vshrl.u32 %v649, 7
      %v651 = vsub.s32 %v648, %v650
      %v652 = vrot.slane %v638, %v651
      %v653 = vcombine.low %v596, %v612
      %v655 = vunpack.c.l.s4 1934713408
      %v656 = vunpack.c.0.s8 %v655
      %v657 = vlaneseq
      %v658 = vshrl.u32 %v657, 7
      %v659 = vsub.s32 %v656, %v658
      %v660 = vrot.slane %v653, %v659
      %v661 = vcombine.low %v621, %v645
      %v662 = vcombine.high %v621, %v645
      %v663 = vcombine.low %v628, %v652
      %v664 = vcombine.high %v628, %v652
      %v665 = vcombine.low %v636, %v660
      %v666 = vcombine.high %v636, %v660
      %v667 = vcombine.low %v500, %v532
      %v668 = vcombine.high %v500, %v532
      %v670 = vunpack.c.l.s4 1983009808
      %v671 = vunpack.c.0.s8 %v670
      %v672 = vlaneseq
      %v673 = vshrl.u32 %v672, 7
      %v674 = vsub.s32 %v671, %v673
      %v675 = vrot.slane %v667, %v674
      %v677 = vunpack.c.l.s4 1983009808
      %v678 = vunpack.c.0.s8 %v677
      %v679 = vlaneseq
      %v680 = vshrl.u32 %v679, 7
      %v681 = vsub.s32 %v678, %v680
      %v682 = vrot.slane %v668, %v681
      %v683 = vcombine.low %v529, %v535
      %v684 = vcombine.high %v529, %v535
      %v686 = vunpack.c.l.s4 1983009808
      %v687 = vunpack.c.0.s8 %v686
      %v688 = vlaneseq
      %v689 = vshrl.u32 %v688, 7
      %v690 = vsub.s32 %v687, %v689
      %v691 = vrot.slane %v683, %v690
      %v693 = vunpack.c.l.s4 1983009808
      %v694 = vunpack.c.0.s8 %v693
      %v695 = vlaneseq
      %v696 = vshrl.u32 %v695, 7
      %v697 = vsub.s32 %v694, %v696
      %v698 = vrot.slane %v684, %v697
      %v699 = vcombine.low %v538, %v544
      %v700 = vcombine.high %v538, %v544
      %v702 = vunpack.c.l.s4 1983009808
      %v703 = vunpack.c.0.s8 %v702
      %v704 = vlaneseq
      %v705 = vshrl.u32 %v704, 7
      %v706 = vsub.s32 %v703, %v705
      %v707 = vrot.slane %v699, %v706
      %v709 = vunpack.c.l.s4 1983009808
      %v710 = vunpack.c.0.s8 %v709
      %v711 = vlaneseq
      %v712 = vshrl.u32 %v711, 7
      %v713 = vsub.s32 %v710, %v712
      %v714 = vrot.slane %v700, %v713
      %v715 = vcombine.low %v541, %v547
      %v716 = vcombine.high %v541, %v547
      %v718 = vunpack.c.l.s4 1983009808
      %v719 = vunpack.c.0.s8 %v718
      %v720 = vlaneseq
      %v721 = vshrl.u32 %v720, 7
      %v722 = vsub.s32 %v719, %v721
      %v723 = vrot.slane %v715, %v722
      %v725 = vunpack.c.l.s4 1983009808
      %v726 = vunpack.c.0.s8 %v725
      %v727 = vlaneseq
      %v728 = vshrl.u32 %v727, 7
      %v729 = vsub.s32 %v726, %v728
      %v730 = vrot.slane %v716, %v729
      %v731 = vcombine.low %v675, %v691
      %v732 = vcombine.high %v675, %v691
      %v734 = vunpack.c.l.s4 1934713408
      %v735 = vunpack.c.0.s8 %v734
      %v736 = vlaneseq
      %v737 = vshrl.u32 %v736, 7
      %v738 = vsub.s32 %v735, %v737
      %v739 = vrot.slane %v731, %v738
      %v741 = vunpack.c.l.s4 1934713408
      %v742 = vunpack.c.0.s8 %v741
      %v743 = vlaneseq
      %v744 = vshrl.u32 %v743, 7
      %v745 = vsub.s32 %v742, %v744
      %v746 = vrot.slane %v732, %v745
      %v747 = vcombine.low %v682, %v698
      %v749 = vunpack.c.l.s4 1934713408
      %v750 = vunpack.c.0.s8 %v749
      %v751 = vlaneseq
      %v752 = vshrl.u32 %v751, 7
      %v753 = vsub.s32 %v750, %v752
      %v754 = vrot.slane %v747, %v753
      %v755 = vcombine.low %v707, %v723
      %v756 = vcombine.high %v707, %v723
      %v758 = vunpack.c.l.s4 1934713408
      %v759 = vunpack.c.0.s8 %v758
      %v760 = vlaneseq
      %v761 = vshrl.u32 %v760, 7
      %v762 = vsub.s32 %v759, %v761
      %v763 = vrot.slane %v755, %v762
      %v765 = vunpack.c.l.s4 1934713408
      %v766 = vunpack.c.0.s8 %v765
      %v767 = vlaneseq
      %v768 = vshrl.u32 %v767, 7
      %v769 = vsub.s32 %v766, %v768
      %v770 = vrot.slane %v756, %v769
      %v771 = vcombine.low %v714, %v730
      %v773 = vunpack.c.l.s4 1934713408
      %v774 = vunpack.c.0.s8 %v773
      %v775 = vlaneseq
      %v776 = vshrl.u32 %v775, 7
      %v777 = vsub.s32 %v774, %v776
      %v778 = vrot.slane %v771, %v777
      %v779 = vcombine.low %v739, %v763
      %v780 = vcombine.high %v739, %v763
      %v781 = vcombine.low %v746, %v770
      %v782 = vcombine.high %v746, %v770
      %v783 = vcombine.low %v754, %v778
      %v784 = vcombine.high %v754, %v778
      %797 = vrot.lane.b32.xlu0 %v661, 1
      %v798 = vpop.permute.xlu0 %797
      %799 = vrot.lane.b32.xlu0 %v779, 1
      %v800 = vpop.permute.xlu0 %799
      %801 = vrot.lane.b32.xlu0 %v662, 1
      %v802 = vpop.permute.xlu0 %801
      %803 = vrot.lane.b32.xlu0 %v780, 1
      %v804 = vpop.permute.xlu0 %803
      %805 = vrot.lane.b32.xlu0 %v663, 1
      %v806 = vpop.permute.xlu0 %805
      %807 = vrot.lane.b32.xlu0 %v781, 1
      %v808 = vpop.permute.xlu0 %807
      %809 = vrot.lane.b32.xlu0 %v664, 1
      %v810 = vpop.permute.xlu0 %809
      %811 = vrot.lane.b32.xlu0 %v782, 1
      %v812 = vpop.permute.xlu0 %811
      %813 = vrot.lane.b32.xlu0 %v665, 1
      %v814 = vpop.permute.xlu0 %813
      %815 = vrot.lane.b32.xlu0 %v783, 1
      %v816 = vpop.permute.xlu0 %815
      %817 = vrot.lane.b32.xlu0 %v666, 1
      %v818 = vpop.permute.xlu0 %817
      %819 = vrot.lane.b32.xlu0 %v784, 1
      %v820 = vpop.permute.xlu0 %819
      %vm833 = vcmask 138248
      %834 = vst.msk [vmem:[#allocation2 + $0x1] sm:$0xff] %vm833, %v798
      %835 = vst.msk [vmem:[#allocation2 + $0x9] sm:$0xff] %vm833, %v800
      %836 = vst.msk [vmem:[#allocation2 + $0x19] sm:$0xff] %vm833, %v802
      %837 = vst.msk [vmem:[#allocation2 + $0x21] sm:$0xff] %vm833, %v804
      %838 = vst.msk [vmem:[#allocation2 + $0x31] sm:$0xff] %vm833, %v806
      %839 = vst.msk [vmem:[#allocation2 + $0x39] sm:$0xff] %vm833, %v808
      %840 = vst.msk [vmem:[#allocation2 + $0x49] sm:$0xff] %vm833, %v810
      %841 = vst.msk [vmem:[#allocation2 + $0x51] sm:$0xff] %vm833, %v812
      %842 = vst.msk [vmem:[#allocation2 + $0x61] sm:$0xff] %vm833, %v814
      %843 = vst.msk [vmem:[#allocation2 + $0x69] sm:$0xff] %vm833, %v816
      %844 = vst.msk [vmem:[#allocation2 + $0x79] sm:$0xff] %vm833, %v818
      %845 = vst.msk [vmem:[#allocation2 + $0x81] sm:$0xff] %vm833, %v820
      %v846 = vld [vmem:[#allocation2] sm:$0xff]
      %v847 = vld [vmem:[#allocation2 + $0x8] sm:$0xff]
      %v848 = vld [vmem:[#allocation2 + $0x18] sm:$0xff]
      %v849 = vld [vmem:[#allocation2 + $0x20] sm:$0xff]
      %v850 = vld [vmem:[#allocation2 + $0x30] sm:$0xff]
      %v851 = vld [vmem:[#allocation2 + $0x38] sm:$0xff]
      %v852 = vld [vmem:[#allocation2 + $0x48] sm:$0xff]
      %v853 = vld [vmem:[#allocation2 + $0x50] sm:$0xff]
      %v854 = vld [vmem:[#allocation2 + $0x60] sm:$0xff]
      %v855 = vld [vmem:[#allocation2 + $0x68] sm:$0xff]
      %v856 = vld [vmem:[#allocation2 + $0x78] sm:$0xff]
      %v857 = vld [vmem:[#allocation2 + $0x80] sm:$0xff]
      %v858 = vcombine.low %v846, %v850
      %v859 = vcombine.high %v846, %v850
      %v861 = vunpack.c.l.s4 1983009808
      %v862 = vunpack.c.0.s8 %v861
      %v863 = vlaneseq
      %v864 = vshrl.u32 %v863, 7
      %v865 = vsub.s32 %v862, %v864
      %v866 = vrot.slane %v858, %v865
      %v868 = vunpack.c.l.s4 1983009808
      %v869 = vunpack.c.0.s8 %v868
      %v870 = vlaneseq
      %v871 = vshrl.u32 %v870, 7
      %v872 = vsub.s32 %v869, %v871
      %v873 = vrot.slane %v859, %v872
      %v874 = vcombine.low %v848, %v852
      %v875 = vcombine.high %v848, %v852
      %v877 = vunpack.c.l.s4 1983009808
      %v878 = vunpack.c.0.s8 %v877
      %v879 = vlaneseq
      %v880 = vshrl.u32 %v879, 7
      %v881 = vsub.s32 %v878, %v880
      %v882 = vrot.slane %v874, %v881
      %v884 = vunpack.c.l.s4 1983009808
      %v885 = vunpack.c.0.s8 %v884
      %v886 = vlaneseq
      %v887 = vshrl.u32 %v886, 7
      %v888 = vsub.s32 %v885, %v887
      %v889 = vrot.slane %v875, %v888
      %v890 = vcombine.high %v854, 0.0
      %v892 = vunpack.c.l.s4 1983009808
      %v893 = vunpack.c.0.s8 %v892
      %v894 = vlaneseq
      %v895 = vshrl.u32 %v894, 7
      %v896 = vsub.s32 %v893, %v895
      %v897 = vrot.slane %v854, %v896
      %v899 = vunpack.c.l.s4 1983009808
      %v900 = vunpack.c.0.s8 %v899
      %v901 = vlaneseq
      %v902 = vshrl.u32 %v901, 7
      %v903 = vsub.s32 %v900, %v902
      %v904 = vrot.slane %v890, %v903
      %v905 = vcombine.high %v856, 0.0
      %v907 = vunpack.c.l.s4 1983009808
      %v908 = vunpack.c.0.s8 %v907
      %v909 = vlaneseq
      %v910 = vshrl.u32 %v909, 7
      %v911 = vsub.s32 %v908, %v910
      %v912 = vrot.slane %v856, %v911
      %v914 = vunpack.c.l.s4 1983009808
      %v915 = vunpack.c.0.s8 %v914
      %v916 = vlaneseq
      %v917 = vshrl.u32 %v916, 7
      %v918 = vsub.s32 %v915, %v917
      %v919 = vrot.slane %v905, %v918
      %v920 = vcombine.low %v866, %v882
      %v921 = vcombine.high %v866, %v882
      %v923 = vunpack.c.l.s4 1934713408
      %v924 = vunpack.c.0.s8 %v923
      %v925 = vlaneseq
      %v926 = vshrl.u32 %v925, 7
      %v927 = vsub.s32 %v924, %v926
      %v928 = vrot.slane %v920, %v927
      %v930 = vunpack.c.l.s4 1934713408
      %v931 = vunpack.c.0.s8 %v930
      %v932 = vlaneseq
      %v933 = vshrl.u32 %v932, 7
      %v934 = vsub.s32 %v931, %v933
      %v935 = vrot.slane %v921, %v934
      %v936 = vcombine.low %v873, %v889
      %v937 = vcombine.high %v873, %v889
      %v939 = vunpack.c.l.s4 1934713408
      %v940 = vunpack.c.0.s8 %v939
      %v941 = vlaneseq
      %v942 = vshrl.u32 %v941, 7
      %v943 = vsub.s32 %v940, %v942
      %v944 = vrot.slane %v936, %v943
      %v946 = vunpack.c.l.s4 1934713408
      %v947 = vunpack.c.0.s8 %v946
      %v948 = vlaneseq
      %v949 = vshrl.u32 %v948, 7
      %v950 = vsub.s32 %v947, %v949
      %v951 = vrot.slane %v937, %v950
      %v952 = vcombine.low %v897, %v912
      %v953 = vcombine.high %v897, %v912
      %v955 = vunpack.c.l.s4 1934713408
      %v956 = vunpack.c.0.s8 %v955
      %v957 = vlaneseq
      %v958 = vshrl.u32 %v957, 7
      %v959 = vsub.s32 %v956, %v958
      %v960 = vrot.slane %v952, %v959
      %v962 = vunpack.c.l.s4 1934713408
      %v963 = vunpack.c.0.s8 %v962
      %v964 = vlaneseq
      %v965 = vshrl.u32 %v964, 7
      %v966 = vsub.s32 %v963, %v965
      %v967 = vrot.slane %v953, %v966
      %v968 = vcombine.low %v904, %v919
      %v969 = vcombine.high %v904, %v919
      %v971 = vunpack.c.l.s4 1934713408
      %v972 = vunpack.c.0.s8 %v971
      %v973 = vlaneseq
      %v974 = vshrl.u32 %v973, 7
      %v975 = vsub.s32 %v972, %v974
      %v976 = vrot.slane %v968, %v975
      %v978 = vunpack.c.l.s4 1934713408
      %v979 = vunpack.c.0.s8 %v978
      %v980 = vlaneseq
      %v981 = vshrl.u32 %v980, 7
      %v982 = vsub.s32 %v979, %v981
      %v983 = vrot.slane %v969, %v982
      %v984 = vcombine.low %v928, %v960
      %v985 = vcombine.high %v928, %v960
      %v986 = vcombine.low %v935, %v967
      %v987 = vcombine.high %v935, %v967
      %v988 = vcombine.low %v944, %v976
      %v989 = vcombine.high %v944, %v976
      %v990 = vcombine.low %v951, %v983
      %v991 = vcombine.high %v951, %v983
      %v992 = vcombine.low %v847, %v851
      %v993 = vcombine.high %v847, %v851
      %v995 = vunpack.c.l.s4 1983009808
      %v996 = vunpack.c.0.s8 %v995
      %v997 = vlaneseq
      %v998 = vshrl.u32 %v997, 7
      %v999 = vsub.s32 %v996, %v998
      %v1000 = vrot.slane %v992, %v999
      %v1002 = vunpack.c.l.s4 1983009808
      %v1003 = vunpack.c.0.s8 %v1002
      %v1004 = vlaneseq
      %v1005 = vshrl.u32 %v1004, 7
      %v1006 = vsub.s32 %v1003, %v1005
      %v1007 = vrot.slane %v993, %v1006
      %v1008 = vcombine.low %v849, %v853
      %v1009 = vcombine.high %v849, %v853
      %v1011 = vunpack.c.l.s4 1983009808
      %v1012 = vunpack.c.0.s8 %v1011
      %v1013 = vlaneseq
      %v1014 = vshrl.u32 %v1013, 7
      %v1015 = vsub.s32 %v1012, %v1014
      %v1016 = vrot.slane %v1008, %v1015
      %v1018 = vunpack.c.l.s4 1983009808
      %v1019 = vunpack.c.0.s8 %v1018
      %v1020 = vlaneseq
      %v1021 = vshrl.u32 %v1020, 7
      %v1022 = vsub.s32 %v1019, %v1021
      %v1023 = vrot.slane %v1009, %v1022
      %v1024 = vcombine.high %v855, 0.0
      %v1026 = vunpack.c.l.s4 1983009808
      %v1027 = vunpack.c.0.s8 %v1026
      %v1028 = vlaneseq
      %v1029 = vshrl.u32 %v1028, 7
      %v1030 = vsub.s32 %v1027, %v1029
      %v1031 = vrot.slane %v855, %v1030
      %v1033 = vunpack.c.l.s4 1983009808
      %v1034 = vunpack.c.0.s8 %v1033
      %v1035 = vlaneseq
      %v1036 = vshrl.u32 %v1035, 7
      %v1037 = vsub.s32 %v1034, %v1036
      %v1038 = vrot.slane %v1024, %v1037
      %v1039 = vcombine.high %v857, 0.0
      %v1041 = vunpack.c.l.s4 1983009808
      %v1042 = vunpack.c.0.s8 %v1041
      %v1043 = vlaneseq
      %v1044 = vshrl.u32 %v1043, 7
      %v1045 = vsub.s32 %v1042, %v1044
      %v1046 = vrot.slane %v857, %v1045
      %v1048 = vunpack.c.l.s4 1983009808
      %v1049 = vunpack.c.0.s8 %v1048
      %v1050 = vlaneseq
      %v1051 = vshrl.u32 %v1050, 7
      %v1052 = vsub.s32 %v1049, %v1051
      %v1053 = vrot.slane %v1039, %v1052
      %v1054 = vcombine.low %v1000, %v1016
      %v1055 = vcombine.high %v1000, %v1016
      %v1057 = vunpack.c.l.s4 1934713408
      %v1058 = vunpack.c.0.s8 %v1057
      %v1059 = vlaneseq
      %v1060 = vshrl.u32 %v1059, 7
      %v1061 = vsub.s32 %v1058, %v1060
      %v1062 = vrot.slane %v1054, %v1061
      %v1064 = vunpack.c.l.s4 1934713408
      %v1065 = vunpack.c.0.s8 %v1064
      %v1066 = vlaneseq
      %v1067 = vshrl.u32 %v1066, 7
      %v1068 = vsub.s32 %v1065, %v1067
      %v1069 = vrot.slane %v1055, %v1068
      %v1070 = vcombine.low %v1007, %v1023
      %v1071 = vcombine.high %v1007, %v1023
      %v1073 = vunpack.c.l.s4 1934713408
      %v1074 = vunpack.c.0.s8 %v1073
      %v1075 = vlaneseq
      %v1076 = vshrl.u32 %v1075, 7
      %v1077 = vsub.s32 %v1074, %v1076
      %v1078 = vrot.slane %v1070, %v1077
      %v1080 = vunpack.c.l.s4 1934713408
      %v1081 = vunpack.c.0.s8 %v1080
      %v1082 = vlaneseq
      %v1083 = vshrl.u32 %v1082, 7
      %v1084 = vsub.s32 %v1081, %v1083
      %v1085 = vrot.slane %v1071, %v1084
      %v1086 = vcombine.low %v1031, %v1046
      %v1087 = vcombine.high %v1031, %v1046
      %v1089 = vunpack.c.l.s4 1934713408
      %v1090 = vunpack.c.0.s8 %v1089
      %v1091 = vlaneseq
      %v1092 = vshrl.u32 %v1091, 7
      %v1093 = vsub.s32 %v1090, %v1092
      %v1094 = vrot.slane %v1086, %v1093
      %v1096 = vunpack.c.l.s4 1934713408
      %v1097 = vunpack.c.0.s8 %v1096
      %v1098 = vlaneseq
      %v1099 = vshrl.u32 %v1098, 7
      %v1100 = vsub.s32 %v1097, %v1099
      %v1101 = vrot.slane %v1087, %v1100
      %v1102 = vcombine.low %v1038, %v1053
      %v1103 = vcombine.high %v1038, %v1053
      %v1105 = vunpack.c.l.s4 1934713408
      %v1106 = vunpack.c.0.s8 %v1105
      %v1107 = vlaneseq
      %v1108 = vshrl.u32 %v1107, 7
      %v1109 = vsub.s32 %v1106, %v1108
      %v1110 = vrot.slane %v1102, %v1109
      %v1112 = vunpack.c.l.s4 1934713408
      %v1113 = vunpack.c.0.s8 %v1112
      %v1114 = vlaneseq
      %v1115 = vshrl.u32 %v1114, 7
      %v1116 = vsub.s32 %v1113, %v1115
      %v1117 = vrot.slane %v1103, %v1116
      %v1118 = vcombine.low %v1062, %v1094
      %v1119 = vcombine.high %v1062, %v1094
      %v1120 = vcombine.low %v1069, %v1101
      %v1121 = vcombine.high %v1069, %v1101
      %v1122 = vcombine.low %v1078, %v1110
      %v1123 = vcombine.high %v1078, %v1110
      %v1124 = vcombine.low %v1085, %v1117
      %v1125 = vcombine.high %v1085, %v1117
      %1127 = vrot.lane.b32.xlu0 %v985, 16
      %v1128 = vpop.permute.xlu0 %1127
      %1131 = vrot.lane.b32.xlu0 %v986, 32
      %v1132 = vpop.permute.xlu0 %1131
      %1135 = vrot.lane.b32.xlu0 %v987, 48
      %v1136 = vpop.permute.xlu0 %1135
      %1139 = vrot.lane.b32.xlu0 %v988, 64
      %v1140 = vpop.permute.xlu0 %1139
      %1143 = vrot.lane.b32.xlu0 %v989, 80
      %v1144 = vpop.permute.xlu0 %1143
      %1147 = vrot.lane.b32.xlu0 %v990, 96
      %v1148 = vpop.permute.xlu0 %1147
      %1151 = vrot.lane.b32.xlu0 %v991, 112
      %v1152 = vpop.permute.xlu0 %1151
      %1155 = vrot.lane.b32.xlu0 %v1119, 16
      %v1156 = vpop.permute.xlu0 %1155
      %1159 = vrot.lane.b32.xlu0 %v1120, 32
      %v1160 = vpop.permute.xlu0 %1159
      %1163 = vrot.lane.b32.xlu0 %v1121, 48
      %v1164 = vpop.permute.xlu0 %1163
      %1167 = vrot.lane.b32.xlu0 %v1122, 64
      %v1168 = vpop.permute.xlu0 %1167
      %1171 = vrot.lane.b32.xlu0 %v1123, 80
      %v1172 = vpop.permute.xlu0 %1171
      %1175 = vrot.lane.b32.xlu0 %v1124, 96
      %v1176 = vpop.permute.xlu0 %1175
      %1179 = vrot.lane.b32.xlu0 %v1125, 112
      %v1180 = vpop.permute.xlu0 %1179
      %vm1182 = vcmask 130048
      %v1183 = vsel %vm1182, %v984, %v1128
      %vm1184 = vcmask 261120
      %v1185 = vsel %vm1184, %v1183, %v1132
      %vm1186 = vcmask 392192
      %v1187 = vsel %vm1186, %v1185, %v1136
      %vm1188 = vcmask 523264
      %v1189 = vsel %vm1188, %v1187, %v1140
      %vm1190 = vcmask 654336
      %v1191 = vsel %vm1190, %v1189, %v1144
      %vm1192 = vcmask 785408
      %v1193 = vsel %vm1192, %v1191, %v1148
      %vm1194 = vcmask 916480
      %v1195 = vsel %vm1194, %v1193, %v1152
      %v1196 = vsel %vm1182, %v1118, %v1156
      %v1197 = vsel %vm1184, %v1196, %v1160
      %v1198 = vsel %vm1186, %v1197, %v1164
      %v1199 = vsel %vm1188, %v1198, %v1168
      %v1200 = vsel %vm1190, %v1199, %v1172
      %v1201 = vsel %vm1192, %v1200, %v1176
      %v1202 = vsel %vm1194, %v1201, %v1180
      %1203 = vst [vmem:[#allocation3] sm:$0x3f] %v1195
      %1204 = vst [vmem:[#allocation3 + $0x8] sm:$0x3f] %v1202
      %v1205 = vld [vmem:[#allocation2] sm:$0xff]
      %v1206 = vld [vmem:[#allocation2 + $0x8] sm:$0xff]
      %v1207 = vld [vmem:[#allocation2 + $0x18] sm:$0xff]
      %v1208 = vld [vmem:[#allocation2 + $0x20] sm:$0xff]
      %v1209 = vld [vmem:[#allocation2 + $0x30] sm:$0xff]
      %v1210 = vld [vmem:[#allocation2 + $0x38] sm:$0xff]
      %v1211 = vld [vmem:[#allocation2 + $0x48] sm:$0xff]
      %v1212 = vld [vmem:[#allocation2 + $0x50] sm:$0xff]
      %v1213 = vld [vmem:[#allocation2 + $0x60] sm:$0xff]
      %v1214 = vld [vmem:[#allocation2 + $0x68] sm:$0xff]
      %v1215 = vld [vmem:[#allocation2 + $0x78] sm:$0xff]
      %v1216 = vld [vmem:[#allocation2 + $0x80] sm:$0xff]
      %1229 = vrot.lane.b32.xlu0 %v1205, 127
      %v1230 = vpop.permute.xlu0 %1229
      %1231 = vrot.lane.b32.xlu0 %v1206, 127
      %v1232 = vpop.permute.xlu0 %1231
      %1233 = vrot.lane.b32.xlu0 %v1207, 127
      %v1234 = vpop.permute.xlu0 %1233
      %1235 = vrot.lane.b32.xlu0 %v1208, 127
      %v1236 = vpop.permute.xlu0 %1235
      %1237 = vrot.lane.b32.xlu0 %v1209, 127
      %v1238 = vpop.permute.xlu0 %1237
      %1239 = vrot.lane.b32.xlu0 %v1210, 127
      %v1240 = vpop.permute.xlu0 %1239
      %1241 = vrot.lane.b32.xlu0 %v1211, 127
      %v1242 = vpop.permute.xlu0 %1241
      %1243 = vrot.lane.b32.xlu0 %v1212, 127
      %v1244 = vpop.permute.xlu0 %1243
      %1245 = vrot.lane.b32.xlu0 %v1213, 127
      %v1246 = vpop.permute.xlu0 %1245
      %1247 = vrot.lane.b32.xlu0 %v1214, 127
      %v1248 = vpop.permute.xlu0 %1247
      %1249 = vrot.lane.b32.xlu0 %v1215, 127
      %v1250 = vpop.permute.xlu0 %1249
      %1251 = vrot.lane.b32.xlu0 %v1216, 127
      %v1252 = vpop.permute.xlu0 %1251
      %v1265 = vcombine.low %v1230, %v1238
      %v1266 = vcombine.high %v1230, %v1238
      %v1268 = vunpack.c.l.s4 1983009808
      %v1269 = vunpack.c.0.s8 %v1268
      %v1270 = vlaneseq
      %v1271 = vshrl.u32 %v1270, 7
      %v1272 = vsub.s32 %v1269, %v1271
      %v1273 = vrot.slane %v1265, %v1272
      %v1275 = vunpack.c.l.s4 1983009808
      %v1276 = vunpack.c.0.s8 %v1275
      %v1277 = vlaneseq
      %v1278 = vshrl.u32 %v1277, 7
      %v1279 = vsub.s32 %v1276, %v1278
      %v1280 = vrot.slane %v1266, %v1279
      %v1281 = vcombine.low %v1234, %v1242
      %v1282 = vcombine.high %v1234, %v1242
      %v1284 = vunpack.c.l.s4 1983009808
      %v1285 = vunpack.c.0.s8 %v1284
      %v1286 = vlaneseq
      %v1287 = vshrl.u32 %v1286, 7
      %v1288 = vsub.s32 %v1285, %v1287
      %v1289 = vrot.slane %v1281, %v1288
      %v1291 = vunpack.c.l.s4 1983009808
      %v1292 = vunpack.c.0.s8 %v1291
      %v1293 = vlaneseq
      %v1294 = vshrl.u32 %v1293, 7
      %v1295 = vsub.s32 %v1292, %v1294
      %v1296 = vrot.slane %v1282, %v1295
      %v1297 = vcombine.high %v1246, 0.0
      %v1299 = vunpack.c.l.s4 1983009808
      %v1300 = vunpack.c.0.s8 %v1299
      %v1301 = vlaneseq
      %v1302 = vshrl.u32 %v1301, 7
      %v1303 = vsub.s32 %v1300, %v1302
      %v1304 = vrot.slane %v1246, %v1303
      %v1306 = vunpack.c.l.s4 1983009808
      %v1307 = vunpack.c.0.s8 %v1306
      %v1308 = vlaneseq
      %v1309 = vshrl.u32 %v1308, 7
      %v1310 = vsub.s32 %v1307, %v1309
      %v1311 = vrot.slane %v1297, %v1310
      %v1312 = vcombine.high %v1250, 0.0
      %v1314 = vunpack.c.l.s4 1983009808
      %v1315 = vunpack.c.0.s8 %v1314
      %v1316 = vlaneseq
      %v1317 = vshrl.u32 %v1316, 7
      %v1318 = vsub.s32 %v1315, %v1317
      %v1319 = vrot.slane %v1250, %v1318
      %v1321 = vunpack.c.l.s4 1983009808
      %v1322 = vunpack.c.0.s8 %v1321
      %v1323 = vlaneseq
      %v1324 = vshrl.u32 %v1323, 7
      %v1325 = vsub.s32 %v1322, %v1324
      %v1326 = vrot.slane %v1312, %v1325
      %v1327 = vcombine.low %v1273, %v1289
      %v1328 = vcombine.high %v1273, %v1289
      %v1330 = vunpack.c.l.s4 1934713408
      %v1331 = vunpack.c.0.s8 %v1330
      %v1332 = vlaneseq
      %v1333 = vshrl.u32 %v1332, 7
      %v1334 = vsub.s32 %v1331, %v1333
      %v1335 = vrot.slane %v1327, %v1334
      %v1337 = vunpack.c.l.s4 1934713408
      %v1338 = vunpack.c.0.s8 %v1337
      %v1339 = vlaneseq
      %v1340 = vshrl.u32 %v1339, 7
      %v1341 = vsub.s32 %v1338, %v1340
      %v1342 = vrot.slane %v1328, %v1341
      %v1343 = vcombine.low %v1280, %v1296
      %v1344 = vcombine.high %v1280, %v1296
      %v1346 = vunpack.c.l.s4 1934713408
      %v1347 = vunpack.c.0.s8 %v1346
      %v1348 = vlaneseq
      %v1349 = vshrl.u32 %v1348, 7
      %v1350 = vsub.s32 %v1347, %v1349
      %v1351 = vrot.slane %v1343, %v1350
      %v1353 = vunpack.c.l.s4 1934713408
      %v1354 = vunpack.c.0.s8 %v1353
      %v1355 = vlaneseq
      %v1356 = vshrl.u32 %v1355, 7
      %v1357 = vsub.s32 %v1354, %v1356
      %v1358 = vrot.slane %v1344, %v1357
      %v1359 = vcombine.low %v1304, %v1319
      %v1360 = vcombine.high %v1304, %v1319
      %v1362 = vunpack.c.l.s4 1934713408
      %v1363 = vunpack.c.0.s8 %v1362
      %v1364 = vlaneseq
      %v1365 = vshrl.u32 %v1364, 7
      %v1366 = vsub.s32 %v1363, %v1365
      %v1367 = vrot.slane %v1359, %v1366
      %v1369 = vunpack.c.l.s4 1934713408
      %v1370 = vunpack.c.0.s8 %v1369
      %v1371 = vlaneseq
      %v1372 = vshrl.u32 %v1371, 7
      %v1373 = vsub.s32 %v1370, %v1372
      %v1374 = vrot.slane %v1360, %v1373
      %v1375 = vcombine.low %v1311, %v1326
      %v1376 = vcombine.high %v1311, %v1326
      %v1378 = vunpack.c.l.s4 1934713408
      %v1379 = vunpack.c.0.s8 %v1378
      %v1380 = vlaneseq
      %v1381 = vshrl.u32 %v1380, 7
      %v1382 = vsub.s32 %v1379, %v1381
      %v1383 = vrot.slane %v1375, %v1382
      %v1385 = vunpack.c.l.s4 1934713408
      %v1386 = vunpack.c.0.s8 %v1385
      %v1387 = vlaneseq
      %v1388 = vshrl.u32 %v1387, 7
      %v1389 = vsub.s32 %v1386, %v1388
      %v1390 = vrot.slane %v1376, %v1389
      %v1391 = vcombine.low %v1335, %v1367
      %v1392 = vcombine.high %v1335, %v1367
      %v1393 = vcombine.low %v1342, %v1374
      %v1394 = vcombine.high %v1342, %v1374
      %v1395 = vcombine.low %v1351, %v1383
      %v1396 = vcombine.high %v1351, %v1383
      %v1397 = vcombine.low %v1358, %v1390
      %v1398 = vcombine.high %v1358, %v1390
      %v1399 = vcombine.low %v1232, %v1240
      %v1400 = vcombine.high %v1232, %v1240
      %v1402 = vunpack.c.l.s4 1983009808
      %v1403 = vunpack.c.0.s8 %v1402
      %v1404 = vlaneseq
      %v1405 = vshrl.u32 %v1404, 7
      %v1406 = vsub.s32 %v1403, %v1405
      %v1407 = vrot.slane %v1399, %v1406
      %v1409 = vunpack.c.l.s4 1983009808
      %v1410 = vunpack.c.0.s8 %v1409
      %v1411 = vlaneseq
      %v1412 = vshrl.u32 %v1411, 7
      %v1413 = vsub.s32 %v1410, %v1412
      %v1414 = vrot.slane %v1400, %v1413
      %v1415 = vcombine.low %v1236, %v1244
      %v1416 = vcombine.high %v1236, %v1244
      %v1418 = vunpack.c.l.s4 1983009808
      %v1419 = vunpack.c.0.s8 %v1418
      %v1420 = vlaneseq
      %v1421 = vshrl.u32 %v1420, 7
      %v1422 = vsub.s32 %v1419, %v1421
      %v1423 = vrot.slane %v1415, %v1422
      %v1425 = vunpack.c.l.s4 1983009808
      %v1426 = vunpack.c.0.s8 %v1425
      %v1427 = vlaneseq
      %v1428 = vshrl.u32 %v1427, 7
      %v1429 = vsub.s32 %v1426, %v1428
      %v1430 = vrot.slane %v1416, %v1429
      %v1431 = vcombine.high %v1248, 0.0
      %v1433 = vunpack.c.l.s4 1983009808
      %v1434 = vunpack.c.0.s8 %v1433
      %v1435 = vlaneseq
      %v1436 = vshrl.u32 %v1435, 7
      %v1437 = vsub.s32 %v1434, %v1436
      %v1438 = vrot.slane %v1248, %v1437
      %v1440 = vunpack.c.l.s4 1983009808
      %v1441 = vunpack.c.0.s8 %v1440
      %v1442 = vlaneseq
      %v1443 = vshrl.u32 %v1442, 7
      %v1444 = vsub.s32 %v1441, %v1443
      %v1445 = vrot.slane %v1431, %v1444
      %v1446 = vcombine.high %v1252, 0.0
      %v1448 = vunpack.c.l.s4 1983009808
      %v1449 = vunpack.c.0.s8 %v1448
      %v1450 = vlaneseq
      %v1451 = vshrl.u32 %v1450, 7
      %v1452 = vsub.s32 %v1449, %v1451
      %v1453 = vrot.slane %v1252, %v1452
      %v1455 = vunpack.c.l.s4 1983009808
      %v1456 = vunpack.c.0.s8 %v1455
      %v1457 = vlaneseq
      %v1458 = vshrl.u32 %v1457, 7
      %v1459 = vsub.s32 %v1456, %v1458
      %v1460 = vrot.slane %v1446, %v1459
      %v1461 = vcombine.low %v1407, %v1423
      %v1462 = vcombine.high %v1407, %v1423
      %v1464 = vunpack.c.l.s4 1934713408
      %v1465 = vunpack.c.0.s8 %v1464
      %v1466 = vlaneseq
      %v1467 = vshrl.u32 %v1466, 7
      %v1468 = vsub.s32 %v1465, %v1467
      %v1469 = vrot.slane %v1461, %v1468
      %v1471 = vunpack.c.l.s4 1934713408
      %v1472 = vunpack.c.0.s8 %v1471
      %v1473 = vlaneseq
      %v1474 = vshrl.u32 %v1473, 7
      %v1475 = vsub.s32 %v1472, %v1474
      %v1476 = vrot.slane %v1462, %v1475
      %v1477 = vcombine.low %v1414, %v1430
      %v1478 = vcombine.high %v1414, %v1430
      %v1480 = vunpack.c.l.s4 1934713408
      %v1481 = vunpack.c.0.s8 %v1480
      %v1482 = vlaneseq
      %v1483 = vshrl.u32 %v1482, 7
      %v1484 = vsub.s32 %v1481, %v1483
      %v1485 = vrot.slane %v1477, %v1484
      %v1487 = vunpack.c.l.s4 1934713408
      %v1488 = vunpack.c.0.s8 %v1487
      %v1489 = vlaneseq
      %v1490 = vshrl.u32 %v1489, 7
      %v1491 = vsub.s32 %v1488, %v1490
      %v1492 = vrot.slane %v1478, %v1491
      %v1493 = vcombine.low %v1438, %v1453
      %v1494 = vcombine.high %v1438, %v1453
      %v1496 = vunpack.c.l.s4 1934713408
      %v1497 = vunpack.c.0.s8 %v1496
      %v1498 = vlaneseq
      %v1499 = vshrl.u32 %v1498, 7
      %v1500 = vsub.s32 %v1497, %v1499
      %v1501 = vrot.slane %v1493, %v1500
      %v1503 = vunpack.c.l.s4 1934713408
      %v1504 = vunpack.c.0.s8 %v1503
      %v1505 = vlaneseq
      %v1506 = vshrl.u32 %v1505, 7
      %v1507 = vsub.s32 %v1504, %v1506
      %v1508 = vrot.slane %v1494, %v1507
      %v1509 = vcombine.low %v1445, %v1460
      %v1510 = vcombine.high %v1445, %v1460
      %v1512 = vunpack.c.l.s4 1934713408
      %v1513 = vunpack.c.0.s8 %v1512
      %v1514 = vlaneseq
      %v1515 = vshrl.u32 %v1514, 7
      %v1516 = vsub.s32 %v1513, %v1515
      %v1517 = vrot.slane %v1509, %v1516
      %v1519 = vunpack.c.l.s4 1934713408
      %v1520 = vunpack.c.0.s8 %v1519
      %v1521 = vlaneseq
      %v1522 = vshrl.u32 %v1521, 7
      %v1523 = vsub.s32 %v1520, %v1522
      %v1524 = vrot.slane %v1510, %v1523
      %v1525 = vcombine.low %v1469, %v1501
      %v1526 = vcombine.high %v1469, %v1501
      %v1527 = vcombine.low %v1476, %v1508
      %v1528 = vcombine.high %v1476, %v1508
      %v1529 = vcombine.low %v1485, %v1517
      %v1530 = vcombine.high %v1485, %v1517
      %v1531 = vcombine.low %v1492, %v1524
      %v1532 = vcombine.high %v1492, %v1524
      %1534 = vrot.lane.b32.xlu0 %v1392, 16
      %v1535 = vpop.permute.xlu0 %1534
      %1538 = vrot.lane.b32.xlu0 %v1393, 32
      %v1539 = vpop.permute.xlu0 %1538
      %1542 = vrot.lane.b32.xlu0 %v1394, 48
      %v1543 = vpop.permute.xlu0 %1542
      %1546 = vrot.lane.b32.xlu0 %v1395, 64
      %v1547 = vpop.permute.xlu0 %1546
      %1550 = vrot.lane.b32.xlu0 %v1396, 80
      %v1551 = vpop.permute.xlu0 %1550
      %1554 = vrot.lane.b32.xlu0 %v1397, 96
      %v1555 = vpop.permute.xlu0 %1554
      %1558 = vrot.lane.b32.xlu0 %v1398, 112
      %v1559 = vpop.permute.xlu0 %1558
      %1562 = vrot.lane.b32.xlu0 %v1526, 16
      %v1563 = vpop.permute.xlu0 %1562
      %1566 = vrot.lane.b32.xlu0 %v1527, 32
      %v1567 = vpop.permute.xlu0 %1566
      %1570 = vrot.lane.b32.xlu0 %v1528, 48
      %v1571 = vpop.permute.xlu0 %1570
      %1574 = vrot.lane.b32.xlu0 %v1529, 64
      %v1575 = vpop.permute.xlu0 %1574
      %1578 = vrot.lane.b32.xlu0 %v1530, 80
      %v1579 = vpop.permute.xlu0 %1578
      %1582 = vrot.lane.b32.xlu0 %v1531, 96
      %v1583 = vpop.permute.xlu0 %1582
      %1586 = vrot.lane.b32.xlu0 %v1532, 112
      %v1587 = vpop.permute.xlu0 %1586
      %v1589 = vsel %vm1182, %v1391, %v1535
      %v1590 = vsel %vm1184, %v1589, %v1539
      %v1591 = vsel %vm1186, %v1590, %v1543
      %v1592 = vsel %vm1188, %v1591, %v1547
      %v1593 = vsel %vm1190, %v1592, %v1551
      %v1594 = vsel %vm1192, %v1593, %v1555
      %v1595 = vsel %vm1194, %v1594, %v1559
      %v1596 = vsel %vm1182, %v1525, %v1563
      %v1597 = vsel %vm1184, %v1596, %v1567
      %v1598 = vsel %vm1186, %v1597, %v1571
      %v1599 = vsel %vm1188, %v1598, %v1575
      %v1600 = vsel %vm1190, %v1599, %v1579
      %v1601 = vsel %vm1192, %v1600, %v1583
      %v1602 = vsel %vm1194, %v1601, %v1587
      %v1605 = vrot.slane %v1595, 2
      %v1606 = vrot.slane %v1602, 2
      %1609 = vst [vmem:[#allocation3] sm:$0xc0] %v1605
      %1610 = vst [vmem:[#allocation3 + $0x8] sm:$0xc0] %v1606
      %1611 = vst [vmem:[#allocation3 + $0x10] sm:$0xf] %v1605
      %1612 = vst [vmem:[#allocation3 + $0x18] sm:$0xf] %v1606
      %v1613 = vld [vmem:[#allocation2] sm:$0xff]
      %v1614 = vld [vmem:[#allocation2 + $0x8] sm:$0xff]
      %v1615 = vld [vmem:[#allocation2 + $0x18] sm:$0xff]
      %v1616 = vld [vmem:[#allocation2 + $0x20] sm:$0xff]
      %v1617 = vld [vmem:[#allocation2 + $0x30] sm:$0xff]
      %v1618 = vld [vmem:[#allocation2 + $0x38] sm:$0xff]
      %v1619 = vld [vmem:[#allocation2 + $0x48] sm:$0xff]
      %v1620 = vld [vmem:[#allocation2 + $0x50] sm:$0xff]
      %v1621 = vld [vmem:[#allocation2 + $0x60] sm:$0xff]
      %v1622 = vld [vmem:[#allocation2 + $0x68] sm:$0xff]
      %v1623 = vld [vmem:[#allocation2 + $0x78] sm:$0xff]
      %v1624 = vld [vmem:[#allocation2 + $0x80] sm:$0xff]
      %1637 = vrot.lane.b32.xlu0 %v1613, 126
      %v1638 = vpop.permute.xlu0 %1637
      %1639 = vrot.lane.b32.xlu0 %v1614, 126
      %v1640 = vpop.permute.xlu0 %1639
      %1641 = vrot.lane.b32.xlu0 %v1615, 126
      %v1642 = vpop.permute.xlu0 %1641
      %1643 = vrot.lane.b32.xlu0 %v1616, 126
      %v1644 = vpop.permute.xlu0 %1643
      %1645 = vrot.lane.b32.xlu0 %v1617, 126
      %v1646 = vpop.permute.xlu0 %1645
      %1647 = vrot.lane.b32.xlu0 %v1618, 126
      %v1648 = vpop.permute.xlu0 %1647
      %1649 = vrot.lane.b32.xlu0 %v1619, 126
      %v1650 = vpop.permute.xlu0 %1649
      %1651 = vrot.lane.b32.xlu0 %v1620, 126
      %v1652 = vpop.permute.xlu0 %1651
      %1653 = vrot.lane.b32.xlu0 %v1621, 126
      %v1654 = vpop.permute.xlu0 %1653
      %1655 = vrot.lane.b32.xlu0 %v1622, 126
      %v1656 = vpop.permute.xlu0 %1655
      %1657 = vrot.lane.b32.xlu0 %v1623, 126
      %v1658 = vpop.permute.xlu0 %1657
      %1659 = vrot.lane.b32.xlu0 %v1624, 126
      %v1660 = vpop.permute.xlu0 %1659
      %v1673 = vcombine.low %v1638, %v1646
      %v1674 = vcombine.high %v1638, %v1646
      %v1676 = vunpack.c.l.s4 1983009808
      %v1677 = vunpack.c.0.s8 %v1676
      %v1678 = vlaneseq
      %v1679 = vshrl.u32 %v1678, 7
      %v1680 = vsub.s32 %v1677, %v1679
      %v1681 = vrot.slane %v1673, %v1680
      %v1683 = vunpack.c.l.s4 1983009808
      %v1684 = vunpack.c.0.s8 %v1683
      %v1685 = vlaneseq
      %v1686 = vshrl.u32 %v1685, 7
      %v1687 = vsub.s32 %v1684, %v1686
      %v1688 = vrot.slane %v1674, %v1687
      %v1689 = vcombine.low %v1642, %v1650
      %v1690 = vcombine.high %v1642, %v1650
      %v1692 = vunpack.c.l.s4 1983009808
      %v1693 = vunpack.c.0.s8 %v1692
      %v1694 = vlaneseq
      %v1695 = vshrl.u32 %v1694, 7
      %v1696 = vsub.s32 %v1693, %v1695
      %v1697 = vrot.slane %v1689, %v1696
      %v1699 = vunpack.c.l.s4 1983009808
      %v1700 = vunpack.c.0.s8 %v1699
      %v1701 = vlaneseq
      %v1702 = vshrl.u32 %v1701, 7
      %v1703 = vsub.s32 %v1700, %v1702
      %v1704 = vrot.slane %v1690, %v1703
      %v1705 = vcombine.high %v1654, 0.0
      %v1707 = vunpack.c.l.s4 1983009808
      %v1708 = vunpack.c.0.s8 %v1707
      %v1709 = vlaneseq
      %v1710 = vshrl.u32 %v1709, 7
      %v1711 = vsub.s32 %v1708, %v1710
      %v1712 = vrot.slane %v1654, %v1711
      %v1714 = vunpack.c.l.s4 1983009808
      %v1715 = vunpack.c.0.s8 %v1714
      %v1716 = vlaneseq
      %v1717 = vshrl.u32 %v1716, 7
      %v1718 = vsub.s32 %v1715, %v1717
      %v1719 = vrot.slane %v1705, %v1718
      %v1720 = vcombine.high %v1658, 0.0
      %v1722 = vunpack.c.l.s4 1983009808
      %v1723 = vunpack.c.0.s8 %v1722
      %v1724 = vlaneseq
      %v1725 = vshrl.u32 %v1724, 7
      %v1726 = vsub.s32 %v1723, %v1725
      %v1727 = vrot.slane %v1658, %v1726
      %v1729 = vunpack.c.l.s4 1983009808
      %v1730 = vunpack.c.0.s8 %v1729
      %v1731 = vlaneseq
      %v1732 = vshrl.u32 %v1731, 7
      %v1733 = vsub.s32 %v1730, %v1732
      %v1734 = vrot.slane %v1720, %v1733
      %v1735 = vcombine.low %v1681, %v1697
      %v1736 = vcombine.high %v1681, %v1697
      %v1738 = vunpack.c.l.s4 1934713408
      %v1739 = vunpack.c.0.s8 %v1738
      %v1740 = vlaneseq
      %v1741 = vshrl.u32 %v1740, 7
      %v1742 = vsub.s32 %v1739, %v1741
      %v1743 = vrot.slane %v1735, %v1742
      %v1745 = vunpack.c.l.s4 1934713408
      %v1746 = vunpack.c.0.s8 %v1745
      %v1747 = vlaneseq
      %v1748 = vshrl.u32 %v1747, 7
      %v1749 = vsub.s32 %v1746, %v1748
      %v1750 = vrot.slane %v1736, %v1749
      %v1751 = vcombine.low %v1688, %v1704
      %v1752 = vcombine.high %v1688, %v1704
      %v1754 = vunpack.c.l.s4 1934713408
      %v1755 = vunpack.c.0.s8 %v1754
      %v1756 = vlaneseq
      %v1757 = vshrl.u32 %v1756, 7
      %v1758 = vsub.s32 %v1755, %v1757
      %v1759 = vrot.slane %v1751, %v1758
      %v1761 = vunpack.c.l.s4 1934713408
      %v1762 = vunpack.c.0.s8 %v1761
      %v1763 = vlaneseq
      %v1764 = vshrl.u32 %v1763, 7
      %v1765 = vsub.s32 %v1762, %v1764
      %v1766 = vrot.slane %v1752, %v1765
      %v1767 = vcombine.low %v1712, %v1727
      %v1768 = vcombine.high %v1712, %v1727
      %v1770 = vunpack.c.l.s4 1934713408
      %v1771 = vunpack.c.0.s8 %v1770
      %v1772 = vlaneseq
      %v1773 = vshrl.u32 %v1772, 7
      %v1774 = vsub.s32 %v1771, %v1773
      %v1775 = vrot.slane %v1767, %v1774
      %v1777 = vunpack.c.l.s4 1934713408
      %v1778 = vunpack.c.0.s8 %v1777
      %v1779 = vlaneseq
      %v1780 = vshrl.u32 %v1779, 7
      %v1781 = vsub.s32 %v1778, %v1780
      %v1782 = vrot.slane %v1768, %v1781
      %v1783 = vcombine.low %v1719, %v1734
      %v1784 = vcombine.high %v1719, %v1734
      %v1786 = vunpack.c.l.s4 1934713408
      %v1787 = vunpack.c.0.s8 %v1786
      %v1788 = vlaneseq
      %v1789 = vshrl.u32 %v1788, 7
      %v1790 = vsub.s32 %v1787, %v1789
      %v1791 = vrot.slane %v1783, %v1790
      %v1793 = vunpack.c.l.s4 1934713408
      %v1794 = vunpack.c.0.s8 %v1793
      %v1795 = vlaneseq
      %v1796 = vshrl.u32 %v1795, 7
      %v1797 = vsub.s32 %v1794, %v1796
      %v1798 = vrot.slane %v1784, %v1797
      %v1799 = vcombine.low %v1743, %v1775
      %v1800 = vcombine.high %v1743, %v1775
      %v1801 = vcombine.low %v1750, %v1782
      %v1802 = vcombine.high %v1750, %v1782
      %v1803 = vcombine.low %v1759, %v1791
      %v1804 = vcombine.high %v1759, %v1791
      %v1805 = vcombine.low %v1766, %v1798
      %v1806 = vcombine.high %v1766, %v1798
      %v1807 = vcombine.low %v1640, %v1648
      %v1808 = vcombine.high %v1640, %v1648
      %v1810 = vunpack.c.l.s4 1983009808
      %v1811 = vunpack.c.0.s8 %v1810
      %v1812 = vlaneseq
      %v1813 = vshrl.u32 %v1812, 7
      %v1814 = vsub.s32 %v1811, %v1813
      %v1815 = vrot.slane %v1807, %v1814
      %v1817 = vunpack.c.l.s4 1983009808
      %v1818 = vunpack.c.0.s8 %v1817
      %v1819 = vlaneseq
      %v1820 = vshrl.u32 %v1819, 7
      %v1821 = vsub.s32 %v1818, %v1820
      %v1822 = vrot.slane %v1808, %v1821
      %v1823 = vcombine.low %v1644, %v1652
      %v1824 = vcombine.high %v1644, %v1652
      %v1826 = vunpack.c.l.s4 1983009808
      %v1827 = vunpack.c.0.s8 %v1826
      %v1828 = vlaneseq
      %v1829 = vshrl.u32 %v1828, 7
      %v1830 = vsub.s32 %v1827, %v1829
      %v1831 = vrot.slane %v1823, %v1830
      %v1833 = vunpack.c.l.s4 1983009808
      %v1834 = vunpack.c.0.s8 %v1833
      %v1835 = vlaneseq
      %v1836 = vshrl.u32 %v1835, 7
      %v1837 = vsub.s32 %v1834, %v1836
      %v1838 = vrot.slane %v1824, %v1837
      %v1839 = vcombine.high %v1656, 0.0
      %v1841 = vunpack.c.l.s4 1983009808
      %v1842 = vunpack.c.0.s8 %v1841
      %v1843 = vlaneseq
      %v1844 = vshrl.u32 %v1843, 7
      %v1845 = vsub.s32 %v1842, %v1844
      %v1846 = vrot.slane %v1656, %v1845
      %v1848 = vunpack.c.l.s4 1983009808
      %v1849 = vunpack.c.0.s8 %v1848
      %v1850 = vlaneseq
      %v1851 = vshrl.u32 %v1850, 7
      %v1852 = vsub.s32 %v1849, %v1851
      %v1853 = vrot.slane %v1839, %v1852
      %v1854 = vcombine.high %v1660, 0.0
      %v1856 = vunpack.c.l.s4 1983009808
      %v1857 = vunpack.c.0.s8 %v1856
      %v1858 = vlaneseq
      %v1859 = vshrl.u32 %v1858, 7
      %v1860 = vsub.s32 %v1857, %v1859
      %v1861 = vrot.slane %v1660, %v1860
      %v1863 = vunpack.c.l.s4 1983009808
      %v1864 = vunpack.c.0.s8 %v1863
      %v1865 = vlaneseq
      %v1866 = vshrl.u32 %v1865, 7
      %v1867 = vsub.s32 %v1864, %v1866
      %v1868 = vrot.slane %v1854, %v1867
      %v1869 = vcombine.low %v1815, %v1831
      %v1870 = vcombine.high %v1815, %v1831
      %v1872 = vunpack.c.l.s4 1934713408
      %v1873 = vunpack.c.0.s8 %v1872
      %v1874 = vlaneseq
      %v1875 = vshrl.u32 %v1874, 7
      %v1876 = vsub.s32 %v1873, %v1875
      %v1877 = vrot.slane %v1869, %v1876
      %v1879 = vunpack.c.l.s4 1934713408
      %v1880 = vunpack.c.0.s8 %v1879
      %v1881 = vlaneseq
      %v1882 = vshrl.u32 %v1881, 7
      %v1883 = vsub.s32 %v1880, %v1882
      %v1884 = vrot.slane %v1870, %v1883
      %v1885 = vcombine.low %v1822, %v1838
      %v1886 = vcombine.high %v1822, %v1838
      %v1888 = vunpack.c.l.s4 1934713408
      %v1889 = vunpack.c.0.s8 %v1888
      %v1890 = vlaneseq
      %v1891 = vshrl.u32 %v1890, 7
      %v1892 = vsub.s32 %v1889, %v1891
      %v1893 = vrot.slane %v1885, %v1892
      %v1895 = vunpack.c.l.s4 1934713408
      %v1896 = vunpack.c.0.s8 %v1895
      %v1897 = vlaneseq
      %v1898 = vshrl.u32 %v1897, 7
      %v1899 = vsub.s32 %v1896, %v1898
      %v1900 = vrot.slane %v1886, %v1899
      %v1901 = vcombine.low %v1846, %v1861
      %v1902 = vcombine.high %v1846, %v1861
      %v1904 = vunpack.c.l.s4 1934713408
      %v1905 = vunpack.c.0.s8 %v1904
      %v1906 = vlaneseq
      %v1907 = vshrl.u32 %v1906, 7
      %v1908 = vsub.s32 %v1905, %v1907
      %v1909 = vrot.slane %v1901, %v1908
      %v1911 = vunpack.c.l.s4 1934713408
      %v1912 = vunpack.c.0.s8 %v1911
      %v1913 = vlaneseq
      %v1914 = vshrl.u32 %v1913, 7
      %v1915 = vsub.s32 %v1912, %v1914
      %v1916 = vrot.slane %v1902, %v1915
      %v1917 = vcombine.low %v1853, %v1868
      %v1918 = vcombine.high %v1853, %v1868
      %v1920 = vunpack.c.l.s4 1934713408
      %v1921 = vunpack.c.0.s8 %v1920
      %v1922 = vlaneseq
      %v1923 = vshrl.u32 %v1922, 7
      %v1924 = vsub.s32 %v1921, %v1923
      %v1925 = vrot.slane %v1917, %v1924
      %v1927 = vunpack.c.l.s4 1934713408
      %v1928 = vunpack.c.0.s8 %v1927
      %v1929 = vlaneseq
      %v1930 = vshrl.u32 %v1929, 7
      %v1931 = vsub.s32 %v1928, %v1930
      %v1932 = vrot.slane %v1918, %v1931
      %v1933 = vcombine.low %v1877, %v1909
      %v1934 = vcombine.high %v1877, %v1909
      %v1935 = vcombine.low %v1884, %v1916
      %v1936 = vcombine.high %v1884, %v1916
      %v1937 = vcombine.low %v1893, %v1925
      %v1938 = vcombine.high %v1893, %v1925
      %v1939 = vcombine.low %v1900, %v1932
      %v1940 = vcombine.high %v1900, %v1932
      %1942 = vrot.lane.b32.xlu0 %v1800, 16
      %v1943 = vpop.permute.xlu0 %1942
      %1946 = vrot.lane.b32.xlu0 %v1801, 32
      %v1947 = vpop.permute.xlu0 %1946
      %1950 = vrot.lane.b32.xlu0 %v1802, 48
      %v1951 = vpop.permute.xlu0 %1950
      %1954 = vrot.lane.b32.xlu0 %v1803, 64
      %v1955 = vpop.permute.xlu0 %1954
      %1958 = vrot.lane.b32.xlu0 %v1804, 80
      %v1959 = vpop.permute.xlu0 %1958
      %1962 = vrot.lane.b32.xlu0 %v1805, 96
      %v1963 = vpop.permute.xlu0 %1962
      %1966 = vrot.lane.b32.xlu0 %v1806, 112
      %v1967 = vpop.permute.xlu0 %1966
      %1970 = vrot.lane.b32.xlu0 %v1934, 16
      %v1971 = vpop.permute.xlu0 %1970
      %1974 = vrot.lane.b32.xlu0 %v1935, 32
      %v1975 = vpop.permute.xlu0 %1974
      %1978 = vrot.lane.b32.xlu0 %v1936, 48
      %v1979 = vpop.permute.xlu0 %1978
      %1982 = vrot.lane.b32.xlu0 %v1937, 64
      %v1983 = vpop.permute.xlu0 %1982
      %1986 = vrot.lane.b32.xlu0 %v1938, 80
      %v1987 = vpop.permute.xlu0 %1986
      %1990 = vrot.lane.b32.xlu0 %v1939, 96
      %v1991 = vpop.permute.xlu0 %1990
      %1994 = vrot.lane.b32.xlu0 %v1940, 112
      %v1995 = vpop.permute.xlu0 %1994
      %v1997 = vsel %vm1182, %v1799, %v1943
      %v1998 = vsel %vm1184, %v1997, %v1947
      %v1999 = vsel %vm1186, %v1998, %v1951
      %v2000 = vsel %vm1188, %v1999, %v1955
      %v2001 = vsel %vm1190, %v2000, %v1959
      %v2002 = vsel %vm1192, %v2001, %v1963
      %v2003 = vsel %vm1194, %v2002, %v1967
      %v2004 = vsel %vm1182, %v1933, %v1971
      %v2005 = vsel %vm1184, %v2004, %v1975
      %v2006 = vsel %vm1186, %v2005, %v1979
      %v2007 = vsel %vm1188, %v2006, %v1983
      %v2008 = vsel %vm1190, %v2007, %v1987
      %v2009 = vsel %vm1192, %v2008, %v1991
      %v2010 = vsel %vm1194, %v2009, %v1995
      %v2013 = vrot.slane %v2003, 4
      %v2014 = vrot.slane %v2010, 4
      %2017 = vst [vmem:[#allocation3 + $0x10] sm:$0xf0] %v2013
      %2018 = vst [vmem:[#allocation3 + $0x18] sm:$0xf0] %v2014
      %2019 = vst [vmem:[#allocation3 + $0x20] sm:$0x3] %v2013
      %2020 = vst [vmem:[#allocation3 + $0x28] sm:$0x3] %v2014
      %v2021 = vld [vmem:[#allocation2 + $0x1] sm:$0xff]
      %v2022 = vld [vmem:[#allocation2 + $0x9] sm:$0xff]
      %v2023 = vld [vmem:[#allocation2 + $0x19] sm:$0xff]
      %v2024 = vld [vmem:[#allocation2 + $0x21] sm:$0xff]
      %v2025 = vld [vmem:[#allocation2 + $0x31] sm:$0xff]
      %v2026 = vld [vmem:[#allocation2 + $0x39] sm:$0xff]
      %v2027 = vld [vmem:[#allocation2 + $0x49] sm:$0xff]
      %v2028 = vld [vmem:[#allocation2 + $0x51] sm:$0xff]
      %v2029 = vld [vmem:[#allocation2 + $0x61] sm:$0xff]
      %v2030 = vld [vmem:[#allocation2 + $0x69] sm:$0xff]
      %v2031 = vld [vmem:[#allocation2 + $0x79] sm:$0xff]
      %v2032 = vld [vmem:[#allocation2 + $0x81] sm:$0xff]
      %v2033 = vcombine.low %v2021, %v2025
      %v2034 = vcombine.high %v2021, %v2025
      %v2036 = vunpack.c.l.s4 1983009808
      %v2037 = vunpack.c.0.s8 %v2036
      %v2038 = vlaneseq
      %v2039 = vshrl.u32 %v2038, 7
      %v2040 = vsub.s32 %v2037, %v2039
      %v2041 = vrot.slane %v2033, %v2040
      %v2043 = vunpack.c.l.s4 1983009808
      %v2044 = vunpack.c.0.s8 %v2043
      %v2045 = vlaneseq
      %v2046 = vshrl.u32 %v2045, 7
      %v2047 = vsub.s32 %v2044, %v2046
      %v2048 = vrot.slane %v2034, %v2047
      %v2049 = vcombine.low %v2023, %v2027
      %v2050 = vcombine.high %v2023, %v2027
      %v2052 = vunpack.c.l.s4 1983009808
      %v2053 = vunpack.c.0.s8 %v2052
      %v2054 = vlaneseq
      %v2055 = vshrl.u32 %v2054, 7
      %v2056 = vsub.s32 %v2053, %v2055
      %v2057 = vrot.slane %v2049, %v2056
      %v2059 = vunpack.c.l.s4 1983009808
      %v2060 = vunpack.c.0.s8 %v2059
      %v2061 = vlaneseq
      %v2062 = vshrl.u32 %v2061, 7
      %v2063 = vsub.s32 %v2060, %v2062
      %v2064 = vrot.slane %v2050, %v2063
      %v2065 = vcombine.high %v2029, 0.0
      %v2067 = vunpack.c.l.s4 1983009808
      %v2068 = vunpack.c.0.s8 %v2067
      %v2069 = vlaneseq
      %v2070 = vshrl.u32 %v2069, 7
      %v2071 = vsub.s32 %v2068, %v2070
      %v2072 = vrot.slane %v2029, %v2071
      %v2074 = vunpack.c.l.s4 1983009808
      %v2075 = vunpack.c.0.s8 %v2074
      %v2076 = vlaneseq
      %v2077 = vshrl.u32 %v2076, 7
      %v2078 = vsub.s32 %v2075, %v2077
      %v2079 = vrot.slane %v2065, %v2078
      %v2080 = vcombine.high %v2031, 0.0
      %v2082 = vunpack.c.l.s4 1983009808
      %v2083 = vunpack.c.0.s8 %v2082
      %v2084 = vlaneseq
      %v2085 = vshrl.u32 %v2084, 7
      %v2086 = vsub.s32 %v2083, %v2085
      %v2087 = vrot.slane %v2031, %v2086
      %v2089 = vunpack.c.l.s4 1983009808
      %v2090 = vunpack.c.0.s8 %v2089
      %v2091 = vlaneseq
      %v2092 = vshrl.u32 %v2091, 7
      %v2093 = vsub.s32 %v2090, %v2092
      %v2094 = vrot.slane %v2080, %v2093
      %v2095 = vcombine.low %v2041, %v2057
      %v2096 = vcombine.high %v2041, %v2057
      %v2098 = vunpack.c.l.s4 1934713408
      %v2099 = vunpack.c.0.s8 %v2098
      %v2100 = vlaneseq
      %v2101 = vshrl.u32 %v2100, 7
      %v2102 = vsub.s32 %v2099, %v2101
      %v2103 = vrot.slane %v2095, %v2102
      %v2105 = vunpack.c.l.s4 1934713408
      %v2106 = vunpack.c.0.s8 %v2105
      %v2107 = vlaneseq
      %v2108 = vshrl.u32 %v2107, 7
      %v2109 = vsub.s32 %v2106, %v2108
      %v2110 = vrot.slane %v2096, %v2109
      %v2111 = vcombine.low %v2048, %v2064
      %v2112 = vcombine.high %v2048, %v2064
      %v2114 = vunpack.c.l.s4 1934713408
      %v2115 = vunpack.c.0.s8 %v2114
      %v2116 = vlaneseq
      %v2117 = vshrl.u32 %v2116, 7
      %v2118 = vsub.s32 %v2115, %v2117
      %v2119 = vrot.slane %v2111, %v2118
      %v2121 = vunpack.c.l.s4 1934713408
      %v2122 = vunpack.c.0.s8 %v2121
      %v2123 = vlaneseq
      %v2124 = vshrl.u32 %v2123, 7
      %v2125 = vsub.s32 %v2122, %v2124
      %v2126 = vrot.slane %v2112, %v2125
      %v2127 = vcombine.low %v2072, %v2087
      %v2128 = vcombine.high %v2072, %v2087
      %v2130 = vunpack.c.l.s4 1934713408
      %v2131 = vunpack.c.0.s8 %v2130
      %v2132 = vlaneseq
      %v2133 = vshrl.u32 %v2132, 7
      %v2134 = vsub.s32 %v2131, %v2133
      %v2135 = vrot.slane %v2127, %v2134
      %v2137 = vunpack.c.l.s4 1934713408
      %v2138 = vunpack.c.0.s8 %v2137
      %v2139 = vlaneseq
      %v2140 = vshrl.u32 %v2139, 7
      %v2141 = vsub.s32 %v2138, %v2140
      %v2142 = vrot.slane %v2128, %v2141
      %v2143 = vcombine.low %v2079, %v2094
      %v2144 = vcombine.high %v2079, %v2094
      %v2146 = vunpack.c.l.s4 1934713408
      %v2147 = vunpack.c.0.s8 %v2146
      %v2148 = vlaneseq
      %v2149 = vshrl.u32 %v2148, 7
      %v2150 = vsub.s32 %v2147, %v2149
      %v2151 = vrot.slane %v2143, %v2150
      %v2153 = vunpack.c.l.s4 1934713408
      %v2154 = vunpack.c.0.s8 %v2153
      %v2155 = vlaneseq
      %v2156 = vshrl.u32 %v2155, 7
      %v2157 = vsub.s32 %v2154, %v2156
      %v2158 = vrot.slane %v2144, %v2157
      %v2159 = vcombine.low %v2103, %v2135
      %v2160 = vcombine.high %v2103, %v2135
      %v2161 = vcombine.low %v2110, %v2142
      %v2162 = vcombine.high %v2110, %v2142
      %v2163 = vcombine.low %v2119, %v2151
      %v2164 = vcombine.high %v2119, %v2151
      %v2165 = vcombine.low %v2126, %v2158
      %v2166 = vcombine.high %v2126, %v2158
      %v2167 = vcombine.low %v2022, %v2026
      %v2168 = vcombine.high %v2022, %v2026
      %v2170 = vunpack.c.l.s4 1983009808
      %v2171 = vunpack.c.0.s8 %v2170
      %v2172 = vlaneseq
      %v2173 = vshrl.u32 %v2172, 7
      %v2174 = vsub.s32 %v2171, %v2173
      %v2175 = vrot.slane %v2167, %v2174
      %v2177 = vunpack.c.l.s4 1983009808
      %v2178 = vunpack.c.0.s8 %v2177
      %v2179 = vlaneseq
      %v2180 = vshrl.u32 %v2179, 7
      %v2181 = vsub.s32 %v2178, %v2180
      %v2182 = vrot.slane %v2168, %v2181
      %v2183 = vcombine.low %v2024, %v2028
      %v2184 = vcombine.high %v2024, %v2028
      %v2186 = vunpack.c.l.s4 1983009808
      %v2187 = vunpack.c.0.s8 %v2186
      %v2188 = vlaneseq
      %v2189 = vshrl.u32 %v2188, 7
      %v2190 = vsub.s32 %v2187, %v2189
      %v2191 = vrot.slane %v2183, %v2190
      %v2193 = vunpack.c.l.s4 1983009808
      %v2194 = vunpack.c.0.s8 %v2193
      %v2195 = vlaneseq
      %v2196 = vshrl.u32 %v2195, 7
      %v2197 = vsub.s32 %v2194, %v2196
      %v2198 = vrot.slane %v2184, %v2197
      %v2199 = vcombine.high %v2030, 0.0
      %v2201 = vunpack.c.l.s4 1983009808
      %v2202 = vunpack.c.0.s8 %v2201
      %v2203 = vlaneseq
      %v2204 = vshrl.u32 %v2203, 7
      %v2205 = vsub.s32 %v2202, %v2204
      %v2206 = vrot.slane %v2030, %v2205
      %v2208 = vunpack.c.l.s4 1983009808
      %v2209 = vunpack.c.0.s8 %v2208
      %v2210 = vlaneseq
      %v2211 = vshrl.u32 %v2210, 7
      %v2212 = vsub.s32 %v2209, %v2211
      %v2213 = vrot.slane %v2199, %v2212
      %v2214 = vcombine.high %v2032, 0.0
      %v2216 = vunpack.c.l.s4 1983009808
      %v2217 = vunpack.c.0.s8 %v2216
      %v2218 = vlaneseq
      %v2219 = vshrl.u32 %v2218, 7
      %v2220 = vsub.s32 %v2217, %v2219
      %v2221 = vrot.slane %v2032, %v2220
      %v2223 = vunpack.c.l.s4 1983009808
      %v2224 = vunpack.c.0.s8 %v2223
      %v2225 = vlaneseq
      %v2226 = vshrl.u32 %v2225, 7
      %v2227 = vsub.s32 %v2224, %v2226
      %v2228 = vrot.slane %v2214, %v2227
      %v2229 = vcombine.low %v2175, %v2191
      %v2230 = vcombine.high %v2175, %v2191
      %v2232 = vunpack.c.l.s4 1934713408
      %v2233 = vunpack.c.0.s8 %v2232
      %v2234 = vlaneseq
      %v2235 = vshrl.u32 %v2234, 7
      %v2236 = vsub.s32 %v2233, %v2235
      %v2237 = vrot.slane %v2229, %v2236
      %v2239 = vunpack.c.l.s4 1934713408
      %v2240 = vunpack.c.0.s8 %v2239
      %v2241 = vlaneseq
      %v2242 = vshrl.u32 %v2241, 7
      %v2243 = vsub.s32 %v2240, %v2242
      %v2244 = vrot.slane %v2230, %v2243
      %v2245 = vcombine.low %v2182, %v2198
      %v2246 = vcombine.high %v2182, %v2198
      %v2248 = vunpack.c.l.s4 1934713408
      %v2249 = vunpack.c.0.s8 %v2248
      %v2250 = vlaneseq
      %v2251 = vshrl.u32 %v2250, 7
      %v2252 = vsub.s32 %v2249, %v2251
      %v2253 = vrot.slane %v2245, %v2252
      %v2255 = vunpack.c.l.s4 1934713408
      %v2256 = vunpack.c.0.s8 %v2255
      %v2257 = vlaneseq
      %v2258 = vshrl.u32 %v2257, 7
      %v2259 = vsub.s32 %v2256, %v2258
      %v2260 = vrot.slane %v2246, %v2259
      %v2261 = vcombine.low %v2206, %v2221
      %v2262 = vcombine.high %v2206, %v2221
      %v2264 = vunpack.c.l.s4 1934713408
      %v2265 = vunpack.c.0.s8 %v2264
      %v2266 = vlaneseq
      %v2267 = vshrl.u32 %v2266, 7
      %v2268 = vsub.s32 %v2265, %v2267
      %v2269 = vrot.slane %v2261, %v2268
      %v2271 = vunpack.c.l.s4 1934713408
      %v2272 = vunpack.c.0.s8 %v2271
      %v2273 = vlaneseq
      %v2274 = vshrl.u32 %v2273, 7
      %v2275 = vsub.s32 %v2272, %v2274
      %v2276 = vrot.slane %v2262, %v2275
      %v2277 = vcombine.low %v2213, %v2228
      %v2278 = vcombine.high %v2213, %v2228
      %v2280 = vunpack.c.l.s4 1934713408
      %v2281 = vunpack.c.0.s8 %v2280
      %v2282 = vlaneseq
      %v2283 = vshrl.u32 %v2282, 7
      %v2284 = vsub.s32 %v2281, %v2283
      %v2285 = vrot.slane %v2277, %v2284
      %v2287 = vunpack.c.l.s4 1934713408
      %v2288 = vunpack.c.0.s8 %v2287
      %v2289 = vlaneseq
      %v2290 = vshrl.u32 %v2289, 7
      %v2291 = vsub.s32 %v2288, %v2290
      %v2292 = vrot.slane %v2278, %v2291
      %v2293 = vcombine.low %v2237, %v2269
      %v2294 = vcombine.high %v2237, %v2269
      %v2295 = vcombine.low %v2244, %v2276
      %v2296 = vcombine.high %v2244, %v2276
      %v2297 = vcombine.low %v2253, %v2285
      %v2298 = vcombine.high %v2253, %v2285
      %v2299 = vcombine.low %v2260, %v2292
      %v2300 = vcombine.high %v2260, %v2292
      %2302 = vrot.lane.b32.xlu0 %v2160, 16
      %v2303 = vpop.permute.xlu0 %2302
      %2306 = vrot.lane.b32.xlu0 %v2161, 32
      %v2307 = vpop.permute.xlu0 %2306
      %2310 = vrot.lane.b32.xlu0 %v2162, 48
      %v2311 = vpop.permute.xlu0 %2310
      %2314 = vrot.lane.b32.xlu0 %v2163, 64
      %v2315 = vpop.permute.xlu0 %2314
      %2318 = vrot.lane.b32.xlu0 %v2164, 80
      %v2319 = vpop.permute.xlu0 %2318
      %2322 = vrot.lane.b32.xlu0 %v2165, 96
      %v2323 = vpop.permute.xlu0 %2322
      %2326 = vrot.lane.b32.xlu0 %v2166, 112
      %v2327 = vpop.permute.xlu0 %2326
      %2330 = vrot.lane.b32.xlu0 %v2294, 16
      %v2331 = vpop.permute.xlu0 %2330
      %2334 = vrot.lane.b32.xlu0 %v2295, 32
      %v2335 = vpop.permute.xlu0 %2334
      %2338 = vrot.lane.b32.xlu0 %v2296, 48
      %v2339 = vpop.permute.xlu0 %2338
      %2342 = vrot.lane.b32.xlu0 %v2297, 64
      %v2343 = vpop.permute.xlu0 %2342
      %2346 = vrot.lane.b32.xlu0 %v2298, 80
      %v2347 = vpop.permute.xlu0 %2346
      %2350 = vrot.lane.b32.xlu0 %v2299, 96
      %v2351 = vpop.permute.xlu0 %2350
      %2354 = vrot.lane.b32.xlu0 %v2300, 112
      %v2355 = vpop.permute.xlu0 %2354
      %v2357 = vsel %vm1182, %v2159, %v2303
      %v2358 = vsel %vm1184, %v2357, %v2307
      %v2359 = vsel %vm1186, %v2358, %v2311
      %v2360 = vsel %vm1188, %v2359, %v2315
      %v2361 = vsel %vm1190, %v2360, %v2319
      %v2362 = vsel %vm1192, %v2361, %v2323
      %v2363 = vsel %vm1194, %v2362, %v2327
      %v2364 = vsel %vm1182, %v2293, %v2331
      %v2365 = vsel %vm1184, %v2364, %v2335
      %v2366 = vsel %vm1186, %v2365, %v2339
      %v2367 = vsel %vm1188, %v2366, %v2343
      %v2368 = vsel %vm1190, %v2367, %v2347
      %v2369 = vsel %vm1192, %v2368, %v2351
      %v2370 = vsel %vm1194, %v2369, %v2355
      %v2373 = vrot.slane %v2363, 6
      %v2374 = vrot.slane %v2370, 6
      %2377 = vst [vmem:[#allocation3 + $0x20] sm:$0xfc] %v2373
      %2378 = vst [vmem:[#allocation3 + $0x28] sm:$0xfc] %v2374
      %v2379 = vld [vmem:[#allocation2 + $0x1] sm:$0xff]
      %v2380 = vld [vmem:[#allocation2 + $0x9] sm:$0xff]
      %v2381 = vld [vmem:[#allocation2 + $0x19] sm:$0xff]
      %v2382 = vld [vmem:[#allocation2 + $0x21] sm:$0xff]
      %v2383 = vld [vmem:[#allocation2 + $0x31] sm:$0xff]
      %v2384 = vld [vmem:[#allocation2 + $0x39] sm:$0xff]
      %v2385 = vld [vmem:[#allocation2 + $0x49] sm:$0xff]
      %v2386 = vld [vmem:[#allocation2 + $0x51] sm:$0xff]
      %v2387 = vld [vmem:[#allocation2 + $0x61] sm:$0xff]
      %v2388 = vld [vmem:[#allocation2 + $0x69] sm:$0xff]
      %v2389 = vld [vmem:[#allocation2 + $0x79] sm:$0xff]
      %v2390 = vld [vmem:[#allocation2 + $0x81] sm:$0xff]
      %2403 = vrot.lane.b32.xlu0 %v2379, 127
      %v2404 = vpop.permute.xlu0 %2403
      %2405 = vrot.lane.b32.xlu0 %v2380, 127
      %v2406 = vpop.permute.xlu0 %2405
      %2407 = vrot.lane.b32.xlu0 %v2381, 127
      %v2408 = vpop.permute.xlu0 %2407
      %2409 = vrot.lane.b32.xlu0 %v2382, 127
      %v2410 = vpop.permute.xlu0 %2409
      %2411 = vrot.lane.b32.xlu0 %v2383, 127
      %v2412 = vpop.permute.xlu0 %2411
      %2413 = vrot.lane.b32.xlu0 %v2384, 127
      %v2414 = vpop.permute.xlu0 %2413
      %2415 = vrot.lane.b32.xlu0 %v2385, 127
      %v2416 = vpop.permute.xlu0 %2415
      %2417 = vrot.lane.b32.xlu0 %v2386, 127
      %v2418 = vpop.permute.xlu0 %2417
      %2419 = vrot.lane.b32.xlu0 %v2387, 127
      %v2420 = vpop.permute.xlu0 %2419
      %2421 = vrot.lane.b32.xlu0 %v2388, 127
      %v2422 = vpop.permute.xlu0 %2421
      %2423 = vrot.lane.b32.xlu0 %v2389, 127
      %v2424 = vpop.permute.xlu0 %2423
      %2425 = vrot.lane.b32.xlu0 %v2390, 127
      %v2426 = vpop.permute.xlu0 %2425
      %v2439 = vcombine.low %v2404, %v2412
      %v2440 = vcombine.high %v2404, %v2412
      %v2442 = vunpack.c.l.s4 1983009808
      %v2443 = vunpack.c.0.s8 %v2442
      %v2444 = vlaneseq
      %v2445 = vshrl.u32 %v2444, 7
      %v2446 = vsub.s32 %v2443, %v2445
      %v2447 = vrot.slane %v2439, %v2446
      %v2449 = vunpack.c.l.s4 1983009808
      %v2450 = vunpack.c.0.s8 %v2449
      %v2451 = vlaneseq
      %v2452 = vshrl.u32 %v2451, 7
      %v2453 = vsub.s32 %v2450, %v2452
      %v2454 = vrot.slane %v2440, %v2453
      %v2455 = vcombine.low %v2408, %v2416
      %v2456 = vcombine.high %v2408, %v2416
      %v2458 = vunpack.c.l.s4 1983009808
      %v2459 = vunpack.c.0.s8 %v2458
      %v2460 = vlaneseq
      %v2461 = vshrl.u32 %v2460, 7
      %v2462 = vsub.s32 %v2459, %v2461
      %v2463 = vrot.slane %v2455, %v2462
      %v2465 = vunpack.c.l.s4 1983009808
      %v2466 = vunpack.c.0.s8 %v2465
      %v2467 = vlaneseq
      %v2468 = vshrl.u32 %v2467, 7
      %v2469 = vsub.s32 %v2466, %v2468
      %v2470 = vrot.slane %v2456, %v2469
      %v2471 = vcombine.high %v2420, 0.0
      %v2473 = vunpack.c.l.s4 1983009808
      %v2474 = vunpack.c.0.s8 %v2473
      %v2475 = vlaneseq
      %v2476 = vshrl.u32 %v2475, 7
      %v2477 = vsub.s32 %v2474, %v2476
      %v2478 = vrot.slane %v2420, %v2477
      %v2480 = vunpack.c.l.s4 1983009808
      %v2481 = vunpack.c.0.s8 %v2480
      %v2482 = vlaneseq
      %v2483 = vshrl.u32 %v2482, 7
      %v2484 = vsub.s32 %v2481, %v2483
      %v2485 = vrot.slane %v2471, %v2484
      %v2486 = vcombine.high %v2424, 0.0
      %v2488 = vunpack.c.l.s4 1983009808
      %v2489 = vunpack.c.0.s8 %v2488
      %v2490 = vlaneseq
      %v2491 = vshrl.u32 %v2490, 7
      %v2492 = vsub.s32 %v2489, %v2491
      %v2493 = vrot.slane %v2424, %v2492
      %v2495 = vunpack.c.l.s4 1983009808
      %v2496 = vunpack.c.0.s8 %v2495
      %v2497 = vlaneseq
      %v2498 = vshrl.u32 %v2497, 7
      %v2499 = vsub.s32 %v2496, %v2498
      %v2500 = vrot.slane %v2486, %v2499
      %v2501 = vcombine.low %v2447, %v2463
      %v2502 = vcombine.high %v2447, %v2463
      %v2504 = vunpack.c.l.s4 1934713408
      %v2505 = vunpack.c.0.s8 %v2504
      %v2506 = vlaneseq
      %v2507 = vshrl.u32 %v2506, 7
      %v2508 = vsub.s32 %v2505, %v2507
      %v2509 = vrot.slane %v2501, %v2508
      %v2511 = vunpack.c.l.s4 1934713408
      %v2512 = vunpack.c.0.s8 %v2511
      %v2513 = vlaneseq
      %v2514 = vshrl.u32 %v2513, 7
      %v2515 = vsub.s32 %v2512, %v2514
      %v2516 = vrot.slane %v2502, %v2515
      %v2517 = vcombine.low %v2454, %v2470
      %v2518 = vcombine.high %v2454, %v2470
      %v2520 = vunpack.c.l.s4 1934713408
      %v2521 = vunpack.c.0.s8 %v2520
      %v2522 = vlaneseq
      %v2523 = vshrl.u32 %v2522, 7
      %v2524 = vsub.s32 %v2521, %v2523
      %v2525 = vrot.slane %v2517, %v2524
      %v2527 = vunpack.c.l.s4 1934713408
      %v2528 = vunpack.c.0.s8 %v2527
      %v2529 = vlaneseq
      %v2530 = vshrl.u32 %v2529, 7
      %v2531 = vsub.s32 %v2528, %v2530
      %v2532 = vrot.slane %v2518, %v2531
      %v2533 = vcombine.low %v2478, %v2493
      %v2534 = vcombine.high %v2478, %v2493
      %v2536 = vunpack.c.l.s4 1934713408
      %v2537 = vunpack.c.0.s8 %v2536
      %v2538 = vlaneseq
      %v2539 = vshrl.u32 %v2538, 7
      %v2540 = vsub.s32 %v2537, %v2539
      %v2541 = vrot.slane %v2533, %v2540
      %v2543 = vunpack.c.l.s4 1934713408
      %v2544 = vunpack.c.0.s8 %v2543
      %v2545 = vlaneseq
      %v2546 = vshrl.u32 %v2545, 7
      %v2547 = vsub.s32 %v2544, %v2546
      %v2548 = vrot.slane %v2534, %v2547
      %v2549 = vcombine.low %v2485, %v2500
      %v2550 = vcombine.high %v2485, %v2500
      %v2552 = vunpack.c.l.s4 1934713408
      %v2553 = vunpack.c.0.s8 %v2552
      %v2554 = vlaneseq
      %v2555 = vshrl.u32 %v2554, 7
      %v2556 = vsub.s32 %v2553, %v2555
      %v2557 = vrot.slane %v2549, %v2556
      %v2559 = vunpack.c.l.s4 1934713408
      %v2560 = vunpack.c.0.s8 %v2559
      %v2561 = vlaneseq
      %v2562 = vshrl.u32 %v2561, 7
      %v2563 = vsub.s32 %v2560, %v2562
      %v2564 = vrot.slane %v2550, %v2563
      %v2565 = vcombine.low %v2509, %v2541
      %v2566 = vcombine.high %v2509, %v2541
      %v2567 = vcombine.low %v2516, %v2548
      %v2568 = vcombine.high %v2516, %v2548
      %v2569 = vcombine.low %v2525, %v2557
      %v2570 = vcombine.high %v2525, %v2557
      %v2571 = vcombine.low %v2532, %v2564
      %v2572 = vcombine.high %v2532, %v2564
      %v2573 = vcombine.low %v2406, %v2414
      %v2574 = vcombine.high %v2406, %v2414
      %v2576 = vunpack.c.l.s4 1983009808
      %v2577 = vunpack.c.0.s8 %v2576
      %v2578 = vlaneseq
      %v2579 = vshrl.u32 %v2578, 7
      %v2580 = vsub.s32 %v2577, %v2579
      %v2581 = vrot.slane %v2573, %v2580
      %v2583 = vunpack.c.l.s4 1983009808
      %v2584 = vunpack.c.0.s8 %v2583
      %v2585 = vlaneseq
      %v2586 = vshrl.u32 %v2585, 7
      %v2587 = vsub.s32 %v2584, %v2586
      %v2588 = vrot.slane %v2574, %v2587
      %v2589 = vcombine.low %v2410, %v2418
      %v2590 = vcombine.high %v2410, %v2418
      %v2592 = vunpack.c.l.s4 1983009808
      %v2593 = vunpack.c.0.s8 %v2592
      %v2594 = vlaneseq
      %v2595 = vshrl.u32 %v2594, 7
      %v2596 = vsub.s32 %v2593, %v2595
      %v2597 = vrot.slane %v2589, %v2596
      %v2599 = vunpack.c.l.s4 1983009808
      %v2600 = vunpack.c.0.s8 %v2599
      %v2601 = vlaneseq
      %v2602 = vshrl.u32 %v2601, 7
      %v2603 = vsub.s32 %v2600, %v2602
      %v2604 = vrot.slane %v2590, %v2603
      %v2605 = vcombine.high %v2422, 0.0
      %v2607 = vunpack.c.l.s4 1983009808
      %v2608 = vunpack.c.0.s8 %v2607
      %v2609 = vlaneseq
      %v2610 = vshrl.u32 %v2609, 7
      %v2611 = vsub.s32 %v2608, %v2610
      %v2612 = vrot.slane %v2422, %v2611
      %v2614 = vunpack.c.l.s4 1983009808
      %v2615 = vunpack.c.0.s8 %v2614
      %v2616 = vlaneseq
      %v2617 = vshrl.u32 %v2616, 7
      %v2618 = vsub.s32 %v2615, %v2617
      %v2619 = vrot.slane %v2605, %v2618
      %v2620 = vcombine.high %v2426, 0.0
      %v2622 = vunpack.c.l.s4 1983009808
      %v2623 = vunpack.c.0.s8 %v2622
      %v2624 = vlaneseq
      %v2625 = vshrl.u32 %v2624, 7
      %v2626 = vsub.s32 %v2623, %v2625
      %v2627 = vrot.slane %v2426, %v2626
      %v2629 = vunpack.c.l.s4 1983009808
      %v2630 = vunpack.c.0.s8 %v2629
      %v2631 = vlaneseq
      %v2632 = vshrl.u32 %v2631, 7
      %v2633 = vsub.s32 %v2630, %v2632
      %v2634 = vrot.slane %v2620, %v2633
      %v2635 = vcombine.low %v2581, %v2597
      %v2636 = vcombine.high %v2581, %v2597
      %v2638 = vunpack.c.l.s4 1934713408
      %v2639 = vunpack.c.0.s8 %v2638
      %v2640 = vlaneseq
      %v2641 = vshrl.u32 %v2640, 7
      %v2642 = vsub.s32 %v2639, %v2641
      %v2643 = vrot.slane %v2635, %v2642
      %v2645 = vunpack.c.l.s4 1934713408
      %v2646 = vunpack.c.0.s8 %v2645
      %v2647 = vlaneseq
      %v2648 = vshrl.u32 %v2647, 7
      %v2649 = vsub.s32 %v2646, %v2648
      %v2650 = vrot.slane %v2636, %v2649
      %v2651 = vcombine.low %v2588, %v2604
      %v2652 = vcombine.high %v2588, %v2604
      %v2654 = vunpack.c.l.s4 1934713408
      %v2655 = vunpack.c.0.s8 %v2654
      %v2656 = vlaneseq
      %v2657 = vshrl.u32 %v2656, 7
      %v2658 = vsub.s32 %v2655, %v2657
      %v2659 = vrot.slane %v2651, %v2658
      %v2661 = vunpack.c.l.s4 1934713408
      %v2662 = vunpack.c.0.s8 %v2661
      %v2663 = vlaneseq
      %v2664 = vshrl.u32 %v2663, 7
      %v2665 = vsub.s32 %v2662, %v2664
      %v2666 = vrot.slane %v2652, %v2665
      %v2667 = vcombine.low %v2612, %v2627
      %v2668 = vcombine.high %v2612, %v2627
      %v2670 = vunpack.c.l.s4 1934713408
      %v2671 = vunpack.c.0.s8 %v2670
      %v2672 = vlaneseq
      %v2673 = vshrl.u32 %v2672, 7
      %v2674 = vsub.s32 %v2671, %v2673
      %v2675 = vrot.slane %v2667, %v2674
      %v2677 = vunpack.c.l.s4 1934713408
      %v2678 = vunpack.c.0.s8 %v2677
      %v2679 = vlaneseq
      %v2680 = vshrl.u32 %v2679, 7
      %v2681 = vsub.s32 %v2678, %v2680
      %v2682 = vrot.slane %v2668, %v2681
      %v2683 = vcombine.low %v2619, %v2634
      %v2684 = vcombine.high %v2619, %v2634
      %v2686 = vunpack.c.l.s4 1934713408
      %v2687 = vunpack.c.0.s8 %v2686
      %v2688 = vlaneseq
      %v2689 = vshrl.u32 %v2688, 7
      %v2690 = vsub.s32 %v2687, %v2689
      %v2691 = vrot.slane %v2683, %v2690
      %v2693 = vunpack.c.l.s4 1934713408
      %v2694 = vunpack.c.0.s8 %v2693
      %v2695 = vlaneseq
      %v2696 = vshrl.u32 %v2695, 7
      %v2697 = vsub.s32 %v2694, %v2696
      %v2698 = vrot.slane %v2684, %v2697
      %v2699 = vcombine.low %v2643, %v2675
      %v2700 = vcombine.high %v2643, %v2675
      %v2701 = vcombine.low %v2650, %v2682
      %v2702 = vcombine.high %v2650, %v2682
      %v2703 = vcombine.low %v2659, %v2691
      %v2704 = vcombine.high %v2659, %v2691
      %v2705 = vcombine.low %v2666, %v2698
      %v2706 = vcombine.high %v2666, %v2698
      %2708 = vrot.lane.b32.xlu0 %v2566, 16
      %v2709 = vpop.permute.xlu0 %2708
      %2712 = vrot.lane.b32.xlu0 %v2567, 32
      %v2713 = vpop.permute.xlu0 %2712
      %2716 = vrot.lane.b32.xlu0 %v2568, 48
      %v2717 = vpop.permute.xlu0 %2716
      %2720 = vrot.lane.b32.xlu0 %v2569, 64
      %v2721 = vpop.permute.xlu0 %2720
      %2724 = vrot.lane.b32.xlu0 %v2570, 80
      %v2725 = vpop.permute.xlu0 %2724
      %2728 = vrot.lane.b32.xlu0 %v2571, 96
      %v2729 = vpop.permute.xlu0 %2728
      %2732 = vrot.lane.b32.xlu0 %v2572, 112
      %v2733 = vpop.permute.xlu0 %2732
      %2736 = vrot.lane.b32.xlu0 %v2700, 16
      %v2737 = vpop.permute.xlu0 %2736
      %2740 = vrot.lane.b32.xlu0 %v2701, 32
      %v2741 = vpop.permute.xlu0 %2740
      %2744 = vrot.lane.b32.xlu0 %v2702, 48
      %v2745 = vpop.permute.xlu0 %2744
      %2748 = vrot.lane.b32.xlu0 %v2703, 64
      %v2749 = vpop.permute.xlu0 %2748
      %2752 = vrot.lane.b32.xlu0 %v2704, 80
      %v2753 = vpop.permute.xlu0 %2752
      %2756 = vrot.lane.b32.xlu0 %v2705, 96
      %v2757 = vpop.permute.xlu0 %2756
      %2760 = vrot.lane.b32.xlu0 %v2706, 112
      %v2761 = vpop.permute.xlu0 %2760
      %v2763 = vsel %vm1182, %v2565, %v2709
      %v2764 = vsel %vm1184, %v2763, %v2713
      %v2765 = vsel %vm1186, %v2764, %v2717
      %v2766 = vsel %vm1188, %v2765, %v2721
      %v2767 = vsel %vm1190, %v2766, %v2725
      %v2768 = vsel %vm1192, %v2767, %v2729
      %v2769 = vsel %vm1194, %v2768, %v2733
      %v2770 = vsel %vm1182, %v2699, %v2737
      %v2771 = vsel %vm1184, %v2770, %v2741
      %v2772 = vsel %vm1186, %v2771, %v2745
      %v2773 = vsel %vm1188, %v2772, %v2749
      %v2774 = vsel %vm1190, %v2773, %v2753
      %v2775 = vsel %vm1192, %v2774, %v2757
      %v2776 = vsel %vm1194, %v2775, %v2761
      %2777 = vst [vmem:[#allocation3 + $0x30] sm:$0x3f] %v2769
      %2778 = vst [vmem:[#allocation3 + $0x38] sm:$0x3f] %v2776
      %v2779 = vld [vmem:[#allocation2 + $0x1] sm:$0xff]
      %v2780 = vld [vmem:[#allocation2 + $0x9] sm:$0xff]
      %v2781 = vld [vmem:[#allocation2 + $0x19] sm:$0xff]
      %v2782 = vld [vmem:[#allocation2 + $0x21] sm:$0xff]
      %v2783 = vld [vmem:[#allocation2 + $0x31] sm:$0xff]
      %v2784 = vld [vmem:[#allocation2 + $0x39] sm:$0xff]
      %v2785 = vld [vmem:[#allocation2 + $0x49] sm:$0xff]
      %v2786 = vld [vmem:[#allocation2 + $0x51] sm:$0xff]
      %v2787 = vld [vmem:[#allocation2 + $0x61] sm:$0xff]
      %v2788 = vld [vmem:[#allocation2 + $0x69] sm:$0xff]
      %v2789 = vld [vmem:[#allocation2 + $0x79] sm:$0xff]
      %v2790 = vld [vmem:[#allocation2 + $0x81] sm:$0xff]
      %2803 = vrot.lane.b32.xlu0 %v2779, 126
      %v2804 = vpop.permute.xlu0 %2803
      %2805 = vrot.lane.b32.xlu0 %v2780, 126
      %v2806 = vpop.permute.xlu0 %2805
      %2807 = vrot.lane.b32.xlu0 %v2781, 126
      %v2808 = vpop.permute.xlu0 %2807
      %2809 = vrot.lane.b32.xlu0 %v2782, 126
      %v2810 = vpop.permute.xlu0 %2809
      %2811 = vrot.lane.b32.xlu0 %v2783, 126
      %v2812 = vpop.permute.xlu0 %2811
      %2813 = vrot.lane.b32.xlu0 %v2784, 126
      %v2814 = vpop.permute.xlu0 %2813
      %2815 = vrot.lane.b32.xlu0 %v2785, 126
      %v2816 = vpop.permute.xlu0 %2815
      %2817 = vrot.lane.b32.xlu0 %v2786, 126
      %v2818 = vpop.permute.xlu0 %2817
      %2819 = vrot.lane.b32.xlu0 %v2787, 126
      %v2820 = vpop.permute.xlu0 %2819
      %2821 = vrot.lane.b32.xlu0 %v2788, 126
      %v2822 = vpop.permute.xlu0 %2821
      %2823 = vrot.lane.b32.xlu0 %v2789, 126
      %v2824 = vpop.permute.xlu0 %2823
      %2825 = vrot.lane.b32.xlu0 %v2790, 126
      %v2826 = vpop.permute.xlu0 %2825
      %v2839 = vcombine.low %v2804, %v2812
      %v2840 = vcombine.high %v2804, %v2812
      %v2842 = vunpack.c.l.s4 1983009808
      %v2843 = vunpack.c.0.s8 %v2842
      %v2844 = vlaneseq
      %v2845 = vshrl.u32 %v2844, 7
      %v2846 = vsub.s32 %v2843, %v2845
      %v2847 = vrot.slane %v2839, %v2846
      %v2849 = vunpack.c.l.s4 1983009808
      %v2850 = vunpack.c.0.s8 %v2849
      %v2851 = vlaneseq
      %v2852 = vshrl.u32 %v2851, 7
      %v2853 = vsub.s32 %v2850, %v2852
      %v2854 = vrot.slane %v2840, %v2853
      %v2855 = vcombine.low %v2808, %v2816
      %v2856 = vcombine.high %v2808, %v2816
      %v2858 = vunpack.c.l.s4 1983009808
      %v2859 = vunpack.c.0.s8 %v2858
      %v2860 = vlaneseq
      %v2861 = vshrl.u32 %v2860, 7
      %v2862 = vsub.s32 %v2859, %v2861
      %v2863 = vrot.slane %v2855, %v2862
      %v2865 = vunpack.c.l.s4 1983009808
      %v2866 = vunpack.c.0.s8 %v2865
      %v2867 = vlaneseq
      %v2868 = vshrl.u32 %v2867, 7
      %v2869 = vsub.s32 %v2866, %v2868
      %v2870 = vrot.slane %v2856, %v2869
      %v2871 = vcombine.high %v2820, 0.0
      %v2873 = vunpack.c.l.s4 1983009808
      %v2874 = vunpack.c.0.s8 %v2873
      %v2875 = vlaneseq
      %v2876 = vshrl.u32 %v2875, 7
      %v2877 = vsub.s32 %v2874, %v2876
      %v2878 = vrot.slane %v2820, %v2877
      %v2880 = vunpack.c.l.s4 1983009808
      %v2881 = vunpack.c.0.s8 %v2880
      %v2882 = vlaneseq
      %v2883 = vshrl.u32 %v2882, 7
      %v2884 = vsub.s32 %v2881, %v2883
      %v2885 = vrot.slane %v2871, %v2884
      %v2886 = vcombine.high %v2824, 0.0
      %v2888 = vunpack.c.l.s4 1983009808
      %v2889 = vunpack.c.0.s8 %v2888
      %v2890 = vlaneseq
      %v2891 = vshrl.u32 %v2890, 7
      %v2892 = vsub.s32 %v2889, %v2891
      %v2893 = vrot.slane %v2824, %v2892
      %v2895 = vunpack.c.l.s4 1983009808
      %v2896 = vunpack.c.0.s8 %v2895
      %v2897 = vlaneseq
      %v2898 = vshrl.u32 %v2897, 7
      %v2899 = vsub.s32 %v2896, %v2898
      %v2900 = vrot.slane %v2886, %v2899
      %v2901 = vcombine.low %v2847, %v2863
      %v2902 = vcombine.high %v2847, %v2863
      %v2904 = vunpack.c.l.s4 1934713408
      %v2905 = vunpack.c.0.s8 %v2904
      %v2906 = vlaneseq
      %v2907 = vshrl.u32 %v2906, 7
      %v2908 = vsub.s32 %v2905, %v2907
      %v2909 = vrot.slane %v2901, %v2908
      %v2911 = vunpack.c.l.s4 1934713408
      %v2912 = vunpack.c.0.s8 %v2911
      %v2913 = vlaneseq
      %v2914 = vshrl.u32 %v2913, 7
      %v2915 = vsub.s32 %v2912, %v2914
      %v2916 = vrot.slane %v2902, %v2915
      %v2917 = vcombine.low %v2854, %v2870
      %v2918 = vcombine.high %v2854, %v2870
      %v2920 = vunpack.c.l.s4 1934713408
      %v2921 = vunpack.c.0.s8 %v2920
      %v2922 = vlaneseq
      %v2923 = vshrl.u32 %v2922, 7
      %v2924 = vsub.s32 %v2921, %v2923
      %v2925 = vrot.slane %v2917, %v2924
      %v2927 = vunpack.c.l.s4 1934713408
      %v2928 = vunpack.c.0.s8 %v2927
      %v2929 = vlaneseq
      %v2930 = vshrl.u32 %v2929, 7
      %v2931 = vsub.s32 %v2928, %v2930
      %v2932 = vrot.slane %v2918, %v2931
      %v2933 = vcombine.low %v2878, %v2893
      %v2934 = vcombine.high %v2878, %v2893
      %v2936 = vunpack.c.l.s4 1934713408
      %v2937 = vunpack.c.0.s8 %v2936
      %v2938 = vlaneseq
      %v2939 = vshrl.u32 %v2938, 7
      %v2940 = vsub.s32 %v2937, %v2939
      %v2941 = vrot.slane %v2933, %v2940
      %v2943 = vunpack.c.l.s4 1934713408
      %v2944 = vunpack.c.0.s8 %v2943
      %v2945 = vlaneseq
      %v2946 = vshrl.u32 %v2945, 7
      %v2947 = vsub.s32 %v2944, %v2946
      %v2948 = vrot.slane %v2934, %v2947
      %v2949 = vcombine.low %v2885, %v2900
      %v2950 = vcombine.high %v2885, %v2900
      %v2952 = vunpack.c.l.s4 1934713408
      %v2953 = vunpack.c.0.s8 %v2952
      %v2954 = vlaneseq
      %v2955 = vshrl.u32 %v2954, 7
      %v2956 = vsub.s32 %v2953, %v2955
      %v2957 = vrot.slane %v2949, %v2956
      %v2959 = vunpack.c.l.s4 1934713408
      %v2960 = vunpack.c.0.s8 %v2959
      %v2961 = vlaneseq
      %v2962 = vshrl.u32 %v2961, 7
      %v2963 = vsub.s32 %v2960, %v2962
      %v2964 = vrot.slane %v2950, %v2963
      %v2965 = vcombine.low %v2909, %v2941
      %v2966 = vcombine.high %v2909, %v2941
      %v2967 = vcombine.low %v2916, %v2948
      %v2968 = vcombine.high %v2916, %v2948
      %v2969 = vcombine.low %v2925, %v2957
      %v2970 = vcombine.high %v2925, %v2957
      %v2971 = vcombine.low %v2932, %v2964
      %v2972 = vcombine.high %v2932, %v2964
      %v2973 = vcombine.low %v2806, %v2814
      %v2974 = vcombine.high %v2806, %v2814
      %v2976 = vunpack.c.l.s4 1983009808
      %v2977 = vunpack.c.0.s8 %v2976
      %v2978 = vlaneseq
      %v2979 = vshrl.u32 %v2978, 7
      %v2980 = vsub.s32 %v2977, %v2979
      %v2981 = vrot.slane %v2973, %v2980
      %v2983 = vunpack.c.l.s4 1983009808
      %v2984 = vunpack.c.0.s8 %v2983
      %v2985 = vlaneseq
      %v2986 = vshrl.u32 %v2985, 7
      %v2987 = vsub.s32 %v2984, %v2986
      %v2988 = vrot.slane %v2974, %v2987
      %v2989 = vcombine.low %v2810, %v2818
      %v2990 = vcombine.high %v2810, %v2818
      %v2992 = vunpack.c.l.s4 1983009808
      %v2993 = vunpack.c.0.s8 %v2992
      %v2994 = vlaneseq
      %v2995 = vshrl.u32 %v2994, 7
      %v2996 = vsub.s32 %v2993, %v2995
      %v2997 = vrot.slane %v2989, %v2996
      %v2999 = vunpack.c.l.s4 1983009808
      %v3000 = vunpack.c.0.s8 %v2999
      %v3001 = vlaneseq
      %v3002 = vshrl.u32 %v3001, 7
      %v3003 = vsub.s32 %v3000, %v3002
      %v3004 = vrot.slane %v2990, %v3003
      %v3005 = vcombine.high %v2822, 0.0
      %v3007 = vunpack.c.l.s4 1983009808
      %v3008 = vunpack.c.0.s8 %v3007
      %v3009 = vlaneseq
      %v3010 = vshrl.u32 %v3009, 7
      %v3011 = vsub.s32 %v3008, %v3010
      %v3012 = vrot.slane %v2822, %v3011
      %v3014 = vunpack.c.l.s4 1983009808
      %v3015 = vunpack.c.0.s8 %v3014
      %v3016 = vlaneseq
      %v3017 = vshrl.u32 %v3016, 7
      %v3018 = vsub.s32 %v3015, %v3017
      %v3019 = vrot.slane %v3005, %v3018
      %v3020 = vcombine.high %v2826, 0.0
      %v3022 = vunpack.c.l.s4 1983009808
      %v3023 = vunpack.c.0.s8 %v3022
      %v3024 = vlaneseq
      %v3025 = vshrl.u32 %v3024, 7
      %v3026 = vsub.s32 %v3023, %v3025
      %v3027 = vrot.slane %v2826, %v3026
      %v3029 = vunpack.c.l.s4 1983009808
      %v3030 = vunpack.c.0.s8 %v3029
      %v3031 = vlaneseq
      %v3032 = vshrl.u32 %v3031, 7
      %v3033 = vsub.s32 %v3030, %v3032
      %v3034 = vrot.slane %v3020, %v3033
      %v3035 = vcombine.low %v2981, %v2997
      %v3036 = vcombine.high %v2981, %v2997
      %v3038 = vunpack.c.l.s4 1934713408
      %v3039 = vunpack.c.0.s8 %v3038
      %v3040 = vlaneseq
      %v3041 = vshrl.u32 %v3040, 7
      %v3042 = vsub.s32 %v3039, %v3041
      %v3043 = vrot.slane %v3035, %v3042
      %v3045 = vunpack.c.l.s4 1934713408
      %v3046 = vunpack.c.0.s8 %v3045
      %v3047 = vlaneseq
      %v3048 = vshrl.u32 %v3047, 7
      %v3049 = vsub.s32 %v3046, %v3048
      %v3050 = vrot.slane %v3036, %v3049
      %v3051 = vcombine.low %v2988, %v3004
      %v3052 = vcombine.high %v2988, %v3004
      %v3054 = vunpack.c.l.s4 1934713408
      %v3055 = vunpack.c.0.s8 %v3054
      %v3056 = vlaneseq
      %v3057 = vshrl.u32 %v3056, 7
      %v3058 = vsub.s32 %v3055, %v3057
      %v3059 = vrot.slane %v3051, %v3058
      %v3061 = vunpack.c.l.s4 1934713408
      %v3062 = vunpack.c.0.s8 %v3061
      %v3063 = vlaneseq
      %v3064 = vshrl.u32 %v3063, 7
      %v3065 = vsub.s32 %v3062, %v3064
      %v3066 = vrot.slane %v3052, %v3065
      %v3067 = vcombine.low %v3012, %v3027
      %v3068 = vcombine.high %v3012, %v3027
      %v3070 = vunpack.c.l.s4 1934713408
      %v3071 = vunpack.c.0.s8 %v3070
      %v3072 = vlaneseq
      %v3073 = vshrl.u32 %v3072, 7
      %v3074 = vsub.s32 %v3071, %v3073
      %v3075 = vrot.slane %v3067, %v3074
      %v3077 = vunpack.c.l.s4 1934713408
      %v3078 = vunpack.c.0.s8 %v3077
      %v3079 = vlaneseq
      %v3080 = vshrl.u32 %v3079, 7
      %v3081 = vsub.s32 %v3078, %v3080
      %v3082 = vrot.slane %v3068, %v3081
      %v3083 = vcombine.low %v3019, %v3034
      %v3084 = vcombine.high %v3019, %v3034
      %v3086 = vunpack.c.l.s4 1934713408
      %v3087 = vunpack.c.0.s8 %v3086
      %v3088 = vlaneseq
      %v3089 = vshrl.u32 %v3088, 7
      %v3090 = vsub.s32 %v3087, %v3089
      %v3091 = vrot.slane %v3083, %v3090
      %v3093 = vunpack.c.l.s4 1934713408
      %v3094 = vunpack.c.0.s8 %v3093
      %v3095 = vlaneseq
      %v3096 = vshrl.u32 %v3095, 7
      %v3097 = vsub.s32 %v3094, %v3096
      %v3098 = vrot.slane %v3084, %v3097
      %v3099 = vcombine.low %v3043, %v3075
      %v3100 = vcombine.high %v3043, %v3075
      %v3101 = vcombine.low %v3050, %v3082
      %v3102 = vcombine.high %v3050, %v3082
      %v3103 = vcombine.low %v3059, %v3091
      %v3104 = vcombine.high %v3059, %v3091
      %v3105 = vcombine.low %v3066, %v3098
      %v3106 = vcombine.high %v3066, %v3098
      %3108 = vrot.lane.b32.xlu0 %v2966, 16
      %v3109 = vpop.permute.xlu0 %3108
      %3112 = vrot.lane.b32.xlu0 %v2967, 32
      %v3113 = vpop.permute.xlu0 %3112
      %3116 = vrot.lane.b32.xlu0 %v2968, 48
      %v3117 = vpop.permute.xlu0 %3116
      %3120 = vrot.lane.b32.xlu0 %v2969, 64
      %v3121 = vpop.permute.xlu0 %3120
      %3124 = vrot.lane.b32.xlu0 %v2970, 80
      %v3125 = vpop.permute.xlu0 %3124
      %3128 = vrot.lane.b32.xlu0 %v2971, 96
      %v3129 = vpop.permute.xlu0 %3128
      %3132 = vrot.lane.b32.xlu0 %v2972, 112
      %v3133 = vpop.permute.xlu0 %3132
      %3136 = vrot.lane.b32.xlu0 %v3100, 16
      %v3137 = vpop.permute.xlu0 %3136
      %3140 = vrot.lane.b32.xlu0 %v3101, 32
      %v3141 = vpop.permute.xlu0 %3140
      %3144 = vrot.lane.b32.xlu0 %v3102, 48
      %v3145 = vpop.permute.xlu0 %3144
      %3148 = vrot.lane.b32.xlu0 %v3103, 64
      %v3149 = vpop.permute.xlu0 %3148
      %3152 = vrot.lane.b32.xlu0 %v3104, 80
      %v3153 = vpop.permute.xlu0 %3152
      %3156 = vrot.lane.b32.xlu0 %v3105, 96
      %v3157 = vpop.permute.xlu0 %3156
      %3160 = vrot.lane.b32.xlu0 %v3106, 112
      %v3161 = vpop.permute.xlu0 %3160
      %v3163 = vsel %vm1182, %v2965, %v3109
      %v3164 = vsel %vm1184, %v3163, %v3113
      %v3165 = vsel %vm1186, %v3164, %v3117
      %v3166 = vsel %vm1188, %v3165, %v3121
      %v3167 = vsel %vm1190, %v3166, %v3125
      %v3168 = vsel %vm1192, %v3167, %v3129
      %v3169 = vsel %vm1194, %v3168, %v3133
      %v3170 = vsel %vm1182, %v3099, %v3137
      %v3171 = vsel %vm1184, %v3170, %v3141
      %v3172 = vsel %vm1186, %v3171, %v3145
      %v3173 = vsel %vm1188, %v3172, %v3149
      %v3174 = vsel %vm1190, %v3173, %v3153
      %v3175 = vsel %vm1192, %v3174, %v3157
      %v3176 = vsel %vm1194, %v3175, %v3161
      %v3179 = vrot.slane %v3169, 2
      %v3180 = vrot.slane %v3176, 2
      %3183 = vst [vmem:[#allocation3 + $0x30] sm:$0xc0] %v3179
      %3184 = vst [vmem:[#allocation3 + $0x38] sm:$0xc0] %v3180
      %3185 = vst [vmem:[#allocation3 + $0x40] sm:$0xf] %v3179
      %3186 = vst [vmem:[#allocation3 + $0x48] sm:$0xf] %v3180
      %v3187 = vld [vmem:[#allocation2 + $0x2] sm:$0xff]
      %v3188 = vld [vmem:[#allocation2 + $0xa] sm:$0xff]
      %v3189 = vld [vmem:[#allocation2 + $0x1a] sm:$0xff]
      %v3190 = vld [vmem:[#allocation2 + $0x22] sm:$0xff]
      %v3191 = vld [vmem:[#allocation2 + $0x32] sm:$0xff]
      %v3192 = vld [vmem:[#allocation2 + $0x3a] sm:$0xff]
      %v3193 = vld [vmem:[#allocation2 + $0x4a] sm:$0xff]
      %v3194 = vld [vmem:[#allocation2 + $0x52] sm:$0xff]
      %v3195 = vld [vmem:[#allocation2 + $0x62] sm:$0xff]
      %v3196 = vld [vmem:[#allocation2 + $0x6a] sm:$0xff]
      %v3197 = vld [vmem:[#allocation2 + $0x7a] sm:$0xff]
      %v3198 = vld [vmem:[#allocation2 + $0x82] sm:$0xff]
      %v3199 = vcombine.low %v3187, %v3191
      %v3200 = vcombine.high %v3187, %v3191
      %v3202 = vunpack.c.l.s4 1983009808
      %v3203 = vunpack.c.0.s8 %v3202
      %v3204 = vlaneseq
      %v3205 = vshrl.u32 %v3204, 7
      %v3206 = vsub.s32 %v3203, %v3205
      %v3207 = vrot.slane %v3199, %v3206
      %v3209 = vunpack.c.l.s4 1983009808
      %v3210 = vunpack.c.0.s8 %v3209
      %v3211 = vlaneseq
      %v3212 = vshrl.u32 %v3211, 7
      %v3213 = vsub.s32 %v3210, %v3212
      %v3214 = vrot.slane %v3200, %v3213
      %v3215 = vcombine.low %v3189, %v3193
      %v3216 = vcombine.high %v3189, %v3193
      %v3218 = vunpack.c.l.s4 1983009808
      %v3219 = vunpack.c.0.s8 %v3218
      %v3220 = vlaneseq
      %v3221 = vshrl.u32 %v3220, 7
      %v3222 = vsub.s32 %v3219, %v3221
      %v3223 = vrot.slane %v3215, %v3222
      %v3225 = vunpack.c.l.s4 1983009808
      %v3226 = vunpack.c.0.s8 %v3225
      %v3227 = vlaneseq
      %v3228 = vshrl.u32 %v3227, 7
      %v3229 = vsub.s32 %v3226, %v3228
      %v3230 = vrot.slane %v3216, %v3229
      %v3231 = vcombine.high %v3195, 0.0
      %v3233 = vunpack.c.l.s4 1983009808
      %v3234 = vunpack.c.0.s8 %v3233
      %v3235 = vlaneseq
      %v3236 = vshrl.u32 %v3235, 7
      %v3237 = vsub.s32 %v3234, %v3236
      %v3238 = vrot.slane %v3195, %v3237
      %v3240 = vunpack.c.l.s4 1983009808
      %v3241 = vunpack.c.0.s8 %v3240
      %v3242 = vlaneseq
      %v3243 = vshrl.u32 %v3242, 7
      %v3244 = vsub.s32 %v3241, %v3243
      %v3245 = vrot.slane %v3231, %v3244
      %v3246 = vcombine.high %v3197, 0.0
      %v3248 = vunpack.c.l.s4 1983009808
      %v3249 = vunpack.c.0.s8 %v3248
      %v3250 = vlaneseq
      %v3251 = vshrl.u32 %v3250, 7
      %v3252 = vsub.s32 %v3249, %v3251
      %v3253 = vrot.slane %v3197, %v3252
      %v3255 = vunpack.c.l.s4 1983009808
      %v3256 = vunpack.c.0.s8 %v3255
      %v3257 = vlaneseq
      %v3258 = vshrl.u32 %v3257, 7
      %v3259 = vsub.s32 %v3256, %v3258
      %v3260 = vrot.slane %v3246, %v3259
      %v3261 = vcombine.low %v3207, %v3223
      %v3262 = vcombine.high %v3207, %v3223
      %v3264 = vunpack.c.l.s4 1934713408
      %v3265 = vunpack.c.0.s8 %v3264
      %v3266 = vlaneseq
      %v3267 = vshrl.u32 %v3266, 7
      %v3268 = vsub.s32 %v3265, %v3267
      %v3269 = vrot.slane %v3261, %v3268
      %v3271 = vunpack.c.l.s4 1934713408
      %v3272 = vunpack.c.0.s8 %v3271
      %v3273 = vlaneseq
      %v3274 = vshrl.u32 %v3273, 7
      %v3275 = vsub.s32 %v3272, %v3274
      %v3276 = vrot.slane %v3262, %v3275
      %v3277 = vcombine.low %v3214, %v3230
      %v3278 = vcombine.high %v3214, %v3230
      %v3280 = vunpack.c.l.s4 1934713408
      %v3281 = vunpack.c.0.s8 %v3280
      %v3282 = vlaneseq
      %v3283 = vshrl.u32 %v3282, 7
      %v3284 = vsub.s32 %v3281, %v3283
      %v3285 = vrot.slane %v3277, %v3284
      %v3287 = vunpack.c.l.s4 1934713408
      %v3288 = vunpack.c.0.s8 %v3287
      %v3289 = vlaneseq
      %v3290 = vshrl.u32 %v3289, 7
      %v3291 = vsub.s32 %v3288, %v3290
      %v3292 = vrot.slane %v3278, %v3291
      %v3293 = vcombine.low %v3238, %v3253
      %v3294 = vcombine.high %v3238, %v3253
      %v3296 = vunpack.c.l.s4 1934713408
      %v3297 = vunpack.c.0.s8 %v3296
      %v3298 = vlaneseq
      %v3299 = vshrl.u32 %v3298, 7
      %v3300 = vsub.s32 %v3297, %v3299
      %v3301 = vrot.slane %v3293, %v3300
      %v3303 = vunpack.c.l.s4 1934713408
      %v3304 = vunpack.c.0.s8 %v3303
      %v3305 = vlaneseq
      %v3306 = vshrl.u32 %v3305, 7
      %v3307 = vsub.s32 %v3304, %v3306
      %v3308 = vrot.slane %v3294, %v3307
      %v3309 = vcombine.low %v3245, %v3260
      %v3310 = vcombine.high %v3245, %v3260
      %v3312 = vunpack.c.l.s4 1934713408
      %v3313 = vunpack.c.0.s8 %v3312
      %v3314 = vlaneseq
      %v3315 = vshrl.u32 %v3314, 7
      %v3316 = vsub.s32 %v3313, %v3315
      %v3317 = vrot.slane %v3309, %v3316
      %v3319 = vunpack.c.l.s4 1934713408
      %v3320 = vunpack.c.0.s8 %v3319
      %v3321 = vlaneseq
      %v3322 = vshrl.u32 %v3321, 7
      %v3323 = vsub.s32 %v3320, %v3322
      %v3324 = vrot.slane %v3310, %v3323
      %v3325 = vcombine.low %v3269, %v3301
      %v3326 = vcombine.high %v3269, %v3301
      %v3327 = vcombine.low %v3276, %v3308
      %v3328 = vcombine.high %v3276, %v3308
      %v3329 = vcombine.low %v3285, %v3317
      %v3330 = vcombine.high %v3285, %v3317
      %v3331 = vcombine.low %v3292, %v3324
      %v3332 = vcombine.high %v3292, %v3324
      %v3333 = vcombine.low %v3188, %v3192
      %v3334 = vcombine.high %v3188, %v3192
      %v3336 = vunpack.c.l.s4 1983009808
      %v3337 = vunpack.c.0.s8 %v3336
      %v3338 = vlaneseq
      %v3339 = vshrl.u32 %v3338, 7
      %v3340 = vsub.s32 %v3337, %v3339
      %v3341 = vrot.slane %v3333, %v3340
      %v3343 = vunpack.c.l.s4 1983009808
      %v3344 = vunpack.c.0.s8 %v3343
      %v3345 = vlaneseq
      %v3346 = vshrl.u32 %v3345, 7
      %v3347 = vsub.s32 %v3344, %v3346
      %v3348 = vrot.slane %v3334, %v3347
      %v3349 = vcombine.low %v3190, %v3194
      %v3350 = vcombine.high %v3190, %v3194
      %v3352 = vunpack.c.l.s4 1983009808
      %v3353 = vunpack.c.0.s8 %v3352
      %v3354 = vlaneseq
      %v3355 = vshrl.u32 %v3354, 7
      %v3356 = vsub.s32 %v3353, %v3355
      %v3357 = vrot.slane %v3349, %v3356
      %v3359 = vunpack.c.l.s4 1983009808
      %v3360 = vunpack.c.0.s8 %v3359
      %v3361 = vlaneseq
      %v3362 = vshrl.u32 %v3361, 7
      %v3363 = vsub.s32 %v3360, %v3362
      %v3364 = vrot.slane %v3350, %v3363
      %v3365 = vcombine.high %v3196, 0.0
      %v3367 = vunpack.c.l.s4 1983009808
      %v3368 = vunpack.c.0.s8 %v3367
      %v3369 = vlaneseq
      %v3370 = vshrl.u32 %v3369, 7
      %v3371 = vsub.s32 %v3368, %v3370
      %v3372 = vrot.slane %v3196, %v3371
      %v3374 = vunpack.c.l.s4 1983009808
      %v3375 = vunpack.c.0.s8 %v3374
      %v3376 = vlaneseq
      %v3377 = vshrl.u32 %v3376, 7
      %v3378 = vsub.s32 %v3375, %v3377
      %v3379 = vrot.slane %v3365, %v3378
      %v3380 = vcombine.high %v3198, 0.0
      %v3382 = vunpack.c.l.s4 1983009808
      %v3383 = vunpack.c.0.s8 %v3382
      %v3384 = vlaneseq
      %v3385 = vshrl.u32 %v3384, 7
      %v3386 = vsub.s32 %v3383, %v3385
      %v3387 = vrot.slane %v3198, %v3386
      %v3389 = vunpack.c.l.s4 1983009808
      %v3390 = vunpack.c.0.s8 %v3389
      %v3391 = vlaneseq
      %v3392 = vshrl.u32 %v3391, 7
      %v3393 = vsub.s32 %v3390, %v3392
      %v3394 = vrot.slane %v3380, %v3393
      %v3395 = vcombine.low %v3341, %v3357
      %v3396 = vcombine.high %v3341, %v3357
      %v3398 = vunpack.c.l.s4 1934713408
      %v3399 = vunpack.c.0.s8 %v3398
      %v3400 = vlaneseq
      %v3401 = vshrl.u32 %v3400, 7
      %v3402 = vsub.s32 %v3399, %v3401
      %v3403 = vrot.slane %v3395, %v3402
      %v3405 = vunpack.c.l.s4 1934713408
      %v3406 = vunpack.c.0.s8 %v3405
      %v3407 = vlaneseq
      %v3408 = vshrl.u32 %v3407, 7
      %v3409 = vsub.s32 %v3406, %v3408
      %v3410 = vrot.slane %v3396, %v3409
      %v3411 = vcombine.low %v3348, %v3364
      %v3412 = vcombine.high %v3348, %v3364
      %v3414 = vunpack.c.l.s4 1934713408
      %v3415 = vunpack.c.0.s8 %v3414
      %v3416 = vlaneseq
      %v3417 = vshrl.u32 %v3416, 7
      %v3418 = vsub.s32 %v3415, %v3417
      %v3419 = vrot.slane %v3411, %v3418
      %v3421 = vunpack.c.l.s4 1934713408
      %v3422 = vunpack.c.0.s8 %v3421
      %v3423 = vlaneseq
      %v3424 = vshrl.u32 %v3423, 7
      %v3425 = vsub.s32 %v3422, %v3424
      %v3426 = vrot.slane %v3412, %v3425
      %v3427 = vcombine.low %v3372, %v3387
      %v3428 = vcombine.high %v3372, %v3387
      %v3430 = vunpack.c.l.s4 1934713408
      %v3431 = vunpack.c.0.s8 %v3430
      %v3432 = vlaneseq
      %v3433 = vshrl.u32 %v3432, 7
      %v3434 = vsub.s32 %v3431, %v3433
      %v3435 = vrot.slane %v3427, %v3434
      %v3437 = vunpack.c.l.s4 1934713408
      %v3438 = vunpack.c.0.s8 %v3437
      %v3439 = vlaneseq
      %v3440 = vshrl.u32 %v3439, 7
      %v3441 = vsub.s32 %v3438, %v3440
      %v3442 = vrot.slane %v3428, %v3441
      %v3443 = vcombine.low %v3379, %v3394
      %v3444 = vcombine.high %v3379, %v3394
      %v3446 = vunpack.c.l.s4 1934713408
      %v3447 = vunpack.c.0.s8 %v3446
      %v3448 = vlaneseq
      %v3449 = vshrl.u32 %v3448, 7
      %v3450 = vsub.s32 %v3447, %v3449
      %v3451 = vrot.slane %v3443, %v3450
      %v3453 = vunpack.c.l.s4 1934713408
      %v3454 = vunpack.c.0.s8 %v3453
      %v3455 = vlaneseq
      %v3456 = vshrl.u32 %v3455, 7
      %v3457 = vsub.s32 %v3454, %v3456
      %v3458 = vrot.slane %v3444, %v3457
      %v3459 = vcombine.low %v3403, %v3435
      %v3460 = vcombine.high %v3403, %v3435
      %v3461 = vcombine.low %v3410, %v3442
      %v3462 = vcombine.high %v3410, %v3442
      %v3463 = vcombine.low %v3419, %v3451
      %v3464 = vcombine.high %v3419, %v3451
      %v3465 = vcombine.low %v3426, %v3458
      %v3466 = vcombine.high %v3426, %v3458
      %3468 = vrot.lane.b32.xlu0 %v3326, 16
      %v3469 = vpop.permute.xlu0 %3468
      %3472 = vrot.lane.b32.xlu0 %v3327, 32
      %v3473 = vpop.permute.xlu0 %3472
      %3476 = vrot.lane.b32.xlu0 %v3328, 48
      %v3477 = vpop.permute.xlu0 %3476
      %3480 = vrot.lane.b32.xlu0 %v3329, 64
      %v3481 = vpop.permute.xlu0 %3480
      %3484 = vrot.lane.b32.xlu0 %v3330, 80
      %v3485 = vpop.permute.xlu0 %3484
      %3488 = vrot.lane.b32.xlu0 %v3331, 96
      %v3489 = vpop.permute.xlu0 %3488
      %3492 = vrot.lane.b32.xlu0 %v3332, 112
      %v3493 = vpop.permute.xlu0 %3492
      %3496 = vrot.lane.b32.xlu0 %v3460, 16
      %v3497 = vpop.permute.xlu0 %3496
      %3500 = vrot.lane.b32.xlu0 %v3461, 32
      %v3501 = vpop.permute.xlu0 %3500
      %3504 = vrot.lane.b32.xlu0 %v3462, 48
      %v3505 = vpop.permute.xlu0 %3504
      %3508 = vrot.lane.b32.xlu0 %v3463, 64
      %v3509 = vpop.permute.xlu0 %3508
      %3512 = vrot.lane.b32.xlu0 %v3464, 80
      %v3513 = vpop.permute.xlu0 %3512
      %3516 = vrot.lane.b32.xlu0 %v3465, 96
      %v3517 = vpop.permute.xlu0 %3516
      %3520 = vrot.lane.b32.xlu0 %v3466, 112
      %v3521 = vpop.permute.xlu0 %3520
      %v3523 = vsel %vm1182, %v3325, %v3469
      %v3524 = vsel %vm1184, %v3523, %v3473
      %v3525 = vsel %vm1186, %v3524, %v3477
      %v3526 = vsel %vm1188, %v3525, %v3481
      %v3527 = vsel %vm1190, %v3526, %v3485
      %v3528 = vsel %vm1192, %v3527, %v3489
      %v3529 = vsel %vm1194, %v3528, %v3493
      %v3530 = vsel %vm1182, %v3459, %v3497
      %v3531 = vsel %vm1184, %v3530, %v3501
      %v3532 = vsel %vm1186, %v3531, %v3505
      %v3533 = vsel %vm1188, %v3532, %v3509
      %v3534 = vsel %vm1190, %v3533, %v3513
      %v3535 = vsel %vm1192, %v3534, %v3517
      %v3536 = vsel %vm1194, %v3535, %v3521
      %v3539 = vrot.slane %v3529, 4
      %v3540 = vrot.slane %v3536, 4
      %3543 = vst [vmem:[#allocation3 + $0x40] sm:$0xf0] %v3539
      %3544 = vst [vmem:[#allocation3 + $0x48] sm:$0xf0] %v3540
      %3545 = vst [vmem:[#allocation3 + $0x50] sm:$0x3] %v3539
      %3546 = vst [vmem:[#allocation3 + $0x58] sm:$0x3] %v3540
      %v3547 = vld [vmem:[#allocation2 + $0x2] sm:$0xff]
      %v3548 = vld [vmem:[#allocation2 + $0xa] sm:$0xff]
      %v3549 = vld [vmem:[#allocation2 + $0x1a] sm:$0xff]
      %v3550 = vld [vmem:[#allocation2 + $0x22] sm:$0xff]
      %v3551 = vld [vmem:[#allocation2 + $0x32] sm:$0xff]
      %v3552 = vld [vmem:[#allocation2 + $0x3a] sm:$0xff]
      %v3553 = vld [vmem:[#allocation2 + $0x4a] sm:$0xff]
      %v3554 = vld [vmem:[#allocation2 + $0x52] sm:$0xff]
      %v3555 = vld [vmem:[#allocation2 + $0x62] sm:$0xff]
      %v3556 = vld [vmem:[#allocation2 + $0x6a] sm:$0xff]
      %v3557 = vld [vmem:[#allocation2 + $0x7a] sm:$0xff]
      %v3558 = vld [vmem:[#allocation2 + $0x82] sm:$0xff]
      %3571 = vrot.lane.b32.xlu0 %v3547, 127
      %v3572 = vpop.permute.xlu0 %3571
      %3573 = vrot.lane.b32.xlu0 %v3548, 127
      %v3574 = vpop.permute.xlu0 %3573
      %3575 = vrot.lane.b32.xlu0 %v3549, 127
      %v3576 = vpop.permute.xlu0 %3575
      %3577 = vrot.lane.b32.xlu0 %v3550, 127
      %v3578 = vpop.permute.xlu0 %3577
      %3579 = vrot.lane.b32.xlu0 %v3551, 127
      %v3580 = vpop.permute.xlu0 %3579
      %3581 = vrot.lane.b32.xlu0 %v3552, 127
      %v3582 = vpop.permute.xlu0 %3581
      %3583 = vrot.lane.b32.xlu0 %v3553, 127
      %v3584 = vpop.permute.xlu0 %3583
      %3585 = vrot.lane.b32.xlu0 %v3554, 127
      %v3586 = vpop.permute.xlu0 %3585
      %3587 = vrot.lane.b32.xlu0 %v3555, 127
      %v3588 = vpop.permute.xlu0 %3587
      %3589 = vrot.lane.b32.xlu0 %v3556, 127
      %v3590 = vpop.permute.xlu0 %3589
      %3591 = vrot.lane.b32.xlu0 %v3557, 127
      %v3592 = vpop.permute.xlu0 %3591
      %3593 = vrot.lane.b32.xlu0 %v3558, 127
      %v3594 = vpop.permute.xlu0 %3593
      %v3607 = vcombine.low %v3572, %v3580
      %v3608 = vcombine.high %v3572, %v3580
      %v3610 = vunpack.c.l.s4 1983009808
      %v3611 = vunpack.c.0.s8 %v3610
      %v3612 = vlaneseq
      %v3613 = vshrl.u32 %v3612, 7
      %v3614 = vsub.s32 %v3611, %v3613
      %v3615 = vrot.slane %v3607, %v3614
      %v3617 = vunpack.c.l.s4 1983009808
      %v3618 = vunpack.c.0.s8 %v3617
      %v3619 = vlaneseq
      %v3620 = vshrl.u32 %v3619, 7
      %v3621 = vsub.s32 %v3618, %v3620
      %v3622 = vrot.slane %v3608, %v3621
      %v3623 = vcombine.low %v3576, %v3584
      %v3624 = vcombine.high %v3576, %v3584
      %v3626 = vunpack.c.l.s4 1983009808
      %v3627 = vunpack.c.0.s8 %v3626
      %v3628 = vlaneseq
      %v3629 = vshrl.u32 %v3628, 7
      %v3630 = vsub.s32 %v3627, %v3629
      %v3631 = vrot.slane %v3623, %v3630
      %v3633 = vunpack.c.l.s4 1983009808
      %v3634 = vunpack.c.0.s8 %v3633
      %v3635 = vlaneseq
      %v3636 = vshrl.u32 %v3635, 7
      %v3637 = vsub.s32 %v3634, %v3636
      %v3638 = vrot.slane %v3624, %v3637
      %v3639 = vcombine.high %v3588, 0.0
      %v3641 = vunpack.c.l.s4 1983009808
      %v3642 = vunpack.c.0.s8 %v3641
      %v3643 = vlaneseq
      %v3644 = vshrl.u32 %v3643, 7
      %v3645 = vsub.s32 %v3642, %v3644
      %v3646 = vrot.slane %v3588, %v3645
      %v3648 = vunpack.c.l.s4 1983009808
      %v3649 = vunpack.c.0.s8 %v3648
      %v3650 = vlaneseq
      %v3651 = vshrl.u32 %v3650, 7
      %v3652 = vsub.s32 %v3649, %v3651
      %v3653 = vrot.slane %v3639, %v3652
      %v3654 = vcombine.high %v3592, 0.0
      %v3656 = vunpack.c.l.s4 1983009808
      %v3657 = vunpack.c.0.s8 %v3656
      %v3658 = vlaneseq
      %v3659 = vshrl.u32 %v3658, 7
      %v3660 = vsub.s32 %v3657, %v3659
      %v3661 = vrot.slane %v3592, %v3660
      %v3663 = vunpack.c.l.s4 1983009808
      %v3664 = vunpack.c.0.s8 %v3663
      %v3665 = vlaneseq
      %v3666 = vshrl.u32 %v3665, 7
      %v3667 = vsub.s32 %v3664, %v3666
      %v3668 = vrot.slane %v3654, %v3667
      %v3669 = vcombine.low %v3615, %v3631
      %v3670 = vcombine.high %v3615, %v3631
      %v3672 = vunpack.c.l.s4 1934713408
      %v3673 = vunpack.c.0.s8 %v3672
      %v3674 = vlaneseq
      %v3675 = vshrl.u32 %v3674, 7
      %v3676 = vsub.s32 %v3673, %v3675
      %v3677 = vrot.slane %v3669, %v3676
      %v3679 = vunpack.c.l.s4 1934713408
      %v3680 = vunpack.c.0.s8 %v3679
      %v3681 = vlaneseq
      %v3682 = vshrl.u32 %v3681, 7
      %v3683 = vsub.s32 %v3680, %v3682
      %v3684 = vrot.slane %v3670, %v3683
      %v3685 = vcombine.low %v3622, %v3638
      %v3686 = vcombine.high %v3622, %v3638
      %v3688 = vunpack.c.l.s4 1934713408
      %v3689 = vunpack.c.0.s8 %v3688
      %v3690 = vlaneseq
      %v3691 = vshrl.u32 %v3690, 7
      %v3692 = vsub.s32 %v3689, %v3691
      %v3693 = vrot.slane %v3685, %v3692
      %v3695 = vunpack.c.l.s4 1934713408
      %v3696 = vunpack.c.0.s8 %v3695
      %v3697 = vlaneseq
      %v3698 = vshrl.u32 %v3697, 7
      %v3699 = vsub.s32 %v3696, %v3698
      %v3700 = vrot.slane %v3686, %v3699
      %v3701 = vcombine.low %v3646, %v3661
      %v3702 = vcombine.high %v3646, %v3661
      %v3704 = vunpack.c.l.s4 1934713408
      %v3705 = vunpack.c.0.s8 %v3704
      %v3706 = vlaneseq
      %v3707 = vshrl.u32 %v3706, 7
      %v3708 = vsub.s32 %v3705, %v3707
      %v3709 = vrot.slane %v3701, %v3708
      %v3711 = vunpack.c.l.s4 1934713408
      %v3712 = vunpack.c.0.s8 %v3711
      %v3713 = vlaneseq
      %v3714 = vshrl.u32 %v3713, 7
      %v3715 = vsub.s32 %v3712, %v3714
      %v3716 = vrot.slane %v3702, %v3715
      %v3717 = vcombine.low %v3653, %v3668
      %v3718 = vcombine.high %v3653, %v3668
      %v3720 = vunpack.c.l.s4 1934713408
      %v3721 = vunpack.c.0.s8 %v3720
      %v3722 = vlaneseq
      %v3723 = vshrl.u32 %v3722, 7
      %v3724 = vsub.s32 %v3721, %v3723
      %v3725 = vrot.slane %v3717, %v3724
      %v3727 = vunpack.c.l.s4 1934713408
      %v3728 = vunpack.c.0.s8 %v3727
      %v3729 = vlaneseq
      %v3730 = vshrl.u32 %v3729, 7
      %v3731 = vsub.s32 %v3728, %v3730
      %v3732 = vrot.slane %v3718, %v3731
      %v3733 = vcombine.low %v3677, %v3709
      %v3734 = vcombine.high %v3677, %v3709
      %v3735 = vcombine.low %v3684, %v3716
      %v3736 = vcombine.high %v3684, %v3716
      %v3737 = vcombine.low %v3693, %v3725
      %v3738 = vcombine.high %v3693, %v3725
      %v3739 = vcombine.low %v3700, %v3732
      %v3740 = vcombine.high %v3700, %v3732
      %v3741 = vcombine.low %v3574, %v3582
      %v3742 = vcombine.high %v3574, %v3582
      %v3744 = vunpack.c.l.s4 1983009808
      %v3745 = vunpack.c.0.s8 %v3744
      %v3746 = vlaneseq
      %v3747 = vshrl.u32 %v3746, 7
      %v3748 = vsub.s32 %v3745, %v3747
      %v3749 = vrot.slane %v3741, %v3748
      %v3751 = vunpack.c.l.s4 1983009808
      %v3752 = vunpack.c.0.s8 %v3751
      %v3753 = vlaneseq
      %v3754 = vshrl.u32 %v3753, 7
      %v3755 = vsub.s32 %v3752, %v3754
      %v3756 = vrot.slane %v3742, %v3755
      %v3757 = vcombine.low %v3578, %v3586
      %v3758 = vcombine.high %v3578, %v3586
      %v3760 = vunpack.c.l.s4 1983009808
      %v3761 = vunpack.c.0.s8 %v3760
      %v3762 = vlaneseq
      %v3763 = vshrl.u32 %v3762, 7
      %v3764 = vsub.s32 %v3761, %v3763
      %v3765 = vrot.slane %v3757, %v3764
      %v3767 = vunpack.c.l.s4 1983009808
      %v3768 = vunpack.c.0.s8 %v3767
      %v3769 = vlaneseq
      %v3770 = vshrl.u32 %v3769, 7
      %v3771 = vsub.s32 %v3768, %v3770
      %v3772 = vrot.slane %v3758, %v3771
      %v3773 = vcombine.high %v3590, 0.0
      %v3775 = vunpack.c.l.s4 1983009808
      %v3776 = vunpack.c.0.s8 %v3775
      %v3777 = vlaneseq
      %v3778 = vshrl.u32 %v3777, 7
      %v3779 = vsub.s32 %v3776, %v3778
      %v3780 = vrot.slane %v3590, %v3779
      %v3782 = vunpack.c.l.s4 1983009808
      %v3783 = vunpack.c.0.s8 %v3782
      %v3784 = vlaneseq
      %v3785 = vshrl.u32 %v3784, 7
      %v3786 = vsub.s32 %v3783, %v3785
      %v3787 = vrot.slane %v3773, %v3786
      %v3788 = vcombine.high %v3594, 0.0
      %v3790 = vunpack.c.l.s4 1983009808
      %v3791 = vunpack.c.0.s8 %v3790
      %v3792 = vlaneseq
      %v3793 = vshrl.u32 %v3792, 7
      %v3794 = vsub.s32 %v3791, %v3793
      %v3795 = vrot.slane %v3594, %v3794
      %v3797 = vunpack.c.l.s4 1983009808
      %v3798 = vunpack.c.0.s8 %v3797
      %v3799 = vlaneseq
      %v3800 = vshrl.u32 %v3799, 7
      %v3801 = vsub.s32 %v3798, %v3800
      %v3802 = vrot.slane %v3788, %v3801
      %v3803 = vcombine.low %v3749, %v3765
      %v3804 = vcombine.high %v3749, %v3765
      %v3806 = vunpack.c.l.s4 1934713408
      %v3807 = vunpack.c.0.s8 %v3806
      %v3808 = vlaneseq
      %v3809 = vshrl.u32 %v3808, 7
      %v3810 = vsub.s32 %v3807, %v3809
      %v3811 = vrot.slane %v3803, %v3810
      %v3813 = vunpack.c.l.s4 1934713408
      %v3814 = vunpack.c.0.s8 %v3813
      %v3815 = vlaneseq
      %v3816 = vshrl.u32 %v3815, 7
      %v3817 = vsub.s32 %v3814, %v3816
      %v3818 = vrot.slane %v3804, %v3817
      %v3819 = vcombine.low %v3756, %v3772
      %v3820 = vcombine.high %v3756, %v3772
      %v3822 = vunpack.c.l.s4 1934713408
      %v3823 = vunpack.c.0.s8 %v3822
      %v3824 = vlaneseq
      %v3825 = vshrl.u32 %v3824, 7
      %v3826 = vsub.s32 %v3823, %v3825
      %v3827 = vrot.slane %v3819, %v3826
      %v3829 = vunpack.c.l.s4 1934713408
      %v3830 = vunpack.c.0.s8 %v3829
      %v3831 = vlaneseq
      %v3832 = vshrl.u32 %v3831, 7
      %v3833 = vsub.s32 %v3830, %v3832
      %v3834 = vrot.slane %v3820, %v3833
      %v3835 = vcombine.low %v3780, %v3795
      %v3836 = vcombine.high %v3780, %v3795
      %v3838 = vunpack.c.l.s4 1934713408
      %v3839 = vunpack.c.0.s8 %v3838
      %v3840 = vlaneseq
      %v3841 = vshrl.u32 %v3840, 7
      %v3842 = vsub.s32 %v3839, %v3841
      %v3843 = vrot.slane %v3835, %v3842
      %v3845 = vunpack.c.l.s4 1934713408
      %v3846 = vunpack.c.0.s8 %v3845
      %v3847 = vlaneseq
      %v3848 = vshrl.u32 %v3847, 7
      %v3849 = vsub.s32 %v3846, %v3848
      %v3850 = vrot.slane %v3836, %v3849
      %v3851 = vcombine.low %v3787, %v3802
      %v3852 = vcombine.high %v3787, %v3802
      %v3854 = vunpack.c.l.s4 1934713408
      %v3855 = vunpack.c.0.s8 %v3854
      %v3856 = vlaneseq
      %v3857 = vshrl.u32 %v3856, 7
      %v3858 = vsub.s32 %v3855, %v3857
      %v3859 = vrot.slane %v3851, %v3858
      %v3861 = vunpack.c.l.s4 1934713408
      %v3862 = vunpack.c.0.s8 %v3861
      %v3863 = vlaneseq
      %v3864 = vshrl.u32 %v3863, 7
      %v3865 = vsub.s32 %v3862, %v3864
      %v3866 = vrot.slane %v3852, %v3865
      %v3867 = vcombine.low %v3811, %v3843
      %v3868 = vcombine.high %v3811, %v3843
      %v3869 = vcombine.low %v3818, %v3850
      %v3870 = vcombine.high %v3818, %v3850
      %v3871 = vcombine.low %v3827, %v3859
      %v3872 = vcombine.high %v3827, %v3859
      %v3873 = vcombine.low %v3834, %v3866
      %v3874 = vcombine.high %v3834, %v3866
      %3876 = vrot.lane.b32.xlu0 %v3734, 16
      %v3877 = vpop.permute.xlu0 %3876
      %3880 = vrot.lane.b32.xlu0 %v3735, 32
      %v3881 = vpop.permute.xlu0 %3880
      %3884 = vrot.lane.b32.xlu0 %v3736, 48
      %v3885 = vpop.permute.xlu0 %3884
      %3888 = vrot.lane.b32.xlu0 %v3737, 64
      %v3889 = vpop.permute.xlu0 %3888
      %3892 = vrot.lane.b32.xlu0 %v3738, 80
      %v3893 = vpop.permute.xlu0 %3892
      %3896 = vrot.lane.b32.xlu0 %v3739, 96
      %v3897 = vpop.permute.xlu0 %3896
      %3900 = vrot.lane.b32.xlu0 %v3740, 112
      %v3901 = vpop.permute.xlu0 %3900
      %3904 = vrot.lane.b32.xlu0 %v3868, 16
      %v3905 = vpop.permute.xlu0 %3904
      %3908 = vrot.lane.b32.xlu0 %v3869, 32
      %v3909 = vpop.permute.xlu0 %3908
      %3912 = vrot.lane.b32.xlu0 %v3870, 48
      %v3913 = vpop.permute.xlu0 %3912
      %3916 = vrot.lane.b32.xlu0 %v3871, 64
      %v3917 = vpop.permute.xlu0 %3916
      %3920 = vrot.lane.b32.xlu0 %v3872, 80
      %v3921 = vpop.permute.xlu0 %3920
      %3924 = vrot.lane.b32.xlu0 %v3873, 96
      %v3925 = vpop.permute.xlu0 %3924
      %3928 = vrot.lane.b32.xlu0 %v3874, 112
      %v3929 = vpop.permute.xlu0 %3928
      %v3931 = vsel %vm1182, %v3733, %v3877
      %v3932 = vsel %vm1184, %v3931, %v3881
      %v3933 = vsel %vm1186, %v3932, %v3885
      %v3934 = vsel %vm1188, %v3933, %v3889
      %v3935 = vsel %vm1190, %v3934, %v3893
      %v3936 = vsel %vm1192, %v3935, %v3897
      %v3937 = vsel %vm1194, %v3936, %v3901
      %v3938 = vsel %vm1182, %v3867, %v3905
      %v3939 = vsel %vm1184, %v3938, %v3909
      %v3940 = vsel %vm1186, %v3939, %v3913
      %v3941 = vsel %vm1188, %v3940, %v3917
      %v3942 = vsel %vm1190, %v3941, %v3921
      %v3943 = vsel %vm1192, %v3942, %v3925
      %v3944 = vsel %vm1194, %v3943, %v3929
      %v3947 = vrot.slane %v3937, 6
      %v3948 = vrot.slane %v3944, 6
      %3951 = vst [vmem:[#allocation3 + $0x50] sm:$0xfc] %v3947
      %3952 = vst [vmem:[#allocation3 + $0x58] sm:$0xfc] %v3948
      %v3953 = vld [vmem:[#allocation2 + $0x2] sm:$0xff]
      %v3954 = vld [vmem:[#allocation2 + $0xa] sm:$0xff]
      %v3955 = vld [vmem:[#allocation2 + $0x1a] sm:$0xff]
      %v3956 = vld [vmem:[#allocation2 + $0x22] sm:$0xff]
      %v3957 = vld [vmem:[#allocation2 + $0x32] sm:$0xff]
      %v3958 = vld [vmem:[#allocation2 + $0x3a] sm:$0xff]
      %v3959 = vld [vmem:[#allocation2 + $0x4a] sm:$0xff]
      %v3960 = vld [vmem:[#allocation2 + $0x52] sm:$0xff]
      %v3961 = vld [vmem:[#allocation2 + $0x62] sm:$0xff]
      %v3962 = vld [vmem:[#allocation2 + $0x6a] sm:$0xff]
      %v3963 = vld [vmem:[#allocation2 + $0x7a] sm:$0xff]
      %v3964 = vld [vmem:[#allocation2 + $0x82] sm:$0xff]
      %3977 = vrot.lane.b32.xlu0 %v3953, 126
      %v3978 = vpop.permute.xlu0 %3977
      %3979 = vrot.lane.b32.xlu0 %v3954, 126
      %v3980 = vpop.permute.xlu0 %3979
      %3981 = vrot.lane.b32.xlu0 %v3955, 126
      %v3982 = vpop.permute.xlu0 %3981
      %3983 = vrot.lane.b32.xlu0 %v3956, 126
      %v3984 = vpop.permute.xlu0 %3983
      %3985 = vrot.lane.b32.xlu0 %v3957, 126
      %v3986 = vpop.permute.xlu0 %3985
      %3987 = vrot.lane.b32.xlu0 %v3958, 126
      %v3988 = vpop.permute.xlu0 %3987
      %3989 = vrot.lane.b32.xlu0 %v3959, 126
      %v3990 = vpop.permute.xlu0 %3989
      %3991 = vrot.lane.b32.xlu0 %v3960, 126
      %v3992 = vpop.permute.xlu0 %3991
      %3993 = vrot.lane.b32.xlu0 %v3961, 126
      %v3994 = vpop.permute.xlu0 %3993
      %3995 = vrot.lane.b32.xlu0 %v3962, 126
      %v3996 = vpop.permute.xlu0 %3995
      %3997 = vrot.lane.b32.xlu0 %v3963, 126
      %v3998 = vpop.permute.xlu0 %3997
      %3999 = vrot.lane.b32.xlu0 %v3964, 126
      %v4000 = vpop.permute.xlu0 %3999
      %v4013 = vcombine.low %v3978, %v3986
      %v4014 = vcombine.high %v3978, %v3986
      %v4016 = vunpack.c.l.s4 1983009808
      %v4017 = vunpack.c.0.s8 %v4016
      %v4018 = vlaneseq
      %v4019 = vshrl.u32 %v4018, 7
      %v4020 = vsub.s32 %v4017, %v4019
      %v4021 = vrot.slane %v4013, %v4020
      %v4023 = vunpack.c.l.s4 1983009808
      %v4024 = vunpack.c.0.s8 %v4023
      %v4025 = vlaneseq
      %v4026 = vshrl.u32 %v4025, 7
      %v4027 = vsub.s32 %v4024, %v4026
      %v4028 = vrot.slane %v4014, %v4027
      %v4029 = vcombine.low %v3982, %v3990
      %v4030 = vcombine.high %v3982, %v3990
      %v4032 = vunpack.c.l.s4 1983009808
      %v4033 = vunpack.c.0.s8 %v4032
      %v4034 = vlaneseq
      %v4035 = vshrl.u32 %v4034, 7
      %v4036 = vsub.s32 %v4033, %v4035
      %v4037 = vrot.slane %v4029, %v4036
      %v4039 = vunpack.c.l.s4 1983009808
      %v4040 = vunpack.c.0.s8 %v4039
      %v4041 = vlaneseq
      %v4042 = vshrl.u32 %v4041, 7
      %v4043 = vsub.s32 %v4040, %v4042
      %v4044 = vrot.slane %v4030, %v4043
      %v4045 = vcombine.high %v3994, 0.0
      %v4047 = vunpack.c.l.s4 1983009808
      %v4048 = vunpack.c.0.s8 %v4047
      %v4049 = vlaneseq
      %v4050 = vshrl.u32 %v4049, 7
      %v4051 = vsub.s32 %v4048, %v4050
      %v4052 = vrot.slane %v3994, %v4051
      %v4054 = vunpack.c.l.s4 1983009808
      %v4055 = vunpack.c.0.s8 %v4054
      %v4056 = vlaneseq
      %v4057 = vshrl.u32 %v4056, 7
      %v4058 = vsub.s32 %v4055, %v4057
      %v4059 = vrot.slane %v4045, %v4058
      %v4060 = vcombine.high %v3998, 0.0
      %v4062 = vunpack.c.l.s4 1983009808
      %v4063 = vunpack.c.0.s8 %v4062
      %v4064 = vlaneseq
      %v4065 = vshrl.u32 %v4064, 7
      %v4066 = vsub.s32 %v4063, %v4065
      %v4067 = vrot.slane %v3998, %v4066
      %v4069 = vunpack.c.l.s4 1983009808
      %v4070 = vunpack.c.0.s8 %v4069
      %v4071 = vlaneseq
      %v4072 = vshrl.u32 %v4071, 7
      %v4073 = vsub.s32 %v4070, %v4072
      %v4074 = vrot.slane %v4060, %v4073
      %v4075 = vcombine.low %v4021, %v4037
      %v4076 = vcombine.high %v4021, %v4037
      %v4078 = vunpack.c.l.s4 1934713408
      %v4079 = vunpack.c.0.s8 %v4078
      %v4080 = vlaneseq
      %v4081 = vshrl.u32 %v4080, 7
      %v4082 = vsub.s32 %v4079, %v4081
      %v4083 = vrot.slane %v4075, %v4082
      %v4085 = vunpack.c.l.s4 1934713408
      %v4086 = vunpack.c.0.s8 %v4085
      %v4087 = vlaneseq
      %v4088 = vshrl.u32 %v4087, 7
      %v4089 = vsub.s32 %v4086, %v4088
      %v4090 = vrot.slane %v4076, %v4089
      %v4091 = vcombine.low %v4028, %v4044
      %v4092 = vcombine.high %v4028, %v4044
      %v4094 = vunpack.c.l.s4 1934713408
      %v4095 = vunpack.c.0.s8 %v4094
      %v4096 = vlaneseq
      %v4097 = vshrl.u32 %v4096, 7
      %v4098 = vsub.s32 %v4095, %v4097
      %v4099 = vrot.slane %v4091, %v4098
      %v4101 = vunpack.c.l.s4 1934713408
      %v4102 = vunpack.c.0.s8 %v4101
      %v4103 = vlaneseq
      %v4104 = vshrl.u32 %v4103, 7
      %v4105 = vsub.s32 %v4102, %v4104
      %v4106 = vrot.slane %v4092, %v4105
      %v4107 = vcombine.low %v4052, %v4067
      %v4108 = vcombine.high %v4052, %v4067
      %v4110 = vunpack.c.l.s4 1934713408
      %v4111 = vunpack.c.0.s8 %v4110
      %v4112 = vlaneseq
      %v4113 = vshrl.u32 %v4112, 7
      %v4114 = vsub.s32 %v4111, %v4113
      %v4115 = vrot.slane %v4107, %v4114
      %v4117 = vunpack.c.l.s4 1934713408
      %v4118 = vunpack.c.0.s8 %v4117
      %v4119 = vlaneseq
      %v4120 = vshrl.u32 %v4119, 7
      %v4121 = vsub.s32 %v4118, %v4120
      %v4122 = vrot.slane %v4108, %v4121
      %v4123 = vcombine.low %v4059, %v4074
      %v4124 = vcombine.high %v4059, %v4074
      %v4126 = vunpack.c.l.s4 1934713408
      %v4127 = vunpack.c.0.s8 %v4126
      %v4128 = vlaneseq
      %v4129 = vshrl.u32 %v4128, 7
      %v4130 = vsub.s32 %v4127, %v4129
      %v4131 = vrot.slane %v4123, %v4130
      %v4133 = vunpack.c.l.s4 1934713408
      %v4134 = vunpack.c.0.s8 %v4133
      %v4135 = vlaneseq
      %v4136 = vshrl.u32 %v4135, 7
      %v4137 = vsub.s32 %v4134, %v4136
      %v4138 = vrot.slane %v4124, %v4137
      %v4139 = vcombine.low %v4083, %v4115
      %v4140 = vcombine.high %v4083, %v4115
      %v4141 = vcombine.low %v4090, %v4122
      %v4142 = vcombine.high %v4090, %v4122
      %v4143 = vcombine.low %v4099, %v4131
      %v4144 = vcombine.high %v4099, %v4131
      %v4145 = vcombine.low %v4106, %v4138
      %v4146 = vcombine.high %v4106, %v4138
      %v4147 = vcombine.low %v3980, %v3988
      %v4148 = vcombine.high %v3980, %v3988
      %v4150 = vunpack.c.l.s4 1983009808
      %v4151 = vunpack.c.0.s8 %v4150
      %v4152 = vlaneseq
      %v4153 = vshrl.u32 %v4152, 7
      %v4154 = vsub.s32 %v4151, %v4153
      %v4155 = vrot.slane %v4147, %v4154
      %v4157 = vunpack.c.l.s4 1983009808
      %v4158 = vunpack.c.0.s8 %v4157
      %v4159 = vlaneseq
      %v4160 = vshrl.u32 %v4159, 7
      %v4161 = vsub.s32 %v4158, %v4160
      %v4162 = vrot.slane %v4148, %v4161
      %v4163 = vcombine.low %v3984, %v3992
      %v4164 = vcombine.high %v3984, %v3992
      %v4166 = vunpack.c.l.s4 1983009808
      %v4167 = vunpack.c.0.s8 %v4166
      %v4168 = vlaneseq
      %v4169 = vshrl.u32 %v4168, 7
      %v4170 = vsub.s32 %v4167, %v4169
      %v4171 = vrot.slane %v4163, %v4170
      %v4173 = vunpack.c.l.s4 1983009808
      %v4174 = vunpack.c.0.s8 %v4173
      %v4175 = vlaneseq
      %v4176 = vshrl.u32 %v4175, 7
      %v4177 = vsub.s32 %v4174, %v4176
      %v4178 = vrot.slane %v4164, %v4177
      %v4179 = vcombine.high %v3996, 0.0
      %v4181 = vunpack.c.l.s4 1983009808
      %v4182 = vunpack.c.0.s8 %v4181
      %v4183 = vlaneseq
      %v4184 = vshrl.u32 %v4183, 7
      %v4185 = vsub.s32 %v4182, %v4184
      %v4186 = vrot.slane %v3996, %v4185
      %v4188 = vunpack.c.l.s4 1983009808
      %v4189 = vunpack.c.0.s8 %v4188
      %v4190 = vlaneseq
      %v4191 = vshrl.u32 %v4190, 7
      %v4192 = vsub.s32 %v4189, %v4191
      %v4193 = vrot.slane %v4179, %v4192
      %v4194 = vcombine.high %v4000, 0.0
      %v4196 = vunpack.c.l.s4 1983009808
      %v4197 = vunpack.c.0.s8 %v4196
      %v4198 = vlaneseq
      %v4199 = vshrl.u32 %v4198, 7
      %v4200 = vsub.s32 %v4197, %v4199
      %v4201 = vrot.slane %v4000, %v4200
      %v4203 = vunpack.c.l.s4 1983009808
      %v4204 = vunpack.c.0.s8 %v4203
      %v4205 = vlaneseq
      %v4206 = vshrl.u32 %v4205, 7
      %v4207 = vsub.s32 %v4204, %v4206
      %v4208 = vrot.slane %v4194, %v4207
      %v4209 = vcombine.low %v4155, %v4171
      %v4210 = vcombine.high %v4155, %v4171
      %v4212 = vunpack.c.l.s4 1934713408
      %v4213 = vunpack.c.0.s8 %v4212
      %v4214 = vlaneseq
      %v4215 = vshrl.u32 %v4214, 7
      %v4216 = vsub.s32 %v4213, %v4215
      %v4217 = vrot.slane %v4209, %v4216
      %v4219 = vunpack.c.l.s4 1934713408
      %v4220 = vunpack.c.0.s8 %v4219
      %v4221 = vlaneseq
      %v4222 = vshrl.u32 %v4221, 7
      %v4223 = vsub.s32 %v4220, %v4222
      %v4224 = vrot.slane %v4210, %v4223
      %v4225 = vcombine.low %v4162, %v4178
      %v4226 = vcombine.high %v4162, %v4178
      %v4228 = vunpack.c.l.s4 1934713408
      %v4229 = vunpack.c.0.s8 %v4228
      %v4230 = vlaneseq
      %v4231 = vshrl.u32 %v4230, 7
      %v4232 = vsub.s32 %v4229, %v4231
      %v4233 = vrot.slane %v4225, %v4232
      %v4235 = vunpack.c.l.s4 1934713408
      %v4236 = vunpack.c.0.s8 %v4235
      %v4237 = vlaneseq
      %v4238 = vshrl.u32 %v4237, 7
      %v4239 = vsub.s32 %v4236, %v4238
      %v4240 = vrot.slane %v4226, %v4239
      %v4241 = vcombine.low %v4186, %v4201
      %v4242 = vcombine.high %v4186, %v4201
      %v4244 = vunpack.c.l.s4 1934713408
      %v4245 = vunpack.c.0.s8 %v4244
      %v4246 = vlaneseq
      %v4247 = vshrl.u32 %v4246, 7
      %v4248 = vsub.s32 %v4245, %v4247
      %v4249 = vrot.slane %v4241, %v4248
      %v4251 = vunpack.c.l.s4 1934713408
      %v4252 = vunpack.c.0.s8 %v4251
      %v4253 = vlaneseq
      %v4254 = vshrl.u32 %v4253, 7
      %v4255 = vsub.s32 %v4252, %v4254
      %v4256 = vrot.slane %v4242, %v4255
      %v4257 = vcombine.low %v4193, %v4208
      %v4258 = vcombine.high %v4193, %v4208
      %v4260 = vunpack.c.l.s4 1934713408
      %v4261 = vunpack.c.0.s8 %v4260
      %v4262 = vlaneseq
      %v4263 = vshrl.u32 %v4262, 7
      %v4264 = vsub.s32 %v4261, %v4263
      %v4265 = vrot.slane %v4257, %v4264
      %v4267 = vunpack.c.l.s4 1934713408
      %v4268 = vunpack.c.0.s8 %v4267
      %v4269 = vlaneseq
      %v4270 = vshrl.u32 %v4269, 7
      %v4271 = vsub.s32 %v4268, %v4270
      %v4272 = vrot.slane %v4258, %v4271
      %v4273 = vcombine.low %v4217, %v4249
      %v4274 = vcombine.high %v4217, %v4249
      %v4275 = vcombine.low %v4224, %v4256
      %v4276 = vcombine.high %v4224, %v4256
      %v4277 = vcombine.low %v4233, %v4265
      %v4278 = vcombine.high %v4233, %v4265
      %v4279 = vcombine.low %v4240, %v4272
      %v4280 = vcombine.high %v4240, %v4272
      %4282 = vrot.lane.b32.xlu0 %v4140, 16
      %v4283 = vpop.permute.xlu0 %4282
      %4286 = vrot.lane.b32.xlu0 %v4141, 32
      %v4287 = vpop.permute.xlu0 %4286
      %4290 = vrot.lane.b32.xlu0 %v4142, 48
      %v4291 = vpop.permute.xlu0 %4290
      %4294 = vrot.lane.b32.xlu0 %v4143, 64
      %v4295 = vpop.permute.xlu0 %4294
      %4298 = vrot.lane.b32.xlu0 %v4144, 80
      %v4299 = vpop.permute.xlu0 %4298
      %4302 = vrot.lane.b32.xlu0 %v4145, 96
      %v4303 = vpop.permute.xlu0 %4302
      %4306 = vrot.lane.b32.xlu0 %v4146, 112
      %v4307 = vpop.permute.xlu0 %4306
      %4310 = vrot.lane.b32.xlu0 %v4274, 16
      %v4311 = vpop.permute.xlu0 %4310
      %4314 = vrot.lane.b32.xlu0 %v4275, 32
      %v4315 = vpop.permute.xlu0 %4314
      %4318 = vrot.lane.b32.xlu0 %v4276, 48
      %v4319 = vpop.permute.xlu0 %4318
      %4322 = vrot.lane.b32.xlu0 %v4277, 64
      %v4323 = vpop.permute.xlu0 %4322
      %4326 = vrot.lane.b32.xlu0 %v4278, 80
      %v4327 = vpop.permute.xlu0 %4326
      %4330 = vrot.lane.b32.xlu0 %v4279, 96
      %v4331 = vpop.permute.xlu0 %4330
      %4334 = vrot.lane.b32.xlu0 %v4280, 112
      %v4335 = vpop.permute.xlu0 %4334
      %v4337 = vsel %vm1182, %v4139, %v4283
      %v4338 = vsel %vm1184, %v4337, %v4287
      %v4339 = vsel %vm1186, %v4338, %v4291
      %v4340 = vsel %vm1188, %v4339, %v4295
      %v4341 = vsel %vm1190, %v4340, %v4299
      %v4342 = vsel %vm1192, %v4341, %v4303
      %v4343 = vsel %vm1194, %v4342, %v4307
      %v4344 = vsel %vm1182, %v4273, %v4311
      %v4345 = vsel %vm1184, %v4344, %v4315
      %v4346 = vsel %vm1186, %v4345, %v4319
      %v4347 = vsel %vm1188, %v4346, %v4323
      %v4348 = vsel %vm1190, %v4347, %v4327
      %v4349 = vsel %vm1192, %v4348, %v4331
      %v4350 = vsel %vm1194, %v4349, %v4335
      %4351 = vst [vmem:[#allocation3 + $0x60] sm:$0x3f] %v4343
      %4352 = vst [vmem:[#allocation3 + $0x68] sm:$0x3f] %v4350
      %v4353 = vld [vmem:[%s3] sm:$0xff]
      %v4354 = vld [vmem:[#allocation3] sm:$0xff]
      %v4355 = vld [vmem:[#allocation3 + $0x8] sm:$0xff]
      %v4356 = vld [vmem:[#allocation3 + $0x10] sm:$0xff]
      %v4357 = vld [vmem:[#allocation3 + $0x18] sm:$0xff]
      %v4358 = vld [vmem:[#allocation3 + $0x20] sm:$0xff]
      %v4359 = vld [vmem:[#allocation3 + $0x28] sm:$0xff]
      %v4360 = vld [vmem:[#allocation3 + $0x30] sm:$0xff]
      %v4361 = vld [vmem:[#allocation3 + $0x38] sm:$0xff]
      %v4362 = vld [vmem:[#allocation3 + $0x40] sm:$0xff]
      %v4363 = vld [vmem:[#allocation3 + $0x48] sm:$0xff]
      %v4364 = vld [vmem:[#allocation3 + $0x50] sm:$0xff]
      %v4365 = vld [vmem:[#allocation3 + $0x58] sm:$0xff]
      %v4366 = vld [vmem:[#allocation3 + $0x60] sm:$0x3f]
      %v4367 = vld [vmem:[#allocation3 + $0x68] sm:$0x3f]
      %v4368 = vld [vmem:[%s4] sm:$0xff]
      %4370 = vset.pattern.permute.xlu0 0
      %4371 = vperm.xlu0 %4370, %v4368
      %v4372 = vpop.permute.xlu0 %4371
      %vm4374 = vcmask 441344
      %v4376 = vsel %vm4374, %v4353, 0
      %vm4378 = vcmask 1045504
      %v4380 = vsel %vm4378, %v4366, 0
      %v4383 = vsel %vm4378, %v4367, 0
      %4385 = vmatprep.subr.mxu0 0.0
      %4386 = vmatpush1.msra.mxu0 0.0
      %4387 = vmatprep.subr.mxu0 0.0
      %4388 = vmatpush1.msra.mxu0 0.0
      %4389 = vmatprep.subr.mxu0 0.0
      %4390 = vmatpush1.msra.mxu0 0.0
      %4391 = vmatprep.subr.mxu0 0.0
      %4392 = vmatpush1.msra.mxu0 0.0
      %4393 = vmatprep.subr.mxu0 0.0
      %4394 = vmatpush1.msra.mxu0 0.0
      %4395 = vmatprep.subr.mxu0 0.0
      %4396 = vmatpush1.msra.mxu0 0.0
      %4397 = vmatprep.subr.mxu0 0.0
      %4398 = vmatpush1.msra.mxu0 0.0
      %4399 = vmatprep.subr.mxu0 0.0
      %4400 = vmatpush1.msra.mxu0 0.0
      %4401 = vmatprep.subr.mxu0 0.0
      %4402 = vmatpush1.msra.mxu0 0.0
      %4403 = vmatprep.subr.mxu0 %v4383
      %4404 = vmatpush1.msra.mxu0 %v4380
      %4405 = vmatprep.subr.mxu0 %v4365
      %4406 = vmatpush1.msra.mxu0 %v4364
      %4407 = vmatprep.subr.mxu0 %v4363
      %4408 = vmatpush1.msra.mxu0 %v4362
      %4409 = vmatprep.subr.mxu0 %v4361
      %4410 = vmatpush1.msra.mxu0 %v4360
      %4411 = vmatprep.subr.mxu0 %v4359
      %4412 = vmatpush1.msra.mxu0 %v4358
      %4413 = vmatprep.subr.mxu0 %v4357
      %4414 = vmatpush1.msra.mxu0 %v4356
      %4415 = vmatprep.subr.mxu0 %v4355
      %4416 = vmatpush1.msra.mxu0 %v4354
      %4417 = vmatprep.subr.mxu0 0.0
      %4418 = vmatpush2.msra.mxu0 0.0
      %4419 = vmatprep.subr.mxu0 0.0
      %4420 = vmatpush2.msra.mxu0 0.0
      %4421 = vmatprep.subr.mxu0 0.0
      %4422 = vmatpush2.msra.mxu0 0.0
      %4423 = vmatprep.subr.mxu0 0.0
      %4424 = vmatpush2.msra.mxu0 0.0
      %4425 = vmatprep.subr.mxu0 0.0
      %4426 = vmatpush2.msra.mxu0 0.0
      %4427 = vmatprep.subr.mxu0 0.0
      %4428 = vmatpush2.msra.mxu0 0.0
      %4429 = vmatprep.subr.mxu0 0.0
      %4430 = vmatpush2.msra.mxu0 0.0
      %4431 = vmatprep.subr.mxu0 0.0
      %4432 = vmatpush2.msra.mxu0 0.0
      %4433 = vmatprep.subr.mxu0 0.0
      %4434 = vmatpush2.msra.mxu0 0.0
      %4435 = vmatprep.subr.mxu0 0.0
      %4436 = vmatpush2.msra.mxu0 0.0
      %4437 = vmatprep.subr.mxu0 0.0
      %4438 = vmatpush2.msra.mxu0 0.0
      %4439 = vmatprep.subr.mxu0 0.0
      %4440 = vmatpush2.msra.mxu0 0.0
      %4441 = vmatprep.subr.mxu0 0.0
      %4442 = vmatpush2.msra.mxu0 0.0
      %4443 = vmatprep.subr.mxu0 0.0
      %4444 = vmatpush2.msra.mxu0 0.0
      %4445 = vmatprep.subr.mxu0 0.0
      %4446 = vmatpush2.msra.mxu0 0.0
      %4447 = vmatprep.subr.mxu0 0.0
      %4448 = vmatpush2.msra.mxu0 0.0
      %4449 = vmatprep.mubr.f32.mxu0 0.0
      %4450 = vmatmul.mubr.f32.gmra.mxu0 %v4376
      %v4451 = vpop.f32.mrf.mxu0
      %v4452 = vadd.f32 %v4372, %v4451
      %v4453 = vpop.f32.mrf.mxu0
      %v4454 = vadd.f32 %v4372, %v4453
      %4455 = vdwg.mxu0
      %v4456 = vmax.f32 %v4452, 0.0
      %v4457 = vmax.f32 %v4454, 0.0
      %4459 = vrot.lane.b32.xlu0 %v501, 112
      %v4460 = vpop.permute.xlu0 %4459
      %4461 = vrot.lane.b32.xlu0 %v501, 96
      %v4462 = vpop.permute.xlu0 %4461
      %4463 = vrot.lane.b32.xlu0 %v501, 80
      %v4464 = vpop.permute.xlu0 %4463
      %4465 = vrot.lane.b32.xlu0 %v501, 64
      %v4466 = vpop.permute.xlu0 %4465
      %4467 = vrot.lane.b32.xlu0 %v501, 48
      %v4468 = vpop.permute.xlu0 %4467
      %4469 = vrot.lane.b32.xlu0 %v501, 32
      %v4470 = vpop.permute.xlu0 %4469
      %4471 = vrot.lane.b32.xlu0 %v501, 16
      %v4472 = vpop.permute.xlu0 %4471
      %4474 = vrot.lane.b32.xlu0 %v502, 112
      %v4475 = vpop.permute.xlu0 %4474
      %4476 = vrot.lane.b32.xlu0 %v502, 96
      %v4477 = vpop.permute.xlu0 %4476
      %4478 = vrot.lane.b32.xlu0 %v502, 80
      %v4479 = vpop.permute.xlu0 %4478
      %4480 = vrot.lane.b32.xlu0 %v502, 64
      %v4481 = vpop.permute.xlu0 %4480
      %4482 = vrot.lane.b32.xlu0 %v502, 48
      %v4483 = vpop.permute.xlu0 %4482
      %4484 = vrot.lane.b32.xlu0 %v502, 32
      %v4485 = vpop.permute.xlu0 %4484
      %4486 = vrot.lane.b32.xlu0 %v502, 16
      %v4487 = vpop.permute.xlu0 %4486
      %vm4488 = vcmask 1041408
      %v4489 = vrot.slane %v499, 6
      %v4490 = vrot.slane %v501, 6
      %v4491 = vsel %vm4488, %v4489, %v4490
      %v4492 = vrot.slane %v507, 6
      %v4493 = vrot.slane %v4460, 6
      %v4494 = vsel %vm4488, %v4492, %v4493
      %v4495 = vrot.slane %v510, 6
      %v4496 = vrot.slane %v4462, 6
      %v4497 = vsel %vm4488, %v4495, %v4496
      %v4498 = vrot.slane %v513, 6
      %v4499 = vrot.slane %v4464, 6
      %v4500 = vsel %vm4488, %v4498, %v4499
      %v4501 = vrot.slane %v516, 6
      %v4502 = vrot.slane %v4466, 6
      %v4503 = vsel %vm4488, %v4501, %v4502
      %v4504 = vrot.slane %v519, 6
      %v4505 = vrot.slane %v4468, 6
      %v4506 = vsel %vm4488, %v4504, %v4505
      %v4507 = vrot.slane %v522, 6
      %v4508 = vrot.slane %v4470, 6
      %v4509 = vsel %vm4488, %v4507, %v4508
      %v4510 = vrot.slane %v525, 6
      %v4511 = vrot.slane %v4472, 6
      %v4512 = vsel %vm4488, %v4510, %v4511
      %v4513 = vrot.slane %v500, 6
      %v4514 = vrot.slane %v502, 6
      %v4515 = vsel %vm4488, %v4513, %v4514
      %v4516 = vrot.slane %v529, 6
      %v4517 = vrot.slane %v4475, 6
      %v4518 = vsel %vm4488, %v4516, %v4517
      %v4519 = vrot.slane %v532, 6
      %v4520 = vrot.slane %v4477, 6
      %v4521 = vsel %vm4488, %v4519, %v4520
      %v4522 = vrot.slane %v535, 6
      %v4523 = vrot.slane %v4479, 6
      %v4524 = vsel %vm4488, %v4522, %v4523
      %v4525 = vrot.slane %v538, 6
      %v4526 = vrot.slane %v4481, 6
      %v4527 = vsel %vm4488, %v4525, %v4526
      %v4528 = vrot.slane %v541, 6
      %v4529 = vrot.slane %v4483, 6
      %v4530 = vsel %vm4488, %v4528, %v4529
      %v4531 = vrot.slane %v544, 6
      %v4532 = vrot.slane %v4485, 6
      %v4533 = vsel %vm4488, %v4531, %v4532
      %v4534 = vrot.slane %v547, 6
      %v4535 = vrot.slane %v4487, 6
      %v4536 = vsel %vm4488, %v4534, %v4535
      %v4553 = vcombine.low %v4491, %v4497
      %v4554 = vcombine.high %v4491, %v4497
      %v4556 = vunpack.c.l.s4 1983009808
      %v4557 = vunpack.c.0.s8 %v4556
      %v4558 = vlaneseq
      %v4559 = vshrl.u32 %v4558, 7
      %v4560 = vsub.s32 %v4557, %v4559
      %v4561 = vrot.slane %v4553, %v4560
      %v4563 = vunpack.c.l.s4 1983009808
      %v4564 = vunpack.c.0.s8 %v4563
      %v4565 = vlaneseq
      %v4566 = vshrl.u32 %v4565, 7
      %v4567 = vsub.s32 %v4564, %v4566
      %v4568 = vrot.slane %v4554, %v4567
      %v4569 = vcombine.low %v4494, %v4500
      %v4570 = vcombine.high %v4494, %v4500
      %v4572 = vunpack.c.l.s4 1983009808
      %v4573 = vunpack.c.0.s8 %v4572
      %v4574 = vlaneseq
      %v4575 = vshrl.u32 %v4574, 7
      %v4576 = vsub.s32 %v4573, %v4575
      %v4577 = vrot.slane %v4569, %v4576
      %v4579 = vunpack.c.l.s4 1983009808
      %v4580 = vunpack.c.0.s8 %v4579
      %v4581 = vlaneseq
      %v4582 = vshrl.u32 %v4581, 7
      %v4583 = vsub.s32 %v4580, %v4582
      %v4584 = vrot.slane %v4570, %v4583
      %v4585 = vcombine.low %v4503, %v4509
      %v4586 = vcombine.high %v4503, %v4509
      %v4588 = vunpack.c.l.s4 1983009808
      %v4589 = vunpack.c.0.s8 %v4588
      %v4590 = vlaneseq
      %v4591 = vshrl.u32 %v4590, 7
      %v4592 = vsub.s32 %v4589, %v4591
      %v4593 = vrot.slane %v4585, %v4592
      %v4595 = vunpack.c.l.s4 1983009808
      %v4596 = vunpack.c.0.s8 %v4595
      %v4597 = vlaneseq
      %v4598 = vshrl.u32 %v4597, 7
      %v4599 = vsub.s32 %v4596, %v4598
      %v4600 = vrot.slane %v4586, %v4599
      %v4601 = vcombine.low %v4506, %v4512
      %v4602 = vcombine.high %v4506, %v4512
      %v4604 = vunpack.c.l.s4 1983009808
      %v4605 = vunpack.c.0.s8 %v4604
      %v4606 = vlaneseq
      %v4607 = vshrl.u32 %v4606, 7
      %v4608 = vsub.s32 %v4605, %v4607
      %v4609 = vrot.slane %v4601, %v4608
      %v4611 = vunpack.c.l.s4 1983009808
      %v4612 = vunpack.c.0.s8 %v4611
      %v4613 = vlaneseq
      %v4614 = vshrl.u32 %v4613, 7
      %v4615 = vsub.s32 %v4612, %v4614
      %v4616 = vrot.slane %v4602, %v4615
      %v4617 = vcombine.low %v4561, %v4577
      %v4618 = vcombine.high %v4561, %v4577
      %v4620 = vunpack.c.l.s4 1934713408
      %v4621 = vunpack.c.0.s8 %v4620
      %v4622 = vlaneseq
      %v4623 = vshrl.u32 %v4622, 7
      %v4624 = vsub.s32 %v4621, %v4623
      %v4625 = vrot.slane %v4617, %v4624
      %v4627 = vunpack.c.l.s4 1934713408
      %v4628 = vunpack.c.0.s8 %v4627
      %v4629 = vlaneseq
      %v4630 = vshrl.u32 %v4629, 7
      %v4631 = vsub.s32 %v4628, %v4630
      %v4632 = vrot.slane %v4618, %v4631
      %v4633 = vcombine.low %v4568, %v4584
      %v4635 = vunpack.c.l.s4 1934713408
      %v4636 = vunpack.c.0.s8 %v4635
      %v4637 = vlaneseq
      %v4638 = vshrl.u32 %v4637, 7
      %v4639 = vsub.s32 %v4636, %v4638
      %v4640 = vrot.slane %v4633, %v4639
      %v4641 = vcombine.low %v4593, %v4609
      %v4642 = vcombine.high %v4593, %v4609
      %v4644 = vunpack.c.l.s4 1934713408
      %v4645 = vunpack.c.0.s8 %v4644
      %v4646 = vlaneseq
      %v4647 = vshrl.u32 %v4646, 7
      %v4648 = vsub.s32 %v4645, %v4647
      %v4649 = vrot.slane %v4641, %v4648
      %v4651 = vunpack.c.l.s4 1934713408
      %v4652 = vunpack.c.0.s8 %v4651
      %v4653 = vlaneseq
      %v4654 = vshrl.u32 %v4653, 7
      %v4655 = vsub.s32 %v4652, %v4654
      %v4656 = vrot.slane %v4642, %v4655
      %v4657 = vcombine.low %v4600, %v4616
      %v4659 = vunpack.c.l.s4 1934713408
      %v4660 = vunpack.c.0.s8 %v4659
      %v4661 = vlaneseq
      %v4662 = vshrl.u32 %v4661, 7
      %v4663 = vsub.s32 %v4660, %v4662
      %v4664 = vrot.slane %v4657, %v4663
      %v4665 = vcombine.low %v4625, %v4649
      %v4666 = vcombine.high %v4625, %v4649
      %v4667 = vcombine.low %v4632, %v4656
      %v4668 = vcombine.high %v4632, %v4656
      %v4669 = vcombine.low %v4640, %v4664
      %v4670 = vcombine.high %v4640, %v4664
      %v4671 = vcombine.low %v4515, %v4521
      %v4672 = vcombine.high %v4515, %v4521
      %v4674 = vunpack.c.l.s4 1983009808
      %v4675 = vunpack.c.0.s8 %v4674
      %v4676 = vlaneseq
      %v4677 = vshrl.u32 %v4676, 7
      %v4678 = vsub.s32 %v4675, %v4677
      %v4679 = vrot.slane %v4671, %v4678
      %v4681 = vunpack.c.l.s4 1983009808
      %v4682 = vunpack.c.0.s8 %v4681
      %v4683 = vlaneseq
      %v4684 = vshrl.u32 %v4683, 7
      %v4685 = vsub.s32 %v4682, %v4684
      %v4686 = vrot.slane %v4672, %v4685
      %v4687 = vcombine.low %v4518, %v4524
      %v4688 = vcombine.high %v4518, %v4524
      %v4690 = vunpack.c.l.s4 1983009808
      %v4691 = vunpack.c.0.s8 %v4690
      %v4692 = vlaneseq
      %v4693 = vshrl.u32 %v4692, 7
      %v4694 = vsub.s32 %v4691, %v4693
      %v4695 = vrot.slane %v4687, %v4694
      %v4697 = vunpack.c.l.s4 1983009808
      %v4698 = vunpack.c.0.s8 %v4697
      %v4699 = vlaneseq
      %v4700 = vshrl.u32 %v4699, 7
      %v4701 = vsub.s32 %v4698, %v4700
      %v4702 = vrot.slane %v4688, %v4701
      %v4703 = vcombine.low %v4527, %v4533
      %v4704 = vcombine.high %v4527, %v4533
      %v4706 = vunpack.c.l.s4 1983009808
      %v4707 = vunpack.c.0.s8 %v4706
      %v4708 = vlaneseq
      %v4709 = vshrl.u32 %v4708, 7
      %v4710 = vsub.s32 %v4707, %v4709
      %v4711 = vrot.slane %v4703, %v4710
      %v4713 = vunpack.c.l.s4 1983009808
      %v4714 = vunpack.c.0.s8 %v4713
      %v4715 = vlaneseq
      %v4716 = vshrl.u32 %v4715, 7
      %v4717 = vsub.s32 %v4714, %v4716
      %v4718 = vrot.slane %v4704, %v4717
      %v4719 = vcombine.low %v4530, %v4536
      %v4720 = vcombine.high %v4530, %v4536
      %v4722 = vunpack.c.l.s4 1983009808
      %v4723 = vunpack.c.0.s8 %v4722
      %v4724 = vlaneseq
      %v4725 = vshrl.u32 %v4724, 7
      %v4726 = vsub.s32 %v4723, %v4725
      %v4727 = vrot.slane %v4719, %v4726
      %v4729 = vunpack.c.l.s4 1983009808
      %v4730 = vunpack.c.0.s8 %v4729
      %v4731 = vlaneseq
      %v4732 = vshrl.u32 %v4731, 7
      %v4733 = vsub.s32 %v4730, %v4732
      %v4734 = vrot.slane %v4720, %v4733
      %v4735 = vcombine.low %v4679, %v4695
      %v4736 = vcombine.high %v4679, %v4695
      %v4738 = vunpack.c.l.s4 1934713408
      %v4739 = vunpack.c.0.s8 %v4738
      %v4740 = vlaneseq
      %v4741 = vshrl.u32 %v4740, 7
      %v4742 = vsub.s32 %v4739, %v4741
      %v4743 = vrot.slane %v4735, %v4742
      %v4745 = vunpack.c.l.s4 1934713408
      %v4746 = vunpack.c.0.s8 %v4745
      %v4747 = vlaneseq
      %v4748 = vshrl.u32 %v4747, 7
      %v4749 = vsub.s32 %v4746, %v4748
      %v4750 = vrot.slane %v4736, %v4749
      %v4751 = vcombine.low %v4686, %v4702
      %v4753 = vunpack.c.l.s4 1934713408
      %v4754 = vunpack.c.0.s8 %v4753
      %v4755 = vlaneseq
      %v4756 = vshrl.u32 %v4755, 7
      %v4757 = vsub.s32 %v4754, %v4756
      %v4758 = vrot.slane %v4751, %v4757
      %v4759 = vcombine.low %v4711, %v4727
      %v4760 = vcombine.high %v4711, %v4727
      %v4762 = vunpack.c.l.s4 1934713408
      %v4763 = vunpack.c.0.s8 %v4762
      %v4764 = vlaneseq
      %v4765 = vshrl.u32 %v4764, 7
      %v4766 = vsub.s32 %v4763, %v4765
      %v4767 = vrot.slane %v4759, %v4766
      %v4769 = vunpack.c.l.s4 1934713408
      %v4770 = vunpack.c.0.s8 %v4769
      %v4771 = vlaneseq
      %v4772 = vshrl.u32 %v4771, 7
      %v4773 = vsub.s32 %v4770, %v4772
      %v4774 = vrot.slane %v4760, %v4773
      %v4775 = vcombine.low %v4718, %v4734
      %v4777 = vunpack.c.l.s4 1934713408
      %v4778 = vunpack.c.0.s8 %v4777
      %v4779 = vlaneseq
      %v4780 = vshrl.u32 %v4779, 7
      %v4781 = vsub.s32 %v4778, %v4780
      %v4782 = vrot.slane %v4775, %v4781
      %v4783 = vcombine.low %v4743, %v4767
      %v4784 = vcombine.high %v4743, %v4767
      %v4785 = vcombine.low %v4750, %v4774
      %v4786 = vcombine.high %v4750, %v4774
      %v4787 = vcombine.low %v4758, %v4782
      %v4788 = vcombine.high %v4758, %v4782
      %4801 = vrot.lane.b32.xlu0 %v4665, 1
      %v4802 = vpop.permute.xlu0 %4801
      %4803 = vrot.lane.b32.xlu0 %v4783, 1
      %v4804 = vpop.permute.xlu0 %4803
      %4805 = vrot.lane.b32.xlu0 %v4666, 1
      %v4806 = vpop.permute.xlu0 %4805
      %4807 = vrot.lane.b32.xlu0 %v4784, 1
      %v4808 = vpop.permute.xlu0 %4807
      %4809 = vrot.lane.b32.xlu0 %v4667, 1
      %v4810 = vpop.permute.xlu0 %4809
      %4811 = vrot.lane.b32.xlu0 %v4785, 1
      %v4812 = vpop.permute.xlu0 %4811
      %4813 = vrot.lane.b32.xlu0 %v4668, 1
      %v4814 = vpop.permute.xlu0 %4813
      %4815 = vrot.lane.b32.xlu0 %v4786, 1
      %v4816 = vpop.permute.xlu0 %4815
      %4817 = vrot.lane.b32.xlu0 %v4669, 1
      %v4818 = vpop.permute.xlu0 %4817
      %4819 = vrot.lane.b32.xlu0 %v4787, 1
      %v4820 = vpop.permute.xlu0 %4819
      %4821 = vrot.lane.b32.xlu0 %v4670, 1
      %v4822 = vpop.permute.xlu0 %4821
      %4823 = vrot.lane.b32.xlu0 %v4788, 1
      %v4824 = vpop.permute.xlu0 %4823
      %4837 = vst.msk [vmem:[#allocation2 + $0x1] sm:$0xff] %vm833, %v4802
      %4838 = vst.msk [vmem:[#allocation2 + $0x9] sm:$0xff] %vm833, %v4804
      %4839 = vst.msk [vmem:[#allocation2 + $0x19] sm:$0xff] %vm833, %v4806
      %4840 = vst.msk [vmem:[#allocation2 + $0x21] sm:$0xff] %vm833, %v4808
      %4841 = vst.msk [vmem:[#allocation2 + $0x31] sm:$0xff] %vm833, %v4810
      %4842 = vst.msk [vmem:[#allocation2 + $0x39] sm:$0xff] %vm833, %v4812
      %4843 = vst.msk [vmem:[#allocation2 + $0x49] sm:$0xff] %vm833, %v4814
      %4844 = vst.msk [vmem:[#allocation2 + $0x51] sm:$0xff] %vm833, %v4816
      %4845 = vst.msk [vmem:[#allocation2 + $0x61] sm:$0xff] %vm833, %v4818
      %4846 = vst.msk [vmem:[#allocation2 + $0x69] sm:$0xff] %vm833, %v4820
      %4847 = vst.msk [vmem:[#allocation2 + $0x79] sm:$0xff] %vm833, %v4822
      %4848 = vst.msk [vmem:[#allocation2 + $0x81] sm:$0xff] %vm833, %v4824
      %v4849 = vld [vmem:[#allocation2] sm:$0xff]
      %v4850 = vld [vmem:[#allocation2 + $0x8] sm:$0xff]
      %v4851 = vld [vmem:[#allocation2 + $0x18] sm:$0xff]
      %v4852 = vld [vmem:[#allocation2 + $0x20] sm:$0xff]
      %v4853 = vld [vmem:[#allocation2 + $0x30] sm:$0xff]
      %v4854 = vld [vmem:[#allocation2 + $0x38] sm:$0xff]
      %v4855 = vld [vmem:[#allocation2 + $0x48] sm:$0xff]
      %v4856 = vld [vmem:[#allocation2 + $0x50] sm:$0xff]
      %v4857 = vld [vmem:[#allocation2 + $0x60] sm:$0xff]
      %v4858 = vld [vmem:[#allocation2 + $0x68] sm:$0xff]
      %v4859 = vld [vmem:[#allocation2 + $0x78] sm:$0xff]
      %v4860 = vld [vmem:[#allocation2 + $0x80] sm:$0xff]
      %v4861 = vcombine.low %v4849, %v4853
      %v4862 = vcombine.high %v4849, %v4853
      %v4864 = vunpack.c.l.s4 1983009808
      %v4865 = vunpack.c.0.s8 %v4864
      %v4866 = vlaneseq
      %v4867 = vshrl.u32 %v4866, 7
      %v4868 = vsub.s32 %v4865, %v4867
      %v4869 = vrot.slane %v4861, %v4868
      %v4871 = vunpack.c.l.s4 1983009808
      %v4872 = vunpack.c.0.s8 %v4871
      %v4873 = vlaneseq
      %v4874 = vshrl.u32 %v4873, 7
      %v4875 = vsub.s32 %v4872, %v4874
      %v4876 = vrot.slane %v4862, %v4875
      %v4877 = vcombine.low %v4851, %v4855
      %v4878 = vcombine.high %v4851, %v4855
      %v4880 = vunpack.c.l.s4 1983009808
      %v4881 = vunpack.c.0.s8 %v4880
      %v4882 = vlaneseq
      %v4883 = vshrl.u32 %v4882, 7
      %v4884 = vsub.s32 %v4881, %v4883
      %v4885 = vrot.slane %v4877, %v4884
      %v4887 = vunpack.c.l.s4 1983009808
      %v4888 = vunpack.c.0.s8 %v4887
      %v4889 = vlaneseq
      %v4890 = vshrl.u32 %v4889, 7
      %v4891 = vsub.s32 %v4888, %v4890
      %v4892 = vrot.slane %v4878, %v4891
      %v4893 = vcombine.high %v4857, 0.0
      %v4895 = vunpack.c.l.s4 1983009808
      %v4896 = vunpack.c.0.s8 %v4895
      %v4897 = vlaneseq
      %v4898 = vshrl.u32 %v4897, 7
      %v4899 = vsub.s32 %v4896, %v4898
      %v4900 = vrot.slane %v4857, %v4899
      %v4902 = vunpack.c.l.s4 1983009808
      %v4903 = vunpack.c.0.s8 %v4902
      %v4904 = vlaneseq
      %v4905 = vshrl.u32 %v4904, 7
      %v4906 = vsub.s32 %v4903, %v4905
      %v4907 = vrot.slane %v4893, %v4906
      %v4908 = vcombine.high %v4859, 0.0
      %v4910 = vunpack.c.l.s4 1983009808
      %v4911 = vunpack.c.0.s8 %v4910
      %v4912 = vlaneseq
      %v4913 = vshrl.u32 %v4912, 7
      %v4914 = vsub.s32 %v4911, %v4913
      %v4915 = vrot.slane %v4859, %v4914
      %v4917 = vunpack.c.l.s4 1983009808
      %v4918 = vunpack.c.0.s8 %v4917
      %v4919 = vlaneseq
      %v4920 = vshrl.u32 %v4919, 7
      %v4921 = vsub.s32 %v4918, %v4920
      %v4922 = vrot.slane %v4908, %v4921
      %v4923 = vcombine.low %v4869, %v4885
      %v4924 = vcombine.high %v4869, %v4885
      %v4926 = vunpack.c.l.s4 1934713408
      %v4927 = vunpack.c.0.s8 %v4926
      %v4928 = vlaneseq
      %v4929 = vshrl.u32 %v4928, 7
      %v4930 = vsub.s32 %v4927, %v4929
      %v4931 = vrot.slane %v4923, %v4930
      %v4933 = vunpack.c.l.s4 1934713408
      %v4934 = vunpack.c.0.s8 %v4933
      %v4935 = vlaneseq
      %v4936 = vshrl.u32 %v4935, 7
      %v4937 = vsub.s32 %v4934, %v4936
      %v4938 = vrot.slane %v4924, %v4937
      %v4939 = vcombine.low %v4876, %v4892
      %v4940 = vcombine.high %v4876, %v4892
      %v4942 = vunpack.c.l.s4 1934713408
      %v4943 = vunpack.c.0.s8 %v4942
      %v4944 = vlaneseq
      %v4945 = vshrl.u32 %v4944, 7
      %v4946 = vsub.s32 %v4943, %v4945
      %v4947 = vrot.slane %v4939, %v4946
      %v4949 = vunpack.c.l.s4 1934713408
      %v4950 = vunpack.c.0.s8 %v4949
      %v4951 = vlaneseq
      %v4952 = vshrl.u32 %v4951, 7
      %v4953 = vsub.s32 %v4950, %v4952
      %v4954 = vrot.slane %v4940, %v4953
      %v4955 = vcombine.low %v4900, %v4915
      %v4956 = vcombine.high %v4900, %v4915
      %v4958 = vunpack.c.l.s4 1934713408
      %v4959 = vunpack.c.0.s8 %v4958
      %v4960 = vlaneseq
      %v4961 = vshrl.u32 %v4960, 7
      %v4962 = vsub.s32 %v4959, %v4961
      %v4963 = vrot.slane %v4955, %v4962
      %v4965 = vunpack.c.l.s4 1934713408
      %v4966 = vunpack.c.0.s8 %v4965
      %v4967 = vlaneseq
      %v4968 = vshrl.u32 %v4967, 7
      %v4969 = vsub.s32 %v4966, %v4968
      %v4970 = vrot.slane %v4956, %v4969
      %v4971 = vcombine.low %v4907, %v4922
      %v4972 = vcombine.high %v4907, %v4922
      %v4974 = vunpack.c.l.s4 1934713408
      %v4975 = vunpack.c.0.s8 %v4974
      %v4976 = vlaneseq
      %v4977 = vshrl.u32 %v4976, 7
      %v4978 = vsub.s32 %v4975, %v4977
      %v4979 = vrot.slane %v4971, %v4978
      %v4981 = vunpack.c.l.s4 1934713408
      %v4982 = vunpack.c.0.s8 %v4981
      %v4983 = vlaneseq
      %v4984 = vshrl.u32 %v4983, 7
      %v4985 = vsub.s32 %v4982, %v4984
      %v4986 = vrot.slane %v4972, %v4985
      %v4987 = vcombine.low %v4931, %v4963
      %v4988 = vcombine.high %v4931, %v4963
      %v4989 = vcombine.low %v4938, %v4970
      %v4990 = vcombine.high %v4938, %v4970
      %v4991 = vcombine.low %v4947, %v4979
      %v4992 = vcombine.high %v4947, %v4979
      %v4993 = vcombine.low %v4954, %v4986
      %v4994 = vcombine.high %v4954, %v4986
      %v4995 = vcombine.low %v4850, %v4854
      %v4996 = vcombine.high %v4850, %v4854
      %v4998 = vunpack.c.l.s4 1983009808
      %v4999 = vunpack.c.0.s8 %v4998
      %v5000 = vlaneseq
      %v5001 = vshrl.u32 %v5000, 7
      %v5002 = vsub.s32 %v4999, %v5001
      %v5003 = vrot.slane %v4995, %v5002
      %v5005 = vunpack.c.l.s4 1983009808
      %v5006 = vunpack.c.0.s8 %v5005
      %v5007 = vlaneseq
      %v5008 = vshrl.u32 %v5007, 7
      %v5009 = vsub.s32 %v5006, %v5008
      %v5010 = vrot.slane %v4996, %v5009
      %v5011 = vcombine.low %v4852, %v4856
      %v5012 = vcombine.high %v4852, %v4856
      %v5014 = vunpack.c.l.s4 1983009808
      %v5015 = vunpack.c.0.s8 %v5014
      %v5016 = vlaneseq
      %v5017 = vshrl.u32 %v5016, 7
      %v5018 = vsub.s32 %v5015, %v5017
      %v5019 = vrot.slane %v5011, %v5018
      %v5021 = vunpack.c.l.s4 1983009808
      %v5022 = vunpack.c.0.s8 %v5021
      %v5023 = vlaneseq
      %v5024 = vshrl.u32 %v5023, 7
      %v5025 = vsub.s32 %v5022, %v5024
      %v5026 = vrot.slane %v5012, %v5025
      %v5027 = vcombine.high %v4858, 0.0
      %v5029 = vunpack.c.l.s4 1983009808
      %v5030 = vunpack.c.0.s8 %v5029
      %v5031 = vlaneseq
      %v5032 = vshrl.u32 %v5031, 7
      %v5033 = vsub.s32 %v5030, %v5032
      %v5034 = vrot.slane %v4858, %v5033
      %v5036 = vunpack.c.l.s4 1983009808
      %v5037 = vunpack.c.0.s8 %v5036
      %v5038 = vlaneseq
      %v5039 = vshrl.u32 %v5038, 7
      %v5040 = vsub.s32 %v5037, %v5039
      %v5041 = vrot.slane %v5027, %v5040
      %v5042 = vcombine.high %v4860, 0.0
      %v5044 = vunpack.c.l.s4 1983009808
      %v5045 = vunpack.c.0.s8 %v5044
      %v5046 = vlaneseq
      %v5047 = vshrl.u32 %v5046, 7
      %v5048 = vsub.s32 %v5045, %v5047
      %v5049 = vrot.slane %v4860, %v5048
      %v5051 = vunpack.c.l.s4 1983009808
      %v5052 = vunpack.c.0.s8 %v5051
      %v5053 = vlaneseq
      %v5054 = vshrl.u32 %v5053, 7
      %v5055 = vsub.s32 %v5052, %v5054
      %v5056 = vrot.slane %v5042, %v5055
      %v5057 = vcombine.low %v5003, %v5019
      %v5058 = vcombine.high %v5003, %v5019
      %v5060 = vunpack.c.l.s4 1934713408
      %v5061 = vunpack.c.0.s8 %v5060
      %v5062 = vlaneseq
      %v5063 = vshrl.u32 %v5062, 7
      %v5064 = vsub.s32 %v5061, %v5063
      %v5065 = vrot.slane %v5057, %v5064
      %v5067 = vunpack.c.l.s4 1934713408
      %v5068 = vunpack.c.0.s8 %v5067
      %v5069 = vlaneseq
      %v5070 = vshrl.u32 %v5069, 7
      %v5071 = vsub.s32 %v5068, %v5070
      %v5072 = vrot.slane %v5058, %v5071
      %v5073 = vcombine.low %v5010, %v5026
      %v5074 = vcombine.high %v5010, %v5026
      %v5076 = vunpack.c.l.s4 1934713408
      %v5077 = vunpack.c.0.s8 %v5076
      %v5078 = vlaneseq
      %v5079 = vshrl.u32 %v5078, 7
      %v5080 = vsub.s32 %v5077, %v5079
      %v5081 = vrot.slane %v5073, %v5080
      %v5083 = vunpack.c.l.s4 1934713408
      %v5084 = vunpack.c.0.s8 %v5083
      %v5085 = vlaneseq
      %v5086 = vshrl.u32 %v5085, 7
      %v5087 = vsub.s32 %v5084, %v5086
      %v5088 = vrot.slane %v5074, %v5087
      %v5089 = vcombine.low %v5034, %v5049
      %v5090 = vcombine.high %v5034, %v5049
      %v5092 = vunpack.c.l.s4 1934713408
      %v5093 = vunpack.c.0.s8 %v5092
      %v5094 = vlaneseq
      %v5095 = vshrl.u32 %v5094, 7
      %v5096 = vsub.s32 %v5093, %v5095
      %v5097 = vrot.slane %v5089, %v5096
      %v5099 = vunpack.c.l.s4 1934713408
      %v5100 = vunpack.c.0.s8 %v5099
      %v5101 = vlaneseq
      %v5102 = vshrl.u32 %v5101, 7
      %v5103 = vsub.s32 %v5100, %v5102
      %v5104 = vrot.slane %v5090, %v5103
      %v5105 = vcombine.low %v5041, %v5056
      %v5106 = vcombine.high %v5041, %v5056
      %v5108 = vunpack.c.l.s4 1934713408
      %v5109 = vunpack.c.0.s8 %v5108
      %v5110 = vlaneseq
      %v5111 = vshrl.u32 %v5110, 7
      %v5112 = vsub.s32 %v5109, %v5111
      %v5113 = vrot.slane %v5105, %v5112
      %v5115 = vunpack.c.l.s4 1934713408
      %v5116 = vunpack.c.0.s8 %v5115
      %v5117 = vlaneseq
      %v5118 = vshrl.u32 %v5117, 7
      %v5119 = vsub.s32 %v5116, %v5118
      %v5120 = vrot.slane %v5106, %v5119
      %v5121 = vcombine.low %v5065, %v5097
      %v5122 = vcombine.high %v5065, %v5097
      %v5123 = vcombine.low %v5072, %v5104
      %v5124 = vcombine.high %v5072, %v5104
      %v5125 = vcombine.low %v5081, %v5113
      %v5126 = vcombine.high %v5081, %v5113
      %v5127 = vcombine.low %v5088, %v5120
      %v5128 = vcombine.high %v5088, %v5120
      %5130 = vrot.lane.b32.xlu0 %v4988, 16
      %v5131 = vpop.permute.xlu0 %5130
      %5134 = vrot.lane.b32.xlu0 %v4989, 32
      %v5135 = vpop.permute.xlu0 %5134
      %5138 = vrot.lane.b32.xlu0 %v4990, 48
      %v5139 = vpop.permute.xlu0 %5138
      %5142 = vrot.lane.b32.xlu0 %v4991, 64
      %v5143 = vpop.permute.xlu0 %5142
      %5146 = vrot.lane.b32.xlu0 %v4992, 80
      %v5147 = vpop.permute.xlu0 %5146
      %5150 = vrot.lane.b32.xlu0 %v4993, 96
      %v5151 = vpop.permute.xlu0 %5150
      %5154 = vrot.lane.b32.xlu0 %v4994, 112
      %v5155 = vpop.permute.xlu0 %5154
      %5158 = vrot.lane.b32.xlu0 %v5122, 16
      %v5159 = vpop.permute.xlu0 %5158
      %5162 = vrot.lane.b32.xlu0 %v5123, 32
      %v5163 = vpop.permute.xlu0 %5162
      %5166 = vrot.lane.b32.xlu0 %v5124, 48
      %v5167 = vpop.permute.xlu0 %5166
      %5170 = vrot.lane.b32.xlu0 %v5125, 64
      %v5171 = vpop.permute.xlu0 %5170
      %5174 = vrot.lane.b32.xlu0 %v5126, 80
      %v5175 = vpop.permute.xlu0 %5174
      %5178 = vrot.lane.b32.xlu0 %v5127, 96
      %v5179 = vpop.permute.xlu0 %5178
      %5182 = vrot.lane.b32.xlu0 %v5128, 112
      %v5183 = vpop.permute.xlu0 %5182
      %v5185 = vsel %vm1182, %v4987, %v5131
      %v5186 = vsel %vm1184, %v5185, %v5135
      %v5187 = vsel %vm1186, %v5186, %v5139
      %v5188 = vsel %vm1188, %v5187, %v5143
      %v5189 = vsel %vm1190, %v5188, %v5147
      %v5190 = vsel %vm1192, %v5189, %v5151
      %v5191 = vsel %vm1194, %v5190, %v5155
      %v5192 = vsel %vm1182, %v5121, %v5159
      %v5193 = vsel %vm1184, %v5192, %v5163
      %v5194 = vsel %vm1186, %v5193, %v5167
      %v5195 = vsel %vm1188, %v5194, %v5171
      %v5196 = vsel %vm1190, %v5195, %v5175
      %v5197 = vsel %vm1192, %v5196, %v5179
      %v5198 = vsel %vm1194, %v5197, %v5183
      %5199 = vst [vmem:[#allocation3] sm:$0x3f] %v5191
      %5200 = vst [vmem:[#allocation3 + $0x8] sm:$0x3f] %v5198
      %v5201 = vld [vmem:[#allocation2] sm:$0xff]
      %v5202 = vld [vmem:[#allocation2 + $0x8] sm:$0xff]
      %v5203 = vld [vmem:[#allocation2 + $0x18] sm:$0xff]
      %v5204 = vld [vmem:[#allocation2 + $0x20] sm:$0xff]
      %v5205 = vld [vmem:[#allocation2 + $0x30] sm:$0xff]
      %v5206 = vld [vmem:[#allocation2 + $0x38] sm:$0xff]
      %v5207 = vld [vmem:[#allocation2 + $0x48] sm:$0xff]
      %v5208 = vld [vmem:[#allocation2 + $0x50] sm:$0xff]
      %v5209 = vld [vmem:[#allocation2 + $0x60] sm:$0xff]
      %v5210 = vld [vmem:[#allocation2 + $0x68] sm:$0xff]
      %v5211 = vld [vmem:[#allocation2 + $0x78] sm:$0xff]
      %v5212 = vld [vmem:[#allocation2 + $0x80] sm:$0xff]
      %5225 = vrot.lane.b32.xlu0 %v5201, 127
      %v5226 = vpop.permute.xlu0 %5225
      %5227 = vrot.lane.b32.xlu0 %v5202, 127
      %v5228 = vpop.permute.xlu0 %5227
      %5229 = vrot.lane.b32.xlu0 %v5203, 127
      %v5230 = vpop.permute.xlu0 %5229
      %5231 = vrot.lane.b32.xlu0 %v5204, 127
      %v5232 = vpop.permute.xlu0 %5231
      %5233 = vrot.lane.b32.xlu0 %v5205, 127
      %v5234 = vpop.permute.xlu0 %5233
      %5235 = vrot.lane.b32.xlu0 %v5206, 127
      %v5236 = vpop.permute.xlu0 %5235
      %5237 = vrot.lane.b32.xlu0 %v5207, 127
      %v5238 = vpop.permute.xlu0 %5237
      %5239 = vrot.lane.b32.xlu0 %v5208, 127
      %v5240 = vpop.permute.xlu0 %5239
      %5241 = vrot.lane.b32.xlu0 %v5209, 127
      %v5242 = vpop.permute.xlu0 %5241
      %5243 = vrot.lane.b32.xlu0 %v5210, 127
      %v5244 = vpop.permute.xlu0 %5243
      %5245 = vrot.lane.b32.xlu0 %v5211, 127
      %v5246 = vpop.permute.xlu0 %5245
      %5247 = vrot.lane.b32.xlu0 %v5212, 127
      %v5248 = vpop.permute.xlu0 %5247
      %v5261 = vcombine.low %v5226, %v5234
      %v5262 = vcombine.high %v5226, %v5234
      %v5264 = vunpack.c.l.s4 1983009808
      %v5265 = vunpack.c.0.s8 %v5264
      %v5266 = vlaneseq
      %v5267 = vshrl.u32 %v5266, 7
      %v5268 = vsub.s32 %v5265, %v5267
      %v5269 = vrot.slane %v5261, %v5268
      %v5271 = vunpack.c.l.s4 1983009808
      %v5272 = vunpack.c.0.s8 %v5271
      %v5273 = vlaneseq
      %v5274 = vshrl.u32 %v5273, 7
      %v5275 = vsub.s32 %v5272, %v5274
      %v5276 = vrot.slane %v5262, %v5275
      %v5277 = vcombine.low %v5230, %v5238
      %v5278 = vcombine.high %v5230, %v5238
      %v5280 = vunpack.c.l.s4 1983009808
      %v5281 = vunpack.c.0.s8 %v5280
      %v5282 = vlaneseq
      %v5283 = vshrl.u32 %v5282, 7
      %v5284 = vsub.s32 %v5281, %v5283
      %v5285 = vrot.slane %v5277, %v5284
      %v5287 = vunpack.c.l.s4 1983009808
      %v5288 = vunpack.c.0.s8 %v5287
      %v5289 = vlaneseq
      %v5290 = vshrl.u32 %v5289, 7
      %v5291 = vsub.s32 %v5288, %v5290
      %v5292 = vrot.slane %v5278, %v5291
      %v5293 = vcombine.high %v5242, 0.0
      %v5295 = vunpack.c.l.s4 1983009808
      %v5296 = vunpack.c.0.s8 %v5295
      %v5297 = vlaneseq
      %v5298 = vshrl.u32 %v5297, 7
      %v5299 = vsub.s32 %v5296, %v5298
      %v5300 = vrot.slane %v5242, %v5299
      %v5302 = vunpack.c.l.s4 1983009808
      %v5303 = vunpack.c.0.s8 %v5302
      %v5304 = vlaneseq
      %v5305 = vshrl.u32 %v5304, 7
      %v5306 = vsub.s32 %v5303, %v5305
      %v5307 = vrot.slane %v5293, %v5306
      %v5308 = vcombine.high %v5246, 0.0
      %v5310 = vunpack.c.l.s4 1983009808
      %v5311 = vunpack.c.0.s8 %v5310
      %v5312 = vlaneseq
      %v5313 = vshrl.u32 %v5312, 7
      %v5314 = vsub.s32 %v5311, %v5313
      %v5315 = vrot.slane %v5246, %v5314
      %v5317 = vunpack.c.l.s4 1983009808
      %v5318 = vunpack.c.0.s8 %v5317
      %v5319 = vlaneseq
      %v5320 = vshrl.u32 %v5319, 7
      %v5321 = vsub.s32 %v5318, %v5320
      %v5322 = vrot.slane %v5308, %v5321
      %v5323 = vcombine.low %v5269, %v5285
      %v5324 = vcombine.high %v5269, %v5285
      %v5326 = vunpack.c.l.s4 1934713408
      %v5327 = vunpack.c.0.s8 %v5326
      %v5328 = vlaneseq
      %v5329 = vshrl.u32 %v5328, 7
      %v5330 = vsub.s32 %v5327, %v5329
      %v5331 = vrot.slane %v5323, %v5330
      %v5333 = vunpack.c.l.s4 1934713408
      %v5334 = vunpack.c.0.s8 %v5333
      %v5335 = vlaneseq
      %v5336 = vshrl.u32 %v5335, 7
      %v5337 = vsub.s32 %v5334, %v5336
      %v5338 = vrot.slane %v5324, %v5337
      %v5339 = vcombine.low %v5276, %v5292
      %v5340 = vcombine.high %v5276, %v5292
      %v5342 = vunpack.c.l.s4 1934713408
      %v5343 = vunpack.c.0.s8 %v5342
      %v5344 = vlaneseq
      %v5345 = vshrl.u32 %v5344, 7
      %v5346 = vsub.s32 %v5343, %v5345
      %v5347 = vrot.slane %v5339, %v5346
      %v5349 = vunpack.c.l.s4 1934713408
      %v5350 = vunpack.c.0.s8 %v5349
      %v5351 = vlaneseq
      %v5352 = vshrl.u32 %v5351, 7
      %v5353 = vsub.s32 %v5350, %v5352
      %v5354 = vrot.slane %v5340, %v5353
      %v5355 = vcombine.low %v5300, %v5315
      %v5356 = vcombine.high %v5300, %v5315
      %v5358 = vunpack.c.l.s4 1934713408
      %v5359 = vunpack.c.0.s8 %v5358
      %v5360 = vlaneseq
      %v5361 = vshrl.u32 %v5360, 7
      %v5362 = vsub.s32 %v5359, %v5361
      %v5363 = vrot.slane %v5355, %v5362
      %v5365 = vunpack.c.l.s4 1934713408
      %v5366 = vunpack.c.0.s8 %v5365
      %v5367 = vlaneseq
      %v5368 = vshrl.u32 %v5367, 7
      %v5369 = vsub.s32 %v5366, %v5368
      %v5370 = vrot.slane %v5356, %v5369
      %v5371 = vcombine.low %v5307, %v5322
      %v5372 = vcombine.high %v5307, %v5322
      %v5374 = vunpack.c.l.s4 1934713408
      %v5375 = vunpack.c.0.s8 %v5374
      %v5376 = vlaneseq
      %v5377 = vshrl.u32 %v5376, 7
      %v5378 = vsub.s32 %v5375, %v5377
      %v5379 = vrot.slane %v5371, %v5378
      %v5381 = vunpack.c.l.s4 1934713408
      %v5382 = vunpack.c.0.s8 %v5381
      %v5383 = vlaneseq
      %v5384 = vshrl.u32 %v5383, 7
      %v5385 = vsub.s32 %v5382, %v5384
      %v5386 = vrot.slane %v5372, %v5385
      %v5387 = vcombine.low %v5331, %v5363
      %v5388 = vcombine.high %v5331, %v5363
      %v5389 = vcombine.low %v5338, %v5370
      %v5390 = vcombine.high %v5338, %v5370
      %v5391 = vcombine.low %v5347, %v5379
      %v5392 = vcombine.high %v5347, %v5379
      %v5393 = vcombine.low %v5354, %v5386
      %v5394 = vcombine.high %v5354, %v5386
      %v5395 = vcombine.low %v5228, %v5236
      %v5396 = vcombine.high %v5228, %v5236
      %v5398 = vunpack.c.l.s4 1983009808
      %v5399 = vunpack.c.0.s8 %v5398
      %v5400 = vlaneseq
      %v5401 = vshrl.u32 %v5400, 7
      %v5402 = vsub.s32 %v5399, %v5401
      %v5403 = vrot.slane %v5395, %v5402
      %v5405 = vunpack.c.l.s4 1983009808
      %v5406 = vunpack.c.0.s8 %v5405
      %v5407 = vlaneseq
      %v5408 = vshrl.u32 %v5407, 7
      %v5409 = vsub.s32 %v5406, %v5408
      %v5410 = vrot.slane %v5396, %v5409
      %v5411 = vcombine.low %v5232, %v5240
      %v5412 = vcombine.high %v5232, %v5240
      %v5414 = vunpack.c.l.s4 1983009808
      %v5415 = vunpack.c.0.s8 %v5414
      %v5416 = vlaneseq
      %v5417 = vshrl.u32 %v5416, 7
      %v5418 = vsub.s32 %v5415, %v5417
      %v5419 = vrot.slane %v5411, %v5418
      %v5421 = vunpack.c.l.s4 1983009808
      %v5422 = vunpack.c.0.s8 %v5421
      %v5423 = vlaneseq
      %v5424 = vshrl.u32 %v5423, 7
      %v5425 = vsub.s32 %v5422, %v5424
      %v5426 = vrot.slane %v5412, %v5425
      %v5427 = vcombine.high %v5244, 0.0
      %v5429 = vunpack.c.l.s4 1983009808
      %v5430 = vunpack.c.0.s8 %v5429
      %v5431 = vlaneseq
      %v5432 = vshrl.u32 %v5431, 7
      %v5433 = vsub.s32 %v5430, %v5432
      %v5434 = vrot.slane %v5244, %v5433
      %v5436 = vunpack.c.l.s4 1983009808
      %v5437 = vunpack.c.0.s8 %v5436
      %v5438 = vlaneseq
      %v5439 = vshrl.u32 %v5438, 7
      %v5440 = vsub.s32 %v5437, %v5439
      %v5441 = vrot.slane %v5427, %v5440
      %v5442 = vcombine.high %v5248, 0.0
      %v5444 = vunpack.c.l.s4 1983009808
      %v5445 = vunpack.c.0.s8 %v5444
      %v5446 = vlaneseq
      %v5447 = vshrl.u32 %v5446, 7
      %v5448 = vsub.s32 %v5445, %v5447
      %v5449 = vrot.slane %v5248, %v5448
      %v5451 = vunpack.c.l.s4 1983009808
      %v5452 = vunpack.c.0.s8 %v5451
      %v5453 = vlaneseq
      %v5454 = vshrl.u32 %v5453, 7
      %v5455 = vsub.s32 %v5452, %v5454
      %v5456 = vrot.slane %v5442, %v5455
      %v5457 = vcombine.low %v5403, %v5419
      %v5458 = vcombine.high %v5403, %v5419
      %v5460 = vunpack.c.l.s4 1934713408
      %v5461 = vunpack.c.0.s8 %v5460
      %v5462 = vlaneseq
      %v5463 = vshrl.u32 %v5462, 7
      %v5464 = vsub.s32 %v5461, %v5463
      %v5465 = vrot.slane %v5457, %v5464
      %v5467 = vunpack.c.l.s4 1934713408
      %v5468 = vunpack.c.0.s8 %v5467
      %v5469 = vlaneseq
      %v5470 = vshrl.u32 %v5469, 7
      %v5471 = vsub.s32 %v5468, %v5470
      %v5472 = vrot.slane %v5458, %v5471
      %v5473 = vcombine.low %v5410, %v5426
      %v5474 = vcombine.high %v5410, %v5426
      %v5476 = vunpack.c.l.s4 1934713408
      %v5477 = vunpack.c.0.s8 %v5476
      %v5478 = vlaneseq
      %v5479 = vshrl.u32 %v5478, 7
      %v5480 = vsub.s32 %v5477, %v5479
      %v5481 = vrot.slane %v5473, %v5480
      %v5483 = vunpack.c.l.s4 1934713408
      %v5484 = vunpack.c.0.s8 %v5483
      %v5485 = vlaneseq
      %v5486 = vshrl.u32 %v5485, 7
      %v5487 = vsub.s32 %v5484, %v5486
      %v5488 = vrot.slane %v5474, %v5487
      %v5489 = vcombine.low %v5434, %v5449
      %v5490 = vcombine.high %v5434, %v5449
      %v5492 = vunpack.c.l.s4 1934713408
      %v5493 = vunpack.c.0.s8 %v5492
      %v5494 = vlaneseq
      %v5495 = vshrl.u32 %v5494, 7
      %v5496 = vsub.s32 %v5493, %v5495
      %v5497 = vrot.slane %v5489, %v5496
      %v5499 = vunpack.c.l.s4 1934713408
      %v5500 = vunpack.c.0.s8 %v5499
      %v5501 = vlaneseq
      %v5502 = vshrl.u32 %v5501, 7
      %v5503 = vsub.s32 %v5500, %v5502
      %v5504 = vrot.slane %v5490, %v5503
      %v5505 = vcombine.low %v5441, %v5456
      %v5506 = vcombine.high %v5441, %v5456
      %v5508 = vunpack.c.l.s4 1934713408
      %v5509 = vunpack.c.0.s8 %v5508
      %v5510 = vlaneseq
      %v5511 = vshrl.u32 %v5510, 7
      %v5512 = vsub.s32 %v5509, %v5511
      %v5513 = vrot.slane %v5505, %v5512
      %v5515 = vunpack.c.l.s4 1934713408
      %v5516 = vunpack.c.0.s8 %v5515
      %v5517 = vlaneseq
      %v5518 = vshrl.u32 %v5517, 7
      %v5519 = vsub.s32 %v5516, %v5518
      %v5520 = vrot.slane %v5506, %v5519
      %v5521 = vcombine.low %v5465, %v5497
      %v5522 = vcombine.high %v5465, %v5497
      %v5523 = vcombine.low %v5472, %v5504
      %v5524 = vcombine.high %v5472, %v5504
      %v5525 = vcombine.low %v5481, %v5513
      %v5526 = vcombine.high %v5481, %v5513
      %v5527 = vcombine.low %v5488, %v5520
      %v5528 = vcombine.high %v5488, %v5520
      %5530 = vrot.lane.b32.xlu0 %v5388, 16
      %v5531 = vpop.permute.xlu0 %5530
      %5534 = vrot.lane.b32.xlu0 %v5389, 32
      %v5535 = vpop.permute.xlu0 %5534
      %5538 = vrot.lane.b32.xlu0 %v5390, 48
      %v5539 = vpop.permute.xlu0 %5538
      %5542 = vrot.lane.b32.xlu0 %v5391, 64
      %v5543 = vpop.permute.xlu0 %5542
      %5546 = vrot.lane.b32.xlu0 %v5392, 80
      %v5547 = vpop.permute.xlu0 %5546
      %5550 = vrot.lane.b32.xlu0 %v5393, 96
      %v5551 = vpop.permute.xlu0 %5550
      %5554 = vrot.lane.b32.xlu0 %v5394, 112
      %v5555 = vpop.permute.xlu0 %5554
      %5558 = vrot.lane.b32.xlu0 %v5522, 16
      %v5559 = vpop.permute.xlu0 %5558
      %5562 = vrot.lane.b32.xlu0 %v5523, 32
      %v5563 = vpop.permute.xlu0 %5562
      %5566 = vrot.lane.b32.xlu0 %v5524, 48
      %v5567 = vpop.permute.xlu0 %5566
      %5570 = vrot.lane.b32.xlu0 %v5525, 64
      %v5571 = vpop.permute.xlu0 %5570
      %5574 = vrot.lane.b32.xlu0 %v5526, 80
      %v5575 = vpop.permute.xlu0 %5574
      %5578 = vrot.lane.b32.xlu0 %v5527, 96
      %v5579 = vpop.permute.xlu0 %5578
      %5582 = vrot.lane.b32.xlu0 %v5528, 112
      %v5583 = vpop.permute.xlu0 %5582
      %v5585 = vsel %vm1182, %v5387, %v5531
      %v5586 = vsel %vm1184, %v5585, %v5535
      %v5587 = vsel %vm1186, %v5586, %v5539
      %v5588 = vsel %vm1188, %v5587, %v5543
      %v5589 = vsel %vm1190, %v5588, %v5547
      %v5590 = vsel %vm1192, %v5589, %v5551
      %v5591 = vsel %vm1194, %v5590, %v5555
      %v5592 = vsel %vm1182, %v5521, %v5559
      %v5593 = vsel %vm1184, %v5592, %v5563
      %v5594 = vsel %vm1186, %v5593, %v5567
      %v5595 = vsel %vm1188, %v5594, %v5571
      %v5596 = vsel %vm1190, %v5595, %v5575
      %v5597 = vsel %vm1192, %v5596, %v5579
      %v5598 = vsel %vm1194, %v5597, %v5583
      %v5601 = vrot.slane %v5591, 2
      %v5602 = vrot.slane %v5598, 2
      %5605 = vst [vmem:[#allocation3] sm:$0xc0] %v5601
      %5606 = vst [vmem:[#allocation3 + $0x8] sm:$0xc0] %v5602
      %5607 = vst [vmem:[#allocation3 + $0x10] sm:$0xf] %v5601
      %5608 = vst [vmem:[#allocation3 + $0x18] sm:$0xf] %v5602
      %v5609 = vld [vmem:[#allocation2] sm:$0xff]
      %v5610 = vld [vmem:[#allocation2 + $0x8] sm:$0xff]
      %v5611 = vld [vmem:[#allocation2 + $0x18] sm:$0xff]
      %v5612 = vld [vmem:[#allocation2 + $0x20] sm:$0xff]
      %v5613 = vld [vmem:[#allocation2 + $0x30] sm:$0xff]
      %v5614 = vld [vmem:[#allocation2 + $0x38] sm:$0xff]
      %v5615 = vld [vmem:[#allocation2 + $0x48] sm:$0xff]
      %v5616 = vld [vmem:[#allocation2 + $0x50] sm:$0xff]
      %v5617 = vld [vmem:[#allocation2 + $0x60] sm:$0xff]
      %v5618 = vld [vmem:[#allocation2 + $0x68] sm:$0xff]
      %v5619 = vld [vmem:[#allocation2 + $0x78] sm:$0xff]
      %v5620 = vld [vmem:[#allocation2 + $0x80] sm:$0xff]
      %5633 = vrot.lane.b32.xlu0 %v5609, 126
      %v5634 = vpop.permute.xlu0 %5633
      %5635 = vrot.lane.b32.xlu0 %v5610, 126
      %v5636 = vpop.permute.xlu0 %5635
      %5637 = vrot.lane.b32.xlu0 %v5611, 126
      %v5638 = vpop.permute.xlu0 %5637
      %5639 = vrot.lane.b32.xlu0 %v5612, 126
      %v5640 = vpop.permute.xlu0 %5639
      %5641 = vrot.lane.b32.xlu0 %v5613, 126
      %v5642 = vpop.permute.xlu0 %5641
      %5643 = vrot.lane.b32.xlu0 %v5614, 126
      %v5644 = vpop.permute.xlu0 %5643
      %5645 = vrot.lane.b32.xlu0 %v5615, 126
      %v5646 = vpop.permute.xlu0 %5645
      %5647 = vrot.lane.b32.xlu0 %v5616, 126
      %v5648 = vpop.permute.xlu0 %5647
      %5649 = vrot.lane.b32.xlu0 %v5617, 126
      %v5650 = vpop.permute.xlu0 %5649
      %5651 = vrot.lane.b32.xlu0 %v5618, 126
      %v5652 = vpop.permute.xlu0 %5651
      %5653 = vrot.lane.b32.xlu0 %v5619, 126
      %v5654 = vpop.permute.xlu0 %5653
      %5655 = vrot.lane.b32.xlu0 %v5620, 126
      %v5656 = vpop.permute.xlu0 %5655
      %v5669 = vcombine.low %v5634, %v5642
      %v5670 = vcombine.high %v5634, %v5642
      %v5672 = vunpack.c.l.s4 1983009808
      %v5673 = vunpack.c.0.s8 %v5672
      %v5674 = vlaneseq
      %v5675 = vshrl.u32 %v5674, 7
      %v5676 = vsub.s32 %v5673, %v5675
      %v5677 = vrot.slane %v5669, %v5676
      %v5679 = vunpack.c.l.s4 1983009808
      %v5680 = vunpack.c.0.s8 %v5679
      %v5681 = vlaneseq
      %v5682 = vshrl.u32 %v5681, 7
      %v5683 = vsub.s32 %v5680, %v5682
      %v5684 = vrot.slane %v5670, %v5683
      %v5685 = vcombine.low %v5638, %v5646
      %v5686 = vcombine.high %v5638, %v5646
      %v5688 = vunpack.c.l.s4 1983009808
      %v5689 = vunpack.c.0.s8 %v5688
      %v5690 = vlaneseq
      %v5691 = vshrl.u32 %v5690, 7
      %v5692 = vsub.s32 %v5689, %v5691
      %v5693 = vrot.slane %v5685, %v5692
      %v5695 = vunpack.c.l.s4 1983009808
      %v5696 = vunpack.c.0.s8 %v5695
      %v5697 = vlaneseq
      %v5698 = vshrl.u32 %v5697, 7
      %v5699 = vsub.s32 %v5696, %v5698
      %v5700 = vrot.slane %v5686, %v5699
      %v5701 = vcombine.high %v5650, 0.0
      %v5703 = vunpack.c.l.s4 1983009808
      %v5704 = vunpack.c.0.s8 %v5703
      %v5705 = vlaneseq
      %v5706 = vshrl.u32 %v5705, 7
      %v5707 = vsub.s32 %v5704, %v5706
      %v5708 = vrot.slane %v5650, %v5707
      %v5710 = vunpack.c.l.s4 1983009808
      %v5711 = vunpack.c.0.s8 %v5710
      %v5712 = vlaneseq
      %v5713 = vshrl.u32 %v5712, 7
      %v5714 = vsub.s32 %v5711, %v5713
      %v5715 = vrot.slane %v5701, %v5714
      %v5716 = vcombine.high %v5654, 0.0
      %v5718 = vunpack.c.l.s4 1983009808
      %v5719 = vunpack.c.0.s8 %v5718
      %v5720 = vlaneseq
      %v5721 = vshrl.u32 %v5720, 7
      %v5722 = vsub.s32 %v5719, %v5721
      %v5723 = vrot.slane %v5654, %v5722
      %v5725 = vunpack.c.l.s4 1983009808
      %v5726 = vunpack.c.0.s8 %v5725
      %v5727 = vlaneseq
      %v5728 = vshrl.u32 %v5727, 7
      %v5729 = vsub.s32 %v5726, %v5728
      %v5730 = vrot.slane %v5716, %v5729
      %v5731 = vcombine.low %v5677, %v5693
      %v5732 = vcombine.high %v5677, %v5693
      %v5734 = vunpack.c.l.s4 1934713408
      %v5735 = vunpack.c.0.s8 %v5734
      %v5736 = vlaneseq
      %v5737 = vshrl.u32 %v5736, 7
      %v5738 = vsub.s32 %v5735, %v5737
      %v5739 = vrot.slane %v5731, %v5738
      %v5741 = vunpack.c.l.s4 1934713408
      %v5742 = vunpack.c.0.s8 %v5741
      %v5743 = vlaneseq
      %v5744 = vshrl.u32 %v5743, 7
      %v5745 = vsub.s32 %v5742, %v5744
      %v5746 = vrot.slane %v5732, %v5745
      %v5747 = vcombine.low %v5684, %v5700
      %v5748 = vcombine.high %v5684, %v5700
      %v5750 = vunpack.c.l.s4 1934713408
      %v5751 = vunpack.c.0.s8 %v5750
      %v5752 = vlaneseq
      %v5753 = vshrl.u32 %v5752, 7
      %v5754 = vsub.s32 %v5751, %v5753
      %v5755 = vrot.slane %v5747, %v5754
      %v5757 = vunpack.c.l.s4 1934713408
      %v5758 = vunpack.c.0.s8 %v5757
      %v5759 = vlaneseq
      %v5760 = vshrl.u32 %v5759, 7
      %v5761 = vsub.s32 %v5758, %v5760
      %v5762 = vrot.slane %v5748, %v5761
      %v5763 = vcombine.low %v5708, %v5723
      %v5764 = vcombine.high %v5708, %v5723
      %v5766 = vunpack.c.l.s4 1934713408
      %v5767 = vunpack.c.0.s8 %v5766
      %v5768 = vlaneseq
      %v5769 = vshrl.u32 %v5768, 7
      %v5770 = vsub.s32 %v5767, %v5769
      %v5771 = vrot.slane %v5763, %v5770
      %v5773 = vunpack.c.l.s4 1934713408
      %v5774 = vunpack.c.0.s8 %v5773
      %v5775 = vlaneseq
      %v5776 = vshrl.u32 %v5775, 7
      %v5777 = vsub.s32 %v5774, %v5776
      %v5778 = vrot.slane %v5764, %v5777
      %v5779 = vcombine.low %v5715, %v5730
      %v5780 = vcombine.high %v5715, %v5730
      %v5782 = vunpack.c.l.s4 1934713408
      %v5783 = vunpack.c.0.s8 %v5782
      %v5784 = vlaneseq
      %v5785 = vshrl.u32 %v5784, 7
      %v5786 = vsub.s32 %v5783, %v5785
      %v5787 = vrot.slane %v5779, %v5786
      %v5789 = vunpack.c.l.s4 1934713408
      %v5790 = vunpack.c.0.s8 %v5789
      %v5791 = vlaneseq
      %v5792 = vshrl.u32 %v5791, 7
      %v5793 = vsub.s32 %v5790, %v5792
      %v5794 = vrot.slane %v5780, %v5793
      %v5795 = vcombine.low %v5739, %v5771
      %v5796 = vcombine.high %v5739, %v5771
      %v5797 = vcombine.low %v5746, %v5778
      %v5798 = vcombine.high %v5746, %v5778
      %v5799 = vcombine.low %v5755, %v5787
      %v5800 = vcombine.high %v5755, %v5787
      %v5801 = vcombine.low %v5762, %v5794
      %v5802 = vcombine.high %v5762, %v5794
      %v5803 = vcombine.low %v5636, %v5644
      %v5804 = vcombine.high %v5636, %v5644
      %v5806 = vunpack.c.l.s4 1983009808
      %v5807 = vunpack.c.0.s8 %v5806
      %v5808 = vlaneseq
      %v5809 = vshrl.u32 %v5808, 7
      %v5810 = vsub.s32 %v5807, %v5809
      %v5811 = vrot.slane %v5803, %v5810
      %v5813 = vunpack.c.l.s4 1983009808
      %v5814 = vunpack.c.0.s8 %v5813
      %v5815 = vlaneseq
      %v5816 = vshrl.u32 %v5815, 7
      %v5817 = vsub.s32 %v5814, %v5816
      %v5818 = vrot.slane %v5804, %v5817
      %v5819 = vcombine.low %v5640, %v5648
      %v5820 = vcombine.high %v5640, %v5648
      %v5822 = vunpack.c.l.s4 1983009808
      %v5823 = vunpack.c.0.s8 %v5822
      %v5824 = vlaneseq
      %v5825 = vshrl.u32 %v5824, 7
      %v5826 = vsub.s32 %v5823, %v5825
      %v5827 = vrot.slane %v5819, %v5826
      %v5829 = vunpack.c.l.s4 1983009808
      %v5830 = vunpack.c.0.s8 %v5829
      %v5831 = vlaneseq
      %v5832 = vshrl.u32 %v5831, 7
      %v5833 = vsub.s32 %v5830, %v5832
      %v5834 = vrot.slane %v5820, %v5833
      %v5835 = vcombine.high %v5652, 0.0
      %v5837 = vunpack.c.l.s4 1983009808
      %v5838 = vunpack.c.0.s8 %v5837
      %v5839 = vlaneseq
      %v5840 = vshrl.u32 %v5839, 7
      %v5841 = vsub.s32 %v5838, %v5840
      %v5842 = vrot.slane %v5652, %v5841
      %v5844 = vunpack.c.l.s4 1983009808
      %v5845 = vunpack.c.0.s8 %v5844
      %v5846 = vlaneseq
      %v5847 = vshrl.u32 %v5846, 7
      %v5848 = vsub.s32 %v5845, %v5847
      %v5849 = vrot.slane %v5835, %v5848
      %v5850 = vcombine.high %v5656, 0.0
      %v5852 = vunpack.c.l.s4 1983009808
      %v5853 = vunpack.c.0.s8 %v5852
      %v5854 = vlaneseq
      %v5855 = vshrl.u32 %v5854, 7
      %v5856 = vsub.s32 %v5853, %v5855
      %v5857 = vrot.slane %v5656, %v5856
      %v5859 = vunpack.c.l.s4 1983009808
      %v5860 = vunpack.c.0.s8 %v5859
      %v5861 = vlaneseq
      %v5862 = vshrl.u32 %v5861, 7
      %v5863 = vsub.s32 %v5860, %v5862
      %v5864 = vrot.slane %v5850, %v5863
      %v5865 = vcombine.low %v5811, %v5827
      %v5866 = vcombine.high %v5811, %v5827
      %v5868 = vunpack.c.l.s4 1934713408
      %v5869 = vunpack.c.0.s8 %v5868
      %v5870 = vlaneseq
      %v5871 = vshrl.u32 %v5870, 7
      %v5872 = vsub.s32 %v5869, %v5871
      %v5873 = vrot.slane %v5865, %v5872
      %v5875 = vunpack.c.l.s4 1934713408
      %v5876 = vunpack.c.0.s8 %v5875
      %v5877 = vlaneseq
      %v5878 = vshrl.u32 %v5877, 7
      %v5879 = vsub.s32 %v5876, %v5878
      %v5880 = vrot.slane %v5866, %v5879
      %v5881 = vcombine.low %v5818, %v5834
      %v5882 = vcombine.high %v5818, %v5834
      %v5884 = vunpack.c.l.s4 1934713408
      %v5885 = vunpack.c.0.s8 %v5884
      %v5886 = vlaneseq
      %v5887 = vshrl.u32 %v5886, 7
      %v5888 = vsub.s32 %v5885, %v5887
      %v5889 = vrot.slane %v5881, %v5888
      %v5891 = vunpack.c.l.s4 1934713408
      %v5892 = vunpack.c.0.s8 %v5891
      %v5893 = vlaneseq
      %v5894 = vshrl.u32 %v5893, 7
      %v5895 = vsub.s32 %v5892, %v5894
      %v5896 = vrot.slane %v5882, %v5895
      %v5897 = vcombine.low %v5842, %v5857
      %v5898 = vcombine.high %v5842, %v5857
      %v5900 = vunpack.c.l.s4 1934713408
      %v5901 = vunpack.c.0.s8 %v5900
      %v5902 = vlaneseq
      %v5903 = vshrl.u32 %v5902, 7
      %v5904 = vsub.s32 %v5901, %v5903
      %v5905 = vrot.slane %v5897, %v5904
      %v5907 = vunpack.c.l.s4 1934713408
      %v5908 = vunpack.c.0.s8 %v5907
      %v5909 = vlaneseq
      %v5910 = vshrl.u32 %v5909, 7
      %v5911 = vsub.s32 %v5908, %v5910
      %v5912 = vrot.slane %v5898, %v5911
      %v5913 = vcombine.low %v5849, %v5864
      %v5914 = vcombine.high %v5849, %v5864
      %v5916 = vunpack.c.l.s4 1934713408
      %v5917 = vunpack.c.0.s8 %v5916
      %v5918 = vlaneseq
      %v5919 = vshrl.u32 %v5918, 7
      %v5920 = vsub.s32 %v5917, %v5919
      %v5921 = vrot.slane %v5913, %v5920
      %v5923 = vunpack.c.l.s4 1934713408
      %v5924 = vunpack.c.0.s8 %v5923
      %v5925 = vlaneseq
      %v5926 = vshrl.u32 %v5925, 7
      %v5927 = vsub.s32 %v5924, %v5926
      %v5928 = vrot.slane %v5914, %v5927
      %v5929 = vcombine.low %v5873, %v5905
      %v5930 = vcombine.high %v5873, %v5905
      %v5931 = vcombine.low %v5880, %v5912
      %v5932 = vcombine.high %v5880, %v5912
      %v5933 = vcombine.low %v5889, %v5921
      %v5934 = vcombine.high %v5889, %v5921
      %v5935 = vcombine.low %v5896, %v5928
      %v5936 = vcombine.high %v5896, %v5928
      %5938 = vrot.lane.b32.xlu0 %v5796, 16
      %v5939 = vpop.permute.xlu0 %5938
      %5942 = vrot.lane.b32.xlu0 %v5797, 32
      %v5943 = vpop.permute.xlu0 %5942
      %5946 = vrot.lane.b32.xlu0 %v5798, 48
      %v5947 = vpop.permute.xlu0 %5946
      %5950 = vrot.lane.b32.xlu0 %v5799, 64
      %v5951 = vpop.permute.xlu0 %5950
      %5954 = vrot.lane.b32.xlu0 %v5800, 80
      %v5955 = vpop.permute.xlu0 %5954
      %5958 = vrot.lane.b32.xlu0 %v5801, 96
      %v5959 = vpop.permute.xlu0 %5958
      %5962 = vrot.lane.b32.xlu0 %v5802, 112
      %v5963 = vpop.permute.xlu0 %5962
      %5966 = vrot.lane.b32.xlu0 %v5930, 16
      %v5967 = vpop.permute.xlu0 %5966
      %5970 = vrot.lane.b32.xlu0 %v5931, 32
      %v5971 = vpop.permute.xlu0 %5970
      %5974 = vrot.lane.b32.xlu0 %v5932, 48
      %v5975 = vpop.permute.xlu0 %5974
      %5978 = vrot.lane.b32.xlu0 %v5933, 64
      %v5979 = vpop.permute.xlu0 %5978
      %5982 = vrot.lane.b32.xlu0 %v5934, 80
      %v5983 = vpop.permute.xlu0 %5982
      %5986 = vrot.lane.b32.xlu0 %v5935, 96
      %v5987 = vpop.permute.xlu0 %5986
      %5990 = vrot.lane.b32.xlu0 %v5936, 112
      %v5991 = vpop.permute.xlu0 %5990
      %v5993 = vsel %vm1182, %v5795, %v5939
      %v5994 = vsel %vm1184, %v5993, %v5943
      %v5995 = vsel %vm1186, %v5994, %v5947
      %v5996 = vsel %vm1188, %v5995, %v5951
      %v5997 = vsel %vm1190, %v5996, %v5955
      %v5998 = vsel %vm1192, %v5997, %v5959
      %v5999 = vsel %vm1194, %v5998, %v5963
      %v6000 = vsel %vm1182, %v5929, %v5967
      %v6001 = vsel %vm1184, %v6000, %v5971
      %v6002 = vsel %vm1186, %v6001, %v5975
      %v6003 = vsel %vm1188, %v6002, %v5979
      %v6004 = vsel %vm1190, %v6003, %v5983
      %v6005 = vsel %vm1192, %v6004, %v5987
      %v6006 = vsel %vm1194, %v6005, %v5991
      %v6009 = vrot.slane %v5999, 4
      %v6010 = vrot.slane %v6006, 4
      %6013 = vst [vmem:[#allocation3 + $0x10] sm:$0xf0] %v6009
      %6014 = vst [vmem:[#allocation3 + $0x18] sm:$0xf0] %v6010
      %6015 = vst [vmem:[#allocation3 + $0x20] sm:$0x3] %v6009
      %6016 = vst [vmem:[#allocation3 + $0x28] sm:$0x3] %v6010
      %v6017 = vld [vmem:[#allocation2 + $0x1] sm:$0xff]
      %v6018 = vld [vmem:[#allocation2 + $0x9] sm:$0xff]
      %v6019 = vld [vmem:[#allocation2 + $0x19] sm:$0xff]
      %v6020 = vld [vmem:[#allocation2 + $0x21] sm:$0xff]
      %v6021 = vld [vmem:[#allocation2 + $0x31] sm:$0xff]
      %v6022 = vld [vmem:[#allocation2 + $0x39] sm:$0xff]
      %v6023 = vld [vmem:[#allocation2 + $0x49] sm:$0xff]
      %v6024 = vld [vmem:[#allocation2 + $0x51] sm:$0xff]
      %v6025 = vld [vmem:[#allocation2 + $0x61] sm:$0xff]
      %v6026 = vld [vmem:[#allocation2 + $0x69] sm:$0xff]
      %v6027 = vld [vmem:[#allocation2 + $0x79] sm:$0xff]
      %v6028 = vld [vmem:[#allocation2 + $0x81] sm:$0xff]
      %v6029 = vcombine.low %v6017, %v6021
      %v6030 = vcombine.high %v6017, %v6021
      %v6032 = vunpack.c.l.s4 1983009808
      %v6033 = vunpack.c.0.s8 %v6032
      %v6034 = vlaneseq
      %v6035 = vshrl.u32 %v6034, 7
      %v6036 = vsub.s32 %v6033, %v6035
      %v6037 = vrot.slane %v6029, %v6036
      %v6039 = vunpack.c.l.s4 1983009808
      %v6040 = vunpack.c.0.s8 %v6039
      %v6041 = vlaneseq
      %v6042 = vshrl.u32 %v6041, 7
      %v6043 = vsub.s32 %v6040, %v6042
      %v6044 = vrot.slane %v6030, %v6043
      %v6045 = vcombine.low %v6019, %v6023
      %v6046 = vcombine.high %v6019, %v6023
      %v6048 = vunpack.c.l.s4 1983009808
      %v6049 = vunpack.c.0.s8 %v6048
      %v6050 = vlaneseq
      %v6051 = vshrl.u32 %v6050, 7
      %v6052 = vsub.s32 %v6049, %v6051
      %v6053 = vrot.slane %v6045, %v6052
      %v6055 = vunpack.c.l.s4 1983009808
      %v6056 = vunpack.c.0.s8 %v6055
      %v6057 = vlaneseq
      %v6058 = vshrl.u32 %v6057, 7
      %v6059 = vsub.s32 %v6056, %v6058
      %v6060 = vrot.slane %v6046, %v6059
      %v6061 = vcombine.high %v6025, 0.0
      %v6063 = vunpack.c.l.s4 1983009808
      %v6064 = vunpack.c.0.s8 %v6063
      %v6065 = vlaneseq
      %v6066 = vshrl.u32 %v6065, 7
      %v6067 = vsub.s32 %v6064, %v6066
      %v6068 = vrot.slane %v6025, %v6067
      %v6070 = vunpack.c.l.s4 1983009808
      %v6071 = vunpack.c.0.s8 %v6070
      %v6072 = vlaneseq
      %v6073 = vshrl.u32 %v6072, 7
      %v6074 = vsub.s32 %v6071, %v6073
      %v6075 = vrot.slane %v6061, %v6074
      %v6076 = vcombine.high %v6027, 0.0
      %v6078 = vunpack.c.l.s4 1983009808
      %v6079 = vunpack.c.0.s8 %v6078
      %v6080 = vlaneseq
      %v6081 = vshrl.u32 %v6080, 7
      %v6082 = vsub.s32 %v6079, %v6081
      %v6083 = vrot.slane %v6027, %v6082
      %v6085 = vunpack.c.l.s4 1983009808
      %v6086 = vunpack.c.0.s8 %v6085
      %v6087 = vlaneseq
      %v6088 = vshrl.u32 %v6087, 7
      %v6089 = vsub.s32 %v6086, %v6088
      %v6090 = vrot.slane %v6076, %v6089
      %v6091 = vcombine.low %v6037, %v6053
      %v6092 = vcombine.high %v6037, %v6053
      %v6094 = vunpack.c.l.s4 1934713408
      %v6095 = vunpack.c.0.s8 %v6094
      %v6096 = vlaneseq
      %v6097 = vshrl.u32 %v6096, 7
      %v6098 = vsub.s32 %v6095, %v6097
      %v6099 = vrot.slane %v6091, %v6098
      %v6101 = vunpack.c.l.s4 1934713408
      %v6102 = vunpack.c.0.s8 %v6101
      %v6103 = vlaneseq
      %v6104 = vshrl.u32 %v6103, 7
      %v6105 = vsub.s32 %v6102, %v6104
      %v6106 = vrot.slane %v6092, %v6105
      %v6107 = vcombine.low %v6044, %v6060
      %v6108 = vcombine.high %v6044, %v6060
      %v6110 = vunpack.c.l.s4 1934713408
      %v6111 = vunpack.c.0.s8 %v6110
      %v6112 = vlaneseq
      %v6113 = vshrl.u32 %v6112, 7
      %v6114 = vsub.s32 %v6111, %v6113
      %v6115 = vrot.slane %v6107, %v6114
      %v6117 = vunpack.c.l.s4 1934713408
      %v6118 = vunpack.c.0.s8 %v6117
      %v6119 = vlaneseq
      %v6120 = vshrl.u32 %v6119, 7
      %v6121 = vsub.s32 %v6118, %v6120
      %v6122 = vrot.slane %v6108, %v6121
      %v6123 = vcombine.low %v6068, %v6083
      %v6124 = vcombine.high %v6068, %v6083
      %v6126 = vunpack.c.l.s4 1934713408
      %v6127 = vunpack.c.0.s8 %v6126
      %v6128 = vlaneseq
      %v6129 = vshrl.u32 %v6128, 7
      %v6130 = vsub.s32 %v6127, %v6129
      %v6131 = vrot.slane %v6123, %v6130
      %v6133 = vunpack.c.l.s4 1934713408
      %v6134 = vunpack.c.0.s8 %v6133
      %v6135 = vlaneseq
      %v6136 = vshrl.u32 %v6135, 7
      %v6137 = vsub.s32 %v6134, %v6136
      %v6138 = vrot.slane %v6124, %v6137
      %v6139 = vcombine.low %v6075, %v6090
      %v6140 = vcombine.high %v6075, %v6090
      %v6142 = vunpack.c.l.s4 1934713408
      %v6143 = vunpack.c.0.s8 %v6142
      %v6144 = vlaneseq
      %v6145 = vshrl.u32 %v6144, 7
      %v6146 = vsub.s32 %v6143, %v6145
      %v6147 = vrot.slane %v6139, %v6146
      %v6149 = vunpack.c.l.s4 1934713408
      %v6150 = vunpack.c.0.s8 %v6149
      %v6151 = vlaneseq
      %v6152 = vshrl.u32 %v6151, 7
      %v6153 = vsub.s32 %v6150, %v6152
      %v6154 = vrot.slane %v6140, %v6153
      %v6155 = vcombine.low %v6099, %v6131
      %v6156 = vcombine.high %v6099, %v6131
      %v6157 = vcombine.low %v6106, %v6138
      %v6158 = vcombine.high %v6106, %v6138
      %v6159 = vcombine.low %v6115, %v6147
      %v6160 = vcombine.high %v6115, %v6147
      %v6161 = vcombine.low %v6122, %v6154
      %v6162 = vcombine.high %v6122, %v6154
      %v6163 = vcombine.low %v6018, %v6022
      %v6164 = vcombine.high %v6018, %v6022
      %v6166 = vunpack.c.l.s4 1983009808
      %v6167 = vunpack.c.0.s8 %v6166
      %v6168 = vlaneseq
      %v6169 = vshrl.u32 %v6168, 7
      %v6170 = vsub.s32 %v6167, %v6169
      %v6171 = vrot.slane %v6163, %v6170
      %v6173 = vunpack.c.l.s4 1983009808
      %v6174 = vunpack.c.0.s8 %v6173
      %v6175 = vlaneseq
      %v6176 = vshrl.u32 %v6175, 7
      %v6177 = vsub.s32 %v6174, %v6176
      %v6178 = vrot.slane %v6164, %v6177
      %v6179 = vcombine.low %v6020, %v6024
      %v6180 = vcombine.high %v6020, %v6024
      %v6182 = vunpack.c.l.s4 1983009808
      %v6183 = vunpack.c.0.s8 %v6182
      %v6184 = vlaneseq
      %v6185 = vshrl.u32 %v6184, 7
      %v6186 = vsub.s32 %v6183, %v6185
      %v6187 = vrot.slane %v6179, %v6186
      %v6189 = vunpack.c.l.s4 1983009808
      %v6190 = vunpack.c.0.s8 %v6189
      %v6191 = vlaneseq
      %v6192 = vshrl.u32 %v6191, 7
      %v6193 = vsub.s32 %v6190, %v6192
      %v6194 = vrot.slane %v6180, %v6193
      %v6195 = vcombine.high %v6026, 0.0
      %v6197 = vunpack.c.l.s4 1983009808
      %v6198 = vunpack.c.0.s8 %v6197
      %v6199 = vlaneseq
      %v6200 = vshrl.u32 %v6199, 7
      %v6201 = vsub.s32 %v6198, %v6200
      %v6202 = vrot.slane %v6026, %v6201
      %v6204 = vunpack.c.l.s4 1983009808
      %v6205 = vunpack.c.0.s8 %v6204
      %v6206 = vlaneseq
      %v6207 = vshrl.u32 %v6206, 7
      %v6208 = vsub.s32 %v6205, %v6207
      %v6209 = vrot.slane %v6195, %v6208
      %v6210 = vcombine.high %v6028, 0.0
      %v6212 = vunpack.c.l.s4 1983009808
      %v6213 = vunpack.c.0.s8 %v6212
      %v6214 = vlaneseq
      %v6215 = vshrl.u32 %v6214, 7
      %v6216 = vsub.s32 %v6213, %v6215
      %v6217 = vrot.slane %v6028, %v6216
      %v6219 = vunpack.c.l.s4 1983009808
      %v6220 = vunpack.c.0.s8 %v6219
      %v6221 = vlaneseq
      %v6222 = vshrl.u32 %v6221, 7
      %v6223 = vsub.s32 %v6220, %v6222
      %v6224 = vrot.slane %v6210, %v6223
      %v6225 = vcombine.low %v6171, %v6187
      %v6226 = vcombine.high %v6171, %v6187
      %v6228 = vunpack.c.l.s4 1934713408
      %v6229 = vunpack.c.0.s8 %v6228
      %v6230 = vlaneseq
      %v6231 = vshrl.u32 %v6230, 7
      %v6232 = vsub.s32 %v6229, %v6231
      %v6233 = vrot.slane %v6225, %v6232
      %v6235 = vunpack.c.l.s4 1934713408
      %v6236 = vunpack.c.0.s8 %v6235
      %v6237 = vlaneseq
      %v6238 = vshrl.u32 %v6237, 7
      %v6239 = vsub.s32 %v6236, %v6238
      %v6240 = vrot.slane %v6226, %v6239
      %v6241 = vcombine.low %v6178, %v6194
      %v6242 = vcombine.high %v6178, %v6194
      %v6244 = vunpack.c.l.s4 1934713408
      %v6245 = vunpack.c.0.s8 %v6244
      %v6246 = vlaneseq
      %v6247 = vshrl.u32 %v6246, 7
      %v6248 = vsub.s32 %v6245, %v6247
      %v6249 = vrot.slane %v6241, %v6248
      %v6251 = vunpack.c.l.s4 1934713408
      %v6252 = vunpack.c.0.s8 %v6251
      %v6253 = vlaneseq
      %v6254 = vshrl.u32 %v6253, 7
      %v6255 = vsub.s32 %v6252, %v6254
      %v6256 = vrot.slane %v6242, %v6255
      %v6257 = vcombine.low %v6202, %v6217
      %v6258 = vcombine.high %v6202, %v6217
      %v6260 = vunpack.c.l.s4 1934713408
      %v6261 = vunpack.c.0.s8 %v6260
      %v6262 = vlaneseq
      %v6263 = vshrl.u32 %v6262, 7
      %v6264 = vsub.s32 %v6261, %v6263
      %v6265 = vrot.slane %v6257, %v6264
      %v6267 = vunpack.c.l.s4 1934713408
      %v6268 = vunpack.c.0.s8 %v6267
      %v6269 = vlaneseq
      %v6270 = vshrl.u32 %v6269, 7
      %v6271 = vsub.s32 %v6268, %v6270
      %v6272 = vrot.slane %v6258, %v6271
      %v6273 = vcombine.low %v6209, %v6224
      %v6274 = vcombine.high %v6209, %v6224
      %v6276 = vunpack.c.l.s4 1934713408
      %v6277 = vunpack.c.0.s8 %v6276
      %v6278 = vlaneseq
      %v6279 = vshrl.u32 %v6278, 7
      %v6280 = vsub.s32 %v6277, %v6279
      %v6281 = vrot.slane %v6273, %v6280
      %v6283 = vunpack.c.l.s4 1934713408
      %v6284 = vunpack.c.0.s8 %v6283
      %v6285 = vlaneseq
      %v6286 = vshrl.u32 %v6285, 7
      %v6287 = vsub.s32 %v6284, %v6286
      %v6288 = vrot.slane %v6274, %v6287
      %v6289 = vcombine.low %v6233, %v6265
      %v6290 = vcombine.high %v6233, %v6265
      %v6291 = vcombine.low %v6240, %v6272
      %v6292 = vcombine.high %v6240, %v6272
      %v6293 = vcombine.low %v6249, %v6281
      %v6294 = vcombine.high %v6249, %v6281
      %v6295 = vcombine.low %v6256, %v6288
      %v6296 = vcombine.high %v6256, %v6288
      %6298 = vrot.lane.b32.xlu0 %v6156, 16
      %v6299 = vpop.permute.xlu0 %6298
      %6302 = vrot.lane.b32.xlu0 %v6157, 32
      %v6303 = vpop.permute.xlu0 %6302
      %6306 = vrot.lane.b32.xlu0 %v6158, 48
      %v6307 = vpop.permute.xlu0 %6306
      %6310 = vrot.lane.b32.xlu0 %v6159, 64
      %v6311 = vpop.permute.xlu0 %6310
      %6314 = vrot.lane.b32.xlu0 %v6160, 80
      %v6315 = vpop.permute.xlu0 %6314
      %6318 = vrot.lane.b32.xlu0 %v6161, 96
      %v6319 = vpop.permute.xlu0 %6318
      %6322 = vrot.lane.b32.xlu0 %v6162, 112
      %v6323 = vpop.permute.xlu0 %6322
      %6326 = vrot.lane.b32.xlu0 %v6290, 16
      %v6327 = vpop.permute.xlu0 %6326
      %6330 = vrot.lane.b32.xlu0 %v6291, 32
      %v6331 = vpop.permute.xlu0 %6330
      %6334 = vrot.lane.b32.xlu0 %v6292, 48
      %v6335 = vpop.permute.xlu0 %6334
      %6338 = vrot.lane.b32.xlu0 %v6293, 64
      %v6339 = vpop.permute.xlu0 %6338
      %6342 = vrot.lane.b32.xlu0 %v6294, 80
      %v6343 = vpop.permute.xlu0 %6342
      %6346 = vrot.lane.b32.xlu0 %v6295, 96
      %v6347 = vpop.permute.xlu0 %6346
      %6350 = vrot.lane.b32.xlu0 %v6296, 112
      %v6351 = vpop.permute.xlu0 %6350
      %v6353 = vsel %vm1182, %v6155, %v6299
      %v6354 = vsel %vm1184, %v6353, %v6303
      %v6355 = vsel %vm1186, %v6354, %v6307
      %v6356 = vsel %vm1188, %v6355, %v6311
      %v6357 = vsel %vm1190, %v6356, %v6315
      %v6358 = vsel %vm1192, %v6357, %v6319
      %v6359 = vsel %vm1194, %v6358, %v6323
      %v6360 = vsel %vm1182, %v6289, %v6327
      %v6361 = vsel %vm1184, %v6360, %v6331
      %v6362 = vsel %vm1186, %v6361, %v6335
      %v6363 = vsel %vm1188, %v6362, %v6339
      %v6364 = vsel %vm1190, %v6363, %v6343
      %v6365 = vsel %vm1192, %v6364, %v6347
      %v6366 = vsel %vm1194, %v6365, %v6351
      %v6369 = vrot.slane %v6359, 6
      %v6370 = vrot.slane %v6366, 6
      %6373 = vst [vmem:[#allocation3 + $0x20] sm:$0xfc] %v6369
      %6374 = vst [vmem:[#allocation3 + $0x28] sm:$0xfc] %v6370
      %v6375 = vld [vmem:[#allocation2 + $0x1] sm:$0xff]
      %v6376 = vld [vmem:[#allocation2 + $0x9] sm:$0xff]
      %v6377 = vld [vmem:[#allocation2 + $0x19] sm:$0xff]
      %v6378 = vld [vmem:[#allocation2 + $0x21] sm:$0xff]
      %v6379 = vld [vmem:[#allocation2 + $0x31] sm:$0xff]
      %v6380 = vld [vmem:[#allocation2 + $0x39] sm:$0xff]
      %v6381 = vld [vmem:[#allocation2 + $0x49] sm:$0xff]
      %v6382 = vld [vmem:[#allocation2 + $0x51] sm:$0xff]
      %v6383 = vld [vmem:[#allocation2 + $0x61] sm:$0xff]
      %v6384 = vld [vmem:[#allocation2 + $0x69] sm:$0xff]
      %v6385 = vld [vmem:[#allocation2 + $0x79] sm:$0xff]
      %v6386 = vld [vmem:[#allocation2 + $0x81] sm:$0xff]
      %6399 = vrot.lane.b32.xlu0 %v6375, 127
      %v6400 = vpop.permute.xlu0 %6399
      %6401 = vrot.lane.b32.xlu0 %v6376, 127
      %v6402 = vpop.permute.xlu0 %6401
      %6403 = vrot.lane.b32.xlu0 %v6377, 127
      %v6404 = vpop.permute.xlu0 %6403
      %6405 = vrot.lane.b32.xlu0 %v6378, 127
      %v6406 = vpop.permute.xlu0 %6405
      %6407 = vrot.lane.b32.xlu0 %v6379, 127
      %v6408 = vpop.permute.xlu0 %6407
      %6409 = vrot.lane.b32.xlu0 %v6380, 127
      %v6410 = vpop.permute.xlu0 %6409
      %6411 = vrot.lane.b32.xlu0 %v6381, 127
      %v6412 = vpop.permute.xlu0 %6411
      %6413 = vrot.lane.b32.xlu0 %v6382, 127
      %v6414 = vpop.permute.xlu0 %6413
      %6415 = vrot.lane.b32.xlu0 %v6383, 127
      %v6416 = vpop.permute.xlu0 %6415
      %6417 = vrot.lane.b32.xlu0 %v6384, 127
      %v6418 = vpop.permute.xlu0 %6417
      %6419 = vrot.lane.b32.xlu0 %v6385, 127
      %v6420 = vpop.permute.xlu0 %6419
      %6421 = vrot.lane.b32.xlu0 %v6386, 127
      %v6422 = vpop.permute.xlu0 %6421
      %v6435 = vcombine.low %v6400, %v6408
      %v6436 = vcombine.high %v6400, %v6408
      %v6438 = vunpack.c.l.s4 1983009808
      %v6439 = vunpack.c.0.s8 %v6438
      %v6440 = vlaneseq
      %v6441 = vshrl.u32 %v6440, 7
      %v6442 = vsub.s32 %v6439, %v6441
      %v6443 = vrot.slane %v6435, %v6442
      %v6445 = vunpack.c.l.s4 1983009808
      %v6446 = vunpack.c.0.s8 %v6445
      %v6447 = vlaneseq
      %v6448 = vshrl.u32 %v6447, 7
      %v6449 = vsub.s32 %v6446, %v6448
      %v6450 = vrot.slane %v6436, %v6449
      %v6451 = vcombine.low %v6404, %v6412
      %v6452 = vcombine.high %v6404, %v6412
      %v6454 = vunpack.c.l.s4 1983009808
      %v6455 = vunpack.c.0.s8 %v6454
      %v6456 = vlaneseq
      %v6457 = vshrl.u32 %v6456, 7
      %v6458 = vsub.s32 %v6455, %v6457
      %v6459 = vrot.slane %v6451, %v6458
      %v6461 = vunpack.c.l.s4 1983009808
      %v6462 = vunpack.c.0.s8 %v6461
      %v6463 = vlaneseq
      %v6464 = vshrl.u32 %v6463, 7
      %v6465 = vsub.s32 %v6462, %v6464
      %v6466 = vrot.slane %v6452, %v6465
      %v6467 = vcombine.high %v6416, 0.0
      %v6469 = vunpack.c.l.s4 1983009808
      %v6470 = vunpack.c.0.s8 %v6469
      %v6471 = vlaneseq
      %v6472 = vshrl.u32 %v6471, 7
      %v6473 = vsub.s32 %v6470, %v6472
      %v6474 = vrot.slane %v6416, %v6473
      %v6476 = vunpack.c.l.s4 1983009808
      %v6477 = vunpack.c.0.s8 %v6476
      %v6478 = vlaneseq
      %v6479 = vshrl.u32 %v6478, 7
      %v6480 = vsub.s32 %v6477, %v6479
      %v6481 = vrot.slane %v6467, %v6480
      %v6482 = vcombine.high %v6420, 0.0
      %v6484 = vunpack.c.l.s4 1983009808
      %v6485 = vunpack.c.0.s8 %v6484
      %v6486 = vlaneseq
      %v6487 = vshrl.u32 %v6486, 7
      %v6488 = vsub.s32 %v6485, %v6487
      %v6489 = vrot.slane %v6420, %v6488
      %v6491 = vunpack.c.l.s4 1983009808
      %v6492 = vunpack.c.0.s8 %v6491
      %v6493 = vlaneseq
      %v6494 = vshrl.u32 %v6493, 7
      %v6495 = vsub.s32 %v6492, %v6494
      %v6496 = vrot.slane %v6482, %v6495
      %v6497 = vcombine.low %v6443, %v6459
      %v6498 = vcombine.high %v6443, %v6459
      %v6500 = vunpack.c.l.s4 1934713408
      %v6501 = vunpack.c.0.s8 %v6500
      %v6502 = vlaneseq
      %v6503 = vshrl.u32 %v6502, 7
      %v6504 = vsub.s32 %v6501, %v6503
      %v6505 = vrot.slane %v6497, %v6504
      %v6507 = vunpack.c.l.s4 1934713408
      %v6508 = vunpack.c.0.s8 %v6507
      %v6509 = vlaneseq
      %v6510 = vshrl.u32 %v6509, 7
      %v6511 = vsub.s32 %v6508, %v6510
      %v6512 = vrot.slane %v6498, %v6511
      %v6513 = vcombine.low %v6450, %v6466
      %v6514 = vcombine.high %v6450, %v6466
      %v6516 = vunpack.c.l.s4 1934713408
      %v6517 = vunpack.c.0.s8 %v6516
      %v6518 = vlaneseq
      %v6519 = vshrl.u32 %v6518, 7
      %v6520 = vsub.s32 %v6517, %v6519
      %v6521 = vrot.slane %v6513, %v6520
      %v6523 = vunpack.c.l.s4 1934713408
      %v6524 = vunpack.c.0.s8 %v6523
      %v6525 = vlaneseq
      %v6526 = vshrl.u32 %v6525, 7
      %v6527 = vsub.s32 %v6524, %v6526
      %v6528 = vrot.slane %v6514, %v6527
      %v6529 = vcombine.low %v6474, %v6489
      %v6530 = vcombine.high %v6474, %v6489
      %v6532 = vunpack.c.l.s4 1934713408
      %v6533 = vunpack.c.0.s8 %v6532
      %v6534 = vlaneseq
      %v6535 = vshrl.u32 %v6534, 7
      %v6536 = vsub.s32 %v6533, %v6535
      %v6537 = vrot.slane %v6529, %v6536
      %v6539 = vunpack.c.l.s4 1934713408
      %v6540 = vunpack.c.0.s8 %v6539
      %v6541 = vlaneseq
      %v6542 = vshrl.u32 %v6541, 7
      %v6543 = vsub.s32 %v6540, %v6542
      %v6544 = vrot.slane %v6530, %v6543
      %v6545 = vcombine.low %v6481, %v6496
      %v6546 = vcombine.high %v6481, %v6496
      %v6548 = vunpack.c.l.s4 1934713408
      %v6549 = vunpack.c.0.s8 %v6548
      %v6550 = vlaneseq
      %v6551 = vshrl.u32 %v6550, 7
      %v6552 = vsub.s32 %v6549, %v6551
      %v6553 = vrot.slane %v6545, %v6552
      %v6555 = vunpack.c.l.s4 1934713408
      %v6556 = vunpack.c.0.s8 %v6555
      %v6557 = vlaneseq
      %v6558 = vshrl.u32 %v6557, 7
      %v6559 = vsub.s32 %v6556, %v6558
      %v6560 = vrot.slane %v6546, %v6559
      %v6561 = vcombine.low %v6505, %v6537
      %v6562 = vcombine.high %v6505, %v6537
      %v6563 = vcombine.low %v6512, %v6544
      %v6564 = vcombine.high %v6512, %v6544
      %v6565 = vcombine.low %v6521, %v6553
      %v6566 = vcombine.high %v6521, %v6553
      %v6567 = vcombine.low %v6528, %v6560
      %v6568 = vcombine.high %v6528, %v6560
      %v6569 = vcombine.low %v6402, %v6410
      %v6570 = vcombine.high %v6402, %v6410
      %v6572 = vunpack.c.l.s4 1983009808
      %v6573 = vunpack.c.0.s8 %v6572
      %v6574 = vlaneseq
      %v6575 = vshrl.u32 %v6574, 7
      %v6576 = vsub.s32 %v6573, %v6575
      %v6577 = vrot.slane %v6569, %v6576
      %v6579 = vunpack.c.l.s4 1983009808
      %v6580 = vunpack.c.0.s8 %v6579
      %v6581 = vlaneseq
      %v6582 = vshrl.u32 %v6581, 7
      %v6583 = vsub.s32 %v6580, %v6582
      %v6584 = vrot.slane %v6570, %v6583
      %v6585 = vcombine.low %v6406, %v6414
      %v6586 = vcombine.high %v6406, %v6414
      %v6588 = vunpack.c.l.s4 1983009808
      %v6589 = vunpack.c.0.s8 %v6588
      %v6590 = vlaneseq
      %v6591 = vshrl.u32 %v6590, 7
      %v6592 = vsub.s32 %v6589, %v6591
      %v6593 = vrot.slane %v6585, %v6592
      %v6595 = vunpack.c.l.s4 1983009808
      %v6596 = vunpack.c.0.s8 %v6595
      %v6597 = vlaneseq
      %v6598 = vshrl.u32 %v6597, 7
      %v6599 = vsub.s32 %v6596, %v6598
      %v6600 = vrot.slane %v6586, %v6599
      %v6601 = vcombine.high %v6418, 0.0
      %v6603 = vunpack.c.l.s4 1983009808
      %v6604 = vunpack.c.0.s8 %v6603
      %v6605 = vlaneseq
      %v6606 = vshrl.u32 %v6605, 7
      %v6607 = vsub.s32 %v6604, %v6606
      %v6608 = vrot.slane %v6418, %v6607
      %v6610 = vunpack.c.l.s4 1983009808
      %v6611 = vunpack.c.0.s8 %v6610
      %v6612 = vlaneseq
      %v6613 = vshrl.u32 %v6612, 7
      %v6614 = vsub.s32 %v6611, %v6613
      %v6615 = vrot.slane %v6601, %v6614
      %v6616 = vcombine.high %v6422, 0.0
      %v6618 = vunpack.c.l.s4 1983009808
      %v6619 = vunpack.c.0.s8 %v6618
      %v6620 = vlaneseq
      %v6621 = vshrl.u32 %v6620, 7
      %v6622 = vsub.s32 %v6619, %v6621
      %v6623 = vrot.slane %v6422, %v6622
      %v6625 = vunpack.c.l.s4 1983009808
      %v6626 = vunpack.c.0.s8 %v6625
      %v6627 = vlaneseq
      %v6628 = vshrl.u32 %v6627, 7
      %v6629 = vsub.s32 %v6626, %v6628
      %v6630 = vrot.slane %v6616, %v6629
      %v6631 = vcombine.low %v6577, %v6593
      %v6632 = vcombine.high %v6577, %v6593
      %v6634 = vunpack.c.l.s4 1934713408
      %v6635 = vunpack.c.0.s8 %v6634
      %v6636 = vlaneseq
      %v6637 = vshrl.u32 %v6636, 7
      %v6638 = vsub.s32 %v6635, %v6637
      %v6639 = vrot.slane %v6631, %v6638
      %v6641 = vunpack.c.l.s4 1934713408
      %v6642 = vunpack.c.0.s8 %v6641
      %v6643 = vlaneseq
      %v6644 = vshrl.u32 %v6643, 7
      %v6645 = vsub.s32 %v6642, %v6644
      %v6646 = vrot.slane %v6632, %v6645
      %v6647 = vcombine.low %v6584, %v6600
      %v6648 = vcombine.high %v6584, %v6600
      %v6650 = vunpack.c.l.s4 1934713408
      %v6651 = vunpack.c.0.s8 %v6650
      %v6652 = vlaneseq
      %v6653 = vshrl.u32 %v6652, 7
      %v6654 = vsub.s32 %v6651, %v6653
      %v6655 = vrot.slane %v6647, %v6654
      %v6657 = vunpack.c.l.s4 1934713408
      %v6658 = vunpack.c.0.s8 %v6657
      %v6659 = vlaneseq
      %v6660 = vshrl.u32 %v6659, 7
      %v6661 = vsub.s32 %v6658, %v6660
      %v6662 = vrot.slane %v6648, %v6661
      %v6663 = vcombine.low %v6608, %v6623
      %v6664 = vcombine.high %v6608, %v6623
      %v6666 = vunpack.c.l.s4 1934713408
      %v6667 = vunpack.c.0.s8 %v6666
      %v6668 = vlaneseq
      %v6669 = vshrl.u32 %v6668, 7
      %v6670 = vsub.s32 %v6667, %v6669
      %v6671 = vrot.slane %v6663, %v6670
      %v6673 = vunpack.c.l.s4 1934713408
      %v6674 = vunpack.c.0.s8 %v6673
      %v6675 = vlaneseq
      %v6676 = vshrl.u32 %v6675, 7
      %v6677 = vsub.s32 %v6674, %v6676
      %v6678 = vrot.slane %v6664, %v6677
      %v6679 = vcombine.low %v6615, %v6630
      %v6680 = vcombine.high %v6615, %v6630
      %v6682 = vunpack.c.l.s4 1934713408
      %v6683 = vunpack.c.0.s8 %v6682
      %v6684 = vlaneseq
      %v6685 = vshrl.u32 %v6684, 7
      %v6686 = vsub.s32 %v6683, %v6685
      %v6687 = vrot.slane %v6679, %v6686
      %v6689 = vunpack.c.l.s4 1934713408
      %v6690 = vunpack.c.0.s8 %v6689
      %v6691 = vlaneseq
      %v6692 = vshrl.u32 %v6691, 7
      %v6693 = vsub.s32 %v6690, %v6692
      %v6694 = vrot.slane %v6680, %v6693
      %v6695 = vcombine.low %v6639, %v6671
      %v6696 = vcombine.high %v6639, %v6671
      %v6697 = vcombine.low %v6646, %v6678
      %v6698 = vcombine.high %v6646, %v6678
      %v6699 = vcombine.low %v6655, %v6687
      %v6700 = vcombine.high %v6655, %v6687
      %v6701 = vcombine.low %v6662, %v6694
      %v6702 = vcombine.high %v6662, %v6694
      %6704 = vrot.lane.b32.xlu0 %v6562, 16
      %v6705 = vpop.permute.xlu0 %6704
      %6708 = vrot.lane.b32.xlu0 %v6563, 32
      %v6709 = vpop.permute.xlu0 %6708
      %6712 = vrot.lane.b32.xlu0 %v6564, 48
      %v6713 = vpop.permute.xlu0 %6712
      %6716 = vrot.lane.b32.xlu0 %v6565, 64
      %v6717 = vpop.permute.xlu0 %6716
      %6720 = vrot.lane.b32.xlu0 %v6566, 80
      %v6721 = vpop.permute.xlu0 %6720
      %6724 = vrot.lane.b32.xlu0 %v6567, 96
      %v6725 = vpop.permute.xlu0 %6724
      %6728 = vrot.lane.b32.xlu0 %v6568, 112
      %v6729 = vpop.permute.xlu0 %6728
      %6732 = vrot.lane.b32.xlu0 %v6696, 16
      %v6733 = vpop.permute.xlu0 %6732
      %6736 = vrot.lane.b32.xlu0 %v6697, 32
      %v6737 = vpop.permute.xlu0 %6736
      %6740 = vrot.lane.b32.xlu0 %v6698, 48
      %v6741 = vpop.permute.xlu0 %6740
      %6744 = vrot.lane.b32.xlu0 %v6699, 64
      %v6745 = vpop.permute.xlu0 %6744
      %6748 = vrot.lane.b32.xlu0 %v6700, 80
      %v6749 = vpop.permute.xlu0 %6748
      %6752 = vrot.lane.b32.xlu0 %v6701, 96
      %v6753 = vpop.permute.xlu0 %6752
      %6756 = vrot.lane.b32.xlu0 %v6702, 112
      %v6757 = vpop.permute.xlu0 %6756
      %v6759 = vsel %vm1182, %v6561, %v6705
      %v6760 = vsel %vm1184, %v6759, %v6709
      %v6761 = vsel %vm1186, %v6760, %v6713
      %v6762 = vsel %vm1188, %v6761, %v6717
      %v6763 = vsel %vm1190, %v6762, %v6721
      %v6764 = vsel %vm1192, %v6763, %v6725
      %v6765 = vsel %vm1194, %v6764, %v6729
      %v6766 = vsel %vm1182, %v6695, %v6733
      %v6767 = vsel %vm1184, %v6766, %v6737
      %v6768 = vsel %vm1186, %v6767, %v6741
      %v6769 = vsel %vm1188, %v6768, %v6745
      %v6770 = vsel %vm1190, %v6769, %v6749
      %v6771 = vsel %vm1192, %v6770, %v6753
      %v6772 = vsel %vm1194, %v6771, %v6757
      %6773 = vst [vmem:[#allocation3 + $0x30] sm:$0x3f] %v6765
      %6774 = vst [vmem:[#allocation3 + $0x38] sm:$0x3f] %v6772
      %v6775 = vld [vmem:[#allocation2 + $0x1] sm:$0xff]
      %v6776 = vld [vmem:[#allocation2 + $0x9] sm:$0xff]
      %v6777 = vld [vmem:[#allocation2 + $0x19] sm:$0xff]
      %v6778 = vld [vmem:[#allocation2 + $0x21] sm:$0xff]
      %v6779 = vld [vmem:[#allocation2 + $0x31] sm:$0xff]
      %v6780 = vld [vmem:[#allocation2 + $0x39] sm:$0xff]
      %v6781 = vld [vmem:[#allocation2 + $0x49] sm:$0xff]
      %v6782 = vld [vmem:[#allocation2 + $0x51] sm:$0xff]
      %v6783 = vld [vmem:[#allocation2 + $0x61] sm:$0xff]
      %v6784 = vld [vmem:[#allocation2 + $0x69] sm:$0xff]
      %v6785 = vld [vmem:[#allocation2 + $0x79] sm:$0xff]
      %v6786 = vld [vmem:[#allocation2 + $0x81] sm:$0xff]
      %6799 = vrot.lane.b32.xlu0 %v6775, 126
      %v6800 = vpop.permute.xlu0 %6799
      %6801 = vrot.lane.b32.xlu0 %v6776, 126
      %v6802 = vpop.permute.xlu0 %6801
      %6803 = vrot.lane.b32.xlu0 %v6777, 126
      %v6804 = vpop.permute.xlu0 %6803
      %6805 = vrot.lane.b32.xlu0 %v6778, 126
      %v6806 = vpop.permute.xlu0 %6805
      %6807 = vrot.lane.b32.xlu0 %v6779, 126
      %v6808 = vpop.permute.xlu0 %6807
      %6809 = vrot.lane.b32.xlu0 %v6780, 126
      %v6810 = vpop.permute.xlu0 %6809
      %6811 = vrot.lane.b32.xlu0 %v6781, 126
      %v6812 = vpop.permute.xlu0 %6811
      %6813 = vrot.lane.b32.xlu0 %v6782, 126
      %v6814 = vpop.permute.xlu0 %6813
      %6815 = vrot.lane.b32.xlu0 %v6783, 126
      %v6816 = vpop.permute.xlu0 %6815
      %6817 = vrot.lane.b32.xlu0 %v6784, 126
      %v6818 = vpop.permute.xlu0 %6817
      %6819 = vrot.lane.b32.xlu0 %v6785, 126
      %v6820 = vpop.permute.xlu0 %6819
      %6821 = vrot.lane.b32.xlu0 %v6786, 126
      %v6822 = vpop.permute.xlu0 %6821
      %v6835 = vcombine.low %v6800, %v6808
      %v6836 = vcombine.high %v6800, %v6808
      %v6838 = vunpack.c.l.s4 1983009808
      %v6839 = vunpack.c.0.s8 %v6838
      %v6840 = vlaneseq
      %v6841 = vshrl.u32 %v6840, 7
      %v6842 = vsub.s32 %v6839, %v6841
      %v6843 = vrot.slane %v6835, %v6842
      %v6845 = vunpack.c.l.s4 1983009808
      %v6846 = vunpack.c.0.s8 %v6845
      %v6847 = vlaneseq
      %v6848 = vshrl.u32 %v6847, 7
      %v6849 = vsub.s32 %v6846, %v6848
      %v6850 = vrot.slane %v6836, %v6849
      %v6851 = vcombine.low %v6804, %v6812
      %v6852 = vcombine.high %v6804, %v6812
      %v6854 = vunpack.c.l.s4 1983009808
      %v6855 = vunpack.c.0.s8 %v6854
      %v6856 = vlaneseq
      %v6857 = vshrl.u32 %v6856, 7
      %v6858 = vsub.s32 %v6855, %v6857
      %v6859 = vrot.slane %v6851, %v6858
      %v6861 = vunpack.c.l.s4 1983009808
      %v6862 = vunpack.c.0.s8 %v6861
      %v6863 = vlaneseq
      %v6864 = vshrl.u32 %v6863, 7
      %v6865 = vsub.s32 %v6862, %v6864
      %v6866 = vrot.slane %v6852, %v6865
      %v6867 = vcombine.high %v6816, 0.0
      %v6869 = vunpack.c.l.s4 1983009808
      %v6870 = vunpack.c.0.s8 %v6869
      %v6871 = vlaneseq
      %v6872 = vshrl.u32 %v6871, 7
      %v6873 = vsub.s32 %v6870, %v6872
      %v6874 = vrot.slane %v6816, %v6873
      %v6876 = vunpack.c.l.s4 1983009808
      %v6877 = vunpack.c.0.s8 %v6876
      %v6878 = vlaneseq
      %v6879 = vshrl.u32 %v6878, 7
      %v6880 = vsub.s32 %v6877, %v6879
      %v6881 = vrot.slane %v6867, %v6880
      %v6882 = vcombine.high %v6820, 0.0
      %v6884 = vunpack.c.l.s4 1983009808
      %v6885 = vunpack.c.0.s8 %v6884
      %v6886 = vlaneseq
      %v6887 = vshrl.u32 %v6886, 7
      %v6888 = vsub.s32 %v6885, %v6887
      %v6889 = vrot.slane %v6820, %v6888
      %v6891 = vunpack.c.l.s4 1983009808
      %v6892 = vunpack.c.0.s8 %v6891
      %v6893 = vlaneseq
      %v6894 = vshrl.u32 %v6893, 7
      %v6895 = vsub.s32 %v6892, %v6894
      %v6896 = vrot.slane %v6882, %v6895
      %v6897 = vcombine.low %v6843, %v6859
      %v6898 = vcombine.high %v6843, %v6859
      %v6900 = vunpack.c.l.s4 1934713408
      %v6901 = vunpack.c.0.s8 %v6900
      %v6902 = vlaneseq
      %v6903 = vshrl.u32 %v6902, 7
      %v6904 = vsub.s32 %v6901, %v6903
      %v6905 = vrot.slane %v6897, %v6904
      %v6907 = vunpack.c.l.s4 1934713408
      %v6908 = vunpack.c.0.s8 %v6907
      %v6909 = vlaneseq
      %v6910 = vshrl.u32 %v6909, 7
      %v6911 = vsub.s32 %v6908, %v6910
      %v6912 = vrot.slane %v6898, %v6911
      %v6913 = vcombine.low %v6850, %v6866
      %v6914 = vcombine.high %v6850, %v6866
      %v6916 = vunpack.c.l.s4 1934713408
      %v6917 = vunpack.c.0.s8 %v6916
      %v6918 = vlaneseq
      %v6919 = vshrl.u32 %v6918, 7
      %v6920 = vsub.s32 %v6917, %v6919
      %v6921 = vrot.slane %v6913, %v6920
      %v6923 = vunpack.c.l.s4 1934713408
      %v6924 = vunpack.c.0.s8 %v6923
      %v6925 = vlaneseq
      %v6926 = vshrl.u32 %v6925, 7
      %v6927 = vsub.s32 %v6924, %v6926
      %v6928 = vrot.slane %v6914, %v6927
      %v6929 = vcombine.low %v6874, %v6889
      %v6930 = vcombine.high %v6874, %v6889
      %v6932 = vunpack.c.l.s4 1934713408
      %v6933 = vunpack.c.0.s8 %v6932
      %v6934 = vlaneseq
      %v6935 = vshrl.u32 %v6934, 7
      %v6936 = vsub.s32 %v6933, %v6935
      %v6937 = vrot.slane %v6929, %v6936
      %v6939 = vunpack.c.l.s4 1934713408
      %v6940 = vunpack.c.0.s8 %v6939
      %v6941 = vlaneseq
      %v6942 = vshrl.u32 %v6941, 7
      %v6943 = vsub.s32 %v6940, %v6942
      %v6944 = vrot.slane %v6930, %v6943
      %v6945 = vcombine.low %v6881, %v6896
      %v6946 = vcombine.high %v6881, %v6896
      %v6948 = vunpack.c.l.s4 1934713408
      %v6949 = vunpack.c.0.s8 %v6948
      %v6950 = vlaneseq
      %v6951 = vshrl.u32 %v6950, 7
      %v6952 = vsub.s32 %v6949, %v6951
      %v6953 = vrot.slane %v6945, %v6952
      %v6955 = vunpack.c.l.s4 1934713408
      %v6956 = vunpack.c.0.s8 %v6955
      %v6957 = vlaneseq
      %v6958 = vshrl.u32 %v6957, 7
      %v6959 = vsub.s32 %v6956, %v6958
      %v6960 = vrot.slane %v6946, %v6959
      %v6961 = vcombine.low %v6905, %v6937
      %v6962 = vcombine.high %v6905, %v6937
      %v6963 = vcombine.low %v6912, %v6944
      %v6964 = vcombine.high %v6912, %v6944
      %v6965 = vcombine.low %v6921, %v6953
      %v6966 = vcombine.high %v6921, %v6953
      %v6967 = vcombine.low %v6928, %v6960
      %v6968 = vcombine.high %v6928, %v6960
      %v6969 = vcombine.low %v6802, %v6810
      %v6970 = vcombine.high %v6802, %v6810
      %v6972 = vunpack.c.l.s4 1983009808
      %v6973 = vunpack.c.0.s8 %v6972
      %v6974 = vlaneseq
      %v6975 = vshrl.u32 %v6974, 7
      %v6976 = vsub.s32 %v6973, %v6975
      %v6977 = vrot.slane %v6969, %v6976
      %v6979 = vunpack.c.l.s4 1983009808
      %v6980 = vunpack.c.0.s8 %v6979
      %v6981 = vlaneseq
      %v6982 = vshrl.u32 %v6981, 7
      %v6983 = vsub.s32 %v6980, %v6982
      %v6984 = vrot.slane %v6970, %v6983
      %v6985 = vcombine.low %v6806, %v6814
      %v6986 = vcombine.high %v6806, %v6814
      %v6988 = vunpack.c.l.s4 1983009808
      %v6989 = vunpack.c.0.s8 %v6988
      %v6990 = vlaneseq
      %v6991 = vshrl.u32 %v6990, 7
      %v6992 = vsub.s32 %v6989, %v6991
      %v6993 = vrot.slane %v6985, %v6992
      %v6995 = vunpack.c.l.s4 1983009808
      %v6996 = vunpack.c.0.s8 %v6995
      %v6997 = vlaneseq
      %v6998 = vshrl.u32 %v6997, 7
      %v6999 = vsub.s32 %v6996, %v6998
      %v7000 = vrot.slane %v6986, %v6999
      %v7001 = vcombine.high %v6818, 0.0
      %v7003 = vunpack.c.l.s4 1983009808
      %v7004 = vunpack.c.0.s8 %v7003
      %v7005 = vlaneseq
      %v7006 = vshrl.u32 %v7005, 7
      %v7007 = vsub.s32 %v7004, %v7006
      %v7008 = vrot.slane %v6818, %v7007
      %v7010 = vunpack.c.l.s4 1983009808
      %v7011 = vunpack.c.0.s8 %v7010
      %v7012 = vlaneseq
      %v7013 = vshrl.u32 %v7012, 7
      %v7014 = vsub.s32 %v7011, %v7013
      %v7015 = vrot.slane %v7001, %v7014
      %v7016 = vcombine.high %v6822, 0.0
      %v7018 = vunpack.c.l.s4 1983009808
      %v7019 = vunpack.c.0.s8 %v7018
      %v7020 = vlaneseq
      %v7021 = vshrl.u32 %v7020, 7
      %v7022 = vsub.s32 %v7019, %v7021
      %v7023 = vrot.slane %v6822, %v7022
      %v7025 = vunpack.c.l.s4 1983009808
      %v7026 = vunpack.c.0.s8 %v7025
      %v7027 = vlaneseq
      %v7028 = vshrl.u32 %v7027, 7
      %v7029 = vsub.s32 %v7026, %v7028
      %v7030 = vrot.slane %v7016, %v7029
      %v7031 = vcombine.low %v6977, %v6993
      %v7032 = vcombine.high %v6977, %v6993
      %v7034 = vunpack.c.l.s4 1934713408
      %v7035 = vunpack.c.0.s8 %v7034
      %v7036 = vlaneseq
      %v7037 = vshrl.u32 %v7036, 7
      %v7038 = vsub.s32 %v7035, %v7037
      %v7039 = vrot.slane %v7031, %v7038
      %v7041 = vunpack.c.l.s4 1934713408
      %v7042 = vunpack.c.0.s8 %v7041
      %v7043 = vlaneseq
      %v7044 = vshrl.u32 %v7043, 7
      %v7045 = vsub.s32 %v7042, %v7044
      %v7046 = vrot.slane %v7032, %v7045
      %v7047 = vcombine.low %v6984, %v7000
      %v7048 = vcombine.high %v6984, %v7000
      %v7050 = vunpack.c.l.s4 1934713408
      %v7051 = vunpack.c.0.s8 %v7050
      %v7052 = vlaneseq
      %v7053 = vshrl.u32 %v7052, 7
      %v7054 = vsub.s32 %v7051, %v7053
      %v7055 = vrot.slane %v7047, %v7054
      %v7057 = vunpack.c.l.s4 1934713408
      %v7058 = vunpack.c.0.s8 %v7057
      %v7059 = vlaneseq
      %v7060 = vshrl.u32 %v7059, 7
      %v7061 = vsub.s32 %v7058, %v7060
      %v7062 = vrot.slane %v7048, %v7061
      %v7063 = vcombine.low %v7008, %v7023
      %v7064 = vcombine.high %v7008, %v7023
      %v7066 = vunpack.c.l.s4 1934713408
      %v7067 = vunpack.c.0.s8 %v7066
      %v7068 = vlaneseq
      %v7069 = vshrl.u32 %v7068, 7
      %v7070 = vsub.s32 %v7067, %v7069
      %v7071 = vrot.slane %v7063, %v7070
      %v7073 = vunpack.c.l.s4 1934713408
      %v7074 = vunpack.c.0.s8 %v7073
      %v7075 = vlaneseq
      %v7076 = vshrl.u32 %v7075, 7
      %v7077 = vsub.s32 %v7074, %v7076
      %v7078 = vrot.slane %v7064, %v7077
      %v7079 = vcombine.low %v7015, %v7030
      %v7080 = vcombine.high %v7015, %v7030
      %v7082 = vunpack.c.l.s4 1934713408
      %v7083 = vunpack.c.0.s8 %v7082
      %v7084 = vlaneseq
      %v7085 = vshrl.u32 %v7084, 7
      %v7086 = vsub.s32 %v7083, %v7085
      %v7087 = vrot.slane %v7079, %v7086
      %v7089 = vunpack.c.l.s4 1934713408
      %v7090 = vunpack.c.0.s8 %v7089
      %v7091 = vlaneseq
      %v7092 = vshrl.u32 %v7091, 7
      %v7093 = vsub.s32 %v7090, %v7092
      %v7094 = vrot.slane %v7080, %v7093
      %v7095 = vcombine.low %v7039, %v7071
      %v7096 = vcombine.high %v7039, %v7071
      %v7097 = vcombine.low %v7046, %v7078
      %v7098 = vcombine.high %v7046, %v7078
      %v7099 = vcombine.low %v7055, %v7087
      %v7100 = vcombine.high %v7055, %v7087
      %v7101 = vcombine.low %v7062, %v7094
      %v7102 = vcombine.high %v7062, %v7094
      %7104 = vrot.lane.b32.xlu0 %v6962, 16
      %v7105 = vpop.permute.xlu0 %7104
      %7108 = vrot.lane.b32.xlu0 %v6963, 32
      %v7109 = vpop.permute.xlu0 %7108
      %7112 = vrot.lane.b32.xlu0 %v6964, 48
      %v7113 = vpop.permute.xlu0 %7112
      %7116 = vrot.lane.b32.xlu0 %v6965, 64
      %v7117 = vpop.permute.xlu0 %7116
      %7120 = vrot.lane.b32.xlu0 %v6966, 80
      %v7121 = vpop.permute.xlu0 %7120
      %7124 = vrot.lane.b32.xlu0 %v6967, 96
      %v7125 = vpop.permute.xlu0 %7124
      %7128 = vrot.lane.b32.xlu0 %v6968, 112
      %v7129 = vpop.permute.xlu0 %7128
      %7132 = vrot.lane.b32.xlu0 %v7096, 16
      %v7133 = vpop.permute.xlu0 %7132
      %7136 = vrot.lane.b32.xlu0 %v7097, 32
      %v7137 = vpop.permute.xlu0 %7136
      %7140 = vrot.lane.b32.xlu0 %v7098, 48
      %v7141 = vpop.permute.xlu0 %7140
      %7144 = vrot.lane.b32.xlu0 %v7099, 64
      %v7145 = vpop.permute.xlu0 %7144
      %7148 = vrot.lane.b32.xlu0 %v7100, 80
      %v7149 = vpop.permute.xlu0 %7148
      %7152 = vrot.lane.b32.xlu0 %v7101, 96
      %v7153 = vpop.permute.xlu0 %7152
      %7156 = vrot.lane.b32.xlu0 %v7102, 112
      %v7157 = vpop.permute.xlu0 %7156
      %v7159 = vsel %vm1182, %v6961, %v7105
      %v7160 = vsel %vm1184, %v7159, %v7109
      %v7161 = vsel %vm1186, %v7160, %v7113
      %v7162 = vsel %vm1188, %v7161, %v7117
      %v7163 = vsel %vm1190, %v7162, %v7121
      %v7164 = vsel %vm1192, %v7163, %v7125
      %v7165 = vsel %vm1194, %v7164, %v7129
      %v7166 = vsel %vm1182, %v7095, %v7133
      %v7167 = vsel %vm1184, %v7166, %v7137
      %v7168 = vsel %vm1186, %v7167, %v7141
      %v7169 = vsel %vm1188, %v7168, %v7145
      %v7170 = vsel %vm1190, %v7169, %v7149
      %v7171 = vsel %vm1192, %v7170, %v7153
      %v7172 = vsel %vm1194, %v7171, %v7157
      %v7175 = vrot.slane %v7165, 2
      %v7176 = vrot.slane %v7172, 2
      %7179 = vst [vmem:[#allocation3 + $0x30] sm:$0xc0] %v7175
      %7180 = vst [vmem:[#allocation3 + $0x38] sm:$0xc0] %v7176
      %7181 = vst [vmem:[#allocation3 + $0x40] sm:$0xf] %v7175
      %7182 = vst [vmem:[#allocation3 + $0x48] sm:$0xf] %v7176
      %v7183 = vld [vmem:[#allocation2 + $0x2] sm:$0xff]
      %v7184 = vld [vmem:[#allocation2 + $0xa] sm:$0xff]
      %v7185 = vld [vmem:[#allocation2 + $0x1a] sm:$0xff]
      %v7186 = vld [vmem:[#allocation2 + $0x22] sm:$0xff]
      %v7187 = vld [vmem:[#allocation2 + $0x32] sm:$0xff]
      %v7188 = vld [vmem:[#allocation2 + $0x3a] sm:$0xff]
      %v7189 = vld [vmem:[#allocation2 + $0x4a] sm:$0xff]
      %v7190 = vld [vmem:[#allocation2 + $0x52] sm:$0xff]
      %v7191 = vld [vmem:[#allocation2 + $0x62] sm:$0xff]
      %v7192 = vld [vmem:[#allocation2 + $0x6a] sm:$0xff]
      %v7193 = vld [vmem:[#allocation2 + $0x7a] sm:$0xff]
      %v7194 = vld [vmem:[#allocation2 + $0x82] sm:$0xff]
      %v7195 = vcombine.low %v7183, %v7187
      %v7196 = vcombine.high %v7183, %v7187
      %v7198 = vunpack.c.l.s4 1983009808
      %v7199 = vunpack.c.0.s8 %v7198
      %v7200 = vlaneseq
      %v7201 = vshrl.u32 %v7200, 7
      %v7202 = vsub.s32 %v7199, %v7201
      %v7203 = vrot.slane %v7195, %v7202
      %v7205 = vunpack.c.l.s4 1983009808
      %v7206 = vunpack.c.0.s8 %v7205
      %v7207 = vlaneseq
      %v7208 = vshrl.u32 %v7207, 7
      %v7209 = vsub.s32 %v7206, %v7208
      %v7210 = vrot.slane %v7196, %v7209
      %v7211 = vcombine.low %v7185, %v7189
      %v7212 = vcombine.high %v7185, %v7189
      %v7214 = vunpack.c.l.s4 1983009808
      %v7215 = vunpack.c.0.s8 %v7214
      %v7216 = vlaneseq
      %v7217 = vshrl.u32 %v7216, 7
      %v7218 = vsub.s32 %v7215, %v7217
      %v7219 = vrot.slane %v7211, %v7218
      %v7221 = vunpack.c.l.s4 1983009808
      %v7222 = vunpack.c.0.s8 %v7221
      %v7223 = vlaneseq
      %v7224 = vshrl.u32 %v7223, 7
      %v7225 = vsub.s32 %v7222, %v7224
      %v7226 = vrot.slane %v7212, %v7225
      %v7227 = vcombine.high %v7191, 0.0
      %v7229 = vunpack.c.l.s4 1983009808
      %v7230 = vunpack.c.0.s8 %v7229
      %v7231 = vlaneseq
      %v7232 = vshrl.u32 %v7231, 7
      %v7233 = vsub.s32 %v7230, %v7232
      %v7234 = vrot.slane %v7191, %v7233
      %v7236 = vunpack.c.l.s4 1983009808
      %v7237 = vunpack.c.0.s8 %v7236
      %v7238 = vlaneseq
      %v7239 = vshrl.u32 %v7238, 7
      %v7240 = vsub.s32 %v7237, %v7239
      %v7241 = vrot.slane %v7227, %v7240
      %v7242 = vcombine.high %v7193, 0.0
      %v7244 = vunpack.c.l.s4 1983009808
      %v7245 = vunpack.c.0.s8 %v7244
      %v7246 = vlaneseq
      %v7247 = vshrl.u32 %v7246, 7
      %v7248 = vsub.s32 %v7245, %v7247
      %v7249 = vrot.slane %v7193, %v7248
      %v7251 = vunpack.c.l.s4 1983009808
      %v7252 = vunpack.c.0.s8 %v7251
      %v7253 = vlaneseq
      %v7254 = vshrl.u32 %v7253, 7
      %v7255 = vsub.s32 %v7252, %v7254
      %v7256 = vrot.slane %v7242, %v7255
      %v7257 = vcombine.low %v7203, %v7219
      %v7258 = vcombine.high %v7203, %v7219
      %v7260 = vunpack.c.l.s4 1934713408
      %v7261 = vunpack.c.0.s8 %v7260
      %v7262 = vlaneseq
      %v7263 = vshrl.u32 %v7262, 7
      %v7264 = vsub.s32 %v7261, %v7263
      %v7265 = vrot.slane %v7257, %v7264
      %v7267 = vunpack.c.l.s4 1934713408
      %v7268 = vunpack.c.0.s8 %v7267
      %v7269 = vlaneseq
      %v7270 = vshrl.u32 %v7269, 7
      %v7271 = vsub.s32 %v7268, %v7270
      %v7272 = vrot.slane %v7258, %v7271
      %v7273 = vcombine.low %v7210, %v7226
      %v7274 = vcombine.high %v7210, %v7226
      %v7276 = vunpack.c.l.s4 1934713408
      %v7277 = vunpack.c.0.s8 %v7276
      %v7278 = vlaneseq
      %v7279 = vshrl.u32 %v7278, 7
      %v7280 = vsub.s32 %v7277, %v7279
      %v7281 = vrot.slane %v7273, %v7280
      %v7283 = vunpack.c.l.s4 1934713408
      %v7284 = vunpack.c.0.s8 %v7283
      %v7285 = vlaneseq
      %v7286 = vshrl.u32 %v7285, 7
      %v7287 = vsub.s32 %v7284, %v7286
      %v7288 = vrot.slane %v7274, %v7287
      %v7289 = vcombine.low %v7234, %v7249
      %v7290 = vcombine.high %v7234, %v7249
      %v7292 = vunpack.c.l.s4 1934713408
      %v7293 = vunpack.c.0.s8 %v7292
      %v7294 = vlaneseq
      %v7295 = vshrl.u32 %v7294, 7
      %v7296 = vsub.s32 %v7293, %v7295
      %v7297 = vrot.slane %v7289, %v7296
      %v7299 = vunpack.c.l.s4 1934713408
      %v7300 = vunpack.c.0.s8 %v7299
      %v7301 = vlaneseq
      %v7302 = vshrl.u32 %v7301, 7
      %v7303 = vsub.s32 %v7300, %v7302
      %v7304 = vrot.slane %v7290, %v7303
      %v7305 = vcombine.low %v7241, %v7256
      %v7306 = vcombine.high %v7241, %v7256
      %v7308 = vunpack.c.l.s4 1934713408
      %v7309 = vunpack.c.0.s8 %v7308
      %v7310 = vlaneseq
      %v7311 = vshrl.u32 %v7310, 7
      %v7312 = vsub.s32 %v7309, %v7311
      %v7313 = vrot.slane %v7305, %v7312
      %v7315 = vunpack.c.l.s4 1934713408
      %v7316 = vunpack.c.0.s8 %v7315
      %v7317 = vlaneseq
      %v7318 = vshrl.u32 %v7317, 7
      %v7319 = vsub.s32 %v7316, %v7318
      %v7320 = vrot.slane %v7306, %v7319
      %v7321 = vcombine.low %v7265, %v7297
      %v7322 = vcombine.high %v7265, %v7297
      %v7323 = vcombine.low %v7272, %v7304
      %v7324 = vcombine.high %v7272, %v7304
      %v7325 = vcombine.low %v7281, %v7313
      %v7326 = vcombine.high %v7281, %v7313
      %v7327 = vcombine.low %v7288, %v7320
      %v7328 = vcombine.high %v7288, %v7320
      %v7329 = vcombine.low %v7184, %v7188
      %v7330 = vcombine.high %v7184, %v7188
      %v7332 = vunpack.c.l.s4 1983009808
      %v7333 = vunpack.c.0.s8 %v7332
      %v7334 = vlaneseq
      %v7335 = vshrl.u32 %v7334, 7
      %v7336 = vsub.s32 %v7333, %v7335
      %v7337 = vrot.slane %v7329, %v7336
      %v7339 = vunpack.c.l.s4 1983009808
      %v7340 = vunpack.c.0.s8 %v7339
      %v7341 = vlaneseq
      %v7342 = vshrl.u32 %v7341, 7
      %v7343 = vsub.s32 %v7340, %v7342
      %v7344 = vrot.slane %v7330, %v7343
      %v7345 = vcombine.low %v7186, %v7190
      %v7346 = vcombine.high %v7186, %v7190
      %v7348 = vunpack.c.l.s4 1983009808
      %v7349 = vunpack.c.0.s8 %v7348
      %v7350 = vlaneseq
      %v7351 = vshrl.u32 %v7350, 7
      %v7352 = vsub.s32 %v7349, %v7351
      %v7353 = vrot.slane %v7345, %v7352
      %v7355 = vunpack.c.l.s4 1983009808
      %v7356 = vunpack.c.0.s8 %v7355
      %v7357 = vlaneseq
      %v7358 = vshrl.u32 %v7357, 7
      %v7359 = vsub.s32 %v7356, %v7358
      %v7360 = vrot.slane %v7346, %v7359
      %v7361 = vcombine.high %v7192, 0.0
      %v7363 = vunpack.c.l.s4 1983009808
      %v7364 = vunpack.c.0.s8 %v7363
      %v7365 = vlaneseq
      %v7366 = vshrl.u32 %v7365, 7
      %v7367 = vsub.s32 %v7364, %v7366
      %v7368 = vrot.slane %v7192, %v7367
      %v7370 = vunpack.c.l.s4 1983009808
      %v7371 = vunpack.c.0.s8 %v7370
      %v7372 = vlaneseq
      %v7373 = vshrl.u32 %v7372, 7
      %v7374 = vsub.s32 %v7371, %v7373
      %v7375 = vrot.slane %v7361, %v7374
      %v7376 = vcombine.high %v7194, 0.0
      %v7378 = vunpack.c.l.s4 1983009808
      %v7379 = vunpack.c.0.s8 %v7378
      %v7380 = vlaneseq
      %v7381 = vshrl.u32 %v7380, 7
      %v7382 = vsub.s32 %v7379, %v7381
      %v7383 = vrot.slane %v7194, %v7382
      %v7385 = vunpack.c.l.s4 1983009808
      %v7386 = vunpack.c.0.s8 %v7385
      %v7387 = vlaneseq
      %v7388 = vshrl.u32 %v7387, 7
      %v7389 = vsub.s32 %v7386, %v7388
      %v7390 = vrot.slane %v7376, %v7389
      %v7391 = vcombine.low %v7337, %v7353
      %v7392 = vcombine.high %v7337, %v7353
      %v7394 = vunpack.c.l.s4 1934713408
      %v7395 = vunpack.c.0.s8 %v7394
      %v7396 = vlaneseq
      %v7397 = vshrl.u32 %v7396, 7
      %v7398 = vsub.s32 %v7395, %v7397
      %v7399 = vrot.slane %v7391, %v7398
      %v7401 = vunpack.c.l.s4 1934713408
      %v7402 = vunpack.c.0.s8 %v7401
      %v7403 = vlaneseq
      %v7404 = vshrl.u32 %v7403, 7
      %v7405 = vsub.s32 %v7402, %v7404
      %v7406 = vrot.slane %v7392, %v7405
      %v7407 = vcombine.low %v7344, %v7360
      %v7408 = vcombine.high %v7344, %v7360
      %v7410 = vunpack.c.l.s4 1934713408
      %v7411 = vunpack.c.0.s8 %v7410
      %v7412 = vlaneseq
      %v7413 = vshrl.u32 %v7412, 7
      %v7414 = vsub.s32 %v7411, %v7413
      %v7415 = vrot.slane %v7407, %v7414
      %v7417 = vunpack.c.l.s4 1934713408
      %v7418 = vunpack.c.0.s8 %v7417
      %v7419 = vlaneseq
      %v7420 = vshrl.u32 %v7419, 7
      %v7421 = vsub.s32 %v7418, %v7420
      %v7422 = vrot.slane %v7408, %v7421
      %v7423 = vcombine.low %v7368, %v7383
      %v7424 = vcombine.high %v7368, %v7383
      %v7426 = vunpack.c.l.s4 1934713408
      %v7427 = vunpack.c.0.s8 %v7426
      %v7428 = vlaneseq
      %v7429 = vshrl.u32 %v7428, 7
      %v7430 = vsub.s32 %v7427, %v7429
      %v7431 = vrot.slane %v7423, %v7430
      %v7433 = vunpack.c.l.s4 1934713408
      %v7434 = vunpack.c.0.s8 %v7433
      %v7435 = vlaneseq
      %v7436 = vshrl.u32 %v7435, 7
      %v7437 = vsub.s32 %v7434, %v7436
      %v7438 = vrot.slane %v7424, %v7437
      %v7439 = vcombine.low %v7375, %v7390
      %v7440 = vcombine.high %v7375, %v7390
      %v7442 = vunpack.c.l.s4 1934713408
      %v7443 = vunpack.c.0.s8 %v7442
      %v7444 = vlaneseq
      %v7445 = vshrl.u32 %v7444, 7
      %v7446 = vsub.s32 %v7443, %v7445
      %v7447 = vrot.slane %v7439, %v7446
      %v7449 = vunpack.c.l.s4 1934713408
      %v7450 = vunpack.c.0.s8 %v7449
      %v7451 = vlaneseq
      %v7452 = vshrl.u32 %v7451, 7
      %v7453 = vsub.s32 %v7450, %v7452
      %v7454 = vrot.slane %v7440, %v7453
      %v7455 = vcombine.low %v7399, %v7431
      %v7456 = vcombine.high %v7399, %v7431
      %v7457 = vcombine.low %v7406, %v7438
      %v7458 = vcombine.high %v7406, %v7438
      %v7459 = vcombine.low %v7415, %v7447
      %v7460 = vcombine.high %v7415, %v7447
      %v7461 = vcombine.low %v7422, %v7454
      %v7462 = vcombine.high %v7422, %v7454
      %7464 = vrot.lane.b32.xlu0 %v7322, 16
      %v7465 = vpop.permute.xlu0 %7464
      %7468 = vrot.lane.b32.xlu0 %v7323, 32
      %v7469 = vpop.permute.xlu0 %7468
      %7472 = vrot.lane.b32.xlu0 %v7324, 48
      %v7473 = vpop.permute.xlu0 %7472
      %7476 = vrot.lane.b32.xlu0 %v7325, 64
      %v7477 = vpop.permute.xlu0 %7476
      %7480 = vrot.lane.b32.xlu0 %v7326, 80
      %v7481 = vpop.permute.xlu0 %7480
      %7484 = vrot.lane.b32.xlu0 %v7327, 96
      %v7485 = vpop.permute.xlu0 %7484
      %7488 = vrot.lane.b32.xlu0 %v7328, 112
      %v7489 = vpop.permute.xlu0 %7488
      %7492 = vrot.lane.b32.xlu0 %v7456, 16
      %v7493 = vpop.permute.xlu0 %7492
      %7496 = vrot.lane.b32.xlu0 %v7457, 32
      %v7497 = vpop.permute.xlu0 %7496
      %7500 = vrot.lane.b32.xlu0 %v7458, 48
      %v7501 = vpop.permute.xlu0 %7500
      %7504 = vrot.lane.b32.xlu0 %v7459, 64
      %v7505 = vpop.permute.xlu0 %7504
      %7508 = vrot.lane.b32.xlu0 %v7460, 80
      %v7509 = vpop.permute.xlu0 %7508
      %7512 = vrot.lane.b32.xlu0 %v7461, 96
      %v7513 = vpop.permute.xlu0 %7512
      %7516 = vrot.lane.b32.xlu0 %v7462, 112
      %v7517 = vpop.permute.xlu0 %7516
      %v7519 = vsel %vm1182, %v7321, %v7465
      %v7520 = vsel %vm1184, %v7519, %v7469
      %v7521 = vsel %vm1186, %v7520, %v7473
      %v7522 = vsel %vm1188, %v7521, %v7477
      %v7523 = vsel %vm1190, %v7522, %v7481
      %v7524 = vsel %vm1192, %v7523, %v7485
      %v7525 = vsel %vm1194, %v7524, %v7489
      %v7526 = vsel %vm1182, %v7455, %v7493
      %v7527 = vsel %vm1184, %v7526, %v7497
      %v7528 = vsel %vm1186, %v7527, %v7501
      %v7529 = vsel %vm1188, %v7528, %v7505
      %v7530 = vsel %vm1190, %v7529, %v7509
      %v7531 = vsel %vm1192, %v7530, %v7513
      %v7532 = vsel %vm1194, %v7531, %v7517
      %v7535 = vrot.slane %v7525, 4
      %v7536 = vrot.slane %v7532, 4
      %7539 = vst [vmem:[#allocation3 + $0x40] sm:$0xf0] %v7535
      %7540 = vst [vmem:[#allocation3 + $0x48] sm:$0xf0] %v7536
      %7541 = vst [vmem:[#allocation3 + $0x50] sm:$0x3] %v7535
      %7542 = vst [vmem:[#allocation3 + $0x58] sm:$0x3] %v7536
      %v7543 = vld [vmem:[#allocation2 + $0x2] sm:$0xff]
      %v7544 = vld [vmem:[#allocation2 + $0xa] sm:$0xff]
      %v7545 = vld [vmem:[#allocation2 + $0x1a] sm:$0xff]
      %v7546 = vld [vmem:[#allocation2 + $0x22] sm:$0xff]
      %v7547 = vld [vmem:[#allocation2 + $0x32] sm:$0xff]
      %v7548 = vld [vmem:[#allocation2 + $0x3a] sm:$0xff]
      %v7549 = vld [vmem:[#allocation2 + $0x4a] sm:$0xff]
      %v7550 = vld [vmem:[#allocation2 + $0x52] sm:$0xff]
      %v7551 = vld [vmem:[#allocation2 + $0x62] sm:$0xff]
      %v7552 = vld [vmem:[#allocation2 + $0x6a] sm:$0xff]
      %v7553 = vld [vmem:[#allocation2 + $0x7a] sm:$0xff]
      %v7554 = vld [vmem:[#allocation2 + $0x82] sm:$0xff]
      %7567 = vrot.lane.b32.xlu0 %v7543, 127
      %v7568 = vpop.permute.xlu0 %7567
      %7569 = vrot.lane.b32.xlu0 %v7544, 127
      %v7570 = vpop.permute.xlu0 %7569
      %7571 = vrot.lane.b32.xlu0 %v7545, 127
      %v7572 = vpop.permute.xlu0 %7571
      %7573 = vrot.lane.b32.xlu0 %v7546, 127
      %v7574 = vpop.permute.xlu0 %7573
      %7575 = vrot.lane.b32.xlu0 %v7547, 127
      %v7576 = vpop.permute.xlu0 %7575
      %7577 = vrot.lane.b32.xlu0 %v7548, 127
      %v7578 = vpop.permute.xlu0 %7577
      %7579 = vrot.lane.b32.xlu0 %v7549, 127
      %v7580 = vpop.permute.xlu0 %7579
      %7581 = vrot.lane.b32.xlu0 %v7550, 127
      %v7582 = vpop.permute.xlu0 %7581
      %7583 = vrot.lane.b32.xlu0 %v7551, 127
      %v7584 = vpop.permute.xlu0 %7583
      %7585 = vrot.lane.b32.xlu0 %v7552, 127
      %v7586 = vpop.permute.xlu0 %7585
      %7587 = vrot.lane.b32.xlu0 %v7553, 127
      %v7588 = vpop.permute.xlu0 %7587
      %7589 = vrot.lane.b32.xlu0 %v7554, 127
      %v7590 = vpop.permute.xlu0 %7589
      %v7603 = vcombine.low %v7568, %v7576
      %v7604 = vcombine.high %v7568, %v7576
      %v7606 = vunpack.c.l.s4 1983009808
      %v7607 = vunpack.c.0.s8 %v7606
      %v7608 = vlaneseq
      %v7609 = vshrl.u32 %v7608, 7
      %v7610 = vsub.s32 %v7607, %v7609
      %v7611 = vrot.slane %v7603, %v7610
      %v7613 = vunpack.c.l.s4 1983009808
      %v7614 = vunpack.c.0.s8 %v7613
      %v7615 = vlaneseq
      %v7616 = vshrl.u32 %v7615, 7
      %v7617 = vsub.s32 %v7614, %v7616
      %v7618 = vrot.slane %v7604, %v7617
      %v7619 = vcombine.low %v7572, %v7580
      %v7620 = vcombine.high %v7572, %v7580
      %v7622 = vunpack.c.l.s4 1983009808
      %v7623 = vunpack.c.0.s8 %v7622
      %v7624 = vlaneseq
      %v7625 = vshrl.u32 %v7624, 7
      %v7626 = vsub.s32 %v7623, %v7625
      %v7627 = vrot.slane %v7619, %v7626
      %v7629 = vunpack.c.l.s4 1983009808
      %v7630 = vunpack.c.0.s8 %v7629
      %v7631 = vlaneseq
      %v7632 = vshrl.u32 %v7631, 7
      %v7633 = vsub.s32 %v7630, %v7632
      %v7634 = vrot.slane %v7620, %v7633
      %v7635 = vcombine.high %v7584, 0.0
      %v7637 = vunpack.c.l.s4 1983009808
      %v7638 = vunpack.c.0.s8 %v7637
      %v7639 = vlaneseq
      %v7640 = vshrl.u32 %v7639, 7
      %v7641 = vsub.s32 %v7638, %v7640
      %v7642 = vrot.slane %v7584, %v7641
      %v7644 = vunpack.c.l.s4 1983009808
      %v7645 = vunpack.c.0.s8 %v7644
      %v7646 = vlaneseq
      %v7647 = vshrl.u32 %v7646, 7
      %v7648 = vsub.s32 %v7645, %v7647
      %v7649 = vrot.slane %v7635, %v7648
      %v7650 = vcombine.high %v7588, 0.0
      %v7652 = vunpack.c.l.s4 1983009808
      %v7653 = vunpack.c.0.s8 %v7652
      %v7654 = vlaneseq
      %v7655 = vshrl.u32 %v7654, 7
      %v7656 = vsub.s32 %v7653, %v7655
      %v7657 = vrot.slane %v7588, %v7656
      %v7659 = vunpack.c.l.s4 1983009808
      %v7660 = vunpack.c.0.s8 %v7659
      %v7661 = vlaneseq
      %v7662 = vshrl.u32 %v7661, 7
      %v7663 = vsub.s32 %v7660, %v7662
      %v7664 = vrot.slane %v7650, %v7663
      %v7665 = vcombine.low %v7611, %v7627
      %v7666 = vcombine.high %v7611, %v7627
      %v7668 = vunpack.c.l.s4 1934713408
      %v7669 = vunpack.c.0.s8 %v7668
      %v7670 = vlaneseq
      %v7671 = vshrl.u32 %v7670, 7
      %v7672 = vsub.s32 %v7669, %v7671
      %v7673 = vrot.slane %v7665, %v7672
      %v7675 = vunpack.c.l.s4 1934713408
      %v7676 = vunpack.c.0.s8 %v7675
      %v7677 = vlaneseq
      %v7678 = vshrl.u32 %v7677, 7
      %v7679 = vsub.s32 %v7676, %v7678
      %v7680 = vrot.slane %v7666, %v7679
      %v7681 = vcombine.low %v7618, %v7634
      %v7682 = vcombine.high %v7618, %v7634
      %v7684 = vunpack.c.l.s4 1934713408
      %v7685 = vunpack.c.0.s8 %v7684
      %v7686 = vlaneseq
      %v7687 = vshrl.u32 %v7686, 7
      %v7688 = vsub.s32 %v7685, %v7687
      %v7689 = vrot.slane %v7681, %v7688
      %v7691 = vunpack.c.l.s4 1934713408
      %v7692 = vunpack.c.0.s8 %v7691
      %v7693 = vlaneseq
      %v7694 = vshrl.u32 %v7693, 7
      %v7695 = vsub.s32 %v7692, %v7694
      %v7696 = vrot.slane %v7682, %v7695
      %v7697 = vcombine.low %v7642, %v7657
      %v7698 = vcombine.high %v7642, %v7657
      %v7700 = vunpack.c.l.s4 1934713408
      %v7701 = vunpack.c.0.s8 %v7700
      %v7702 = vlaneseq
      %v7703 = vshrl.u32 %v7702, 7
      %v7704 = vsub.s32 %v7701, %v7703
      %v7705 = vrot.slane %v7697, %v7704
      %v7707 = vunpack.c.l.s4 1934713408
      %v7708 = vunpack.c.0.s8 %v7707
      %v7709 = vlaneseq
      %v7710 = vshrl.u32 %v7709, 7
      %v7711 = vsub.s32 %v7708, %v7710
      %v7712 = vrot.slane %v7698, %v7711
      %v7713 = vcombine.low %v7649, %v7664
      %v7714 = vcombine.high %v7649, %v7664
      %v7716 = vunpack.c.l.s4 1934713408
      %v7717 = vunpack.c.0.s8 %v7716
      %v7718 = vlaneseq
      %v7719 = vshrl.u32 %v7718, 7
      %v7720 = vsub.s32 %v7717, %v7719
      %v7721 = vrot.slane %v7713, %v7720
      %v7723 = vunpack.c.l.s4 1934713408
      %v7724 = vunpack.c.0.s8 %v7723
      %v7725 = vlaneseq
      %v7726 = vshrl.u32 %v7725, 7
      %v7727 = vsub.s32 %v7724, %v7726
      %v7728 = vrot.slane %v7714, %v7727
      %v7729 = vcombine.low %v7673, %v7705
      %v7730 = vcombine.high %v7673, %v7705
      %v7731 = vcombine.low %v7680, %v7712
      %v7732 = vcombine.high %v7680, %v7712
      %v7733 = vcombine.low %v7689, %v7721
      %v7734 = vcombine.high %v7689, %v7721
      %v7735 = vcombine.low %v7696, %v7728
      %v7736 = vcombine.high %v7696, %v7728
      %v7737 = vcombine.low %v7570, %v7578
      %v7738 = vcombine.high %v7570, %v7578
      %v7740 = vunpack.c.l.s4 1983009808
      %v7741 = vunpack.c.0.s8 %v7740
      %v7742 = vlaneseq
      %v7743 = vshrl.u32 %v7742, 7
      %v7744 = vsub.s32 %v7741, %v7743
      %v7745 = vrot.slane %v7737, %v7744
      %v7747 = vunpack.c.l.s4 1983009808
      %v7748 = vunpack.c.0.s8 %v7747
      %v7749 = vlaneseq
      %v7750 = vshrl.u32 %v7749, 7
      %v7751 = vsub.s32 %v7748, %v7750
      %v7752 = vrot.slane %v7738, %v7751
      %v7753 = vcombine.low %v7574, %v7582
      %v7754 = vcombine.high %v7574, %v7582
      %v7756 = vunpack.c.l.s4 1983009808
      %v7757 = vunpack.c.0.s8 %v7756
      %v7758 = vlaneseq
      %v7759 = vshrl.u32 %v7758, 7
      %v7760 = vsub.s32 %v7757, %v7759
      %v7761 = vrot.slane %v7753, %v7760
      %v7763 = vunpack.c.l.s4 1983009808
      %v7764 = vunpack.c.0.s8 %v7763
      %v7765 = vlaneseq
      %v7766 = vshrl.u32 %v7765, 7
      %v7767 = vsub.s32 %v7764, %v7766
      %v7768 = vrot.slane %v7754, %v7767
      %v7769 = vcombine.high %v7586, 0.0
      %v7771 = vunpack.c.l.s4 1983009808
      %v7772 = vunpack.c.0.s8 %v7771
      %v7773 = vlaneseq
      %v7774 = vshrl.u32 %v7773, 7
      %v7775 = vsub.s32 %v7772, %v7774
      %v7776 = vrot.slane %v7586, %v7775
      %v7778 = vunpack.c.l.s4 1983009808
      %v7779 = vunpack.c.0.s8 %v7778
      %v7780 = vlaneseq
      %v7781 = vshrl.u32 %v7780, 7
      %v7782 = vsub.s32 %v7779, %v7781
      %v7783 = vrot.slane %v7769, %v7782
      %v7784 = vcombine.high %v7590, 0.0
      %v7786 = vunpack.c.l.s4 1983009808
      %v7787 = vunpack.c.0.s8 %v7786
      %v7788 = vlaneseq
      %v7789 = vshrl.u32 %v7788, 7
      %v7790 = vsub.s32 %v7787, %v7789
      %v7791 = vrot.slane %v7590, %v7790
      %v7793 = vunpack.c.l.s4 1983009808
      %v7794 = vunpack.c.0.s8 %v7793
      %v7795 = vlaneseq
      %v7796 = vshrl.u32 %v7795, 7
      %v7797 = vsub.s32 %v7794, %v7796
      %v7798 = vrot.slane %v7784, %v7797
      %v7799 = vcombine.low %v7745, %v7761
      %v7800 = vcombine.high %v7745, %v7761
      %v7802 = vunpack.c.l.s4 1934713408
      %v7803 = vunpack.c.0.s8 %v7802
      %v7804 = vlaneseq
      %v7805 = vshrl.u32 %v7804, 7
      %v7806 = vsub.s32 %v7803, %v7805
      %v7807 = vrot.slane %v7799, %v7806
      %v7809 = vunpack.c.l.s4 1934713408
      %v7810 = vunpack.c.0.s8 %v7809
      %v7811 = vlaneseq
      %v7812 = vshrl.u32 %v7811, 7
      %v7813 = vsub.s32 %v7810, %v7812
      %v7814 = vrot.slane %v7800, %v7813
      %v7815 = vcombine.low %v7752, %v7768
      %v7816 = vcombine.high %v7752, %v7768
      %v7818 = vunpack.c.l.s4 1934713408
      %v7819 = vunpack.c.0.s8 %v7818
      %v7820 = vlaneseq
      %v7821 = vshrl.u32 %v7820, 7
      %v7822 = vsub.s32 %v7819, %v7821
      %v7823 = vrot.slane %v7815, %v7822
      %v7825 = vunpack.c.l.s4 1934713408
      %v7826 = vunpack.c.0.s8 %v7825
      %v7827 = vlaneseq
      %v7828 = vshrl.u32 %v7827, 7
      %v7829 = vsub.s32 %v7826, %v7828
      %v7830 = vrot.slane %v7816, %v7829
      %v7831 = vcombine.low %v7776, %v7791
      %v7832 = vcombine.high %v7776, %v7791
      %v7834 = vunpack.c.l.s4 1934713408
      %v7835 = vunpack.c.0.s8 %v7834
      %v7836 = vlaneseq
      %v7837 = vshrl.u32 %v7836, 7
      %v7838 = vsub.s32 %v7835, %v7837
      %v7839 = vrot.slane %v7831, %v7838
      %v7841 = vunpack.c.l.s4 1934713408
      %v7842 = vunpack.c.0.s8 %v7841
      %v7843 = vlaneseq
      %v7844 = vshrl.u32 %v7843, 7
      %v7845 = vsub.s32 %v7842, %v7844
      %v7846 = vrot.slane %v7832, %v7845
      %v7847 = vcombine.low %v7783, %v7798
      %v7848 = vcombine.high %v7783, %v7798
      %v7850 = vunpack.c.l.s4 1934713408
      %v7851 = vunpack.c.0.s8 %v7850
      %v7852 = vlaneseq
      %v7853 = vshrl.u32 %v7852, 7
      %v7854 = vsub.s32 %v7851, %v7853
      %v7855 = vrot.slane %v7847, %v7854
      %v7857 = vunpack.c.l.s4 1934713408
      %v7858 = vunpack.c.0.s8 %v7857
      %v7859 = vlaneseq
      %v7860 = vshrl.u32 %v7859, 7
      %v7861 = vsub.s32 %v7858, %v7860
      %v7862 = vrot.slane %v7848, %v7861
      %v7863 = vcombine.low %v7807, %v7839
      %v7864 = vcombine.high %v7807, %v7839
      %v7865 = vcombine.low %v7814, %v7846
      %v7866 = vcombine.high %v7814, %v7846
      %v7867 = vcombine.low %v7823, %v7855
      %v7868 = vcombine.high %v7823, %v7855
      %v7869 = vcombine.low %v7830, %v7862
      %v7870 = vcombine.high %v7830, %v7862
      %7872 = vrot.lane.b32.xlu0 %v7730, 16
      %v7873 = vpop.permute.xlu0 %7872
      %7876 = vrot.lane.b32.xlu0 %v7731, 32
      %v7877 = vpop.permute.xlu0 %7876
      %7880 = vrot.lane.b32.xlu0 %v7732, 48
      %v7881 = vpop.permute.xlu0 %7880
      %7884 = vrot.lane.b32.xlu0 %v7733, 64
      %v7885 = vpop.permute.xlu0 %7884
      %7888 = vrot.lane.b32.xlu0 %v7734, 80
      %v7889 = vpop.permute.xlu0 %7888
      %7892 = vrot.lane.b32.xlu0 %v7735, 96
      %v7893 = vpop.permute.xlu0 %7892
      %7896 = vrot.lane.b32.xlu0 %v7736, 112
      %v7897 = vpop.permute.xlu0 %7896
      %7900 = vrot.lane.b32.xlu0 %v7864, 16
      %v7901 = vpop.permute.xlu0 %7900
      %7904 = vrot.lane.b32.xlu0 %v7865, 32
      %v7905 = vpop.permute.xlu0 %7904
      %7908 = vrot.lane.b32.xlu0 %v7866, 48
      %v7909 = vpop.permute.xlu0 %7908
      %7912 = vrot.lane.b32.xlu0 %v7867, 64
      %v7913 = vpop.permute.xlu0 %7912
      %7916 = vrot.lane.b32.xlu0 %v7868, 80
      %v7917 = vpop.permute.xlu0 %7916
      %7920 = vrot.lane.b32.xlu0 %v7869, 96
      %v7921 = vpop.permute.xlu0 %7920
      %7924 = vrot.lane.b32.xlu0 %v7870, 112
      %v7925 = vpop.permute.xlu0 %7924
      %v7927 = vsel %vm1182, %v7729, %v7873
      %v7928 = vsel %vm1184, %v7927, %v7877
      %v7929 = vsel %vm1186, %v7928, %v7881
      %v7930 = vsel %vm1188, %v7929, %v7885
      %v7931 = vsel %vm1190, %v7930, %v7889
      %v7932 = vsel %vm1192, %v7931, %v7893
      %v7933 = vsel %vm1194, %v7932, %v7897
      %v7934 = vsel %vm1182, %v7863, %v7901
      %v7935 = vsel %vm1184, %v7934, %v7905
      %v7936 = vsel %vm1186, %v7935, %v7909
      %v7937 = vsel %vm1188, %v7936, %v7913
      %v7938 = vsel %vm1190, %v7937, %v7917
      %v7939 = vsel %vm1192, %v7938, %v7921
      %v7940 = vsel %vm1194, %v7939, %v7925
      %v7943 = vrot.slane %v7933, 6
      %v7944 = vrot.slane %v7940, 6
      %7947 = vst [vmem:[#allocation3 + $0x50] sm:$0xfc] %v7943
      %7948 = vst [vmem:[#allocation3 + $0x58] sm:$0xfc] %v7944
      %v7949 = vld [vmem:[#allocation2 + $0x2] sm:$0xff]
      %v7950 = vld [vmem:[#allocation2 + $0xa] sm:$0xff]
      %v7951 = vld [vmem:[#allocation2 + $0x1a] sm:$0xff]
      %v7952 = vld [vmem:[#allocation2 + $0x22] sm:$0xff]
      %v7953 = vld [vmem:[#allocation2 + $0x32] sm:$0xff]
      %v7954 = vld [vmem:[#allocation2 + $0x3a] sm:$0xff]
      %v7955 = vld [vmem:[#allocation2 + $0x4a] sm:$0xff]
      %v7956 = vld [vmem:[#allocation2 + $0x52] sm:$0xff]
      %v7957 = vld [vmem:[#allocation2 + $0x62] sm:$0xff]
      %v7958 = vld [vmem:[#allocation2 + $0x6a] sm:$0xff]
      %v7959 = vld [vmem:[#allocation2 + $0x7a] sm:$0xff]
      %v7960 = vld [vmem:[#allocation2 + $0x82] sm:$0xff]
      %7973 = vrot.lane.b32.xlu0 %v7949, 126
      %v7974 = vpop.permute.xlu0 %7973
      %7975 = vrot.lane.b32.xlu0 %v7950, 126
      %v7976 = vpop.permute.xlu0 %7975
      %7977 = vrot.lane.b32.xlu0 %v7951, 126
      %v7978 = vpop.permute.xlu0 %7977
      %7979 = vrot.lane.b32.xlu0 %v7952, 126
      %v7980 = vpop.permute.xlu0 %7979
      %7981 = vrot.lane.b32.xlu0 %v7953, 126
      %v7982 = vpop.permute.xlu0 %7981
      %7983 = vrot.lane.b32.xlu0 %v7954, 126
      %v7984 = vpop.permute.xlu0 %7983
      %7985 = vrot.lane.b32.xlu0 %v7955, 126
      %v7986 = vpop.permute.xlu0 %7985
      %7987 = vrot.lane.b32.xlu0 %v7956, 126
      %v7988 = vpop.permute.xlu0 %7987
      %7989 = vrot.lane.b32.xlu0 %v7957, 126
      %v7990 = vpop.permute.xlu0 %7989
      %7991 = vrot.lane.b32.xlu0 %v7958, 126
      %v7992 = vpop.permute.xlu0 %7991
      %7993 = vrot.lane.b32.xlu0 %v7959, 126
      %v7994 = vpop.permute.xlu0 %7993
      %7995 = vrot.lane.b32.xlu0 %v7960, 126
      %v7996 = vpop.permute.xlu0 %7995
      %v8009 = vcombine.low %v7974, %v7982
      %v8010 = vcombine.high %v7974, %v7982
      %v8012 = vunpack.c.l.s4 1983009808
      %v8013 = vunpack.c.0.s8 %v8012
      %v8014 = vlaneseq
      %v8015 = vshrl.u32 %v8014, 7
      %v8016 = vsub.s32 %v8013, %v8015
      %v8017 = vrot.slane %v8009, %v8016
      %v8019 = vunpack.c.l.s4 1983009808
      %v8020 = vunpack.c.0.s8 %v8019
      %v8021 = vlaneseq
      %v8022 = vshrl.u32 %v8021, 7
      %v8023 = vsub.s32 %v8020, %v8022
      %v8024 = vrot.slane %v8010, %v8023
      %v8025 = vcombine.low %v7978, %v7986
      %v8026 = vcombine.high %v7978, %v7986
      %v8028 = vunpack.c.l.s4 1983009808
      %v8029 = vunpack.c.0.s8 %v8028
      %v8030 = vlaneseq
      %v8031 = vshrl.u32 %v8030, 7
      %v8032 = vsub.s32 %v8029, %v8031
      %v8033 = vrot.slane %v8025, %v8032
      %v8035 = vunpack.c.l.s4 1983009808
      %v8036 = vunpack.c.0.s8 %v8035
      %v8037 = vlaneseq
      %v8038 = vshrl.u32 %v8037, 7
      %v8039 = vsub.s32 %v8036, %v8038
      %v8040 = vrot.slane %v8026, %v8039
      %v8041 = vcombine.high %v7990, 0.0
      %v8043 = vunpack.c.l.s4 1983009808
      %v8044 = vunpack.c.0.s8 %v8043
      %v8045 = vlaneseq
      %v8046 = vshrl.u32 %v8045, 7
      %v8047 = vsub.s32 %v8044, %v8046
      %v8048 = vrot.slane %v7990, %v8047
      %v8050 = vunpack.c.l.s4 1983009808
      %v8051 = vunpack.c.0.s8 %v8050
      %v8052 = vlaneseq
      %v8053 = vshrl.u32 %v8052, 7
      %v8054 = vsub.s32 %v8051, %v8053
      %v8055 = vrot.slane %v8041, %v8054
      %v8056 = vcombine.high %v7994, 0.0
      %v8058 = vunpack.c.l.s4 1983009808
      %v8059 = vunpack.c.0.s8 %v8058
      %v8060 = vlaneseq
      %v8061 = vshrl.u32 %v8060, 7
      %v8062 = vsub.s32 %v8059, %v8061
      %v8063 = vrot.slane %v7994, %v8062
      %v8065 = vunpack.c.l.s4 1983009808
      %v8066 = vunpack.c.0.s8 %v8065
      %v8067 = vlaneseq
      %v8068 = vshrl.u32 %v8067, 7
      %v8069 = vsub.s32 %v8066, %v8068
      %v8070 = vrot.slane %v8056, %v8069
      %v8071 = vcombine.low %v8017, %v8033
      %v8072 = vcombine.high %v8017, %v8033
      %v8074 = vunpack.c.l.s4 1934713408
      %v8075 = vunpack.c.0.s8 %v8074
      %v8076 = vlaneseq
      %v8077 = vshrl.u32 %v8076, 7
      %v8078 = vsub.s32 %v8075, %v8077
      %v8079 = vrot.slane %v8071, %v8078
      %v8081 = vunpack.c.l.s4 1934713408
      %v8082 = vunpack.c.0.s8 %v8081
      %v8083 = vlaneseq
      %v8084 = vshrl.u32 %v8083, 7
      %v8085 = vsub.s32 %v8082, %v8084
      %v8086 = vrot.slane %v8072, %v8085
      %v8087 = vcombine.low %v8024, %v8040
      %v8088 = vcombine.high %v8024, %v8040
      %v8090 = vunpack.c.l.s4 1934713408
      %v8091 = vunpack.c.0.s8 %v8090
      %v8092 = vlaneseq
      %v8093 = vshrl.u32 %v8092, 7
      %v8094 = vsub.s32 %v8091, %v8093
      %v8095 = vrot.slane %v8087, %v8094
      %v8097 = vunpack.c.l.s4 1934713408
      %v8098 = vunpack.c.0.s8 %v8097
      %v8099 = vlaneseq
      %v8100 = vshrl.u32 %v8099, 7
      %v8101 = vsub.s32 %v8098, %v8100
      %v8102 = vrot.slane %v8088, %v8101
      %v8103 = vcombine.low %v8048, %v8063
      %v8104 = vcombine.high %v8048, %v8063
      %v8106 = vunpack.c.l.s4 1934713408
      %v8107 = vunpack.c.0.s8 %v8106
      %v8108 = vlaneseq
      %v8109 = vshrl.u32 %v8108, 7
      %v8110 = vsub.s32 %v8107, %v8109
      %v8111 = vrot.slane %v8103, %v8110
      %v8113 = vunpack.c.l.s4 1934713408
      %v8114 = vunpack.c.0.s8 %v8113
      %v8115 = vlaneseq
      %v8116 = vshrl.u32 %v8115, 7
      %v8117 = vsub.s32 %v8114, %v8116
      %v8118 = vrot.slane %v8104, %v8117
      %v8119 = vcombine.low %v8055, %v8070
      %v8120 = vcombine.high %v8055, %v8070
      %v8122 = vunpack.c.l.s4 1934713408
      %v8123 = vunpack.c.0.s8 %v8122
      %v8124 = vlaneseq
      %v8125 = vshrl.u32 %v8124, 7
      %v8126 = vsub.s32 %v8123, %v8125
      %v8127 = vrot.slane %v8119, %v8126
      %v8129 = vunpack.c.l.s4 1934713408
      %v8130 = vunpack.c.0.s8 %v8129
      %v8131 = vlaneseq
      %v8132 = vshrl.u32 %v8131, 7
      %v8133 = vsub.s32 %v8130, %v8132
      %v8134 = vrot.slane %v8120, %v8133
      %v8135 = vcombine.low %v8079, %v8111
      %v8136 = vcombine.high %v8079, %v8111
      %v8137 = vcombine.low %v8086, %v8118
      %v8138 = vcombine.high %v8086, %v8118
      %v8139 = vcombine.low %v8095, %v8127
      %v8140 = vcombine.high %v8095, %v8127
      %v8141 = vcombine.low %v8102, %v8134
      %v8142 = vcombine.high %v8102, %v8134
      %v8143 = vcombine.low %v7976, %v7984
      %v8144 = vcombine.high %v7976, %v7984
      %v8146 = vunpack.c.l.s4 1983009808
      %v8147 = vunpack.c.0.s8 %v8146
      %v8148 = vlaneseq
      %v8149 = vshrl.u32 %v8148, 7
      %v8150 = vsub.s32 %v8147, %v8149
      %v8151 = vrot.slane %v8143, %v8150
      %v8153 = vunpack.c.l.s4 1983009808
      %v8154 = vunpack.c.0.s8 %v8153
      %v8155 = vlaneseq
      %v8156 = vshrl.u32 %v8155, 7
      %v8157 = vsub.s32 %v8154, %v8156
      %v8158 = vrot.slane %v8144, %v8157
      %v8159 = vcombine.low %v7980, %v7988
      %v8160 = vcombine.high %v7980, %v7988
      %v8162 = vunpack.c.l.s4 1983009808
      %v8163 = vunpack.c.0.s8 %v8162
      %v8164 = vlaneseq
      %v8165 = vshrl.u32 %v8164, 7
      %v8166 = vsub.s32 %v8163, %v8165
      %v8167 = vrot.slane %v8159, %v8166
      %v8169 = vunpack.c.l.s4 1983009808
      %v8170 = vunpack.c.0.s8 %v8169
      %v8171 = vlaneseq
      %v8172 = vshrl.u32 %v8171, 7
      %v8173 = vsub.s32 %v8170, %v8172
      %v8174 = vrot.slane %v8160, %v8173
      %v8175 = vcombine.high %v7992, 0.0
      %v8177 = vunpack.c.l.s4 1983009808
      %v8178 = vunpack.c.0.s8 %v8177
      %v8179 = vlaneseq
      %v8180 = vshrl.u32 %v8179, 7
      %v8181 = vsub.s32 %v8178, %v8180
      %v8182 = vrot.slane %v7992, %v8181
      %v8184 = vunpack.c.l.s4 1983009808
      %v8185 = vunpack.c.0.s8 %v8184
      %v8186 = vlaneseq
      %v8187 = vshrl.u32 %v8186, 7
      %v8188 = vsub.s32 %v8185, %v8187
      %v8189 = vrot.slane %v8175, %v8188
      %v8190 = vcombine.high %v7996, 0.0
      %v8192 = vunpack.c.l.s4 1983009808
      %v8193 = vunpack.c.0.s8 %v8192
      %v8194 = vlaneseq
      %v8195 = vshrl.u32 %v8194, 7
      %v8196 = vsub.s32 %v8193, %v8195
      %v8197 = vrot.slane %v7996, %v8196
      %v8199 = vunpack.c.l.s4 1983009808
      %v8200 = vunpack.c.0.s8 %v8199
      %v8201 = vlaneseq
      %v8202 = vshrl.u32 %v8201, 7
      %v8203 = vsub.s32 %v8200, %v8202
      %v8204 = vrot.slane %v8190, %v8203
      %v8205 = vcombine.low %v8151, %v8167
      %v8206 = vcombine.high %v8151, %v8167
      %v8208 = vunpack.c.l.s4 1934713408
      %v8209 = vunpack.c.0.s8 %v8208
      %v8210 = vlaneseq
      %v8211 = vshrl.u32 %v8210, 7
      %v8212 = vsub.s32 %v8209, %v8211
      %v8213 = vrot.slane %v8205, %v8212
      %v8215 = vunpack.c.l.s4 1934713408
      %v8216 = vunpack.c.0.s8 %v8215
      %v8217 = vlaneseq
      %v8218 = vshrl.u32 %v8217, 7
      %v8219 = vsub.s32 %v8216, %v8218
      %v8220 = vrot.slane %v8206, %v8219
      %v8221 = vcombine.low %v8158, %v8174
      %v8222 = vcombine.high %v8158, %v8174
      %v8224 = vunpack.c.l.s4 1934713408
      %v8225 = vunpack.c.0.s8 %v8224
      %v8226 = vlaneseq
      %v8227 = vshrl.u32 %v8226, 7
      %v8228 = vsub.s32 %v8225, %v8227
      %v8229 = vrot.slane %v8221, %v8228
      %v8231 = vunpack.c.l.s4 1934713408
      %v8232 = vunpack.c.0.s8 %v8231
      %v8233 = vlaneseq
      %v8234 = vshrl.u32 %v8233, 7
      %v8235 = vsub.s32 %v8232, %v8234
      %v8236 = vrot.slane %v8222, %v8235
      %v8237 = vcombine.low %v8182, %v8197
      %v8238 = vcombine.high %v8182, %v8197
      %v8240 = vunpack.c.l.s4 1934713408
      %v8241 = vunpack.c.0.s8 %v8240
      %v8242 = vlaneseq
      %v8243 = vshrl.u32 %v8242, 7
      %v8244 = vsub.s32 %v8241, %v8243
      %v8245 = vrot.slane %v8237, %v8244
      %v8247 = vunpack.c.l.s4 1934713408
      %v8248 = vunpack.c.0.s8 %v8247
      %v8249 = vlaneseq
      %v8250 = vshrl.u32 %v8249, 7
      %v8251 = vsub.s32 %v8248, %v8250
      %v8252 = vrot.slane %v8238, %v8251
      %v8253 = vcombine.low %v8189, %v8204
      %v8254 = vcombine.high %v8189, %v8204
      %v8256 = vunpack.c.l.s4 1934713408
      %v8257 = vunpack.c.0.s8 %v8256
      %v8258 = vlaneseq
      %v8259 = vshrl.u32 %v8258, 7
      %v8260 = vsub.s32 %v8257, %v8259
      %v8261 = vrot.slane %v8253, %v8260
      %v8263 = vunpack.c.l.s4 1934713408
      %v8264 = vunpack.c.0.s8 %v8263
      %v8265 = vlaneseq
      %v8266 = vshrl.u32 %v8265, 7
      %v8267 = vsub.s32 %v8264, %v8266
      %v8268 = vrot.slane %v8254, %v8267
      %v8269 = vcombine.low %v8213, %v8245
      %v8270 = vcombine.high %v8213, %v8245
      %v8271 = vcombine.low %v8220, %v8252
      %v8272 = vcombine.high %v8220, %v8252
      %v8273 = vcombine.low %v8229, %v8261
      %v8274 = vcombine.high %v8229, %v8261
      %v8275 = vcombine.low %v8236, %v8268
      %v8276 = vcombine.high %v8236, %v8268
      %8278 = vrot.lane.b32.xlu0 %v8136, 16
      %v8279 = vpop.permute.xlu0 %8278
      %8282 = vrot.lane.b32.xlu0 %v8137, 32
      %v8283 = vpop.permute.xlu0 %8282
      %8286 = vrot.lane.b32.xlu0 %v8138, 48
      %v8287 = vpop.permute.xlu0 %8286
      %8290 = vrot.lane.b32.xlu0 %v8139, 64
      %v8291 = vpop.permute.xlu0 %8290
      %8294 = vrot.lane.b32.xlu0 %v8140, 80
      %v8295 = vpop.permute.xlu0 %8294
      %8298 = vrot.lane.b32.xlu0 %v8141, 96
      %v8299 = vpop.permute.xlu0 %8298
      %8302 = vrot.lane.b32.xlu0 %v8142, 112
      %v8303 = vpop.permute.xlu0 %8302
      %8306 = vrot.lane.b32.xlu0 %v8270, 16
      %v8307 = vpop.permute.xlu0 %8306
      %8310 = vrot.lane.b32.xlu0 %v8271, 32
      %v8311 = vpop.permute.xlu0 %8310
      %8314 = vrot.lane.b32.xlu0 %v8272, 48
      %v8315 = vpop.permute.xlu0 %8314
      %8318 = vrot.lane.b32.xlu0 %v8273, 64
      %v8319 = vpop.permute.xlu0 %8318
      %8322 = vrot.lane.b32.xlu0 %v8274, 80
      %v8323 = vpop.permute.xlu0 %8322
      %8326 = vrot.lane.b32.xlu0 %v8275, 96
      %v8327 = vpop.permute.xlu0 %8326
      %8330 = vrot.lane.b32.xlu0 %v8276, 112
      %v8331 = vpop.permute.xlu0 %8330
      %v8333 = vsel %vm1182, %v8135, %v8279
      %v8334 = vsel %vm1184, %v8333, %v8283
      %v8335 = vsel %vm1186, %v8334, %v8287
      %v8336 = vsel %vm1188, %v8335, %v8291
      %v8337 = vsel %vm1190, %v8336, %v8295
      %v8338 = vsel %vm1192, %v8337, %v8299
      %v8339 = vsel %vm1194, %v8338, %v8303
      %v8340 = vsel %vm1182, %v8269, %v8307
      %v8341 = vsel %vm1184, %v8340, %v8311
      %v8342 = vsel %vm1186, %v8341, %v8315
      %v8343 = vsel %vm1188, %v8342, %v8319
      %v8344 = vsel %vm1190, %v8343, %v8323
      %v8345 = vsel %vm1192, %v8344, %v8327
      %v8346 = vsel %vm1194, %v8345, %v8331
      %8347 = vst [vmem:[#allocation3 + $0x60] sm:$0x3f] %v8339
      %8348 = vst [vmem:[#allocation3 + $0x68] sm:$0x3f] %v8346
      %v8349 = vld [vmem:[%s5] sm:$0xff]
      %v8350 = vld [vmem:[#allocation3] sm:$0xff]
      %v8351 = vld [vmem:[#allocation3 + $0x8] sm:$0xff]
      %v8352 = vld [vmem:[#allocation3 + $0x10] sm:$0xff]
      %v8353 = vld [vmem:[#allocation3 + $0x18] sm:$0xff]
      %v8354 = vld [vmem:[#allocation3 + $0x20] sm:$0xff]
      %v8355 = vld [vmem:[#allocation3 + $0x28] sm:$0xff]
      %v8356 = vld [vmem:[#allocation3 + $0x30] sm:$0xff]
      %v8357 = vld [vmem:[#allocation3 + $0x38] sm:$0xff]
      %v8358 = vld [vmem:[#allocation3 + $0x40] sm:$0xff]
      %v8359 = vld [vmem:[#allocation3 + $0x48] sm:$0xff]
      %v8360 = vld [vmem:[#allocation3 + $0x50] sm:$0xff]
      %v8361 = vld [vmem:[#allocation3 + $0x58] sm:$0xff]
      %v8362 = vld [vmem:[#allocation3 + $0x60] sm:$0x3f]
      %v8363 = vld [vmem:[#allocation3 + $0x68] sm:$0x3f]
      %v8364 = vld [vmem:[%s6] sm:$0xff]
      %8366 = vset.pattern.permute.xlu0 0
      %8367 = vperm.xlu0 %8366, %v8364
      %v8368 = vpop.permute.xlu0 %8367
      %v8371 = vsel %vm4374, %v8349, 0
      %v8374 = vsel %vm4378, %v8362, 0
      %v8377 = vsel %vm4378, %v8363, 0
      %8379 = vmatprep.subr.mxu0 0.0
      %8380 = vmatpush1.msra.mxu0 0.0
      %8381 = vmatprep.subr.mxu0 0.0
      %8382 = vmatpush1.msra.mxu0 0.0
      %8383 = vmatprep.subr.mxu0 0.0
      %8384 = vmatpush1.msra.mxu0 0.0
      %8385 = vmatprep.subr.mxu0 0.0
      %8386 = vmatpush1.msra.mxu0 0.0
      %8387 = vmatprep.subr.mxu0 0.0
      %8388 = vmatpush1.msra.mxu0 0.0
      %8389 = vmatprep.subr.mxu0 0.0
      %8390 = vmatpush1.msra.mxu0 0.0
      %8391 = vmatprep.subr.mxu0 0.0
      %8392 = vmatpush1.msra.mxu0 0.0
      %8393 = vmatprep.subr.mxu0 0.0
      %8394 = vmatpush1.msra.mxu0 0.0
      %8395 = vmatprep.subr.mxu0 0.0
      %8396 = vmatpush1.msra.mxu0 0.0
      %8397 = vmatprep.subr.mxu0 %v8377
      %8398 = vmatpush1.msra.mxu0 %v8374
      %8399 = vmatprep.subr.mxu0 %v8361
      %8400 = vmatpush1.msra.mxu0 %v8360
      %8401 = vmatprep.subr.mxu0 %v8359
      %8402 = vmatpush1.msra.mxu0 %v8358
      %8403 = vmatprep.subr.mxu0 %v8357
      %8404 = vmatpush1.msra.mxu0 %v8356
      %8405 = vmatprep.subr.mxu0 %v8355
      %8406 = vmatpush1.msra.mxu0 %v8354
      %8407 = vmatprep.subr.mxu0 %v8353
      %8408 = vmatpush1.msra.mxu0 %v8352
      %8409 = vmatprep.subr.mxu0 %v8351
      %8410 = vmatpush1.msra.mxu0 %v8350
      %8411 = vmatprep.subr.mxu0 0.0
      %8412 = vmatpush2.msra.mxu0 0.0
      %8413 = vmatprep.subr.mxu0 0.0
      %8414 = vmatpush2.msra.mxu0 0.0
      %8415 = vmatprep.subr.mxu0 0.0
      %8416 = vmatpush2.msra.mxu0 0.0
      %8417 = vmatprep.subr.mxu0 0.0
      %8418 = vmatpush2.msra.mxu0 0.0
      %8419 = vmatprep.subr.mxu0 0.0
      %8420 = vmatpush2.msra.mxu0 0.0
      %8421 = vmatprep.subr.mxu0 0.0
      %8422 = vmatpush2.msra.mxu0 0.0
      %8423 = vmatprep.subr.mxu0 0.0
      %8424 = vmatpush2.msra.mxu0 0.0
      %8425 = vmatprep.subr.mxu0 0.0
      %8426 = vmatpush2.msra.mxu0 0.0
      %8427 = vmatprep.subr.mxu0 0.0
      %8428 = vmatpush2.msra.mxu0 0.0
      %8429 = vmatprep.subr.mxu0 0.0
      %8430 = vmatpush2.msra.mxu0 0.0
      %8431 = vmatprep.subr.mxu0 0.0
      %8432 = vmatpush2.msra.mxu0 0.0
      %8433 = vmatprep.subr.mxu0 0.0
      %8434 = vmatpush2.msra.mxu0 0.0
      %8435 = vmatprep.subr.mxu0 0.0
      %8436 = vmatpush2.msra.mxu0 0.0
      %8437 = vmatprep.subr.mxu0 0.0
      %8438 = vmatpush2.msra.mxu0 0.0
      %8439 = vmatprep.subr.mxu0 0.0
      %8440 = vmatpush2.msra.mxu0 0.0
      %8441 = vmatprep.subr.mxu0 0.0
      %8442 = vmatpush2.msra.mxu0 0.0
      %8443 = vmatprep.mubr.f32.mxu0 0.0
      %8444 = vmatmul.mubr.f32.gmra.mxu0 %v8371
      %v8445 = vpop.f32.mrf.mxu0
      %v8446 = vadd.f32 %v8368, %v8445
      %v8447 = vpop.f32.mrf.mxu0
      %v8448 = vadd.f32 %v8368, %v8447
      %8449 = vdwg.mxu0
      %v8450 = vmax.f32 %v8446, 0.0
      %v8451 = vmax.f32 %v8448, 0.0
      %8453 = vrot.lane.b32.xlu0 %v8450, 112
      %v8454 = vpop.permute.xlu0 %8453
      %8456 = vrot.lane.b32.xlu0 %v8450, 96
      %v8457 = vpop.permute.xlu0 %8456
      %8459 = vrot.lane.b32.xlu0 %v8450, 80
      %v8460 = vpop.permute.xlu0 %8459
      %8462 = vrot.lane.b32.xlu0 %v8450, 64
      %v8463 = vpop.permute.xlu0 %8462
      %8465 = vrot.lane.b32.xlu0 %v8450, 48
      %v8466 = vpop.permute.xlu0 %8465
      %8468 = vrot.lane.b32.xlu0 %v8450, 32
      %v8469 = vpop.permute.xlu0 %8468
      %8471 = vrot.lane.b32.xlu0 %v8450, 16
      %v8472 = vpop.permute.xlu0 %8471
      %8475 = vrot.lane.b32.xlu0 %v8451, 112
      %v8476 = vpop.permute.xlu0 %8475
      %8478 = vrot.lane.b32.xlu0 %v8451, 96
      %v8479 = vpop.permute.xlu0 %8478
      %8481 = vrot.lane.b32.xlu0 %v8451, 80
      %v8482 = vpop.permute.xlu0 %8481
      %8484 = vrot.lane.b32.xlu0 %v8451, 64
      %v8485 = vpop.permute.xlu0 %8484
      %8487 = vrot.lane.b32.xlu0 %v8451, 48
      %v8488 = vpop.permute.xlu0 %8487
      %8490 = vrot.lane.b32.xlu0 %v8451, 32
      %v8491 = vpop.permute.xlu0 %8490
      %8493 = vrot.lane.b32.xlu0 %v8451, 16
      %v8494 = vpop.permute.xlu0 %8493
      %v8496 = vcombine.low %v8450, %v8457
      %v8497 = vcombine.high %v8450, %v8457
      %v8499 = vunpack.c.l.s4 1983009808
      %v8500 = vunpack.c.0.s8 %v8499
      %v8501 = vlaneseq
      %v8502 = vshrl.u32 %v8501, 7
      %v8503 = vsub.s32 %v8500, %v8502
      %v8504 = vrot.slane %v8496, %v8503
      %v8506 = vunpack.c.l.s4 1983009808
      %v8507 = vunpack.c.0.s8 %v8506
      %v8508 = vlaneseq
      %v8509 = vshrl.u32 %v8508, 7
      %v8510 = vsub.s32 %v8507, %v8509
      %v8511 = vrot.slane %v8497, %v8510
      %v8512 = vcombine.low %v8454, %v8460
      %v8513 = vcombine.high %v8454, %v8460
      %v8515 = vunpack.c.l.s4 1983009808
      %v8516 = vunpack.c.0.s8 %v8515
      %v8517 = vlaneseq
      %v8518 = vshrl.u32 %v8517, 7
      %v8519 = vsub.s32 %v8516, %v8518
      %v8520 = vrot.slane %v8512, %v8519
      %v8522 = vunpack.c.l.s4 1983009808
      %v8523 = vunpack.c.0.s8 %v8522
      %v8524 = vlaneseq
      %v8525 = vshrl.u32 %v8524, 7
      %v8526 = vsub.s32 %v8523, %v8525
      %v8527 = vrot.slane %v8513, %v8526
      %v8528 = vcombine.low %v8463, %v8469
      %v8529 = vcombine.high %v8463, %v8469
      %v8531 = vunpack.c.l.s4 1983009808
      %v8532 = vunpack.c.0.s8 %v8531
      %v8533 = vlaneseq
      %v8534 = vshrl.u32 %v8533, 7
      %v8535 = vsub.s32 %v8532, %v8534
      %v8536 = vrot.slane %v8528, %v8535
      %v8538 = vunpack.c.l.s4 1983009808
      %v8539 = vunpack.c.0.s8 %v8538
      %v8540 = vlaneseq
      %v8541 = vshrl.u32 %v8540, 7
      %v8542 = vsub.s32 %v8539, %v8541
      %v8543 = vrot.slane %v8529, %v8542
      %v8544 = vcombine.low %v8466, %v8472
      %v8545 = vcombine.high %v8466, %v8472
      %v8547 = vunpack.c.l.s4 1983009808
      %v8548 = vunpack.c.0.s8 %v8547
      %v8549 = vlaneseq
      %v8550 = vshrl.u32 %v8549, 7
      %v8551 = vsub.s32 %v8548, %v8550
      %v8552 = vrot.slane %v8544, %v8551
      %v8554 = vunpack.c.l.s4 1983009808
      %v8555 = vunpack.c.0.s8 %v8554
      %v8556 = vlaneseq
      %v8557 = vshrl.u32 %v8556, 7
      %v8558 = vsub.s32 %v8555, %v8557
      %v8559 = vrot.slane %v8545, %v8558
      %v8560 = vcombine.low %v8504, %v8520
      %v8561 = vcombine.high %v8504, %v8520
      %v8563 = vunpack.c.l.s4 1934713408
      %v8564 = vunpack.c.0.s8 %v8563
      %v8565 = vlaneseq
      %v8566 = vshrl.u32 %v8565, 7
      %v8567 = vsub.s32 %v8564, %v8566
      %v8568 = vrot.slane %v8560, %v8567
      %v8570 = vunpack.c.l.s4 1934713408
      %v8571 = vunpack.c.0.s8 %v8570
      %v8572 = vlaneseq
      %v8573 = vshrl.u32 %v8572, 7
      %v8574 = vsub.s32 %v8571, %v8573
      %v8575 = vrot.slane %v8561, %v8574
      %v8576 = vcombine.low %v8511, %v8527
      %v8577 = vcombine.high %v8511, %v8527
      %v8579 = vunpack.c.l.s4 1934713408
      %v8580 = vunpack.c.0.s8 %v8579
      %v8581 = vlaneseq
      %v8582 = vshrl.u32 %v8581, 7
      %v8583 = vsub.s32 %v8580, %v8582
      %v8584 = vrot.slane %v8576, %v8583
      %v8586 = vunpack.c.l.s4 1934713408
      %v8587 = vunpack.c.0.s8 %v8586
      %v8588 = vlaneseq
      %v8589 = vshrl.u32 %v8588, 7
      %v8590 = vsub.s32 %v8587, %v8589
      %v8591 = vrot.slane %v8577, %v8590
      %v8592 = vcombine.low %v8536, %v8552
      %v8593 = vcombine.high %v8536, %v8552
      %v8595 = vunpack.c.l.s4 1934713408
      %v8596 = vunpack.c.0.s8 %v8595
      %v8597 = vlaneseq
      %v8598 = vshrl.u32 %v8597, 7
      %v8599 = vsub.s32 %v8596, %v8598
      %v8600 = vrot.slane %v8592, %v8599
      %v8602 = vunpack.c.l.s4 1934713408
      %v8603 = vunpack.c.0.s8 %v8602
      %v8604 = vlaneseq
      %v8605 = vshrl.u32 %v8604, 7
      %v8606 = vsub.s32 %v8603, %v8605
      %v8607 = vrot.slane %v8593, %v8606
      %v8608 = vcombine.low %v8543, %v8559
      %v8609 = vcombine.high %v8543, %v8559
      %v8611 = vunpack.c.l.s4 1934713408
      %v8612 = vunpack.c.0.s8 %v8611
      %v8613 = vlaneseq
      %v8614 = vshrl.u32 %v8613, 7
      %v8615 = vsub.s32 %v8612, %v8614
      %v8616 = vrot.slane %v8608, %v8615
      %v8618 = vunpack.c.l.s4 1934713408
      %v8619 = vunpack.c.0.s8 %v8618
      %v8620 = vlaneseq
      %v8621 = vshrl.u32 %v8620, 7
      %v8622 = vsub.s32 %v8619, %v8621
      %v8623 = vrot.slane %v8609, %v8622
      %v8624 = vcombine.low %v8568, %v8600
      %v8625 = vcombine.high %v8568, %v8600
      %v8626 = vcombine.low %v8575, %v8607
      %v8627 = vcombine.high %v8575, %v8607
      %v8628 = vcombine.low %v8584, %v8616
      %v8629 = vcombine.high %v8584, %v8616
      %v8630 = vcombine.low %v8591, %v8623
      %v8631 = vcombine.high %v8591, %v8623
      %v8632 = vcombine.low %v8451, %v8479
      %v8633 = vcombine.high %v8451, %v8479
      %v8635 = vunpack.c.l.s4 1983009808
      %v8636 = vunpack.c.0.s8 %v8635
      %v8637 = vlaneseq
      %v8638 = vshrl.u32 %v8637, 7
      %v8639 = vsub.s32 %v8636, %v8638
      %v8640 = vrot.slane %v8632, %v8639
      %v8642 = vunpack.c.l.s4 1983009808
      %v8643 = vunpack.c.0.s8 %v8642
      %v8644 = vlaneseq
      %v8645 = vshrl.u32 %v8644, 7
      %v8646 = vsub.s32 %v8643, %v8645
      %v8647 = vrot.slane %v8633, %v8646
      %v8648 = vcombine.low %v8476, %v8482
      %v8649 = vcombine.high %v8476, %v8482
      %v8651 = vunpack.c.l.s4 1983009808
      %v8652 = vunpack.c.0.s8 %v8651
      %v8653 = vlaneseq
      %v8654 = vshrl.u32 %v8653, 7
      %v8655 = vsub.s32 %v8652, %v8654
      %v8656 = vrot.slane %v8648, %v8655
      %v8658 = vunpack.c.l.s4 1983009808
      %v8659 = vunpack.c.0.s8 %v8658
      %v8660 = vlaneseq
      %v8661 = vshrl.u32 %v8660, 7
      %v8662 = vsub.s32 %v8659, %v8661
      %v8663 = vrot.slane %v8649, %v8662
      %v8664 = vcombine.low %v8485, %v8491
      %v8665 = vcombine.high %v8485, %v8491
      %v8667 = vunpack.c.l.s4 1983009808
      %v8668 = vunpack.c.0.s8 %v8667
      %v8669 = vlaneseq
      %v8670 = vshrl.u32 %v8669, 7
      %v8671 = vsub.s32 %v8668, %v8670
      %v8672 = vrot.slane %v8664, %v8671
      %v8674 = vunpack.c.l.s4 1983009808
      %v8675 = vunpack.c.0.s8 %v8674
      %v8676 = vlaneseq
      %v8677 = vshrl.u32 %v8676, 7
      %v8678 = vsub.s32 %v8675, %v8677
      %v8679 = vrot.slane %v8665, %v8678
      %v8680 = vcombine.low %v8488, %v8494
      %v8681 = vcombine.high %v8488, %v8494
      %v8683 = vunpack.c.l.s4 1983009808
      %v8684 = vunpack.c.0.s8 %v8683
      %v8685 = vlaneseq
      %v8686 = vshrl.u32 %v8685, 7
      %v8687 = vsub.s32 %v8684, %v8686
      %v8688 = vrot.slane %v8680, %v8687
      %v8690 = vunpack.c.l.s4 1983009808
      %v8691 = vunpack.c.0.s8 %v8690
      %v8692 = vlaneseq
      %v8693 = vshrl.u32 %v8692, 7
      %v8694 = vsub.s32 %v8691, %v8693
      %v8695 = vrot.slane %v8681, %v8694
      %v8696 = vcombine.low %v8640, %v8656
      %v8697 = vcombine.high %v8640, %v8656
      %v8699 = vunpack.c.l.s4 1934713408
      %v8700 = vunpack.c.0.s8 %v8699
      %v8701 = vlaneseq
      %v8702 = vshrl.u32 %v8701, 7
      %v8703 = vsub.s32 %v8700, %v8702
      %v8704 = vrot.slane %v8696, %v8703
      %v8706 = vunpack.c.l.s4 1934713408
      %v8707 = vunpack.c.0.s8 %v8706
      %v8708 = vlaneseq
      %v8709 = vshrl.u32 %v8708, 7
      %v8710 = vsub.s32 %v8707, %v8709
      %v8711 = vrot.slane %v8697, %v8710
      %v8712 = vcombine.low %v8647, %v8663
      %v8713 = vcombine.high %v8647, %v8663
      %v8715 = vunpack.c.l.s4 1934713408
      %v8716 = vunpack.c.0.s8 %v8715
      %v8717 = vlaneseq
      %v8718 = vshrl.u32 %v8717, 7
      %v8719 = vsub.s32 %v8716, %v8718
      %v8720 = vrot.slane %v8712, %v8719
      %v8722 = vunpack.c.l.s4 1934713408
      %v8723 = vunpack.c.0.s8 %v8722
      %v8724 = vlaneseq
      %v8725 = vshrl.u32 %v8724, 7
      %v8726 = vsub.s32 %v8723, %v8725
      %v8727 = vrot.slane %v8713, %v8726
      %v8728 = vcombine.low %v8672, %v8688
      %v8729 = vcombine.high %v8672, %v8688
      %v8731 = vunpack.c.l.s4 1934713408
      %v8732 = vunpack.c.0.s8 %v8731
      %v8733 = vlaneseq
      %v8734 = vshrl.u32 %v8733, 7
      %v8735 = vsub.s32 %v8732, %v8734
      %v8736 = vrot.slane %v8728, %v8735
      %v8738 = vunpack.c.l.s4 1934713408
      %v8739 = vunpack.c.0.s8 %v8738
      %v8740 = vlaneseq
      %v8741 = vshrl.u32 %v8740, 7
      %v8742 = vsub.s32 %v8739, %v8741
      %v8743 = vrot.slane %v8729, %v8742
      %v8744 = vcombine.low %v8679, %v8695
      %v8745 = vcombine.high %v8679, %v8695
      %v8747 = vunpack.c.l.s4 1934713408
      %v8748 = vunpack.c.0.s8 %v8747
      %v8749 = vlaneseq
      %v8750 = vshrl.u32 %v8749, 7
      %v8751 = vsub.s32 %v8748, %v8750
      %v8752 = vrot.slane %v8744, %v8751
      %v8754 = vunpack.c.l.s4 1934713408
      %v8755 = vunpack.c.0.s8 %v8754
      %v8756 = vlaneseq
      %v8757 = vshrl.u32 %v8756, 7
      %v8758 = vsub.s32 %v8755, %v8757
      %v8759 = vrot.slane %v8745, %v8758
      %v8760 = vcombine.low %v8704, %v8736
      %v8761 = vcombine.high %v8704, %v8736
      %v8762 = vcombine.low %v8711, %v8743
      %v8763 = vcombine.high %v8711, %v8743
      %v8764 = vcombine.low %v8720, %v8752
      %v8765 = vcombine.high %v8720, %v8752
      %v8766 = vcombine.low %v8727, %v8759
      %v8767 = vcombine.high %v8727, %v8759
      %8784 = vrot.lane.b32.xlu0 %v8624, 1
      %v8785 = vpop.permute.xlu0 %8784
      %8786 = vrot.lane.b32.xlu0 %v8760, 1
      %v8787 = vpop.permute.xlu0 %8786
      %8788 = vrot.lane.b32.xlu0 %v8625, 1
      %v8789 = vpop.permute.xlu0 %8788
      %8790 = vrot.lane.b32.xlu0 %v8761, 1
      %v8791 = vpop.permute.xlu0 %8790
      %8792 = vrot.lane.b32.xlu0 %v8626, 1
      %v8793 = vpop.permute.xlu0 %8792
      %8794 = vrot.lane.b32.xlu0 %v8762, 1
      %v8795 = vpop.permute.xlu0 %8794
      %8796 = vrot.lane.b32.xlu0 %v8627, 1
      %v8797 = vpop.permute.xlu0 %8796
      %8798 = vrot.lane.b32.xlu0 %v8763, 1
      %v8799 = vpop.permute.xlu0 %8798
      %8800 = vrot.lane.b32.xlu0 %v8628, 1
      %v8801 = vpop.permute.xlu0 %8800
      %8802 = vrot.lane.b32.xlu0 %v8764, 1
      %v8803 = vpop.permute.xlu0 %8802
      %8804 = vrot.lane.b32.xlu0 %v8629, 1
      %v8805 = vpop.permute.xlu0 %8804
      %8806 = vrot.lane.b32.xlu0 %v8765, 1
      %v8807 = vpop.permute.xlu0 %8806
      %8808 = vrot.lane.b32.xlu0 %v8630, 1
      %v8809 = vpop.permute.xlu0 %8808
      %8810 = vrot.lane.b32.xlu0 %v8766, 1
      %v8811 = vpop.permute.xlu0 %8810
      %8812 = vrot.lane.b32.xlu0 %v8631, 1
      %v8813 = vpop.permute.xlu0 %8812
      %8814 = vrot.lane.b32.xlu0 %v8767, 1
      %v8815 = vpop.permute.xlu0 %8814
      %8832 = vst.msk [vmem:[#allocation2 + $0x1] sm:$0xff] %vm833, %v8785
      %8833 = vst.msk [vmem:[#allocation2 + $0x9] sm:$0xff] %vm833, %v8787
      %8834 = vst.msk [vmem:[#allocation2 + $0x19] sm:$0xff] %vm833, %v8789
      %8835 = vst.msk [vmem:[#allocation2 + $0x21] sm:$0xff] %vm833, %v8791
      %8836 = vst.msk [vmem:[#allocation2 + $0x31] sm:$0xff] %vm833, %v8793
      %8837 = vst.msk [vmem:[#allocation2 + $0x39] sm:$0xff] %vm833, %v8795
      %8838 = vst.msk [vmem:[#allocation2 + $0x49] sm:$0xff] %vm833, %v8797
      %8839 = vst.msk [vmem:[#allocation2 + $0x51] sm:$0xff] %vm833, %v8799
      %8840 = vst.msk [vmem:[#allocation2 + $0x61] sm:$0xff] %vm833, %v8801
      %8841 = vst.msk [vmem:[#allocation2 + $0x69] sm:$0xff] %vm833, %v8803
      %8842 = vst.msk [vmem:[#allocation2 + $0x79] sm:$0xff] %vm833, %v8805
      %8843 = vst.msk [vmem:[#allocation2 + $0x81] sm:$0xff] %vm833, %v8807
      %8844 = vst.msk [vmem:[#allocation2 + $0x91] sm:$0xff] %vm833, %v8809
      %8845 = vst.msk [vmem:[#allocation2 + $0x99] sm:$0xff] %vm833, %v8811
      %8846 = vst.msk [vmem:[#allocation2 + $0xa9] sm:$0xff] %vm833, %v8813
      %8847 = vst.msk [vmem:[#allocation2 + $0xb1] sm:$0xff] %vm833, %v8815
      %v8848 = vld [vmem:[#allocation2] sm:$0xff]
      %v8849 = vld [vmem:[#allocation2 + $0x8] sm:$0xff]
      %v8850 = vld [vmem:[#allocation2 + $0x18] sm:$0xff]
      %v8851 = vld [vmem:[#allocation2 + $0x20] sm:$0xff]
      %v8852 = vld [vmem:[#allocation2 + $0x30] sm:$0xff]
      %v8853 = vld [vmem:[#allocation2 + $0x38] sm:$0xff]
      %v8854 = vld [vmem:[#allocation2 + $0x48] sm:$0xff]
      %v8855 = vld [vmem:[#allocation2 + $0x50] sm:$0xff]
      %v8856 = vld [vmem:[#allocation2 + $0x60] sm:$0xff]
      %v8857 = vld [vmem:[#allocation2 + $0x68] sm:$0xff]
      %v8858 = vld [vmem:[#allocation2 + $0x78] sm:$0xff]
      %v8859 = vld [vmem:[#allocation2 + $0x80] sm:$0xff]
      %v8860 = vld [vmem:[#allocation2 + $0x90] sm:$0xff]
      %v8861 = vld [vmem:[#allocation2 + $0x98] sm:$0xff]
      %v8862 = vld [vmem:[#allocation2 + $0xa8] sm:$0xff]
      %v8863 = vld [vmem:[#allocation2 + $0xb0] sm:$0xff]
      %v8864 = vcombine.low %v8848, %v8852
      %v8865 = vcombine.high %v8848, %v8852
      %v8867 = vunpack.c.l.s4 1983009808
      %v8868 = vunpack.c.0.s8 %v8867
      %v8869 = vlaneseq
      %v8870 = vshrl.u32 %v8869, 7
      %v8871 = vsub.s32 %v8868, %v8870
      %v8872 = vrot.slane %v8864, %v8871
      %v8874 = vunpack.c.l.s4 1983009808
      %v8875 = vunpack.c.0.s8 %v8874
      %v8876 = vlaneseq
      %v8877 = vshrl.u32 %v8876, 7
      %v8878 = vsub.s32 %v8875, %v8877
      %v8879 = vrot.slane %v8865, %v8878
      %v8880 = vcombine.low %v8850, %v8854
      %v8881 = vcombine.high %v8850, %v8854
      %v8883 = vunpack.c.l.s4 1983009808
      %v8884 = vunpack.c.0.s8 %v8883
      %v8885 = vlaneseq
      %v8886 = vshrl.u32 %v8885, 7
      %v8887 = vsub.s32 %v8884, %v8886
      %v8888 = vrot.slane %v8880, %v8887
      %v8890 = vunpack.c.l.s4 1983009808
      %v8891 = vunpack.c.0.s8 %v8890
      %v8892 = vlaneseq
      %v8893 = vshrl.u32 %v8892, 7
      %v8894 = vsub.s32 %v8891, %v8893
      %v8895 = vrot.slane %v8881, %v8894
      %v8896 = vcombine.low %v8856, %v8860
      %v8897 = vcombine.high %v8856, %v8860
      %v8899 = vunpack.c.l.s4 1983009808
      %v8900 = vunpack.c.0.s8 %v8899
      %v8901 = vlaneseq
      %v8902 = vshrl.u32 %v8901, 7
      %v8903 = vsub.s32 %v8900, %v8902
      %v8904 = vrot.slane %v8896, %v8903
      %v8906 = vunpack.c.l.s4 1983009808
      %v8907 = vunpack.c.0.s8 %v8906
      %v8908 = vlaneseq
      %v8909 = vshrl.u32 %v8908, 7
      %v8910 = vsub.s32 %v8907, %v8909
      %v8911 = vrot.slane %v8897, %v8910
      %v8912 = vcombine.low %v8858, %v8862
      %v8913 = vcombine.high %v8858, %v8862
      %v8915 = vunpack.c.l.s4 1983009808
      %v8916 = vunpack.c.0.s8 %v8915
      %v8917 = vlaneseq
      %v8918 = vshrl.u32 %v8917, 7
      %v8919 = vsub.s32 %v8916, %v8918
      %v8920 = vrot.slane %v8912, %v8919
      %v8922 = vunpack.c.l.s4 1983009808
      %v8923 = vunpack.c.0.s8 %v8922
      %v8924 = vlaneseq
      %v8925 = vshrl.u32 %v8924, 7
      %v8926 = vsub.s32 %v8923, %v8925
      %v8927 = vrot.slane %v8913, %v8926
      %v8928 = vcombine.low %v8872, %v8888
      %v8929 = vcombine.high %v8872, %v8888
      %v8931 = vunpack.c.l.s4 1934713408
      %v8932 = vunpack.c.0.s8 %v8931
      %v8933 = vlaneseq
      %v8934 = vshrl.u32 %v8933, 7
      %v8935 = vsub.s32 %v8932, %v8934
      %v8936 = vrot.slane %v8928, %v8935
      %v8938 = vunpack.c.l.s4 1934713408
      %v8939 = vunpack.c.0.s8 %v8938
      %v8940 = vlaneseq
      %v8941 = vshrl.u32 %v8940, 7
      %v8942 = vsub.s32 %v8939, %v8941
      %v8943 = vrot.slane %v8929, %v8942
      %v8944 = vcombine.low %v8879, %v8895
      %v8945 = vcombine.high %v8879, %v8895
      %v8947 = vunpack.c.l.s4 1934713408
      %v8948 = vunpack.c.0.s8 %v8947
      %v8949 = vlaneseq
      %v8950 = vshrl.u32 %v8949, 7
      %v8951 = vsub.s32 %v8948, %v8950
      %v8952 = vrot.slane %v8944, %v8951
      %v8954 = vunpack.c.l.s4 1934713408
      %v8955 = vunpack.c.0.s8 %v8954
      %v8956 = vlaneseq
      %v8957 = vshrl.u32 %v8956, 7
      %v8958 = vsub.s32 %v8955, %v8957
      %v8959 = vrot.slane %v8945, %v8958
      %v8960 = vcombine.low %v8904, %v8920
      %v8961 = vcombine.high %v8904, %v8920
      %v8963 = vunpack.c.l.s4 1934713408
      %v8964 = vunpack.c.0.s8 %v8963
      %v8965 = vlaneseq
      %v8966 = vshrl.u32 %v8965, 7
      %v8967 = vsub.s32 %v8964, %v8966
      %v8968 = vrot.slane %v8960, %v8967
      %v8970 = vunpack.c.l.s4 1934713408
      %v8971 = vunpack.c.0.s8 %v8970
      %v8972 = vlaneseq
      %v8973 = vshrl.u32 %v8972, 7
      %v8974 = vsub.s32 %v8971, %v8973
      %v8975 = vrot.slane %v8961, %v8974
      %v8976 = vcombine.low %v8911, %v8927
      %v8977 = vcombine.high %v8911, %v8927
      %v8979 = vunpack.c.l.s4 1934713408
      %v8980 = vunpack.c.0.s8 %v8979
      %v8981 = vlaneseq
      %v8982 = vshrl.u32 %v8981, 7
      %v8983 = vsub.s32 %v8980, %v8982
      %v8984 = vrot.slane %v8976, %v8983
      %v8986 = vunpack.c.l.s4 1934713408
      %v8987 = vunpack.c.0.s8 %v8986
      %v8988 = vlaneseq
      %v8989 = vshrl.u32 %v8988, 7
      %v8990 = vsub.s32 %v8987, %v8989
      %v8991 = vrot.slane %v8977, %v8990
      %v8992 = vcombine.low %v8936, %v8968
      %v8993 = vcombine.high %v8936, %v8968
      %v8994 = vcombine.low %v8943, %v8975
      %v8995 = vcombine.high %v8943, %v8975
      %v8996 = vcombine.low %v8952, %v8984
      %v8997 = vcombine.high %v8952, %v8984
      %v8998 = vcombine.low %v8959, %v8991
      %v8999 = vcombine.high %v8959, %v8991
      %v9000 = vcombine.low %v8849, %v8853
      %v9001 = vcombine.high %v8849, %v8853
      %v9003 = vunpack.c.l.s4 1983009808
      %v9004 = vunpack.c.0.s8 %v9003
      %v9005 = vlaneseq
      %v9006 = vshrl.u32 %v9005, 7
      %v9007 = vsub.s32 %v9004, %v9006
      %v9008 = vrot.slane %v9000, %v9007
      %v9010 = vunpack.c.l.s4 1983009808
      %v9011 = vunpack.c.0.s8 %v9010
      %v9012 = vlaneseq
      %v9013 = vshrl.u32 %v9012, 7
      %v9014 = vsub.s32 %v9011, %v9013
      %v9015 = vrot.slane %v9001, %v9014
      %v9016 = vcombine.low %v8851, %v8855
      %v9017 = vcombine.high %v8851, %v8855
      %v9019 = vunpack.c.l.s4 1983009808
      %v9020 = vunpack.c.0.s8 %v9019
      %v9021 = vlaneseq
      %v9022 = vshrl.u32 %v9021, 7
      %v9023 = vsub.s32 %v9020, %v9022
      %v9024 = vrot.slane %v9016, %v9023
      %v9026 = vunpack.c.l.s4 1983009808
      %v9027 = vunpack.c.0.s8 %v9026
      %v9028 = vlaneseq
      %v9029 = vshrl.u32 %v9028, 7
      %v9030 = vsub.s32 %v9027, %v9029
      %v9031 = vrot.slane %v9017, %v9030
      %v9032 = vcombine.low %v8857, %v8861
      %v9033 = vcombine.high %v8857, %v8861
      %v9035 = vunpack.c.l.s4 1983009808
      %v9036 = vunpack.c.0.s8 %v9035
      %v9037 = vlaneseq
      %v9038 = vshrl.u32 %v9037, 7
      %v9039 = vsub.s32 %v9036, %v9038
      %v9040 = vrot.slane %v9032, %v9039
      %v9042 = vunpack.c.l.s4 1983009808
      %v9043 = vunpack.c.0.s8 %v9042
      %v9044 = vlaneseq
      %v9045 = vshrl.u32 %v9044, 7
      %v9046 = vsub.s32 %v9043, %v9045
      %v9047 = vrot.slane %v9033, %v9046
      %v9048 = vcombine.low %v8859, %v8863
      %v9049 = vcombine.high %v8859, %v8863
      %v9051 = vunpack.c.l.s4 1983009808
      %v9052 = vunpack.c.0.s8 %v9051
      %v9053 = vlaneseq
      %v9054 = vshrl.u32 %v9053, 7
      %v9055 = vsub.s32 %v9052, %v9054
      %v9056 = vrot.slane %v9048, %v9055
      %v9058 = vunpack.c.l.s4 1983009808
      %v9059 = vunpack.c.0.s8 %v9058
      %v9060 = vlaneseq
      %v9061 = vshrl.u32 %v9060, 7
      %v9062 = vsub.s32 %v9059, %v9061
      %v9063 = vrot.slane %v9049, %v9062
      %v9064 = vcombine.low %v9008, %v9024
      %v9065 = vcombine.high %v9008, %v9024
      %v9067 = vunpack.c.l.s4 1934713408
      %v9068 = vunpack.c.0.s8 %v9067
      %v9069 = vlaneseq
      %v9070 = vshrl.u32 %v9069, 7
      %v9071 = vsub.s32 %v9068, %v9070
      %v9072 = vrot.slane %v9064, %v9071
      %v9074 = vunpack.c.l.s4 1934713408
      %v9075 = vunpack.c.0.s8 %v9074
      %v9076 = vlaneseq
      %v9077 = vshrl.u32 %v9076, 7
      %v9078 = vsub.s32 %v9075, %v9077
      %v9079 = vrot.slane %v9065, %v9078
      %v9080 = vcombine.low %v9015, %v9031
      %v9081 = vcombine.high %v9015, %v9031
      %v9083 = vunpack.c.l.s4 1934713408
      %v9084 = vunpack.c.0.s8 %v9083
      %v9085 = vlaneseq
      %v9086 = vshrl.u32 %v9085, 7
      %v9087 = vsub.s32 %v9084, %v9086
      %v9088 = vrot.slane %v9080, %v9087
      %v9090 = vunpack.c.l.s4 1934713408
      %v9091 = vunpack.c.0.s8 %v9090
      %v9092 = vlaneseq
      %v9093 = vshrl.u32 %v9092, 7
      %v9094 = vsub.s32 %v9091, %v9093
      %v9095 = vrot.slane %v9081, %v9094
      %v9096 = vcombine.low %v9040, %v9056
      %v9097 = vcombine.high %v9040, %v9056
      %v9099 = vunpack.c.l.s4 1934713408
      %v9100 = vunpack.c.0.s8 %v9099
      %v9101 = vlaneseq
      %v9102 = vshrl.u32 %v9101, 7
      %v9103 = vsub.s32 %v9100, %v9102
      %v9104 = vrot.slane %v9096, %v9103
      %v9106 = vunpack.c.l.s4 1934713408
      %v9107 = vunpack.c.0.s8 %v9106
      %v9108 = vlaneseq
      %v9109 = vshrl.u32 %v9108, 7
      %v9110 = vsub.s32 %v9107, %v9109
      %v9111 = vrot.slane %v9097, %v9110
      %v9112 = vcombine.low %v9047, %v9063
      %v9113 = vcombine.high %v9047, %v9063
      %v9115 = vunpack.c.l.s4 1934713408
      %v9116 = vunpack.c.0.s8 %v9115
      %v9117 = vlaneseq
      %v9118 = vshrl.u32 %v9117, 7
      %v9119 = vsub.s32 %v9116, %v9118
      %v9120 = vrot.slane %v9112, %v9119
      %v9122 = vunpack.c.l.s4 1934713408
      %v9123 = vunpack.c.0.s8 %v9122
      %v9124 = vlaneseq
      %v9125 = vshrl.u32 %v9124, 7
      %v9126 = vsub.s32 %v9123, %v9125
      %v9127 = vrot.slane %v9113, %v9126
      %v9128 = vcombine.low %v9072, %v9104
      %v9129 = vcombine.high %v9072, %v9104
      %v9130 = vcombine.low %v9079, %v9111
      %v9131 = vcombine.high %v9079, %v9111
      %v9132 = vcombine.low %v9088, %v9120
      %v9133 = vcombine.high %v9088, %v9120
      %v9134 = vcombine.low %v9095, %v9127
      %v9135 = vcombine.high %v9095, %v9127
      %9137 = vrot.lane.b32.xlu0 %v8993, 16
      %v9138 = vpop.permute.xlu0 %9137
      %9141 = vrot.lane.b32.xlu0 %v8994, 32
      %v9142 = vpop.permute.xlu0 %9141
      %9145 = vrot.lane.b32.xlu0 %v8995, 48
      %v9146 = vpop.permute.xlu0 %9145
      %9149 = vrot.lane.b32.xlu0 %v8996, 64
      %v9150 = vpop.permute.xlu0 %9149
      %9153 = vrot.lane.b32.xlu0 %v8997, 80
      %v9154 = vpop.permute.xlu0 %9153
      %9157 = vrot.lane.b32.xlu0 %v8998, 96
      %v9158 = vpop.permute.xlu0 %9157
      %9161 = vrot.lane.b32.xlu0 %v8999, 112
      %v9162 = vpop.permute.xlu0 %9161
      %9165 = vrot.lane.b32.xlu0 %v9129, 16
      %v9166 = vpop.permute.xlu0 %9165
      %9169 = vrot.lane.b32.xlu0 %v9130, 32
      %v9170 = vpop.permute.xlu0 %9169
      %9173 = vrot.lane.b32.xlu0 %v9131, 48
      %v9174 = vpop.permute.xlu0 %9173
      %9177 = vrot.lane.b32.xlu0 %v9132, 64
      %v9178 = vpop.permute.xlu0 %9177
      %9181 = vrot.lane.b32.xlu0 %v9133, 80
      %v9182 = vpop.permute.xlu0 %9181
      %9185 = vrot.lane.b32.xlu0 %v9134, 96
      %v9186 = vpop.permute.xlu0 %9185
      %9189 = vrot.lane.b32.xlu0 %v9135, 112
      %v9190 = vpop.permute.xlu0 %9189
      %v9192 = vsel %vm1182, %v8992, %v9138
      %v9193 = vsel %vm1184, %v9192, %v9142
      %v9194 = vsel %vm1186, %v9193, %v9146
      %v9195 = vsel %vm1188, %v9194, %v9150
      %v9196 = vsel %vm1190, %v9195, %v9154
      %v9197 = vsel %vm1192, %v9196, %v9158
      %v9198 = vsel %vm1194, %v9197, %v9162
      %v9199 = vsel %vm1182, %v9128, %v9166
      %v9200 = vsel %vm1184, %v9199, %v9170
      %v9201 = vsel %vm1186, %v9200, %v9174
      %v9202 = vsel %vm1188, %v9201, %v9178
      %v9203 = vsel %vm1190, %v9202, %v9182
      %v9204 = vsel %vm1192, %v9203, %v9186
      %v9205 = vsel %vm1194, %v9204, %v9190
      %9206 = vst [vmem:[#allocation3] sm:$0xff] %v9198
      %9207 = vst [vmem:[#allocation3 + $0x8] sm:$0xff] %v9205
      %v9208 = vld [vmem:[#allocation2] sm:$0xff]
      %v9209 = vld [vmem:[#allocation2 + $0x8] sm:$0xff]
      %v9210 = vld [vmem:[#allocation2 + $0x18] sm:$0xff]
      %v9211 = vld [vmem:[#allocation2 + $0x20] sm:$0xff]
      %v9212 = vld [vmem:[#allocation2 + $0x30] sm:$0xff]
      %v9213 = vld [vmem:[#allocation2 + $0x38] sm:$0xff]
      %v9214 = vld [vmem:[#allocation2 + $0x48] sm:$0xff]
      %v9215 = vld [vmem:[#allocation2 + $0x50] sm:$0xff]
      %v9216 = vld [vmem:[#allocation2 + $0x60] sm:$0xff]
      %v9217 = vld [vmem:[#allocation2 + $0x68] sm:$0xff]
      %v9218 = vld [vmem:[#allocation2 + $0x78] sm:$0xff]
      %v9219 = vld [vmem:[#allocation2 + $0x80] sm:$0xff]
      %v9220 = vld [vmem:[#allocation2 + $0x90] sm:$0xff]
      %v9221 = vld [vmem:[#allocation2 + $0x98] sm:$0xff]
      %v9222 = vld [vmem:[#allocation2 + $0xa8] sm:$0xff]
      %v9223 = vld [vmem:[#allocation2 + $0xb0] sm:$0xff]
      %9240 = vrot.lane.b32.xlu0 %v9208, 127
      %v9241 = vpop.permute.xlu0 %9240
      %9242 = vrot.lane.b32.xlu0 %v9209, 127
      %v9243 = vpop.permute.xlu0 %9242
      %9244 = vrot.lane.b32.xlu0 %v9210, 127
      %v9245 = vpop.permute.xlu0 %9244
      %9246 = vrot.lane.b32.xlu0 %v9211, 127
      %v9247 = vpop.permute.xlu0 %9246
      %9248 = vrot.lane.b32.xlu0 %v9212, 127
      %v9249 = vpop.permute.xlu0 %9248
      %9250 = vrot.lane.b32.xlu0 %v9213, 127
      %v9251 = vpop.permute.xlu0 %9250
      %9252 = vrot.lane.b32.xlu0 %v9214, 127
      %v9253 = vpop.permute.xlu0 %9252
      %9254 = vrot.lane.b32.xlu0 %v9215, 127
      %v9255 = vpop.permute.xlu0 %9254
      %9256 = vrot.lane.b32.xlu0 %v9216, 127
      %v9257 = vpop.permute.xlu0 %9256
      %9258 = vrot.lane.b32.xlu0 %v9217, 127
      %v9259 = vpop.permute.xlu0 %9258
      %9260 = vrot.lane.b32.xlu0 %v9218, 127
      %v9261 = vpop.permute.xlu0 %9260
      %9262 = vrot.lane.b32.xlu0 %v9219, 127
      %v9263 = vpop.permute.xlu0 %9262
      %9264 = vrot.lane.b32.xlu0 %v9220, 127
      %v9265 = vpop.permute.xlu0 %9264
      %9266 = vrot.lane.b32.xlu0 %v9221, 127
      %v9267 = vpop.permute.xlu0 %9266
      %9268 = vrot.lane.b32.xlu0 %v9222, 127
      %v9269 = vpop.permute.xlu0 %9268
      %9270 = vrot.lane.b32.xlu0 %v9223, 127
      %v9271 = vpop.permute.xlu0 %9270
      %v9288 = vcombine.low %v9241, %v9249
      %v9289 = vcombine.high %v9241, %v9249
      %v9291 = vunpack.c.l.s4 1983009808
      %v9292 = vunpack.c.0.s8 %v9291
      %v9293 = vlaneseq
      %v9294 = vshrl.u32 %v9293, 7
      %v9295 = vsub.s32 %v9292, %v9294
      %v9296 = vrot.slane %v9288, %v9295
      %v9298 = vunpack.c.l.s4 1983009808
      %v9299 = vunpack.c.0.s8 %v9298
      %v9300 = vlaneseq
      %v9301 = vshrl.u32 %v9300, 7
      %v9302 = vsub.s32 %v9299, %v9301
      %v9303 = vrot.slane %v9289, %v9302
      %v9304 = vcombine.low %v9245, %v9253
      %v9305 = vcombine.high %v9245, %v9253
      %v9307 = vunpack.c.l.s4 1983009808
      %v9308 = vunpack.c.0.s8 %v9307
      %v9309 = vlaneseq
      %v9310 = vshrl.u32 %v9309, 7
      %v9311 = vsub.s32 %v9308, %v9310
      %v9312 = vrot.slane %v9304, %v9311
      %v9314 = vunpack.c.l.s4 1983009808
      %v9315 = vunpack.c.0.s8 %v9314
      %v9316 = vlaneseq
      %v9317 = vshrl.u32 %v9316, 7
      %v9318 = vsub.s32 %v9315, %v9317
      %v9319 = vrot.slane %v9305, %v9318
      %v9320 = vcombine.low %v9257, %v9265
      %v9321 = vcombine.high %v9257, %v9265
      %v9323 = vunpack.c.l.s4 1983009808
      %v9324 = vunpack.c.0.s8 %v9323
      %v9325 = vlaneseq
      %v9326 = vshrl.u32 %v9325, 7
      %v9327 = vsub.s32 %v9324, %v9326
      %v9328 = vrot.slane %v9320, %v9327
      %v9330 = vunpack.c.l.s4 1983009808
      %v9331 = vunpack.c.0.s8 %v9330
      %v9332 = vlaneseq
      %v9333 = vshrl.u32 %v9332, 7
      %v9334 = vsub.s32 %v9331, %v9333
      %v9335 = vrot.slane %v9321, %v9334
      %v9336 = vcombine.low %v9261, %v9269
      %v9337 = vcombine.high %v9261, %v9269
      %v9339 = vunpack.c.l.s4 1983009808
      %v9340 = vunpack.c.0.s8 %v9339
      %v9341 = vlaneseq
      %v9342 = vshrl.u32 %v9341, 7
      %v9343 = vsub.s32 %v9340, %v9342
      %v9344 = vrot.slane %v9336, %v9343
      %v9346 = vunpack.c.l.s4 1983009808
      %v9347 = vunpack.c.0.s8 %v9346
      %v9348 = vlaneseq
      %v9349 = vshrl.u32 %v9348, 7
      %v9350 = vsub.s32 %v9347, %v9349
      %v9351 = vrot.slane %v9337, %v9350
      %v9352 = vcombine.low %v9296, %v9312
      %v9353 = vcombine.high %v9296, %v9312
      %v9355 = vunpack.c.l.s4 1934713408
      %v9356 = vunpack.c.0.s8 %v9355
      %v9357 = vlaneseq
      %v9358 = vshrl.u32 %v9357, 7
      %v9359 = vsub.s32 %v9356, %v9358
      %v9360 = vrot.slane %v9352, %v9359
      %v9362 = vunpack.c.l.s4 1934713408
      %v9363 = vunpack.c.0.s8 %v9362
      %v9364 = vlaneseq
      %v9365 = vshrl.u32 %v9364, 7
      %v9366 = vsub.s32 %v9363, %v9365
      %v9367 = vrot.slane %v9353, %v9366
      %v9368 = vcombine.low %v9303, %v9319
      %v9369 = vcombine.high %v9303, %v9319
      %v9371 = vunpack.c.l.s4 1934713408
      %v9372 = vunpack.c.0.s8 %v9371
      %v9373 = vlaneseq
      %v9374 = vshrl.u32 %v9373, 7
      %v9375 = vsub.s32 %v9372, %v9374
      %v9376 = vrot.slane %v9368, %v9375
      %v9378 = vunpack.c.l.s4 1934713408
      %v9379 = vunpack.c.0.s8 %v9378
      %v9380 = vlaneseq
      %v9381 = vshrl.u32 %v9380, 7
      %v9382 = vsub.s32 %v9379, %v9381
      %v9383 = vrot.slane %v9369, %v9382
      %v9384 = vcombine.low %v9328, %v9344
      %v9385 = vcombine.high %v9328, %v9344
      %v9387 = vunpack.c.l.s4 1934713408
      %v9388 = vunpack.c.0.s8 %v9387
      %v9389 = vlaneseq
      %v9390 = vshrl.u32 %v9389, 7
      %v9391 = vsub.s32 %v9388, %v9390
      %v9392 = vrot.slane %v9384, %v9391
      %v9394 = vunpack.c.l.s4 1934713408
      %v9395 = vunpack.c.0.s8 %v9394
      %v9396 = vlaneseq
      %v9397 = vshrl.u32 %v9396, 7
      %v9398 = vsub.s32 %v9395, %v9397
      %v9399 = vrot.slane %v9385, %v9398
      %v9400 = vcombine.low %v9335, %v9351
      %v9401 = vcombine.high %v9335, %v9351
      %v9403 = vunpack.c.l.s4 1934713408
      %v9404 = vunpack.c.0.s8 %v9403
      %v9405 = vlaneseq
      %v9406 = vshrl.u32 %v9405, 7
      %v9407 = vsub.s32 %v9404, %v9406
      %v9408 = vrot.slane %v9400, %v9407
      %v9410 = vunpack.c.l.s4 1934713408
      %v9411 = vunpack.c.0.s8 %v9410
      %v9412 = vlaneseq
      %v9413 = vshrl.u32 %v9412, 7
      %v9414 = vsub.s32 %v9411, %v9413
      %v9415 = vrot.slane %v9401, %v9414
      %v9416 = vcombine.low %v9360, %v9392
      %v9417 = vcombine.high %v9360, %v9392
      %v9418 = vcombine.low %v9367, %v9399
      %v9419 = vcombine.high %v9367, %v9399
      %v9420 = vcombine.low %v9376, %v9408
      %v9421 = vcombine.high %v9376, %v9408
      %v9422 = vcombine.low %v9383, %v9415
      %v9423 = vcombine.high %v9383, %v9415
      %v9424 = vcombine.low %v9243, %v9251
      %v9425 = vcombine.high %v9243, %v9251
      %v9427 = vunpack.c.l.s4 1983009808
      %v9428 = vunpack.c.0.s8 %v9427
      %v9429 = vlaneseq
      %v9430 = vshrl.u32 %v9429, 7
      %v9431 = vsub.s32 %v9428, %v9430
      %v9432 = vrot.slane %v9424, %v9431
      %v9434 = vunpack.c.l.s4 1983009808
      %v9435 = vunpack.c.0.s8 %v9434
      %v9436 = vlaneseq
      %v9437 = vshrl.u32 %v9436, 7
      %v9438 = vsub.s32 %v9435, %v9437
      %v9439 = vrot.slane %v9425, %v9438
      %v9440 = vcombine.low %v9247, %v9255
      %v9441 = vcombine.high %v9247, %v9255
      %v9443 = vunpack.c.l.s4 1983009808
      %v9444 = vunpack.c.0.s8 %v9443
      %v9445 = vlaneseq
      %v9446 = vshrl.u32 %v9445, 7
      %v9447 = vsub.s32 %v9444, %v9446
      %v9448 = vrot.slane %v9440, %v9447
      %v9450 = vunpack.c.l.s4 1983009808
      %v9451 = vunpack.c.0.s8 %v9450
      %v9452 = vlaneseq
      %v9453 = vshrl.u32 %v9452, 7
      %v9454 = vsub.s32 %v9451, %v9453
      %v9455 = vrot.slane %v9441, %v9454
      %v9456 = vcombine.low %v9259, %v9267
      %v9457 = vcombine.high %v9259, %v9267
      %v9459 = vunpack.c.l.s4 1983009808
      %v9460 = vunpack.c.0.s8 %v9459
      %v9461 = vlaneseq
      %v9462 = vshrl.u32 %v9461, 7
      %v9463 = vsub.s32 %v9460, %v9462
      %v9464 = vrot.slane %v9456, %v9463
      %v9466 = vunpack.c.l.s4 1983009808
      %v9467 = vunpack.c.0.s8 %v9466
      %v9468 = vlaneseq
      %v9469 = vshrl.u32 %v9468, 7
      %v9470 = vsub.s32 %v9467, %v9469
      %v9471 = vrot.slane %v9457, %v9470
      %v9472 = vcombine.low %v9263, %v9271
      %v9473 = vcombine.high %v9263, %v9271
      %v9475 = vunpack.c.l.s4 1983009808
      %v9476 = vunpack.c.0.s8 %v9475
      %v9477 = vlaneseq
      %v9478 = vshrl.u32 %v9477, 7
      %v9479 = vsub.s32 %v9476, %v9478
      %v9480 = vrot.slane %v9472, %v9479
      %v9482 = vunpack.c.l.s4 1983009808
      %v9483 = vunpack.c.0.s8 %v9482
      %v9484 = vlaneseq
      %v9485 = vshrl.u32 %v9484, 7
      %v9486 = vsub.s32 %v9483, %v9485
      %v9487 = vrot.slane %v9473, %v9486
      %v9488 = vcombine.low %v9432, %v9448
      %v9489 = vcombine.high %v9432, %v9448
      %v9491 = vunpack.c.l.s4 1934713408
      %v9492 = vunpack.c.0.s8 %v9491
      %v9493 = vlaneseq
      %v9494 = vshrl.u32 %v9493, 7
      %v9495 = vsub.s32 %v9492, %v9494
      %v9496 = vrot.slane %v9488, %v9495
      %v9498 = vunpack.c.l.s4 1934713408
      %v9499 = vunpack.c.0.s8 %v9498
      %v9500 = vlaneseq
      %v9501 = vshrl.u32 %v9500, 7
      %v9502 = vsub.s32 %v9499, %v9501
      %v9503 = vrot.slane %v9489, %v9502
      %v9504 = vcombine.low %v9439, %v9455
      %v9505 = vcombine.high %v9439, %v9455
      %v9507 = vunpack.c.l.s4 1934713408
      %v9508 = vunpack.c.0.s8 %v9507
      %v9509 = vlaneseq
      %v9510 = vshrl.u32 %v9509, 7
      %v9511 = vsub.s32 %v9508, %v9510
      %v9512 = vrot.slane %v9504, %v9511
      %v9514 = vunpack.c.l.s4 1934713408
      %v9515 = vunpack.c.0.s8 %v9514
      %v9516 = vlaneseq
      %v9517 = vshrl.u32 %v9516, 7
      %v9518 = vsub.s32 %v9515, %v9517
      %v9519 = vrot.slane %v9505, %v9518
      %v9520 = vcombine.low %v9464, %v9480
      %v9521 = vcombine.high %v9464, %v9480
      %v9523 = vunpack.c.l.s4 1934713408
      %v9524 = vunpack.c.0.s8 %v9523
      %v9525 = vlaneseq
      %v9526 = vshrl.u32 %v9525, 7
      %v9527 = vsub.s32 %v9524, %v9526
      %v9528 = vrot.slane %v9520, %v9527
      %v9530 = vunpack.c.l.s4 1934713408
      %v9531 = vunpack.c.0.s8 %v9530
      %v9532 = vlaneseq
      %v9533 = vshrl.u32 %v9532, 7
      %v9534 = vsub.s32 %v9531, %v9533
      %v9535 = vrot.slane %v9521, %v9534
      %v9536 = vcombine.low %v9471, %v9487
      %v9537 = vcombine.high %v9471, %v9487
      %v9539 = vunpack.c.l.s4 1934713408
      %v9540 = vunpack.c.0.s8 %v9539
      %v9541 = vlaneseq
      %v9542 = vshrl.u32 %v9541, 7
      %v9543 = vsub.s32 %v9540, %v9542
      %v9544 = vrot.slane %v9536, %v9543
      %v9546 = vunpack.c.l.s4 1934713408
      %v9547 = vunpack.c.0.s8 %v9546
      %v9548 = vlaneseq
      %v9549 = vshrl.u32 %v9548, 7
      %v9550 = vsub.s32 %v9547, %v9549
      %v9551 = vrot.slane %v9537, %v9550
      %v9552 = vcombine.low %v9496, %v9528
      %v9553 = vcombine.high %v9496, %v9528
      %v9554 = vcombine.low %v9503, %v9535
      %v9555 = vcombine.high %v9503, %v9535
      %v9556 = vcombine.low %v9512, %v9544
      %v9557 = vcombine.high %v9512, %v9544
      %v9558 = vcombine.low %v9519, %v9551
      %v9559 = vcombine.high %v9519, %v9551
      %9561 = vrot.lane.b32.xlu0 %v9417, 16
      %v9562 = vpop.permute.xlu0 %9561
      %9565 = vrot.lane.b32.xlu0 %v9418, 32
      %v9566 = vpop.permute.xlu0 %9565
      %9569 = vrot.lane.b32.xlu0 %v9419, 48
      %v9570 = vpop.permute.xlu0 %9569
      %9573 = vrot.lane.b32.xlu0 %v9420, 64
      %v9574 = vpop.permute.xlu0 %9573
      %9577 = vrot.lane.b32.xlu0 %v9421, 80
      %v9578 = vpop.permute.xlu0 %9577
      %9581 = vrot.lane.b32.xlu0 %v9422, 96
      %v9582 = vpop.permute.xlu0 %9581
      %9585 = vrot.lane.b32.xlu0 %v9423, 112
      %v9586 = vpop.permute.xlu0 %9585
      %9589 = vrot.lane.b32.xlu0 %v9553, 16
      %v9590 = vpop.permute.xlu0 %9589
      %9593 = vrot.lane.b32.xlu0 %v9554, 32
      %v9594 = vpop.permute.xlu0 %9593
      %9597 = vrot.lane.b32.xlu0 %v9555, 48
      %v9598 = vpop.permute.xlu0 %9597
      %9601 = vrot.lane.b32.xlu0 %v9556, 64
      %v9602 = vpop.permute.xlu0 %9601
      %9605 = vrot.lane.b32.xlu0 %v9557, 80
      %v9606 = vpop.permute.xlu0 %9605
      %9609 = vrot.lane.b32.xlu0 %v9558, 96
      %v9610 = vpop.permute.xlu0 %9609
      %9613 = vrot.lane.b32.xlu0 %v9559, 112
      %v9614 = vpop.permute.xlu0 %9613
      %v9616 = vsel %vm1182, %v9416, %v9562
      %v9617 = vsel %vm1184, %v9616, %v9566
      %v9618 = vsel %vm1186, %v9617, %v9570
      %v9619 = vsel %vm1188, %v9618, %v9574
      %v9620 = vsel %vm1190, %v9619, %v9578
      %v9621 = vsel %vm1192, %v9620, %v9582
      %v9622 = vsel %vm1194, %v9621, %v9586
      %v9623 = vsel %vm1182, %v9552, %v9590
      %v9624 = vsel %vm1184, %v9623, %v9594
      %v9625 = vsel %vm1186, %v9624, %v9598
      %v9626 = vsel %vm1188, %v9625, %v9602
      %v9627 = vsel %vm1190, %v9626, %v9606
      %v9628 = vsel %vm1192, %v9627, %v9610
      %v9629 = vsel %vm1194, %v9628, %v9614
      %9630 = vst [vmem:[#allocation3 + $0x10] sm:$0xff] %v9622
      %9631 = vst [vmem:[#allocation3 + $0x18] sm:$0xff] %v9629
      %v9632 = vld [vmem:[#allocation2] sm:$0xff]
      %v9633 = vld [vmem:[#allocation2 + $0x8] sm:$0xff]
      %v9634 = vld [vmem:[#allocation2 + $0x18] sm:$0xff]
      %v9635 = vld [vmem:[#allocation2 + $0x20] sm:$0xff]
      %v9636 = vld [vmem:[#allocation2 + $0x30] sm:$0xff]
      %v9637 = vld [vmem:[#allocation2 + $0x38] sm:$0xff]
      %v9638 = vld [vmem:[#allocation2 + $0x48] sm:$0xff]
      %v9639 = vld [vmem:[#allocation2 + $0x50] sm:$0xff]
      %v9640 = vld [vmem:[#allocation2 + $0x60] sm:$0xff]
      %v9641 = vld [vmem:[#allocation2 + $0x68] sm:$0xff]
      %v9642 = vld [vmem:[#allocation2 + $0x78] sm:$0xff]
      %v9643 = vld [vmem:[#allocation2 + $0x80] sm:$0xff]
      %v9644 = vld [vmem:[#allocation2 + $0x90] sm:$0xff]
      %v9645 = vld [vmem:[#allocation2 + $0x98] sm:$0xff]
      %v9646 = vld [vmem:[#allocation2 + $0xa8] sm:$0xff]
      %v9647 = vld [vmem:[#allocation2 + $0xb0] sm:$0xff]
      %9664 = vrot.lane.b32.xlu0 %v9632, 126
      %v9665 = vpop.permute.xlu0 %9664
      %9666 = vrot.lane.b32.xlu0 %v9633, 126
      %v9667 = vpop.permute.xlu0 %9666
      %9668 = vrot.lane.b32.xlu0 %v9634, 126
      %v9669 = vpop.permute.xlu0 %9668
      %9670 = vrot.lane.b32.xlu0 %v9635, 126
      %v9671 = vpop.permute.xlu0 %9670
      %9672 = vrot.lane.b32.xlu0 %v9636, 126
      %v9673 = vpop.permute.xlu0 %9672
      %9674 = vrot.lane.b32.xlu0 %v9637, 126
      %v9675 = vpop.permute.xlu0 %9674
      %9676 = vrot.lane.b32.xlu0 %v9638, 126
      %v9677 = vpop.permute.xlu0 %9676
      %9678 = vrot.lane.b32.xlu0 %v9639, 126
      %v9679 = vpop.permute.xlu0 %9678
      %9680 = vrot.lane.b32.xlu0 %v9640, 126
      %v9681 = vpop.permute.xlu0 %9680
      %9682 = vrot.lane.b32.xlu0 %v9641, 126
      %v9683 = vpop.permute.xlu0 %9682
      %9684 = vrot.lane.b32.xlu0 %v9642, 126
      %v9685 = vpop.permute.xlu0 %9684
      %9686 = vrot.lane.b32.xlu0 %v9643, 126
      %v9687 = vpop.permute.xlu0 %9686
      %9688 = vrot.lane.b32.xlu0 %v9644, 126
      %v9689 = vpop.permute.xlu0 %9688
      %9690 = vrot.lane.b32.xlu0 %v9645, 126
      %v9691 = vpop.permute.xlu0 %9690
      %9692 = vrot.lane.b32.xlu0 %v9646, 126
      %v9693 = vpop.permute.xlu0 %9692
      %9694 = vrot.lane.b32.xlu0 %v9647, 126
      %v9695 = vpop.permute.xlu0 %9694
      %v9712 = vcombine.low %v9665, %v9673
      %v9713 = vcombine.high %v9665, %v9673
      %v9715 = vunpack.c.l.s4 1983009808
      %v9716 = vunpack.c.0.s8 %v9715
      %v9717 = vlaneseq
      %v9718 = vshrl.u32 %v9717, 7
      %v9719 = vsub.s32 %v9716, %v9718
      %v9720 = vrot.slane %v9712, %v9719
      %v9722 = vunpack.c.l.s4 1983009808
      %v9723 = vunpack.c.0.s8 %v9722
      %v9724 = vlaneseq
      %v9725 = vshrl.u32 %v9724, 7
      %v9726 = vsub.s32 %v9723, %v9725
      %v9727 = vrot.slane %v9713, %v9726
      %v9728 = vcombine.low %v9669, %v9677
      %v9729 = vcombine.high %v9669, %v9677
      %v9731 = vunpack.c.l.s4 1983009808
      %v9732 = vunpack.c.0.s8 %v9731
      %v9733 = vlaneseq
      %v9734 = vshrl.u32 %v9733, 7
      %v9735 = vsub.s32 %v9732, %v9734
      %v9736 = vrot.slane %v9728, %v9735
      %v9738 = vunpack.c.l.s4 1983009808
      %v9739 = vunpack.c.0.s8 %v9738
      %v9740 = vlaneseq
      %v9741 = vshrl.u32 %v9740, 7
      %v9742 = vsub.s32 %v9739, %v9741
      %v9743 = vrot.slane %v9729, %v9742
      %v9744 = vcombine.low %v9681, %v9689
      %v9745 = vcombine.high %v9681, %v9689
      %v9747 = vunpack.c.l.s4 1983009808
      %v9748 = vunpack.c.0.s8 %v9747
      %v9749 = vlaneseq
      %v9750 = vshrl.u32 %v9749, 7
      %v9751 = vsub.s32 %v9748, %v9750
      %v9752 = vrot.slane %v9744, %v9751
      %v9754 = vunpack.c.l.s4 1983009808
      %v9755 = vunpack.c.0.s8 %v9754
      %v9756 = vlaneseq
      %v9757 = vshrl.u32 %v9756, 7
      %v9758 = vsub.s32 %v9755, %v9757
      %v9759 = vrot.slane %v9745, %v9758
      %v9760 = vcombine.low %v9685, %v9693
      %v9761 = vcombine.high %v9685, %v9693
      %v9763 = vunpack.c.l.s4 1983009808
      %v9764 = vunpack.c.0.s8 %v9763
      %v9765 = vlaneseq
      %v9766 = vshrl.u32 %v9765, 7
      %v9767 = vsub.s32 %v9764, %v9766
      %v9768 = vrot.slane %v9760, %v9767
      %v9770 = vunpack.c.l.s4 1983009808
      %v9771 = vunpack.c.0.s8 %v9770
      %v9772 = vlaneseq
      %v9773 = vshrl.u32 %v9772, 7
      %v9774 = vsub.s32 %v9771, %v9773
      %v9775 = vrot.slane %v9761, %v9774
      %v9776 = vcombine.low %v9720, %v9736
      %v9777 = vcombine.high %v9720, %v9736
      %v9779 = vunpack.c.l.s4 1934713408
      %v9780 = vunpack.c.0.s8 %v9779
      %v9781 = vlaneseq
      %v9782 = vshrl.u32 %v9781, 7
      %v9783 = vsub.s32 %v9780, %v9782
      %v9784 = vrot.slane %v9776, %v9783
      %v9786 = vunpack.c.l.s4 1934713408
      %v9787 = vunpack.c.0.s8 %v9786
      %v9788 = vlaneseq
      %v9789 = vshrl.u32 %v9788, 7
      %v9790 = vsub.s32 %v9787, %v9789
      %v9791 = vrot.slane %v9777, %v9790
      %v9792 = vcombine.low %v9727, %v9743
      %v9793 = vcombine.high %v9727, %v9743
      %v9795 = vunpack.c.l.s4 1934713408
      %v9796 = vunpack.c.0.s8 %v9795
      %v9797 = vlaneseq
      %v9798 = vshrl.u32 %v9797, 7
      %v9799 = vsub.s32 %v9796, %v9798
      %v9800 = vrot.slane %v9792, %v9799
      %v9802 = vunpack.c.l.s4 1934713408
      %v9803 = vunpack.c.0.s8 %v9802
      %v9804 = vlaneseq
      %v9805 = vshrl.u32 %v9804, 7
      %v9806 = vsub.s32 %v9803, %v9805
      %v9807 = vrot.slane %v9793, %v9806
      %v9808 = vcombine.low %v9752, %v9768
      %v9809 = vcombine.high %v9752, %v9768
      %v9811 = vunpack.c.l.s4 1934713408
      %v9812 = vunpack.c.0.s8 %v9811
      %v9813 = vlaneseq
      %v9814 = vshrl.u32 %v9813, 7
      %v9815 = vsub.s32 %v9812, %v9814
      %v9816 = vrot.slane %v9808, %v9815
      %v9818 = vunpack.c.l.s4 1934713408
      %v9819 = vunpack.c.0.s8 %v9818
      %v9820 = vlaneseq
      %v9821 = vshrl.u32 %v9820, 7
      %v9822 = vsub.s32 %v9819, %v9821
      %v9823 = vrot.slane %v9809, %v9822
      %v9824 = vcombine.low %v9759, %v9775
      %v9825 = vcombine.high %v9759, %v9775
      %v9827 = vunpack.c.l.s4 1934713408
      %v9828 = vunpack.c.0.s8 %v9827
      %v9829 = vlaneseq
      %v9830 = vshrl.u32 %v9829, 7
      %v9831 = vsub.s32 %v9828, %v9830
      %v9832 = vrot.slane %v9824, %v9831
      %v9834 = vunpack.c.l.s4 1934713408
      %v9835 = vunpack.c.0.s8 %v9834
      %v9836 = vlaneseq
      %v9837 = vshrl.u32 %v9836, 7
      %v9838 = vsub.s32 %v9835, %v9837
      %v9839 = vrot.slane %v9825, %v9838
      %v9840 = vcombine.low %v9784, %v9816
      %v9841 = vcombine.high %v9784, %v9816
      %v9842 = vcombine.low %v9791, %v9823
      %v9843 = vcombine.high %v9791, %v9823
      %v9844 = vcombine.low %v9800, %v9832
      %v9845 = vcombine.high %v9800, %v9832
      %v9846 = vcombine.low %v9807, %v9839
      %v9847 = vcombine.high %v9807, %v9839
      %v9848 = vcombine.low %v9667, %v9675
      %v9849 = vcombine.high %v9667, %v9675
      %v9851 = vunpack.c.l.s4 1983009808
      %v9852 = vunpack.c.0.s8 %v9851
      %v9853 = vlaneseq
      %v9854 = vshrl.u32 %v9853, 7
      %v9855 = vsub.s32 %v9852, %v9854
      %v9856 = vrot.slane %v9848, %v9855
      %v9858 = vunpack.c.l.s4 1983009808
      %v9859 = vunpack.c.0.s8 %v9858
      %v9860 = vlaneseq
      %v9861 = vshrl.u32 %v9860, 7
      %v9862 = vsub.s32 %v9859, %v9861
      %v9863 = vrot.slane %v9849, %v9862
      %v9864 = vcombine.low %v9671, %v9679
      %v9865 = vcombine.high %v9671, %v9679
      %v9867 = vunpack.c.l.s4 1983009808
      %v9868 = vunpack.c.0.s8 %v9867
      %v9869 = vlaneseq
      %v9870 = vshrl.u32 %v9869, 7
      %v9871 = vsub.s32 %v9868, %v9870
      %v9872 = vrot.slane %v9864, %v9871
      %v9874 = vunpack.c.l.s4 1983009808
      %v9875 = vunpack.c.0.s8 %v9874
      %v9876 = vlaneseq
      %v9877 = vshrl.u32 %v9876, 7
      %v9878 = vsub.s32 %v9875, %v9877
      %v9879 = vrot.slane %v9865, %v9878
      %v9880 = vcombine.low %v9683, %v9691
      %v9881 = vcombine.high %v9683, %v9691
      %v9883 = vunpack.c.l.s4 1983009808
      %v9884 = vunpack.c.0.s8 %v9883
      %v9885 = vlaneseq
      %v9886 = vshrl.u32 %v9885, 7
      %v9887 = vsub.s32 %v9884, %v9886
      %v9888 = vrot.slane %v9880, %v9887
      %v9890 = vunpack.c.l.s4 1983009808
      %v9891 = vunpack.c.0.s8 %v9890
      %v9892 = vlaneseq
      %v9893 = vshrl.u32 %v9892, 7
      %v9894 = vsub.s32 %v9891, %v9893
      %v9895 = vrot.slane %v9881, %v9894
      %v9896 = vcombine.low %v9687, %v9695
      %v9897 = vcombine.high %v9687, %v9695
      %v9899 = vunpack.c.l.s4 1983009808
      %v9900 = vunpack.c.0.s8 %v9899
      %v9901 = vlaneseq
      %v9902 = vshrl.u32 %v9901, 7
      %v9903 = vsub.s32 %v9900, %v9902
      %v9904 = vrot.slane %v9896, %v9903
      %v9906 = vunpack.c.l.s4 1983009808
      %v9907 = vunpack.c.0.s8 %v9906
      %v9908 = vlaneseq
      %v9909 = vshrl.u32 %v9908, 7
      %v9910 = vsub.s32 %v9907, %v9909
      %v9911 = vrot.slane %v9897, %v9910
      %v9912 = vcombine.low %v9856, %v9872
      %v9913 = vcombine.high %v9856, %v9872
      %v9915 = vunpack.c.l.s4 1934713408
      %v9916 = vunpack.c.0.s8 %v9915
      %v9917 = vlaneseq
      %v9918 = vshrl.u32 %v9917, 7
      %v9919 = vsub.s32 %v9916, %v9918
      %v9920 = vrot.slane %v9912, %v9919
      %v9922 = vunpack.c.l.s4 1934713408
      %v9923 = vunpack.c.0.s8 %v9922
      %v9924 = vlaneseq
      %v9925 = vshrl.u32 %v9924, 7
      %v9926 = vsub.s32 %v9923, %v9925
      %v9927 = vrot.slane %v9913, %v9926
      %v9928 = vcombine.low %v9863, %v9879
      %v9929 = vcombine.high %v9863, %v9879
      %v9931 = vunpack.c.l.s4 1934713408
      %v9932 = vunpack.c.0.s8 %v9931
      %v9933 = vlaneseq
      %v9934 = vshrl.u32 %v9933, 7
      %v9935 = vsub.s32 %v9932, %v9934
      %v9936 = vrot.slane %v9928, %v9935
      %v9938 = vunpack.c.l.s4 1934713408
      %v9939 = vunpack.c.0.s8 %v9938
      %v9940 = vlaneseq
      %v9941 = vshrl.u32 %v9940, 7
      %v9942 = vsub.s32 %v9939, %v9941
      %v9943 = vrot.slane %v9929, %v9942
      %v9944 = vcombine.low %v9888, %v9904
      %v9945 = vcombine.high %v9888, %v9904
      %v9947 = vunpack.c.l.s4 1934713408
      %v9948 = vunpack.c.0.s8 %v9947
      %v9949 = vlaneseq
      %v9950 = vshrl.u32 %v9949, 7
      %v9951 = vsub.s32 %v9948, %v9950
      %v9952 = vrot.slane %v9944, %v9951
      %v9954 = vunpack.c.l.s4 1934713408
      %v9955 = vunpack.c.0.s8 %v9954
      %v9956 = vlaneseq
      %v9957 = vshrl.u32 %v9956, 7
      %v9958 = vsub.s32 %v9955, %v9957
      %v9959 = vrot.slane %v9945, %v9958
      %v9960 = vcombine.low %v9895, %v9911
      %v9961 = vcombine.high %v9895, %v9911
      %v9963 = vunpack.c.l.s4 1934713408
      %v9964 = vunpack.c.0.s8 %v9963
      %v9965 = vlaneseq
      %v9966 = vshrl.u32 %v9965, 7
      %v9967 = vsub.s32 %v9964, %v9966
      %v9968 = vrot.slane %v9960, %v9967
      %v9970 = vunpack.c.l.s4 1934713408
      %v9971 = vunpack.c.0.s8 %v9970
      %v9972 = vlaneseq
      %v9973 = vshrl.u32 %v9972, 7
      %v9974 = vsub.s32 %v9971, %v9973
      %v9975 = vrot.slane %v9961, %v9974
      %v9976 = vcombine.low %v9920, %v9952
      %v9977 = vcombine.high %v9920, %v9952
      %v9978 = vcombine.low %v9927, %v9959
      %v9979 = vcombine.high %v9927, %v9959
      %v9980 = vcombine.low %v9936, %v9968
      %v9981 = vcombine.high %v9936, %v9968
      %v9982 = vcombine.low %v9943, %v9975
      %v9983 = vcombine.high %v9943, %v9975
      %9985 = vrot.lane.b32.xlu0 %v9841, 16
      %v9986 = vpop.permute.xlu0 %9985
      %9989 = vrot.lane.b32.xlu0 %v9842, 32
      %v9990 = vpop.permute.xlu0 %9989
      %9993 = vrot.lane.b32.xlu0 %v9843, 48
      %v9994 = vpop.permute.xlu0 %9993
      %9997 = vrot.lane.b32.xlu0 %v9844, 64
      %v9998 = vpop.permute.xlu0 %9997
      %10001 = vrot.lane.b32.xlu0 %v9845, 80
      %v10002 = vpop.permute.xlu0 %10001
      %10005 = vrot.lane.b32.xlu0 %v9846, 96
      %v10006 = vpop.permute.xlu0 %10005
      %10009 = vrot.lane.b32.xlu0 %v9847, 112
      %v10010 = vpop.permute.xlu0 %10009
      %10013 = vrot.lane.b32.xlu0 %v9977, 16
      %v10014 = vpop.permute.xlu0 %10013
      %10017 = vrot.lane.b32.xlu0 %v9978, 32
      %v10018 = vpop.permute.xlu0 %10017
      %10021 = vrot.lane.b32.xlu0 %v9979, 48
      %v10022 = vpop.permute.xlu0 %10021
      %10025 = vrot.lane.b32.xlu0 %v9980, 64
      %v10026 = vpop.permute.xlu0 %10025
      %10029 = vrot.lane.b32.xlu0 %v9981, 80
      %v10030 = vpop.permute.xlu0 %10029
      %10033 = vrot.lane.b32.xlu0 %v9982, 96
      %v10034 = vpop.permute.xlu0 %10033
      %10037 = vrot.lane.b32.xlu0 %v9983, 112
      %v10038 = vpop.permute.xlu0 %10037
      %v10040 = vsel %vm1182, %v9840, %v9986
      %v10041 = vsel %vm1184, %v10040, %v9990
      %v10042 = vsel %vm1186, %v10041, %v9994
      %v10043 = vsel %vm1188, %v10042, %v9998
      %v10044 = vsel %vm1190, %v10043, %v10002
      %v10045 = vsel %vm1192, %v10044, %v10006
      %v10046 = vsel %vm1194, %v10045, %v10010
      %v10047 = vsel %vm1182, %v9976, %v10014
      %v10048 = vsel %vm1184, %v10047, %v10018
      %v10049 = vsel %vm1186, %v10048, %v10022
      %v10050 = vsel %vm1188, %v10049, %v10026
      %v10051 = vsel %vm1190, %v10050, %v10030
      %v10052 = vsel %vm1192, %v10051, %v10034
      %v10053 = vsel %vm1194, %v10052, %v10038
      %10054 = vst [vmem:[#allocation3 + $0x20] sm:$0xff] %v10046
      %10055 = vst [vmem:[#allocation3 + $0x28] sm:$0xff] %v10053
      %v10056 = vld [vmem:[#allocation2 + $0x1] sm:$0xff]
      %v10057 = vld [vmem:[#allocation2 + $0x9] sm:$0xff]
      %v10058 = vld [vmem:[#allocation2 + $0x19] sm:$0xff]
      %v10059 = vld [vmem:[#allocation2 + $0x21] sm:$0xff]
      %v10060 = vld [vmem:[#allocation2 + $0x31] sm:$0xff]
      %v10061 = vld [vmem:[#allocation2 + $0x39] sm:$0xff]
      %v10062 = vld [vmem:[#allocation2 + $0x49] sm:$0xff]
      %v10063 = vld [vmem:[#allocation2 + $0x51] sm:$0xff]
      %v10064 = vld [vmem:[#allocation2 + $0x61] sm:$0xff]
      %v10065 = vld [vmem:[#allocation2 + $0x69] sm:$0xff]
      %v10066 = vld [vmem:[#allocation2 + $0x79] sm:$0xff]
      %v10067 = vld [vmem:[#allocation2 + $0x81] sm:$0xff]
      %v10068 = vld [vmem:[#allocation2 + $0x91] sm:$0xff]
      %v10069 = vld [vmem:[#allocation2 + $0x99] sm:$0xff]
      %v10070 = vld [vmem:[#allocation2 + $0xa9] sm:$0xff]
      %v10071 = vld [vmem:[#allocation2 + $0xb1] sm:$0xff]
      %v10072 = vcombine.low %v10056, %v10060
      %v10073 = vcombine.high %v10056, %v10060
      %v10075 = vunpack.c.l.s4 1983009808
      %v10076 = vunpack.c.0.s8 %v10075
      %v10077 = vlaneseq
      %v10078 = vshrl.u32 %v10077, 7
      %v10079 = vsub.s32 %v10076, %v10078
      %v10080 = vrot.slane %v10072, %v10079
      %v10082 = vunpack.c.l.s4 1983009808
      %v10083 = vunpack.c.0.s8 %v10082
      %v10084 = vlaneseq
      %v10085 = vshrl.u32 %v10084, 7
      %v10086 = vsub.s32 %v10083, %v10085
      %v10087 = vrot.slane %v10073, %v10086
      %v10088 = vcombine.low %v10058, %v10062
      %v10089 = vcombine.high %v10058, %v10062
      %v10091 = vunpack.c.l.s4 1983009808
      %v10092 = vunpack.c.0.s8 %v10091
      %v10093 = vlaneseq
      %v10094 = vshrl.u32 %v10093, 7
      %v10095 = vsub.s32 %v10092, %v10094
      %v10096 = vrot.slane %v10088, %v10095
      %v10098 = vunpack.c.l.s4 1983009808
      %v10099 = vunpack.c.0.s8 %v10098
      %v10100 = vlaneseq
      %v10101 = vshrl.u32 %v10100, 7
      %v10102 = vsub.s32 %v10099, %v10101
      %v10103 = vrot.slane %v10089, %v10102
      %v10104 = vcombine.low %v10064, %v10068
      %v10105 = vcombine.high %v10064, %v10068
      %v10107 = vunpack.c.l.s4 1983009808
      %v10108 = vunpack.c.0.s8 %v10107
      %v10109 = vlaneseq
      %v10110 = vshrl.u32 %v10109, 7
      %v10111 = vsub.s32 %v10108, %v10110
      %v10112 = vrot.slane %v10104, %v10111
      %v10114 = vunpack.c.l.s4 1983009808
      %v10115 = vunpack.c.0.s8 %v10114
      %v10116 = vlaneseq
      %v10117 = vshrl.u32 %v10116, 7
      %v10118 = vsub.s32 %v10115, %v10117
      %v10119 = vrot.slane %v10105, %v10118
      %v10120 = vcombine.low %v10066, %v10070
      %v10121 = vcombine.high %v10066, %v10070
      %v10123 = vunpack.c.l.s4 1983009808
      %v10124 = vunpack.c.0.s8 %v10123
      %v10125 = vlaneseq
      %v10126 = vshrl.u32 %v10125, 7
      %v10127 = vsub.s32 %v10124, %v10126
      %v10128 = vrot.slane %v10120, %v10127
      %v10130 = vunpack.c.l.s4 1983009808
      %v10131 = vunpack.c.0.s8 %v10130
      %v10132 = vlaneseq
      %v10133 = vshrl.u32 %v10132, 7
      %v10134 = vsub.s32 %v10131, %v10133
      %v10135 = vrot.slane %v10121, %v10134
      %v10136 = vcombine.low %v10080, %v10096
      %v10137 = vcombine.high %v10080, %v10096
      %v10139 = vunpack.c.l.s4 1934713408
      %v10140 = vunpack.c.0.s8 %v10139
      %v10141 = vlaneseq
      %v10142 = vshrl.u32 %v10141, 7
      %v10143 = vsub.s32 %v10140, %v10142
      %v10144 = vrot.slane %v10136, %v10143
      %v10146 = vunpack.c.l.s4 1934713408
      %v10147 = vunpack.c.0.s8 %v10146
      %v10148 = vlaneseq
      %v10149 = vshrl.u32 %v10148, 7
      %v10150 = vsub.s32 %v10147, %v10149
      %v10151 = vrot.slane %v10137, %v10150
      %v10152 = vcombine.low %v10087, %v10103
      %v10153 = vcombine.high %v10087, %v10103
      %v10155 = vunpack.c.l.s4 1934713408
      %v10156 = vunpack.c.0.s8 %v10155
      %v10157 = vlaneseq
      %v10158 = vshrl.u32 %v10157, 7
      %v10159 = vsub.s32 %v10156, %v10158
      %v10160 = vrot.slane %v10152, %v10159
      %v10162 = vunpack.c.l.s4 1934713408
      %v10163 = vunpack.c.0.s8 %v10162
      %v10164 = vlaneseq
      %v10165 = vshrl.u32 %v10164, 7
      %v10166 = vsub.s32 %v10163, %v10165
      %v10167 = vrot.slane %v10153, %v10166
      %v10168 = vcombine.low %v10112, %v10128
      %v10169 = vcombine.high %v10112, %v10128
      %v10171 = vunpack.c.l.s4 1934713408
      %v10172 = vunpack.c.0.s8 %v10171
      %v10173 = vlaneseq
      %v10174 = vshrl.u32 %v10173, 7
      %v10175 = vsub.s32 %v10172, %v10174
      %v10176 = vrot.slane %v10168, %v10175
      %v10178 = vunpack.c.l.s4 1934713408
      %v10179 = vunpack.c.0.s8 %v10178
      %v10180 = vlaneseq
      %v10181 = vshrl.u32 %v10180, 7
      %v10182 = vsub.s32 %v10179, %v10181
      %v10183 = vrot.slane %v10169, %v10182
      %v10184 = vcombine.low %v10119, %v10135
      %v10185 = vcombine.high %v10119, %v10135
      %v10187 = vunpack.c.l.s4 1934713408
      %v10188 = vunpack.c.0.s8 %v10187
      %v10189 = vlaneseq
      %v10190 = vshrl.u32 %v10189, 7
      %v10191 = vsub.s32 %v10188, %v10190
      %v10192 = vrot.slane %v10184, %v10191
      %v10194 = vunpack.c.l.s4 1934713408
      %v10195 = vunpack.c.0.s8 %v10194
      %v10196 = vlaneseq
      %v10197 = vshrl.u32 %v10196, 7
      %v10198 = vsub.s32 %v10195, %v10197
      %v10199 = vrot.slane %v10185, %v10198
      %v10200 = vcombine.low %v10144, %v10176
      %v10201 = vcombine.high %v10144, %v10176
      %v10202 = vcombine.low %v10151, %v10183
      %v10203 = vcombine.high %v10151, %v10183
      %v10204 = vcombine.low %v10160, %v10192
      %v10205 = vcombine.high %v10160, %v10192
      %v10206 = vcombine.low %v10167, %v10199
      %v10207 = vcombine.high %v10167, %v10199
      %v10208 = vcombine.low %v10057, %v10061
      %v10209 = vcombine.high %v10057, %v10061
      %v10211 = vunpack.c.l.s4 1983009808
      %v10212 = vunpack.c.0.s8 %v10211
      %v10213 = vlaneseq
      %v10214 = vshrl.u32 %v10213, 7
      %v10215 = vsub.s32 %v10212, %v10214
      %v10216 = vrot.slane %v10208, %v10215
      %v10218 = vunpack.c.l.s4 1983009808
      %v10219 = vunpack.c.0.s8 %v10218
      %v10220 = vlaneseq
      %v10221 = vshrl.u32 %v10220, 7
      %v10222 = vsub.s32 %v10219, %v10221
      %v10223 = vrot.slane %v10209, %v10222
      %v10224 = vcombine.low %v10059, %v10063
      %v10225 = vcombine.high %v10059, %v10063
      %v10227 = vunpack.c.l.s4 1983009808
      %v10228 = vunpack.c.0.s8 %v10227
      %v10229 = vlaneseq
      %v10230 = vshrl.u32 %v10229, 7
      %v10231 = vsub.s32 %v10228, %v10230
      %v10232 = vrot.slane %v10224, %v10231
      %v10234 = vunpack.c.l.s4 1983009808
      %v10235 = vunpack.c.0.s8 %v10234
      %v10236 = vlaneseq
      %v10237 = vshrl.u32 %v10236, 7
      %v10238 = vsub.s32 %v10235, %v10237
      %v10239 = vrot.slane %v10225, %v10238
      %v10240 = vcombine.low %v10065, %v10069
      %v10241 = vcombine.high %v10065, %v10069
      %v10243 = vunpack.c.l.s4 1983009808
      %v10244 = vunpack.c.0.s8 %v10243
      %v10245 = vlaneseq
      %v10246 = vshrl.u32 %v10245, 7
      %v10247 = vsub.s32 %v10244, %v10246
      %v10248 = vrot.slane %v10240, %v10247
      %v10250 = vunpack.c.l.s4 1983009808
      %v10251 = vunpack.c.0.s8 %v10250
      %v10252 = vlaneseq
      %v10253 = vshrl.u32 %v10252, 7
      %v10254 = vsub.s32 %v10251, %v10253
      %v10255 = vrot.slane %v10241, %v10254
      %v10256 = vcombine.low %v10067, %v10071
      %v10257 = vcombine.high %v10067, %v10071
      %v10259 = vunpack.c.l.s4 1983009808
      %v10260 = vunpack.c.0.s8 %v10259
      %v10261 = vlaneseq
      %v10262 = vshrl.u32 %v10261, 7
      %v10263 = vsub.s32 %v10260, %v10262
      %v10264 = vrot.slane %v10256, %v10263
      %v10266 = vunpack.c.l.s4 1983009808
      %v10267 = vunpack.c.0.s8 %v10266
      %v10268 = vlaneseq
      %v10269 = vshrl.u32 %v10268, 7
      %v10270 = vsub.s32 %v10267, %v10269
      %v10271 = vrot.slane %v10257, %v10270
      %v10272 = vcombine.low %v10216, %v10232
      %v10273 = vcombine.high %v10216, %v10232
      %v10275 = vunpack.c.l.s4 1934713408
      %v10276 = vunpack.c.0.s8 %v10275
      %v10277 = vlaneseq
      %v10278 = vshrl.u32 %v10277, 7
      %v10279 = vsub.s32 %v10276, %v10278
      %v10280 = vrot.slane %v10272, %v10279
      %v10282 = vunpack.c.l.s4 1934713408
      %v10283 = vunpack.c.0.s8 %v10282
      %v10284 = vlaneseq
      %v10285 = vshrl.u32 %v10284, 7
      %v10286 = vsub.s32 %v10283, %v10285
      %v10287 = vrot.slane %v10273, %v10286
      %v10288 = vcombine.low %v10223, %v10239
      %v10289 = vcombine.high %v10223, %v10239
      %v10291 = vunpack.c.l.s4 1934713408
      %v10292 = vunpack.c.0.s8 %v10291
      %v10293 = vlaneseq
      %v10294 = vshrl.u32 %v10293, 7
      %v10295 = vsub.s32 %v10292, %v10294
      %v10296 = vrot.slane %v10288, %v10295
      %v10298 = vunpack.c.l.s4 1934713408
      %v10299 = vunpack.c.0.s8 %v10298
      %v10300 = vlaneseq
      %v10301 = vshrl.u32 %v10300, 7
      %v10302 = vsub.s32 %v10299, %v10301
      %v10303 = vrot.slane %v10289, %v10302
      %v10304 = vcombine.low %v10248, %v10264
      %v10305 = vcombine.high %v10248, %v10264
      %v10307 = vunpack.c.l.s4 1934713408
      %v10308 = vunpack.c.0.s8 %v10307
      %v10309 = vlaneseq
      %v10310 = vshrl.u32 %v10309, 7
      %v10311 = vsub.s32 %v10308, %v10310
      %v10312 = vrot.slane %v10304, %v10311
      %v10314 = vunpack.c.l.s4 1934713408
      %v10315 = vunpack.c.0.s8 %v10314
      %v10316 = vlaneseq
      %v10317 = vshrl.u32 %v10316, 7
      %v10318 = vsub.s32 %v10315, %v10317
      %v10319 = vrot.slane %v10305, %v10318
      %v10320 = vcombine.low %v10255, %v10271
      %v10321 = vcombine.high %v10255, %v10271
      %v10323 = vunpack.c.l.s4 1934713408
      %v10324 = vunpack.c.0.s8 %v10323
      %v10325 = vlaneseq
      %v10326 = vshrl.u32 %v10325, 7
      %v10327 = vsub.s32 %v10324, %v10326
      %v10328 = vrot.slane %v10320, %v10327
      %v10330 = vunpack.c.l.s4 1934713408
      %v10331 = vunpack.c.0.s8 %v10330
      %v10332 = vlaneseq
      %v10333 = vshrl.u32 %v10332, 7
      %v10334 = vsub.s32 %v10331, %v10333
      %v10335 = vrot.slane %v10321, %v10334
      %v10336 = vcombine.low %v10280, %v10312
      %v10337 = vcombine.high %v10280, %v10312
      %v10338 = vcombine.low %v10287, %v10319
      %v10339 = vcombine.high %v10287, %v10319
      %v10340 = vcombine.low %v10296, %v10328
      %v10341 = vcombine.high %v10296, %v10328
      %v10342 = vcombine.low %v10303, %v10335
      %v10343 = vcombine.high %v10303, %v10335
      %10345 = vrot.lane.b32.xlu0 %v10201, 16
      %v10346 = vpop.permute.xlu0 %10345
      %10349 = vrot.lane.b32.xlu0 %v10202, 32
      %v10350 = vpop.permute.xlu0 %10349
      %10353 = vrot.lane.b32.xlu0 %v10203, 48
      %v10354 = vpop.permute.xlu0 %10353
      %10357 = vrot.lane.b32.xlu0 %v10204, 64
      %v10358 = vpop.permute.xlu0 %10357
      %10361 = vrot.lane.b32.xlu0 %v10205, 80
      %v10362 = vpop.permute.xlu0 %10361
      %10365 = vrot.lane.b32.xlu0 %v10206, 96
      %v10366 = vpop.permute.xlu0 %10365
      %10369 = vrot.lane.b32.xlu0 %v10207, 112
      %v10370 = vpop.permute.xlu0 %10369
      %10373 = vrot.lane.b32.xlu0 %v10337, 16
      %v10374 = vpop.permute.xlu0 %10373
      %10377 = vrot.lane.b32.xlu0 %v10338, 32
      %v10378 = vpop.permute.xlu0 %10377
      %10381 = vrot.lane.b32.xlu0 %v10339, 48
      %v10382 = vpop.permute.xlu0 %10381
      %10385 = vrot.lane.b32.xlu0 %v10340, 64
      %v10386 = vpop.permute.xlu0 %10385
      %10389 = vrot.lane.b32.xlu0 %v10341, 80
      %v10390 = vpop.permute.xlu0 %10389
      %10393 = vrot.lane.b32.xlu0 %v10342, 96
      %v10394 = vpop.permute.xlu0 %10393
      %10397 = vrot.lane.b32.xlu0 %v10343, 112
      %v10398 = vpop.permute.xlu0 %10397
      %v10400 = vsel %vm1182, %v10200, %v10346
      %v10401 = vsel %vm1184, %v10400, %v10350
      %v10402 = vsel %vm1186, %v10401, %v10354
      %v10403 = vsel %vm1188, %v10402, %v10358
      %v10404 = vsel %vm1190, %v10403, %v10362
      %v10405 = vsel %vm1192, %v10404, %v10366
      %v10406 = vsel %vm1194, %v10405, %v10370
      %v10407 = vsel %vm1182, %v10336, %v10374
      %v10408 = vsel %vm1184, %v10407, %v10378
      %v10409 = vsel %vm1186, %v10408, %v10382
      %v10410 = vsel %vm1188, %v10409, %v10386
      %v10411 = vsel %vm1190, %v10410, %v10390
      %v10412 = vsel %vm1192, %v10411, %v10394
      %v10413 = vsel %vm1194, %v10412, %v10398
      %10414 = vst [vmem:[#allocation3 + $0x30] sm:$0xff] %v10406
      %10415 = vst [vmem:[#allocation3 + $0x38] sm:$0xff] %v10413
      %v10416 = vld [vmem:[#allocation2 + $0x1] sm:$0xff]
      %v10417 = vld [vmem:[#allocation2 + $0x9] sm:$0xff]
      %v10418 = vld [vmem:[#allocation2 + $0x19] sm:$0xff]
      %v10419 = vld [vmem:[#allocation2 + $0x21] sm:$0xff]
      %v10420 = vld [vmem:[#allocation2 + $0x31] sm:$0xff]
      %v10421 = vld [vmem:[#allocation2 + $0x39] sm:$0xff]
      %v10422 = vld [vmem:[#allocation2 + $0x49] sm:$0xff]
      %v10423 = vld [vmem:[#allocation2 + $0x51] sm:$0xff]
      %v10424 = vld [vmem:[#allocation2 + $0x61] sm:$0xff]
      %v10425 = vld [vmem:[#allocation2 + $0x69] sm:$0xff]
      %v10426 = vld [vmem:[#allocation2 + $0x79] sm:$0xff]
      %v10427 = vld [vmem:[#allocation2 + $0x81] sm:$0xff]
      %v10428 = vld [vmem:[#allocation2 + $0x91] sm:$0xff]
      %v10429 = vld [vmem:[#allocation2 + $0x99] sm:$0xff]
      %v10430 = vld [vmem:[#allocation2 + $0xa9] sm:$0xff]
      %v10431 = vld [vmem:[#allocation2 + $0xb1] sm:$0xff]
      %10448 = vrot.lane.b32.xlu0 %v10416, 127
      %v10449 = vpop.permute.xlu0 %10448
      %10450 = vrot.lane.b32.xlu0 %v10417, 127
      %v10451 = vpop.permute.xlu0 %10450
      %10452 = vrot.lane.b32.xlu0 %v10418, 127
      %v10453 = vpop.permute.xlu0 %10452
      %10454 = vrot.lane.b32.xlu0 %v10419, 127
      %v10455 = vpop.permute.xlu0 %10454
      %10456 = vrot.lane.b32.xlu0 %v10420, 127
      %v10457 = vpop.permute.xlu0 %10456
      %10458 = vrot.lane.b32.xlu0 %v10421, 127
      %v10459 = vpop.permute.xlu0 %10458
      %10460 = vrot.lane.b32.xlu0 %v10422, 127
      %v10461 = vpop.permute.xlu0 %10460
      %10462 = vrot.lane.b32.xlu0 %v10423, 127
      %v10463 = vpop.permute.xlu0 %10462
      %10464 = vrot.lane.b32.xlu0 %v10424, 127
      %v10465 = vpop.permute.xlu0 %10464
      %10466 = vrot.lane.b32.xlu0 %v10425, 127
      %v10467 = vpop.permute.xlu0 %10466
      %10468 = vrot.lane.b32.xlu0 %v10426, 127
      %v10469 = vpop.permute.xlu0 %10468
      %10470 = vrot.lane.b32.xlu0 %v10427, 127
      %v10471 = vpop.permute.xlu0 %10470
      %10472 = vrot.lane.b32.xlu0 %v10428, 127
      %v10473 = vpop.permute.xlu0 %10472
      %10474 = vrot.lane.b32.xlu0 %v10429, 127
      %v10475 = vpop.permute.xlu0 %10474
      %10476 = vrot.lane.b32.xlu0 %v10430, 127
      %v10477 = vpop.permute.xlu0 %10476
      %10478 = vrot.lane.b32.xlu0 %v10431, 127
      %v10479 = vpop.permute.xlu0 %10478
      %v10496 = vcombine.low %v10449, %v10457
      %v10497 = vcombine.high %v10449, %v10457
      %v10499 = vunpack.c.l.s4 1983009808
      %v10500 = vunpack.c.0.s8 %v10499
      %v10501 = vlaneseq
      %v10502 = vshrl.u32 %v10501, 7
      %v10503 = vsub.s32 %v10500, %v10502
      %v10504 = vrot.slane %v10496, %v10503
      %v10506 = vunpack.c.l.s4 1983009808
      %v10507 = vunpack.c.0.s8 %v10506
      %v10508 = vlaneseq
      %v10509 = vshrl.u32 %v10508, 7
      %v10510 = vsub.s32 %v10507, %v10509
      %v10511 = vrot.slane %v10497, %v10510
      %v10512 = vcombine.low %v10453, %v10461
      %v10513 = vcombine.high %v10453, %v10461
      %v10515 = vunpack.c.l.s4 1983009808
      %v10516 = vunpack.c.0.s8 %v10515
      %v10517 = vlaneseq
      %v10518 = vshrl.u32 %v10517, 7
      %v10519 = vsub.s32 %v10516, %v10518
      %v10520 = vrot.slane %v10512, %v10519
      %v10522 = vunpack.c.l.s4 1983009808
      %v10523 = vunpack.c.0.s8 %v10522
      %v10524 = vlaneseq
      %v10525 = vshrl.u32 %v10524, 7
      %v10526 = vsub.s32 %v10523, %v10525
      %v10527 = vrot.slane %v10513, %v10526
      %v10528 = vcombine.low %v10465, %v10473
      %v10529 = vcombine.high %v10465, %v10473
      %v10531 = vunpack.c.l.s4 1983009808
      %v10532 = vunpack.c.0.s8 %v10531
      %v10533 = vlaneseq
      %v10534 = vshrl.u32 %v10533, 7
      %v10535 = vsub.s32 %v10532, %v10534
      %v10536 = vrot.slane %v10528, %v10535
      %v10538 = vunpack.c.l.s4 1983009808
      %v10539 = vunpack.c.0.s8 %v10538
      %v10540 = vlaneseq
      %v10541 = vshrl.u32 %v10540, 7
      %v10542 = vsub.s32 %v10539, %v10541
      %v10543 = vrot.slane %v10529, %v10542
      %v10544 = vcombine.low %v10469, %v10477
      %v10545 = vcombine.high %v10469, %v10477
      %v10547 = vunpack.c.l.s4 1983009808
      %v10548 = vunpack.c.0.s8 %v10547
      %v10549 = vlaneseq
      %v10550 = vshrl.u32 %v10549, 7
      %v10551 = vsub.s32 %v10548, %v10550
      %v10552 = vrot.slane %v10544, %v10551
      %v10554 = vunpack.c.l.s4 1983009808
      %v10555 = vunpack.c.0.s8 %v10554
      %v10556 = vlaneseq
      %v10557 = vshrl.u32 %v10556, 7
      %v10558 = vsub.s32 %v10555, %v10557
      %v10559 = vrot.slane %v10545, %v10558
      %v10560 = vcombine.low %v10504, %v10520
      %v10561 = vcombine.high %v10504, %v10520
      %v10563 = vunpack.c.l.s4 1934713408
      %v10564 = vunpack.c.0.s8 %v10563
      %v10565 = vlaneseq
      %v10566 = vshrl.u32 %v10565, 7
      %v10567 = vsub.s32 %v10564, %v10566
      %v10568 = vrot.slane %v10560, %v10567
      %v10570 = vunpack.c.l.s4 1934713408
      %v10571 = vunpack.c.0.s8 %v10570
      %v10572 = vlaneseq
      %v10573 = vshrl.u32 %v10572, 7
      %v10574 = vsub.s32 %v10571, %v10573
      %v10575 = vrot.slane %v10561, %v10574
      %v10576 = vcombine.low %v10511, %v10527
      %v10577 = vcombine.high %v10511, %v10527
      %v10579 = vunpack.c.l.s4 1934713408
      %v10580 = vunpack.c.0.s8 %v10579
      %v10581 = vlaneseq
      %v10582 = vshrl.u32 %v10581, 7
      %v10583 = vsub.s32 %v10580, %v10582
      %v10584 = vrot.slane %v10576, %v10583
      %v10586 = vunpack.c.l.s4 1934713408
      %v10587 = vunpack.c.0.s8 %v10586
      %v10588 = vlaneseq
      %v10589 = vshrl.u32 %v10588, 7
      %v10590 = vsub.s32 %v10587, %v10589
      %v10591 = vrot.slane %v10577, %v10590
      %v10592 = vcombine.low %v10536, %v10552
      %v10593 = vcombine.high %v10536, %v10552
      %v10595 = vunpack.c.l.s4 1934713408
      %v10596 = vunpack.c.0.s8 %v10595
      %v10597 = vlaneseq
      %v10598 = vshrl.u32 %v10597, 7
      %v10599 = vsub.s32 %v10596, %v10598
      %v10600 = vrot.slane %v10592, %v10599
      %v10602 = vunpack.c.l.s4 1934713408
      %v10603 = vunpack.c.0.s8 %v10602
      %v10604 = vlaneseq
      %v10605 = vshrl.u32 %v10604, 7
      %v10606 = vsub.s32 %v10603, %v10605
      %v10607 = vrot.slane %v10593, %v10606
      %v10608 = vcombine.low %v10543, %v10559
      %v10609 = vcombine.high %v10543, %v10559
      %v10611 = vunpack.c.l.s4 1934713408
      %v10612 = vunpack.c.0.s8 %v10611
      %v10613 = vlaneseq
      %v10614 = vshrl.u32 %v10613, 7
      %v10615 = vsub.s32 %v10612, %v10614
      %v10616 = vrot.slane %v10608, %v10615
      %v10618 = vunpack.c.l.s4 1934713408
      %v10619 = vunpack.c.0.s8 %v10618
      %v10620 = vlaneseq
      %v10621 = vshrl.u32 %v10620, 7
      %v10622 = vsub.s32 %v10619, %v10621
      %v10623 = vrot.slane %v10609, %v10622
      %v10624 = vcombine.low %v10568, %v10600
      %v10625 = vcombine.high %v10568, %v10600
      %v10626 = vcombine.low %v10575, %v10607
      %v10627 = vcombine.high %v10575, %v10607
      %v10628 = vcombine.low %v10584, %v10616
      %v10629 = vcombine.high %v10584, %v10616
      %v10630 = vcombine.low %v10591, %v10623
      %v10631 = vcombine.high %v10591, %v10623
      %v10632 = vcombine.low %v10451, %v10459
      %v10633 = vcombine.high %v10451, %v10459
      %v10635 = vunpack.c.l.s4 1983009808
      %v10636 = vunpack.c.0.s8 %v10635
      %v10637 = vlaneseq
      %v10638 = vshrl.u32 %v10637, 7
      %v10639 = vsub.s32 %v10636, %v10638
      %v10640 = vrot.slane %v10632, %v10639
      %v10642 = vunpack.c.l.s4 1983009808
      %v10643 = vunpack.c.0.s8 %v10642
      %v10644 = vlaneseq
      %v10645 = vshrl.u32 %v10644, 7
      %v10646 = vsub.s32 %v10643, %v10645
      %v10647 = vrot.slane %v10633, %v10646
      %v10648 = vcombine.low %v10455, %v10463
      %v10649 = vcombine.high %v10455, %v10463
      %v10651 = vunpack.c.l.s4 1983009808
      %v10652 = vunpack.c.0.s8 %v10651
      %v10653 = vlaneseq
      %v10654 = vshrl.u32 %v10653, 7
      %v10655 = vsub.s32 %v10652, %v10654
      %v10656 = vrot.slane %v10648, %v10655
      %v10658 = vunpack.c.l.s4 1983009808
      %v10659 = vunpack.c.0.s8 %v10658
      %v10660 = vlaneseq
      %v10661 = vshrl.u32 %v10660, 7
      %v10662 = vsub.s32 %v10659, %v10661
      %v10663 = vrot.slane %v10649, %v10662
      %v10664 = vcombine.low %v10467, %v10475
      %v10665 = vcombine.high %v10467, %v10475
      %v10667 = vunpack.c.l.s4 1983009808
      %v10668 = vunpack.c.0.s8 %v10667
      %v10669 = vlaneseq
      %v10670 = vshrl.u32 %v10669, 7
      %v10671 = vsub.s32 %v10668, %v10670
      %v10672 = vrot.slane %v10664, %v10671
      %v10674 = vunpack.c.l.s4 1983009808
      %v10675 = vunpack.c.0.s8 %v10674
      %v10676 = vlaneseq
      %v10677 = vshrl.u32 %v10676, 7
      %v10678 = vsub.s32 %v10675, %v10677
      %v10679 = vrot.slane %v10665, %v10678
      %v10680 = vcombine.low %v10471, %v10479
      %v10681 = vcombine.high %v10471, %v10479
      %v10683 = vunpack.c.l.s4 1983009808
      %v10684 = vunpack.c.0.s8 %v10683
      %v10685 = vlaneseq
      %v10686 = vshrl.u32 %v10685, 7
      %v10687 = vsub.s32 %v10684, %v10686
      %v10688 = vrot.slane %v10680, %v10687
      %v10690 = vunpack.c.l.s4 1983009808
      %v10691 = vunpack.c.0.s8 %v10690
      %v10692 = vlaneseq
      %v10693 = vshrl.u32 %v10692, 7
      %v10694 = vsub.s32 %v10691, %v10693
      %v10695 = vrot.slane %v10681, %v10694
      %v10696 = vcombine.low %v10640, %v10656
      %v10697 = vcombine.high %v10640, %v10656
      %v10699 = vunpack.c.l.s4 1934713408
      %v10700 = vunpack.c.0.s8 %v10699
      %v10701 = vlaneseq
      %v10702 = vshrl.u32 %v10701, 7
      %v10703 = vsub.s32 %v10700, %v10702
      %v10704 = vrot.slane %v10696, %v10703
      %v10706 = vunpack.c.l.s4 1934713408
      %v10707 = vunpack.c.0.s8 %v10706
      %v10708 = vlaneseq
      %v10709 = vshrl.u32 %v10708, 7
      %v10710 = vsub.s32 %v10707, %v10709
      %v10711 = vrot.slane %v10697, %v10710
      %v10712 = vcombine.low %v10647, %v10663
      %v10713 = vcombine.high %v10647, %v10663
      %v10715 = vunpack.c.l.s4 1934713408
      %v10716 = vunpack.c.0.s8 %v10715
      %v10717 = vlaneseq
      %v10718 = vshrl.u32 %v10717, 7
      %v10719 = vsub.s32 %v10716, %v10718
      %v10720 = vrot.slane %v10712, %v10719
      %v10722 = vunpack.c.l.s4 1934713408
      %v10723 = vunpack.c.0.s8 %v10722
      %v10724 = vlaneseq
      %v10725 = vshrl.u32 %v10724, 7
      %v10726 = vsub.s32 %v10723, %v10725
      %v10727 = vrot.slane %v10713, %v10726
      %v10728 = vcombine.low %v10672, %v10688
      %v10729 = vcombine.high %v10672, %v10688
      %v10731 = vunpack.c.l.s4 1934713408
      %v10732 = vunpack.c.0.s8 %v10731
      %v10733 = vlaneseq
      %v10734 = vshrl.u32 %v10733, 7
      %v10735 = vsub.s32 %v10732, %v10734
      %v10736 = vrot.slane %v10728, %v10735
      %v10738 = vunpack.c.l.s4 1934713408
      %v10739 = vunpack.c.0.s8 %v10738
      %v10740 = vlaneseq
      %v10741 = vshrl.u32 %v10740, 7
      %v10742 = vsub.s32 %v10739, %v10741
      %v10743 = vrot.slane %v10729, %v10742
      %v10744 = vcombine.low %v10679, %v10695
      %v10745 = vcombine.high %v10679, %v10695
      %v10747 = vunpack.c.l.s4 1934713408
      %v10748 = vunpack.c.0.s8 %v10747
      %v10749 = vlaneseq
      %v10750 = vshrl.u32 %v10749, 7
      %v10751 = vsub.s32 %v10748, %v10750
      %v10752 = vrot.slane %v10744, %v10751
      %v10754 = vunpack.c.l.s4 1934713408
      %v10755 = vunpack.c.0.s8 %v10754
      %v10756 = vlaneseq
      %v10757 = vshrl.u32 %v10756, 7
      %v10758 = vsub.s32 %v10755, %v10757
      %v10759 = vrot.slane %v10745, %v10758
      %v10760 = vcombine.low %v10704, %v10736
      %v10761 = vcombine.high %v10704, %v10736
      %v10762 = vcombine.low %v10711, %v10743
      %v10763 = vcombine.high %v10711, %v10743
      %v10764 = vcombine.low %v10720, %v10752
      %v10765 = vcombine.high %v10720, %v10752
      %v10766 = vcombine.low %v10727, %v10759
      %v10767 = vcombine.high %v10727, %v10759
      %10769 = vrot.lane.b32.xlu0 %v10625, 16
      %v10770 = vpop.permute.xlu0 %10769
      %10773 = vrot.lane.b32.xlu0 %v10626, 32
      %v10774 = vpop.permute.xlu0 %10773
      %10777 = vrot.lane.b32.xlu0 %v10627, 48
      %v10778 = vpop.permute.xlu0 %10777
      %10781 = vrot.lane.b32.xlu0 %v10628, 64
      %v10782 = vpop.permute.xlu0 %10781
      %10785 = vrot.lane.b32.xlu0 %v10629, 80
      %v10786 = vpop.permute.xlu0 %10785
      %10789 = vrot.lane.b32.xlu0 %v10630, 96
      %v10790 = vpop.permute.xlu0 %10789
      %10793 = vrot.lane.b32.xlu0 %v10631, 112
      %v10794 = vpop.permute.xlu0 %10793
      %10797 = vrot.lane.b32.xlu0 %v10761, 16
      %v10798 = vpop.permute.xlu0 %10797
      %10801 = vrot.lane.b32.xlu0 %v10762, 32
      %v10802 = vpop.permute.xlu0 %10801
      %10805 = vrot.lane.b32.xlu0 %v10763, 48
      %v10806 = vpop.permute.xlu0 %10805
      %10809 = vrot.lane.b32.xlu0 %v10764, 64
      %v10810 = vpop.permute.xlu0 %10809
      %10813 = vrot.lane.b32.xlu0 %v10765, 80
      %v10814 = vpop.permute.xlu0 %10813
      %10817 = vrot.lane.b32.xlu0 %v10766, 96
      %v10818 = vpop.permute.xlu0 %10817
      %10821 = vrot.lane.b32.xlu0 %v10767, 112
      %v10822 = vpop.permute.xlu0 %10821
      %v10824 = vsel %vm1182, %v10624, %v10770
      %v10825 = vsel %vm1184, %v10824, %v10774
      %v10826 = vsel %vm1186, %v10825, %v10778
      %v10827 = vsel %vm1188, %v10826, %v10782
      %v10828 = vsel %vm1190, %v10827, %v10786
      %v10829 = vsel %vm1192, %v10828, %v10790
      %v10830 = vsel %vm1194, %v10829, %v10794
      %v10831 = vsel %vm1182, %v10760, %v10798
      %v10832 = vsel %vm1184, %v10831, %v10802
      %v10833 = vsel %vm1186, %v10832, %v10806
      %v10834 = vsel %vm1188, %v10833, %v10810
      %v10835 = vsel %vm1190, %v10834, %v10814
      %v10836 = vsel %vm1192, %v10835, %v10818
      %v10837 = vsel %vm1194, %v10836, %v10822
      %10838 = vst [vmem:[#allocation3 + $0x40] sm:$0xff] %v10830
      %10839 = vst [vmem:[#allocation3 + $0x48] sm:$0xff] %v10837
      %v10840 = vld [vmem:[#allocation2 + $0x1] sm:$0xff]
      %v10841 = vld [vmem:[#allocation2 + $0x9] sm:$0xff]
      %v10842 = vld [vmem:[#allocation2 + $0x19] sm:$0xff]
      %v10843 = vld [vmem:[#allocation2 + $0x21] sm:$0xff]
      %v10844 = vld [vmem:[#allocation2 + $0x31] sm:$0xff]
      %v10845 = vld [vmem:[#allocation2 + $0x39] sm:$0xff]
      %v10846 = vld [vmem:[#allocation2 + $0x49] sm:$0xff]
      %v10847 = vld [vmem:[#allocation2 + $0x51] sm:$0xff]
      %v10848 = vld [vmem:[#allocation2 + $0x61] sm:$0xff]
      %v10849 = vld [vmem:[#allocation2 + $0x69] sm:$0xff]
      %v10850 = vld [vmem:[#allocation2 + $0x79] sm:$0xff]
      %v10851 = vld [vmem:[#allocation2 + $0x81] sm:$0xff]
      %v10852 = vld [vmem:[#allocation2 + $0x91] sm:$0xff]
      %v10853 = vld [vmem:[#allocation2 + $0x99] sm:$0xff]
      %v10854 = vld [vmem:[#allocation2 + $0xa9] sm:$0xff]
      %v10855 = vld [vmem:[#allocation2 + $0xb1] sm:$0xff]
      %10872 = vrot.lane.b32.xlu0 %v10840, 126
      %v10873 = vpop.permute.xlu0 %10872
      %10874 = vrot.lane.b32.xlu0 %v10841, 126
      %v10875 = vpop.permute.xlu0 %10874
      %10876 = vrot.lane.b32.xlu0 %v10842, 126
      %v10877 = vpop.permute.xlu0 %10876
      %10878 = vrot.lane.b32.xlu0 %v10843, 126
      %v10879 = vpop.permute.xlu0 %10878
      %10880 = vrot.lane.b32.xlu0 %v10844, 126
      %v10881 = vpop.permute.xlu0 %10880
      %10882 = vrot.lane.b32.xlu0 %v10845, 126
      %v10883 = vpop.permute.xlu0 %10882
      %10884 = vrot.lane.b32.xlu0 %v10846, 126
      %v10885 = vpop.permute.xlu0 %10884
      %10886 = vrot.lane.b32.xlu0 %v10847, 126
      %v10887 = vpop.permute.xlu0 %10886
      %10888 = vrot.lane.b32.xlu0 %v10848, 126
      %v10889 = vpop.permute.xlu0 %10888
      %10890 = vrot.lane.b32.xlu0 %v10849, 126
      %v10891 = vpop.permute.xlu0 %10890
      %10892 = vrot.lane.b32.xlu0 %v10850, 126
      %v10893 = vpop.permute.xlu0 %10892
      %10894 = vrot.lane.b32.xlu0 %v10851, 126
      %v10895 = vpop.permute.xlu0 %10894
      %10896 = vrot.lane.b32.xlu0 %v10852, 126
      %v10897 = vpop.permute.xlu0 %10896
      %10898 = vrot.lane.b32.xlu0 %v10853, 126
      %v10899 = vpop.permute.xlu0 %10898
      %10900 = vrot.lane.b32.xlu0 %v10854, 126
      %v10901 = vpop.permute.xlu0 %10900
      %10902 = vrot.lane.b32.xlu0 %v10855, 126
      %v10903 = vpop.permute.xlu0 %10902
      %v10920 = vcombine.low %v10873, %v10881
      %v10921 = vcombine.high %v10873, %v10881
      %v10923 = vunpack.c.l.s4 1983009808
      %v10924 = vunpack.c.0.s8 %v10923
      %v10925 = vlaneseq
      %v10926 = vshrl.u32 %v10925, 7
      %v10927 = vsub.s32 %v10924, %v10926
      %v10928 = vrot.slane %v10920, %v10927
      %v10930 = vunpack.c.l.s4 1983009808
      %v10931 = vunpack.c.0.s8 %v10930
      %v10932 = vlaneseq
      %v10933 = vshrl.u32 %v10932, 7
      %v10934 = vsub.s32 %v10931, %v10933
      %v10935 = vrot.slane %v10921, %v10934
      %v10936 = vcombine.low %v10877, %v10885
      %v10937 = vcombine.high %v10877, %v10885
      %v10939 = vunpack.c.l.s4 1983009808
      %v10940 = vunpack.c.0.s8 %v10939
      %v10941 = vlaneseq
      %v10942 = vshrl.u32 %v10941, 7
      %v10943 = vsub.s32 %v10940, %v10942
      %v10944 = vrot.slane %v10936, %v10943
      %v10946 = vunpack.c.l.s4 1983009808
      %v10947 = vunpack.c.0.s8 %v10946
      %v10948 = vlaneseq
      %v10949 = vshrl.u32 %v10948, 7
      %v10950 = vsub.s32 %v10947, %v10949
      %v10951 = vrot.slane %v10937, %v10950
      %v10952 = vcombine.low %v10889, %v10897
      %v10953 = vcombine.high %v10889, %v10897
      %v10955 = vunpack.c.l.s4 1983009808
      %v10956 = vunpack.c.0.s8 %v10955
      %v10957 = vlaneseq
      %v10958 = vshrl.u32 %v10957, 7
      %v10959 = vsub.s32 %v10956, %v10958
      %v10960 = vrot.slane %v10952, %v10959
      %v10962 = vunpack.c.l.s4 1983009808
      %v10963 = vunpack.c.0.s8 %v10962
      %v10964 = vlaneseq
      %v10965 = vshrl.u32 %v10964, 7
      %v10966 = vsub.s32 %v10963, %v10965
      %v10967 = vrot.slane %v10953, %v10966
      %v10968 = vcombine.low %v10893, %v10901
      %v10969 = vcombine.high %v10893, %v10901
      %v10971 = vunpack.c.l.s4 1983009808
      %v10972 = vunpack.c.0.s8 %v10971
      %v10973 = vlaneseq
      %v10974 = vshrl.u32 %v10973, 7
      %v10975 = vsub.s32 %v10972, %v10974
      %v10976 = vrot.slane %v10968, %v10975
      %v10978 = vunpack.c.l.s4 1983009808
      %v10979 = vunpack.c.0.s8 %v10978
      %v10980 = vlaneseq
      %v10981 = vshrl.u32 %v10980, 7
      %v10982 = vsub.s32 %v10979, %v10981
      %v10983 = vrot.slane %v10969, %v10982
      %v10984 = vcombine.low %v10928, %v10944
      %v10985 = vcombine.high %v10928, %v10944
      %v10987 = vunpack.c.l.s4 1934713408
      %v10988 = vunpack.c.0.s8 %v10987
      %v10989 = vlaneseq
      %v10990 = vshrl.u32 %v10989, 7
      %v10991 = vsub.s32 %v10988, %v10990
      %v10992 = vrot.slane %v10984, %v10991
      %v10994 = vunpack.c.l.s4 1934713408
      %v10995 = vunpack.c.0.s8 %v10994
      %v10996 = vlaneseq
      %v10997 = vshrl.u32 %v10996, 7
      %v10998 = vsub.s32 %v10995, %v10997
      %v10999 = vrot.slane %v10985, %v10998
      %v11000 = vcombine.low %v10935, %v10951
      %v11001 = vcombine.high %v10935, %v10951
      %v11003 = vunpack.c.l.s4 1934713408
      %v11004 = vunpack.c.0.s8 %v11003
      %v11005 = vlaneseq
      %v11006 = vshrl.u32 %v11005, 7
      %v11007 = vsub.s32 %v11004, %v11006
      %v11008 = vrot.slane %v11000, %v11007
      %v11010 = vunpack.c.l.s4 1934713408
      %v11011 = vunpack.c.0.s8 %v11010
      %v11012 = vlaneseq
      %v11013 = vshrl.u32 %v11012, 7
      %v11014 = vsub.s32 %v11011, %v11013
      %v11015 = vrot.slane %v11001, %v11014
      %v11016 = vcombine.low %v10960, %v10976
      %v11017 = vcombine.high %v10960, %v10976
      %v11019 = vunpack.c.l.s4 1934713408
      %v11020 = vunpack.c.0.s8 %v11019
      %v11021 = vlaneseq
      %v11022 = vshrl.u32 %v11021, 7
      %v11023 = vsub.s32 %v11020, %v11022
      %v11024 = vrot.slane %v11016, %v11023
      %v11026 = vunpack.c.l.s4 1934713408
      %v11027 = vunpack.c.0.s8 %v11026
      %v11028 = vlaneseq
      %v11029 = vshrl.u32 %v11028, 7
      %v11030 = vsub.s32 %v11027, %v11029
      %v11031 = vrot.slane %v11017, %v11030
      %v11032 = vcombine.low %v10967, %v10983
      %v11033 = vcombine.high %v10967, %v10983
      %v11035 = vunpack.c.l.s4 1934713408
      %v11036 = vunpack.c.0.s8 %v11035
      %v11037 = vlaneseq
      %v11038 = vshrl.u32 %v11037, 7
      %v11039 = vsub.s32 %v11036, %v11038
      %v11040 = vrot.slane %v11032, %v11039
      %v11042 = vunpack.c.l.s4 1934713408
      %v11043 = vunpack.c.0.s8 %v11042
      %v11044 = vlaneseq
      %v11045 = vshrl.u32 %v11044, 7
      %v11046 = vsub.s32 %v11043, %v11045
      %v11047 = vrot.slane %v11033, %v11046
      %v11048 = vcombine.low %v10992, %v11024
      %v11049 = vcombine.high %v10992, %v11024
      %v11050 = vcombine.low %v10999, %v11031
      %v11051 = vcombine.high %v10999, %v11031
      %v11052 = vcombine.low %v11008, %v11040
      %v11053 = vcombine.high %v11008, %v11040
      %v11054 = vcombine.low %v11015, %v11047
      %v11055 = vcombine.high %v11015, %v11047
      %v11056 = vcombine.low %v10875, %v10883
      %v11057 = vcombine.high %v10875, %v10883
      %v11059 = vunpack.c.l.s4 1983009808
      %v11060 = vunpack.c.0.s8 %v11059
      %v11061 = vlaneseq
      %v11062 = vshrl.u32 %v11061, 7
      %v11063 = vsub.s32 %v11060, %v11062
      %v11064 = vrot.slane %v11056, %v11063
      %v11066 = vunpack.c.l.s4 1983009808
      %v11067 = vunpack.c.0.s8 %v11066
      %v11068 = vlaneseq
      %v11069 = vshrl.u32 %v11068, 7
      %v11070 = vsub.s32 %v11067, %v11069
      %v11071 = vrot.slane %v11057, %v11070
      %v11072 = vcombine.low %v10879, %v10887
      %v11073 = vcombine.high %v10879, %v10887
      %v11075 = vunpack.c.l.s4 1983009808
      %v11076 = vunpack.c.0.s8 %v11075
      %v11077 = vlaneseq
      %v11078 = vshrl.u32 %v11077, 7
      %v11079 = vsub.s32 %v11076, %v11078
      %v11080 = vrot.slane %v11072, %v11079
      %v11082 = vunpack.c.l.s4 1983009808
      %v11083 = vunpack.c.0.s8 %v11082
      %v11084 = vlaneseq
      %v11085 = vshrl.u32 %v11084, 7
      %v11086 = vsub.s32 %v11083, %v11085
      %v11087 = vrot.slane %v11073, %v11086
      %v11088 = vcombine.low %v10891, %v10899
      %v11089 = vcombine.high %v10891, %v10899
      %v11091 = vunpack.c.l.s4 1983009808
      %v11092 = vunpack.c.0.s8 %v11091
      %v11093 = vlaneseq
      %v11094 = vshrl.u32 %v11093, 7
      %v11095 = vsub.s32 %v11092, %v11094
      %v11096 = vrot.slane %v11088, %v11095
      %v11098 = vunpack.c.l.s4 1983009808
      %v11099 = vunpack.c.0.s8 %v11098
      %v11100 = vlaneseq
      %v11101 = vshrl.u32 %v11100, 7
      %v11102 = vsub.s32 %v11099, %v11101
      %v11103 = vrot.slane %v11089, %v11102
      %v11104 = vcombine.low %v10895, %v10903
      %v11105 = vcombine.high %v10895, %v10903
      %v11107 = vunpack.c.l.s4 1983009808
      %v11108 = vunpack.c.0.s8 %v11107
      %v11109 = vlaneseq
      %v11110 = vshrl.u32 %v11109, 7
      %v11111 = vsub.s32 %v11108, %v11110
      %v11112 = vrot.slane %v11104, %v11111
      %v11114 = vunpack.c.l.s4 1983009808
      %v11115 = vunpack.c.0.s8 %v11114
      %v11116 = vlaneseq
      %v11117 = vshrl.u32 %v11116, 7
      %v11118 = vsub.s32 %v11115, %v11117
      %v11119 = vrot.slane %v11105, %v11118
      %v11120 = vcombine.low %v11064, %v11080
      %v11121 = vcombine.high %v11064, %v11080
      %v11123 = vunpack.c.l.s4 1934713408
      %v11124 = vunpack.c.0.s8 %v11123
      %v11125 = vlaneseq
      %v11126 = vshrl.u32 %v11125, 7
      %v11127 = vsub.s32 %v11124, %v11126
      %v11128 = vrot.slane %v11120, %v11127
      %v11130 = vunpack.c.l.s4 1934713408
      %v11131 = vunpack.c.0.s8 %v11130
      %v11132 = vlaneseq
      %v11133 = vshrl.u32 %v11132, 7
      %v11134 = vsub.s32 %v11131, %v11133
      %v11135 = vrot.slane %v11121, %v11134
      %v11136 = vcombine.low %v11071, %v11087
      %v11137 = vcombine.high %v11071, %v11087
      %v11139 = vunpack.c.l.s4 1934713408
      %v11140 = vunpack.c.0.s8 %v11139
      %v11141 = vlaneseq
      %v11142 = vshrl.u32 %v11141, 7
      %v11143 = vsub.s32 %v11140, %v11142
      %v11144 = vrot.slane %v11136, %v11143
      %v11146 = vunpack.c.l.s4 1934713408
      %v11147 = vunpack.c.0.s8 %v11146
      %v11148 = vlaneseq
      %v11149 = vshrl.u32 %v11148, 7
      %v11150 = vsub.s32 %v11147, %v11149
      %v11151 = vrot.slane %v11137, %v11150
      %v11152 = vcombine.low %v11096, %v11112
      %v11153 = vcombine.high %v11096, %v11112
      %v11155 = vunpack.c.l.s4 1934713408
      %v11156 = vunpack.c.0.s8 %v11155
      %v11157 = vlaneseq
      %v11158 = vshrl.u32 %v11157, 7
      %v11159 = vsub.s32 %v11156, %v11158
      %v11160 = vrot.slane %v11152, %v11159
      %v11162 = vunpack.c.l.s4 1934713408
      %v11163 = vunpack.c.0.s8 %v11162
      %v11164 = vlaneseq
      %v11165 = vshrl.u32 %v11164, 7
      %v11166 = vsub.s32 %v11163, %v11165
      %v11167 = vrot.slane %v11153, %v11166
      %v11168 = vcombine.low %v11103, %v11119
      %v11169 = vcombine.high %v11103, %v11119
      %v11171 = vunpack.c.l.s4 1934713408
      %v11172 = vunpack.c.0.s8 %v11171
      %v11173 = vlaneseq
      %v11174 = vshrl.u32 %v11173, 7
      %v11175 = vsub.s32 %v11172, %v11174
      %v11176 = vrot.slane %v11168, %v11175
      %v11178 = vunpack.c.l.s4 1934713408
      %v11179 = vunpack.c.0.s8 %v11178
      %v11180 = vlaneseq
      %v11181 = vshrl.u32 %v11180, 7
      %v11182 = vsub.s32 %v11179, %v11181
      %v11183 = vrot.slane %v11169, %v11182
      %v11184 = vcombine.low %v11128, %v11160
      %v11185 = vcombine.high %v11128, %v11160
      %v11186 = vcombine.low %v11135, %v11167
      %v11187 = vcombine.high %v11135, %v11167
      %v11188 = vcombine.low %v11144, %v11176
      %v11189 = vcombine.high %v11144, %v11176
      %v11190 = vcombine.low %v11151, %v11183
      %v11191 = vcombine.high %v11151, %v11183
      %11193 = vrot.lane.b32.xlu0 %v11049, 16
      %v11194 = vpop.permute.xlu0 %11193
      %11197 = vrot.lane.b32.xlu0 %v11050, 32
      %v11198 = vpop.permute.xlu0 %11197
      %11201 = vrot.lane.b32.xlu0 %v11051, 48
      %v11202 = vpop.permute.xlu0 %11201
      %11205 = vrot.lane.b32.xlu0 %v11052, 64
      %v11206 = vpop.permute.xlu0 %11205
      %11209 = vrot.lane.b32.xlu0 %v11053, 80
      %v11210 = vpop.permute.xlu0 %11209
      %11213 = vrot.lane.b32.xlu0 %v11054, 96
      %v11214 = vpop.permute.xlu0 %11213
      %11217 = vrot.lane.b32.xlu0 %v11055, 112
      %v11218 = vpop.permute.xlu0 %11217
      %11221 = vrot.lane.b32.xlu0 %v11185, 16
      %v11222 = vpop.permute.xlu0 %11221
      %11225 = vrot.lane.b32.xlu0 %v11186, 32
      %v11226 = vpop.permute.xlu0 %11225
      %11229 = vrot.lane.b32.xlu0 %v11187, 48
      %v11230 = vpop.permute.xlu0 %11229
      %11233 = vrot.lane.b32.xlu0 %v11188, 64
      %v11234 = vpop.permute.xlu0 %11233
      %11237 = vrot.lane.b32.xlu0 %v11189, 80
      %v11238 = vpop.permute.xlu0 %11237
      %11241 = vrot.lane.b32.xlu0 %v11190, 96
      %v11242 = vpop.permute.xlu0 %11241
      %11245 = vrot.lane.b32.xlu0 %v11191, 112
      %v11246 = vpop.permute.xlu0 %11245
      %v11248 = vsel %vm1182, %v11048, %v11194
      %v11249 = vsel %vm1184, %v11248, %v11198
      %v11250 = vsel %vm1186, %v11249, %v11202
      %v11251 = vsel %vm1188, %v11250, %v11206
      %v11252 = vsel %vm1190, %v11251, %v11210
      %v11253 = vsel %vm1192, %v11252, %v11214
      %v11254 = vsel %vm1194, %v11253, %v11218
      %v11255 = vsel %vm1182, %v11184, %v11222
      %v11256 = vsel %vm1184, %v11255, %v11226
      %v11257 = vsel %vm1186, %v11256, %v11230
      %v11258 = vsel %vm1188, %v11257, %v11234
      %v11259 = vsel %vm1190, %v11258, %v11238
      %v11260 = vsel %vm1192, %v11259, %v11242
      %v11261 = vsel %vm1194, %v11260, %v11246
      %11262 = vst [vmem:[#allocation3 + $0x50] sm:$0xff] %v11254
      %11263 = vst [vmem:[#allocation3 + $0x58] sm:$0xff] %v11261
      %v11264 = vld [vmem:[#allocation2 + $0x2] sm:$0xff]
      %v11265 = vld [vmem:[#allocation2 + $0xa] sm:$0xff]
      %v11266 = vld [vmem:[#allocation2 + $0x1a] sm:$0xff]
      %v11267 = vld [vmem:[#allocation2 + $0x22] sm:$0xff]
      %v11268 = vld [vmem:[#allocation2 + $0x32] sm:$0xff]
      %v11269 = vld [vmem:[#allocation2 + $0x3a] sm:$0xff]
      %v11270 = vld [vmem:[#allocation2 + $0x4a] sm:$0xff]
      %v11271 = vld [vmem:[#allocation2 + $0x52] sm:$0xff]
      %v11272 = vld [vmem:[#allocation2 + $0x62] sm:$0xff]
      %v11273 = vld [vmem:[#allocation2 + $0x6a] sm:$0xff]
      %v11274 = vld [vmem:[#allocation2 + $0x7a] sm:$0xff]
      %v11275 = vld [vmem:[#allocation2 + $0x82] sm:$0xff]
      %v11276 = vld [vmem:[#allocation2 + $0x92] sm:$0xff]
      %v11277 = vld [vmem:[#allocation2 + $0x9a] sm:$0xff]
      %v11278 = vld [vmem:[#allocation2 + $0xaa] sm:$0xff]
      %v11279 = vld [vmem:[#allocation2 + $0xb2] sm:$0xff]
      %v11280 = vcombine.low %v11264, %v11268
      %v11281 = vcombine.high %v11264, %v11268
      %v11283 = vunpack.c.l.s4 1983009808
      %v11284 = vunpack.c.0.s8 %v11283
      %v11285 = vlaneseq
      %v11286 = vshrl.u32 %v11285, 7
      %v11287 = vsub.s32 %v11284, %v11286
      %v11288 = vrot.slane %v11280, %v11287
      %v11290 = vunpack.c.l.s4 1983009808
      %v11291 = vunpack.c.0.s8 %v11290
      %v11292 = vlaneseq
      %v11293 = vshrl.u32 %v11292, 7
      %v11294 = vsub.s32 %v11291, %v11293
      %v11295 = vrot.slane %v11281, %v11294
      %v11296 = vcombine.low %v11266, %v11270
      %v11297 = vcombine.high %v11266, %v11270
      %v11299 = vunpack.c.l.s4 1983009808
      %v11300 = vunpack.c.0.s8 %v11299
      %v11301 = vlaneseq
      %v11302 = vshrl.u32 %v11301, 7
      %v11303 = vsub.s32 %v11300, %v11302
      %v11304 = vrot.slane %v11296, %v11303
      %v11306 = vunpack.c.l.s4 1983009808
      %v11307 = vunpack.c.0.s8 %v11306
      %v11308 = vlaneseq
      %v11309 = vshrl.u32 %v11308, 7
      %v11310 = vsub.s32 %v11307, %v11309
      %v11311 = vrot.slane %v11297, %v11310
      %v11312 = vcombine.low %v11272, %v11276
      %v11313 = vcombine.high %v11272, %v11276
      %v11315 = vunpack.c.l.s4 1983009808
      %v11316 = vunpack.c.0.s8 %v11315
      %v11317 = vlaneseq
      %v11318 = vshrl.u32 %v11317, 7
      %v11319 = vsub.s32 %v11316, %v11318
      %v11320 = vrot.slane %v11312, %v11319
      %v11322 = vunpack.c.l.s4 1983009808
      %v11323 = vunpack.c.0.s8 %v11322
      %v11324 = vlaneseq
      %v11325 = vshrl.u32 %v11324, 7
      %v11326 = vsub.s32 %v11323, %v11325
      %v11327 = vrot.slane %v11313, %v11326
      %v11328 = vcombine.low %v11274, %v11278
      %v11329 = vcombine.high %v11274, %v11278
      %v11331 = vunpack.c.l.s4 1983009808
      %v11332 = vunpack.c.0.s8 %v11331
      %v11333 = vlaneseq
      %v11334 = vshrl.u32 %v11333, 7
      %v11335 = vsub.s32 %v11332, %v11334
      %v11336 = vrot.slane %v11328, %v11335
      %v11338 = vunpack.c.l.s4 1983009808
      %v11339 = vunpack.c.0.s8 %v11338
      %v11340 = vlaneseq
      %v11341 = vshrl.u32 %v11340, 7
      %v11342 = vsub.s32 %v11339, %v11341
      %v11343 = vrot.slane %v11329, %v11342
      %v11344 = vcombine.low %v11288, %v11304
      %v11345 = vcombine.high %v11288, %v11304
      %v11347 = vunpack.c.l.s4 1934713408
      %v11348 = vunpack.c.0.s8 %v11347
      %v11349 = vlaneseq
      %v11350 = vshrl.u32 %v11349, 7
      %v11351 = vsub.s32 %v11348, %v11350
      %v11352 = vrot.slane %v11344, %v11351
      %v11354 = vunpack.c.l.s4 1934713408
      %v11355 = vunpack.c.0.s8 %v11354
      %v11356 = vlaneseq
      %v11357 = vshrl.u32 %v11356, 7
      %v11358 = vsub.s32 %v11355, %v11357
      %v11359 = vrot.slane %v11345, %v11358
      %v11360 = vcombine.low %v11295, %v11311
      %v11361 = vcombine.high %v11295, %v11311
      %v11363 = vunpack.c.l.s4 1934713408
      %v11364 = vunpack.c.0.s8 %v11363
      %v11365 = vlaneseq
      %v11366 = vshrl.u32 %v11365, 7
      %v11367 = vsub.s32 %v11364, %v11366
      %v11368 = vrot.slane %v11360, %v11367
      %v11370 = vunpack.c.l.s4 1934713408
      %v11371 = vunpack.c.0.s8 %v11370
      %v11372 = vlaneseq
      %v11373 = vshrl.u32 %v11372, 7
      %v11374 = vsub.s32 %v11371, %v11373
      %v11375 = vrot.slane %v11361, %v11374
      %v11376 = vcombine.low %v11320, %v11336
      %v11377 = vcombine.high %v11320, %v11336
      %v11379 = vunpack.c.l.s4 1934713408
      %v11380 = vunpack.c.0.s8 %v11379
      %v11381 = vlaneseq
      %v11382 = vshrl.u32 %v11381, 7
      %v11383 = vsub.s32 %v11380, %v11382
      %v11384 = vrot.slane %v11376, %v11383
      %v11386 = vunpack.c.l.s4 1934713408
      %v11387 = vunpack.c.0.s8 %v11386
      %v11388 = vlaneseq
      %v11389 = vshrl.u32 %v11388, 7
      %v11390 = vsub.s32 %v11387, %v11389
      %v11391 = vrot.slane %v11377, %v11390
      %v11392 = vcombine.low %v11327, %v11343
      %v11393 = vcombine.high %v11327, %v11343
      %v11395 = vunpack.c.l.s4 1934713408
      %v11396 = vunpack.c.0.s8 %v11395
      %v11397 = vlaneseq
      %v11398 = vshrl.u32 %v11397, 7
      %v11399 = vsub.s32 %v11396, %v11398
      %v11400 = vrot.slane %v11392, %v11399
      %v11402 = vunpack.c.l.s4 1934713408
      %v11403 = vunpack.c.0.s8 %v11402
      %v11404 = vlaneseq
      %v11405 = vshrl.u32 %v11404, 7
      %v11406 = vsub.s32 %v11403, %v11405
      %v11407 = vrot.slane %v11393, %v11406
      %v11408 = vcombine.low %v11352, %v11384
      %v11409 = vcombine.high %v11352, %v11384
      %v11410 = vcombine.low %v11359, %v11391
      %v11411 = vcombine.high %v11359, %v11391
      %v11412 = vcombine.low %v11368, %v11400
      %v11413 = vcombine.high %v11368, %v11400
      %v11414 = vcombine.low %v11375, %v11407
      %v11415 = vcombine.high %v11375, %v11407
      %v11416 = vcombine.low %v11265, %v11269
      %v11417 = vcombine.high %v11265, %v11269
      %v11419 = vunpack.c.l.s4 1983009808
      %v11420 = vunpack.c.0.s8 %v11419
      %v11421 = vlaneseq
      %v11422 = vshrl.u32 %v11421, 7
      %v11423 = vsub.s32 %v11420, %v11422
      %v11424 = vrot.slane %v11416, %v11423
      %v11426 = vunpack.c.l.s4 1983009808
      %v11427 = vunpack.c.0.s8 %v11426
      %v11428 = vlaneseq
      %v11429 = vshrl.u32 %v11428, 7
      %v11430 = vsub.s32 %v11427, %v11429
      %v11431 = vrot.slane %v11417, %v11430
      %v11432 = vcombine.low %v11267, %v11271
      %v11433 = vcombine.high %v11267, %v11271
      %v11435 = vunpack.c.l.s4 1983009808
      %v11436 = vunpack.c.0.s8 %v11435
      %v11437 = vlaneseq
      %v11438 = vshrl.u32 %v11437, 7
      %v11439 = vsub.s32 %v11436, %v11438
      %v11440 = vrot.slane %v11432, %v11439
      %v11442 = vunpack.c.l.s4 1983009808
      %v11443 = vunpack.c.0.s8 %v11442
      %v11444 = vlaneseq
      %v11445 = vshrl.u32 %v11444, 7
      %v11446 = vsub.s32 %v11443, %v11445
      %v11447 = vrot.slane %v11433, %v11446
      %v11448 = vcombine.low %v11273, %v11277
      %v11449 = vcombine.high %v11273, %v11277
      %v11451 = vunpack.c.l.s4 1983009808
      %v11452 = vunpack.c.0.s8 %v11451
      %v11453 = vlaneseq
      %v11454 = vshrl.u32 %v11453, 7
      %v11455 = vsub.s32 %v11452, %v11454
      %v11456 = vrot.slane %v11448, %v11455
      %v11458 = vunpack.c.l.s4 1983009808
      %v11459 = vunpack.c.0.s8 %v11458
      %v11460 = vlaneseq
      %v11461 = vshrl.u32 %v11460, 7
      %v11462 = vsub.s32 %v11459, %v11461
      %v11463 = vrot.slane %v11449, %v11462
      %v11464 = vcombine.low %v11275, %v11279
      %v11465 = vcombine.high %v11275, %v11279
      %v11467 = vunpack.c.l.s4 1983009808
      %v11468 = vunpack.c.0.s8 %v11467
      %v11469 = vlaneseq
      %v11470 = vshrl.u32 %v11469, 7
      %v11471 = vsub.s32 %v11468, %v11470
      %v11472 = vrot.slane %v11464, %v11471
      %v11474 = vunpack.c.l.s4 1983009808
      %v11475 = vunpack.c.0.s8 %v11474
      %v11476 = vlaneseq
      %v11477 = vshrl.u32 %v11476, 7
      %v11478 = vsub.s32 %v11475, %v11477
      %v11479 = vrot.slane %v11465, %v11478
      %v11480 = vcombine.low %v11424, %v11440
      %v11481 = vcombine.high %v11424, %v11440
      %v11483 = vunpack.c.l.s4 1934713408
      %v11484 = vunpack.c.0.s8 %v11483
      %v11485 = vlaneseq
      %v11486 = vshrl.u32 %v11485, 7
      %v11487 = vsub.s32 %v11484, %v11486
      %v11488 = vrot.slane %v11480, %v11487
      %v11490 = vunpack.c.l.s4 1934713408
      %v11491 = vunpack.c.0.s8 %v11490
      %v11492 = vlaneseq
      %v11493 = vshrl.u32 %v11492, 7
      %v11494 = vsub.s32 %v11491, %v11493
      %v11495 = vrot.slane %v11481, %v11494
      %v11496 = vcombine.low %v11431, %v11447
      %v11497 = vcombine.high %v11431, %v11447
      %v11499 = vunpack.c.l.s4 1934713408
      %v11500 = vunpack.c.0.s8 %v11499
      %v11501 = vlaneseq
      %v11502 = vshrl.u32 %v11501, 7
      %v11503 = vsub.s32 %v11500, %v11502
      %v11504 = vrot.slane %v11496, %v11503
      %v11506 = vunpack.c.l.s4 1934713408
      %v11507 = vunpack.c.0.s8 %v11506
      %v11508 = vlaneseq
      %v11509 = vshrl.u32 %v11508, 7
      %v11510 = vsub.s32 %v11507, %v11509
      %v11511 = vrot.slane %v11497, %v11510
      %v11512 = vcombine.low %v11456, %v11472
      %v11513 = vcombine.high %v11456, %v11472
      %v11515 = vunpack.c.l.s4 1934713408
      %v11516 = vunpack.c.0.s8 %v11515
      %v11517 = vlaneseq
      %v11518 = vshrl.u32 %v11517, 7
      %v11519 = vsub.s32 %v11516, %v11518
      %v11520 = vrot.slane %v11512, %v11519
      %v11522 = vunpack.c.l.s4 1934713408
      %v11523 = vunpack.c.0.s8 %v11522
      %v11524 = vlaneseq
      %v11525 = vshrl.u32 %v11524, 7
      %v11526 = vsub.s32 %v11523, %v11525
      %v11527 = vrot.slane %v11513, %v11526
      %v11528 = vcombine.low %v11463, %v11479
      %v11529 = vcombine.high %v11463, %v11479
      %v11531 = vunpack.c.l.s4 1934713408
      %v11532 = vunpack.c.0.s8 %v11531
      %v11533 = vlaneseq
      %v11534 = vshrl.u32 %v11533, 7
      %v11535 = vsub.s32 %v11532, %v11534
      %v11536 = vrot.slane %v11528, %v11535
      %v11538 = vunpack.c.l.s4 1934713408
      %v11539 = vunpack.c.0.s8 %v11538
      %v11540 = vlaneseq
      %v11541 = vshrl.u32 %v11540, 7
      %v11542 = vsub.s32 %v11539, %v11541
      %v11543 = vrot.slane %v11529, %v11542
      %v11544 = vcombine.low %v11488, %v11520
      %v11545 = vcombine.high %v11488, %v11520
      %v11546 = vcombine.low %v11495, %v11527
      %v11547 = vcombine.high %v11495, %v11527
      %v11548 = vcombine.low %v11504, %v11536
      %v11549 = vcombine.high %v11504, %v11536
      %v11550 = vcombine.low %v11511, %v11543
      %v11551 = vcombine.high %v11511, %v11543
      %11553 = vrot.lane.b32.xlu0 %v11409, 16
      %v11554 = vpop.permute.xlu0 %11553
      %11557 = vrot.lane.b32.xlu0 %v11410, 32
      %v11558 = vpop.permute.xlu0 %11557
      %11561 = vrot.lane.b32.xlu0 %v11411, 48
      %v11562 = vpop.permute.xlu0 %11561
      %11565 = vrot.lane.b32.xlu0 %v11412, 64
      %v11566 = vpop.permute.xlu0 %11565
      %11569 = vrot.lane.b32.xlu0 %v11413, 80
      %v11570 = vpop.permute.xlu0 %11569
      %11573 = vrot.lane.b32.xlu0 %v11414, 96
      %v11574 = vpop.permute.xlu0 %11573
      %11577 = vrot.lane.b32.xlu0 %v11415, 112
      %v11578 = vpop.permute.xlu0 %11577
      %11581 = vrot.lane.b32.xlu0 %v11545, 16
      %v11582 = vpop.permute.xlu0 %11581
      %11585 = vrot.lane.b32.xlu0 %v11546, 32
      %v11586 = vpop.permute.xlu0 %11585
      %11589 = vrot.lane.b32.xlu0 %v11547, 48
      %v11590 = vpop.permute.xlu0 %11589
      %11593 = vrot.lane.b32.xlu0 %v11548, 64
      %v11594 = vpop.permute.xlu0 %11593
      %11597 = vrot.lane.b32.xlu0 %v11549, 80
      %v11598 = vpop.permute.xlu0 %11597
      %11601 = vrot.lane.b32.xlu0 %v11550, 96
      %v11602 = vpop.permute.xlu0 %11601
      %11605 = vrot.lane.b32.xlu0 %v11551, 112
      %v11606 = vpop.permute.xlu0 %11605
      %v11608 = vsel %vm1182, %v11408, %v11554
      %v11609 = vsel %vm1184, %v11608, %v11558
      %v11610 = vsel %vm1186, %v11609, %v11562
      %v11611 = vsel %vm1188, %v11610, %v11566
      %v11612 = vsel %vm1190, %v11611, %v11570
      %v11613 = vsel %vm1192, %v11612, %v11574
      %v11614 = vsel %vm1194, %v11613, %v11578
      %v11615 = vsel %vm1182, %v11544, %v11582
      %v11616 = vsel %vm1184, %v11615, %v11586
      %v11617 = vsel %vm1186, %v11616, %v11590
      %v11618 = vsel %vm1188, %v11617, %v11594
      %v11619 = vsel %vm1190, %v11618, %v11598
      %v11620 = vsel %vm1192, %v11619, %v11602
      %v11621 = vsel %vm1194, %v11620, %v11606
      %11622 = vst [vmem:[#allocation3 + $0x60] sm:$0xff] %v11614
      %11623 = vst [vmem:[#allocation3 + $0x68] sm:$0xff] %v11621
      %v11624 = vld [vmem:[#allocation2 + $0x2] sm:$0xff]
      %v11625 = vld [vmem:[#allocation2 + $0xa] sm:$0xff]
      %v11626 = vld [vmem:[#allocation2 + $0x1a] sm:$0xff]
      %v11627 = vld [vmem:[#allocation2 + $0x22] sm:$0xff]
      %v11628 = vld [vmem:[#allocation2 + $0x32] sm:$0xff]
      %v11629 = vld [vmem:[#allocation2 + $0x3a] sm:$0xff]
      %v11630 = vld [vmem:[#allocation2 + $0x4a] sm:$0xff]
      %v11631 = vld [vmem:[#allocation2 + $0x52] sm:$0xff]
      %v11632 = vld [vmem:[#allocation2 + $0x62] sm:$0xff]
      %v11633 = vld [vmem:[#allocation2 + $0x6a] sm:$0xff]
      %v11634 = vld [vmem:[#allocation2 + $0x7a] sm:$0xff]
      %v11635 = vld [vmem:[#allocation2 + $0x82] sm:$0xff]
      %v11636 = vld [vmem:[#allocation2 + $0x92] sm:$0xff]
      %v11637 = vld [vmem:[#allocation2 + $0x9a] sm:$0xff]
      %v11638 = vld [vmem:[#allocation2 + $0xaa] sm:$0xff]
      %v11639 = vld [vmem:[#allocation2 + $0xb2] sm:$0xff]
      %11656 = vrot.lane.b32.xlu0 %v11624, 127
      %v11657 = vpop.permute.xlu0 %11656
      %11658 = vrot.lane.b32.xlu0 %v11625, 127
      %v11659 = vpop.permute.xlu0 %11658
      %11660 = vrot.lane.b32.xlu0 %v11626, 127
      %v11661 = vpop.permute.xlu0 %11660
      %11662 = vrot.lane.b32.xlu0 %v11627, 127
      %v11663 = vpop.permute.xlu0 %11662
      %11664 = vrot.lane.b32.xlu0 %v11628, 127
      %v11665 = vpop.permute.xlu0 %11664
      %11666 = vrot.lane.b32.xlu0 %v11629, 127
      %v11667 = vpop.permute.xlu0 %11666
      %11668 = vrot.lane.b32.xlu0 %v11630, 127
      %v11669 = vpop.permute.xlu0 %11668
      %11670 = vrot.lane.b32.xlu0 %v11631, 127
      %v11671 = vpop.permute.xlu0 %11670
      %11672 = vrot.lane.b32.xlu0 %v11632, 127
      %v11673 = vpop.permute.xlu0 %11672
      %11674 = vrot.lane.b32.xlu0 %v11633, 127
      %v11675 = vpop.permute.xlu0 %11674
      %11676 = vrot.lane.b32.xlu0 %v11634, 127
      %v11677 = vpop.permute.xlu0 %11676
      %11678 = vrot.lane.b32.xlu0 %v11635, 127
      %v11679 = vpop.permute.xlu0 %11678
      %11680 = vrot.lane.b32.xlu0 %v11636, 127
      %v11681 = vpop.permute.xlu0 %11680
      %11682 = vrot.lane.b32.xlu0 %v11637, 127
      %v11683 = vpop.permute.xlu0 %11682
      %11684 = vrot.lane.b32.xlu0 %v11638, 127
      %v11685 = vpop.permute.xlu0 %11684
      %11686 = vrot.lane.b32.xlu0 %v11639, 127
      %v11687 = vpop.permute.xlu0 %11686
      %v11704 = vcombine.low %v11657, %v11665
      %v11705 = vcombine.high %v11657, %v11665
      %v11707 = vunpack.c.l.s4 1983009808
      %v11708 = vunpack.c.0.s8 %v11707
      %v11709 = vlaneseq
      %v11710 = vshrl.u32 %v11709, 7
      %v11711 = vsub.s32 %v11708, %v11710
      %v11712 = vrot.slane %v11704, %v11711
      %v11714 = vunpack.c.l.s4 1983009808
      %v11715 = vunpack.c.0.s8 %v11714
      %v11716 = vlaneseq
      %v11717 = vshrl.u32 %v11716, 7
      %v11718 = vsub.s32 %v11715, %v11717
      %v11719 = vrot.slane %v11705, %v11718
      %v11720 = vcombine.low %v11661, %v11669
      %v11721 = vcombine.high %v11661, %v11669
      %v11723 = vunpack.c.l.s4 1983009808
      %v11724 = vunpack.c.0.s8 %v11723
      %v11725 = vlaneseq
      %v11726 = vshrl.u32 %v11725, 7
      %v11727 = vsub.s32 %v11724, %v11726
      %v11728 = vrot.slane %v11720, %v11727
      %v11730 = vunpack.c.l.s4 1983009808
      %v11731 = vunpack.c.0.s8 %v11730
      %v11732 = vlaneseq
      %v11733 = vshrl.u32 %v11732, 7
      %v11734 = vsub.s32 %v11731, %v11733
      %v11735 = vrot.slane %v11721, %v11734
      %v11736 = vcombine.low %v11673, %v11681
      %v11737 = vcombine.high %v11673, %v11681
      %v11739 = vunpack.c.l.s4 1983009808
      %v11740 = vunpack.c.0.s8 %v11739
      %v11741 = vlaneseq
      %v11742 = vshrl.u32 %v11741, 7
      %v11743 = vsub.s32 %v11740, %v11742
      %v11744 = vrot.slane %v11736, %v11743
      %v11746 = vunpack.c.l.s4 1983009808
      %v11747 = vunpack.c.0.s8 %v11746
      %v11748 = vlaneseq
      %v11749 = vshrl.u32 %v11748, 7
      %v11750 = vsub.s32 %v11747, %v11749
      %v11751 = vrot.slane %v11737, %v11750
      %v11752 = vcombine.low %v11677, %v11685
      %v11753 = vcombine.high %v11677, %v11685
      %v11755 = vunpack.c.l.s4 1983009808
      %v11756 = vunpack.c.0.s8 %v11755
      %v11757 = vlaneseq
      %v11758 = vshrl.u32 %v11757, 7
      %v11759 = vsub.s32 %v11756, %v11758
      %v11760 = vrot.slane %v11752, %v11759
      %v11762 = vunpack.c.l.s4 1983009808
      %v11763 = vunpack.c.0.s8 %v11762
      %v11764 = vlaneseq
      %v11765 = vshrl.u32 %v11764, 7
      %v11766 = vsub.s32 %v11763, %v11765
      %v11767 = vrot.slane %v11753, %v11766
      %v11768 = vcombine.low %v11712, %v11728
      %v11769 = vcombine.high %v11712, %v11728
      %v11771 = vunpack.c.l.s4 1934713408
      %v11772 = vunpack.c.0.s8 %v11771
      %v11773 = vlaneseq
      %v11774 = vshrl.u32 %v11773, 7
      %v11775 = vsub.s32 %v11772, %v11774
      %v11776 = vrot.slane %v11768, %v11775
      %v11778 = vunpack.c.l.s4 1934713408
      %v11779 = vunpack.c.0.s8 %v11778
      %v11780 = vlaneseq
      %v11781 = vshrl.u32 %v11780, 7
      %v11782 = vsub.s32 %v11779, %v11781
      %v11783 = vrot.slane %v11769, %v11782
      %v11784 = vcombine.low %v11719, %v11735
      %v11785 = vcombine.high %v11719, %v11735
      %v11787 = vunpack.c.l.s4 1934713408
      %v11788 = vunpack.c.0.s8 %v11787
      %v11789 = vlaneseq
      %v11790 = vshrl.u32 %v11789, 7
      %v11791 = vsub.s32 %v11788, %v11790
      %v11792 = vrot.slane %v11784, %v11791
      %v11794 = vunpack.c.l.s4 1934713408
      %v11795 = vunpack.c.0.s8 %v11794
      %v11796 = vlaneseq
      %v11797 = vshrl.u32 %v11796, 7
      %v11798 = vsub.s32 %v11795, %v11797
      %v11799 = vrot.slane %v11785, %v11798
      %v11800 = vcombine.low %v11744, %v11760
      %v11801 = vcombine.high %v11744, %v11760
      %v11803 = vunpack.c.l.s4 1934713408
      %v11804 = vunpack.c.0.s8 %v11803
      %v11805 = vlaneseq
      %v11806 = vshrl.u32 %v11805, 7
      %v11807 = vsub.s32 %v11804, %v11806
      %v11808 = vrot.slane %v11800, %v11807
      %v11810 = vunpack.c.l.s4 1934713408
      %v11811 = vunpack.c.0.s8 %v11810
      %v11812 = vlaneseq
      %v11813 = vshrl.u32 %v11812, 7
      %v11814 = vsub.s32 %v11811, %v11813
      %v11815 = vrot.slane %v11801, %v11814
      %v11816 = vcombine.low %v11751, %v11767
      %v11817 = vcombine.high %v11751, %v11767
      %v11819 = vunpack.c.l.s4 1934713408
      %v11820 = vunpack.c.0.s8 %v11819
      %v11821 = vlaneseq
      %v11822 = vshrl.u32 %v11821, 7
      %v11823 = vsub.s32 %v11820, %v11822
      %v11824 = vrot.slane %v11816, %v11823
      %v11826 = vunpack.c.l.s4 1934713408
      %v11827 = vunpack.c.0.s8 %v11826
      %v11828 = vlaneseq
      %v11829 = vshrl.u32 %v11828, 7
      %v11830 = vsub.s32 %v11827, %v11829
      %v11831 = vrot.slane %v11817, %v11830
      %v11832 = vcombine.low %v11776, %v11808
      %v11833 = vcombine.high %v11776, %v11808
      %v11834 = vcombine.low %v11783, %v11815
      %v11835 = vcombine.high %v11783, %v11815
      %v11836 = vcombine.low %v11792, %v11824
      %v11837 = vcombine.high %v11792, %v11824
      %v11838 = vcombine.low %v11799, %v11831
      %v11839 = vcombine.high %v11799, %v11831
      %v11840 = vcombine.low %v11659, %v11667
      %v11841 = vcombine.high %v11659, %v11667
      %v11843 = vunpack.c.l.s4 1983009808
      %v11844 = vunpack.c.0.s8 %v11843
      %v11845 = vlaneseq
      %v11846 = vshrl.u32 %v11845, 7
      %v11847 = vsub.s32 %v11844, %v11846
      %v11848 = vrot.slane %v11840, %v11847
      %v11850 = vunpack.c.l.s4 1983009808
      %v11851 = vunpack.c.0.s8 %v11850
      %v11852 = vlaneseq
      %v11853 = vshrl.u32 %v11852, 7
      %v11854 = vsub.s32 %v11851, %v11853
      %v11855 = vrot.slane %v11841, %v11854
      %v11856 = vcombine.low %v11663, %v11671
      %v11857 = vcombine.high %v11663, %v11671
      %v11859 = vunpack.c.l.s4 1983009808
      %v11860 = vunpack.c.0.s8 %v11859
      %v11861 = vlaneseq
      %v11862 = vshrl.u32 %v11861, 7
      %v11863 = vsub.s32 %v11860, %v11862
      %v11864 = vrot.slane %v11856, %v11863
      %v11866 = vunpack.c.l.s4 1983009808
      %v11867 = vunpack.c.0.s8 %v11866
      %v11868 = vlaneseq
      %v11869 = vshrl.u32 %v11868, 7
      %v11870 = vsub.s32 %v11867, %v11869
      %v11871 = vrot.slane %v11857, %v11870
      %v11872 = vcombine.low %v11675, %v11683
      %v11873 = vcombine.high %v11675, %v11683
      %v11875 = vunpack.c.l.s4 1983009808
      %v11876 = vunpack.c.0.s8 %v11875
      %v11877 = vlaneseq
      %v11878 = vshrl.u32 %v11877, 7
      %v11879 = vsub.s32 %v11876, %v11878
      %v11880 = vrot.slane %v11872, %v11879
      %v11882 = vunpack.c.l.s4 1983009808
      %v11883 = vunpack.c.0.s8 %v11882
      %v11884 = vlaneseq
      %v11885 = vshrl.u32 %v11884, 7
      %v11886 = vsub.s32 %v11883, %v11885
      %v11887 = vrot.slane %v11873, %v11886
      %v11888 = vcombine.low %v11679, %v11687
      %v11889 = vcombine.high %v11679, %v11687
      %v11891 = vunpack.c.l.s4 1983009808
      %v11892 = vunpack.c.0.s8 %v11891
      %v11893 = vlaneseq
      %v11894 = vshrl.u32 %v11893, 7
      %v11895 = vsub.s32 %v11892, %v11894
      %v11896 = vrot.slane %v11888, %v11895
      %v11898 = vunpack.c.l.s4 1983009808
      %v11899 = vunpack.c.0.s8 %v11898
      %v11900 = vlaneseq
      %v11901 = vshrl.u32 %v11900, 7
      %v11902 = vsub.s32 %v11899, %v11901
      %v11903 = vrot.slane %v11889, %v11902
      %v11904 = vcombine.low %v11848, %v11864
      %v11905 = vcombine.high %v11848, %v11864
      %v11907 = vunpack.c.l.s4 1934713408
      %v11908 = vunpack.c.0.s8 %v11907
      %v11909 = vlaneseq
      %v11910 = vshrl.u32 %v11909, 7
      %v11911 = vsub.s32 %v11908, %v11910
      %v11912 = vrot.slane %v11904, %v11911
      %v11914 = vunpack.c.l.s4 1934713408
      %v11915 = vunpack.c.0.s8 %v11914
      %v11916 = vlaneseq
      %v11917 = vshrl.u32 %v11916, 7
      %v11918 = vsub.s32 %v11915, %v11917
      %v11919 = vrot.slane %v11905, %v11918
      %v11920 = vcombine.low %v11855, %v11871
      %v11921 = vcombine.high %v11855, %v11871
      %v11923 = vunpack.c.l.s4 1934713408
      %v11924 = vunpack.c.0.s8 %v11923
      %v11925 = vlaneseq
      %v11926 = vshrl.u32 %v11925, 7
      %v11927 = vsub.s32 %v11924, %v11926
      %v11928 = vrot.slane %v11920, %v11927
      %v11930 = vunpack.c.l.s4 1934713408
      %v11931 = vunpack.c.0.s8 %v11930
      %v11932 = vlaneseq
      %v11933 = vshrl.u32 %v11932, 7
      %v11934 = vsub.s32 %v11931, %v11933
      %v11935 = vrot.slane %v11921, %v11934
      %v11936 = vcombine.low %v11880, %v11896
      %v11937 = vcombine.high %v11880, %v11896
      %v11939 = vunpack.c.l.s4 1934713408
      %v11940 = vunpack.c.0.s8 %v11939
      %v11941 = vlaneseq
      %v11942 = vshrl.u32 %v11941, 7
      %v11943 = vsub.s32 %v11940, %v11942
      %v11944 = vrot.slane %v11936, %v11943
      %v11946 = vunpack.c.l.s4 1934713408
      %v11947 = vunpack.c.0.s8 %v11946
      %v11948 = vlaneseq
      %v11949 = vshrl.u32 %v11948, 7
      %v11950 = vsub.s32 %v11947, %v11949
      %v11951 = vrot.slane %v11937, %v11950
      %v11952 = vcombine.low %v11887, %v11903
      %v11953 = vcombine.high %v11887, %v11903
      %v11955 = vunpack.c.l.s4 1934713408
      %v11956 = vunpack.c.0.s8 %v11955
      %v11957 = vlaneseq
      %v11958 = vshrl.u32 %v11957, 7
      %v11959 = vsub.s32 %v11956, %v11958
      %v11960 = vrot.slane %v11952, %v11959
      %v11962 = vunpack.c.l.s4 1934713408
      %v11963 = vunpack.c.0.s8 %v11962
      %v11964 = vlaneseq
      %v11965 = vshrl.u32 %v11964, 7
      %v11966 = vsub.s32 %v11963, %v11965
      %v11967 = vrot.slane %v11953, %v11966
      %v11968 = vcombine.low %v11912, %v11944
      %v11969 = vcombine.high %v11912, %v11944
      %v11970 = vcombine.low %v11919, %v11951
      %v11971 = vcombine.high %v11919, %v11951
      %v11972 = vcombine.low %v11928, %v11960
      %v11973 = vcombine.high %v11928, %v11960
      %v11974 = vcombine.low %v11935, %v11967
      %v11975 = vcombine.high %v11935, %v11967
      %11977 = vrot.lane.b32.xlu0 %v11833, 16
      %v11978 = vpop.permute.xlu0 %11977
      %11981 = vrot.lane.b32.xlu0 %v11834, 32
      %v11982 = vpop.permute.xlu0 %11981
      %11985 = vrot.lane.b32.xlu0 %v11835, 48
      %v11986 = vpop.permute.xlu0 %11985
      %11989 = vrot.lane.b32.xlu0 %v11836, 64
      %v11990 = vpop.permute.xlu0 %11989
      %11993 = vrot.lane.b32.xlu0 %v11837, 80
      %v11994 = vpop.permute.xlu0 %11993
      %11997 = vrot.lane.b32.xlu0 %v11838, 96
      %v11998 = vpop.permute.xlu0 %11997
      %12001 = vrot.lane.b32.xlu0 %v11839, 112
      %v12002 = vpop.permute.xlu0 %12001
      %12005 = vrot.lane.b32.xlu0 %v11969, 16
      %v12006 = vpop.permute.xlu0 %12005
      %12009 = vrot.lane.b32.xlu0 %v11970, 32
      %v12010 = vpop.permute.xlu0 %12009
      %12013 = vrot.lane.b32.xlu0 %v11971, 48
      %v12014 = vpop.permute.xlu0 %12013
      %12017 = vrot.lane.b32.xlu0 %v11972, 64
      %v12018 = vpop.permute.xlu0 %12017
      %12021 = vrot.lane.b32.xlu0 %v11973, 80
      %v12022 = vpop.permute.xlu0 %12021
      %12025 = vrot.lane.b32.xlu0 %v11974, 96
      %v12026 = vpop.permute.xlu0 %12025
      %12029 = vrot.lane.b32.xlu0 %v11975, 112
      %v12030 = vpop.permute.xlu0 %12029
      %v12032 = vsel %vm1182, %v11832, %v11978
      %v12033 = vsel %vm1184, %v12032, %v11982
      %v12034 = vsel %vm1186, %v12033, %v11986
      %v12035 = vsel %vm1188, %v12034, %v11990
      %v12036 = vsel %vm1190, %v12035, %v11994
      %v12037 = vsel %vm1192, %v12036, %v11998
      %v12038 = vsel %vm1194, %v12037, %v12002
      %v12039 = vsel %vm1182, %v11968, %v12006
      %v12040 = vsel %vm1184, %v12039, %v12010
      %v12041 = vsel %vm1186, %v12040, %v12014
      %v12042 = vsel %vm1188, %v12041, %v12018
      %v12043 = vsel %vm1190, %v12042, %v12022
      %v12044 = vsel %vm1192, %v12043, %v12026
      %v12045 = vsel %vm1194, %v12044, %v12030
      %12046 = vst [vmem:[#allocation3 + $0x70] sm:$0xff] %v12038
      %12047 = vst [vmem:[#allocation3 + $0x78] sm:$0xff] %v12045
      %v12048 = vld [vmem:[#allocation2 + $0x2] sm:$0xff]
      %v12049 = vld [vmem:[#allocation2 + $0xa] sm:$0xff]
      %v12050 = vld [vmem:[#allocation2 + $0x1a] sm:$0xff]
      %v12051 = vld [vmem:[#allocation2 + $0x22] sm:$0xff]
      %v12052 = vld [vmem:[#allocation2 + $0x32] sm:$0xff]
      %v12053 = vld [vmem:[#allocation2 + $0x3a] sm:$0xff]
      %v12054 = vld [vmem:[#allocation2 + $0x4a] sm:$0xff]
      %v12055 = vld [vmem:[#allocation2 + $0x52] sm:$0xff]
      %v12056 = vld [vmem:[#allocation2 + $0x62] sm:$0xff]
      %v12057 = vld [vmem:[#allocation2 + $0x6a] sm:$0xff]
      %v12058 = vld [vmem:[#allocation2 + $0x7a] sm:$0xff]
      %v12059 = vld [vmem:[#allocation2 + $0x82] sm:$0xff]
      %v12060 = vld [vmem:[#allocation2 + $0x92] sm:$0xff]
      %v12061 = vld [vmem:[#allocation2 + $0x9a] sm:$0xff]
      %v12062 = vld [vmem:[#allocation2 + $0xaa] sm:$0xff]
      %v12063 = vld [vmem:[#allocation2 + $0xb2] sm:$0xff]
      %12080 = vrot.lane.b32.xlu0 %v12048, 126
      %v12081 = vpop.permute.xlu0 %12080
      %12082 = vrot.lane.b32.xlu0 %v12049, 126
      %v12083 = vpop.permute.xlu0 %12082
      %12084 = vrot.lane.b32.xlu0 %v12050, 126
      %v12085 = vpop.permute.xlu0 %12084
      %12086 = vrot.lane.b32.xlu0 %v12051, 126
      %v12087 = vpop.permute.xlu0 %12086
      %12088 = vrot.lane.b32.xlu0 %v12052, 126
      %v12089 = vpop.permute.xlu0 %12088
      %12090 = vrot.lane.b32.xlu0 %v12053, 126
      %v12091 = vpop.permute.xlu0 %12090
      %12092 = vrot.lane.b32.xlu0 %v12054, 126
      %v12093 = vpop.permute.xlu0 %12092
      %12094 = vrot.lane.b32.xlu0 %v12055, 126
      %v12095 = vpop.permute.xlu0 %12094
      %12096 = vrot.lane.b32.xlu0 %v12056, 126
      %v12097 = vpop.permute.xlu0 %12096
      %12098 = vrot.lane.b32.xlu0 %v12057, 126
      %v12099 = vpop.permute.xlu0 %12098
      %12100 = vrot.lane.b32.xlu0 %v12058, 126
      %v12101 = vpop.permute.xlu0 %12100
      %12102 = vrot.lane.b32.xlu0 %v12059, 126
      %v12103 = vpop.permute.xlu0 %12102
      %12104 = vrot.lane.b32.xlu0 %v12060, 126
      %v12105 = vpop.permute.xlu0 %12104
      %12106 = vrot.lane.b32.xlu0 %v12061, 126
      %v12107 = vpop.permute.xlu0 %12106
      %12108 = vrot.lane.b32.xlu0 %v12062, 126
      %v12109 = vpop.permute.xlu0 %12108
      %12110 = vrot.lane.b32.xlu0 %v12063, 126
      %v12111 = vpop.permute.xlu0 %12110
      %v12128 = vcombine.low %v12081, %v12089
      %v12129 = vcombine.high %v12081, %v12089
      %v12131 = vunpack.c.l.s4 1983009808
      %v12132 = vunpack.c.0.s8 %v12131
      %v12133 = vlaneseq
      %v12134 = vshrl.u32 %v12133, 7
      %v12135 = vsub.s32 %v12132, %v12134
      %v12136 = vrot.slane %v12128, %v12135
      %v12138 = vunpack.c.l.s4 1983009808
      %v12139 = vunpack.c.0.s8 %v12138
      %v12140 = vlaneseq
      %v12141 = vshrl.u32 %v12140, 7
      %v12142 = vsub.s32 %v12139, %v12141
      %v12143 = vrot.slane %v12129, %v12142
      %v12144 = vcombine.low %v12085, %v12093
      %v12145 = vcombine.high %v12085, %v12093
      %v12147 = vunpack.c.l.s4 1983009808
      %v12148 = vunpack.c.0.s8 %v12147
      %v12149 = vlaneseq
      %v12150 = vshrl.u32 %v12149, 7
      %v12151 = vsub.s32 %v12148, %v12150
      %v12152 = vrot.slane %v12144, %v12151
      %v12154 = vunpack.c.l.s4 1983009808
      %v12155 = vunpack.c.0.s8 %v12154
      %v12156 = vlaneseq
      %v12157 = vshrl.u32 %v12156, 7
      %v12158 = vsub.s32 %v12155, %v12157
      %v12159 = vrot.slane %v12145, %v12158
      %v12160 = vcombine.low %v12097, %v12105
      %v12161 = vcombine.high %v12097, %v12105
      %v12163 = vunpack.c.l.s4 1983009808
      %v12164 = vunpack.c.0.s8 %v12163
      %v12165 = vlaneseq
      %v12166 = vshrl.u32 %v12165, 7
      %v12167 = vsub.s32 %v12164, %v12166
      %v12168 = vrot.slane %v12160, %v12167
      %v12170 = vunpack.c.l.s4 1983009808
      %v12171 = vunpack.c.0.s8 %v12170
      %v12172 = vlaneseq
      %v12173 = vshrl.u32 %v12172, 7
      %v12174 = vsub.s32 %v12171, %v12173
      %v12175 = vrot.slane %v12161, %v12174
      %v12176 = vcombine.low %v12101, %v12109
      %v12177 = vcombine.high %v12101, %v12109
      %v12179 = vunpack.c.l.s4 1983009808
      %v12180 = vunpack.c.0.s8 %v12179
      %v12181 = vlaneseq
      %v12182 = vshrl.u32 %v12181, 7
      %v12183 = vsub.s32 %v12180, %v12182
      %v12184 = vrot.slane %v12176, %v12183
      %v12186 = vunpack.c.l.s4 1983009808
      %v12187 = vunpack.c.0.s8 %v12186
      %v12188 = vlaneseq
      %v12189 = vshrl.u32 %v12188, 7
      %v12190 = vsub.s32 %v12187, %v12189
      %v12191 = vrot.slane %v12177, %v12190
      %v12192 = vcombine.low %v12136, %v12152
      %v12193 = vcombine.high %v12136, %v12152
      %v12195 = vunpack.c.l.s4 1934713408
      %v12196 = vunpack.c.0.s8 %v12195
      %v12197 = vlaneseq
      %v12198 = vshrl.u32 %v12197, 7
      %v12199 = vsub.s32 %v12196, %v12198
      %v12200 = vrot.slane %v12192, %v12199
      %v12202 = vunpack.c.l.s4 1934713408
      %v12203 = vunpack.c.0.s8 %v12202
      %v12204 = vlaneseq
      %v12205 = vshrl.u32 %v12204, 7
      %v12206 = vsub.s32 %v12203, %v12205
      %v12207 = vrot.slane %v12193, %v12206
      %v12208 = vcombine.low %v12143, %v12159
      %v12209 = vcombine.high %v12143, %v12159
      %v12211 = vunpack.c.l.s4 1934713408
      %v12212 = vunpack.c.0.s8 %v12211
      %v12213 = vlaneseq
      %v12214 = vshrl.u32 %v12213, 7
      %v12215 = vsub.s32 %v12212, %v12214
      %v12216 = vrot.slane %v12208, %v12215
      %v12218 = vunpack.c.l.s4 1934713408
      %v12219 = vunpack.c.0.s8 %v12218
      %v12220 = vlaneseq
      %v12221 = vshrl.u32 %v12220, 7
      %v12222 = vsub.s32 %v12219, %v12221
      %v12223 = vrot.slane %v12209, %v12222
      %v12224 = vcombine.low %v12168, %v12184
      %v12225 = vcombine.high %v12168, %v12184
      %v12227 = vunpack.c.l.s4 1934713408
      %v12228 = vunpack.c.0.s8 %v12227
      %v12229 = vlaneseq
      %v12230 = vshrl.u32 %v12229, 7
      %v12231 = vsub.s32 %v12228, %v12230
      %v12232 = vrot.slane %v12224, %v12231
      %v12234 = vunpack.c.l.s4 1934713408
      %v12235 = vunpack.c.0.s8 %v12234
      %v12236 = vlaneseq
      %v12237 = vshrl.u32 %v12236, 7
      %v12238 = vsub.s32 %v12235, %v12237
      %v12239 = vrot.slane %v12225, %v12238
      %v12240 = vcombine.low %v12175, %v12191
      %v12241 = vcombine.high %v12175, %v12191
      %v12243 = vunpack.c.l.s4 1934713408
      %v12244 = vunpack.c.0.s8 %v12243
      %v12245 = vlaneseq
      %v12246 = vshrl.u32 %v12245, 7
      %v12247 = vsub.s32 %v12244, %v12246
      %v12248 = vrot.slane %v12240, %v12247
      %v12250 = vunpack.c.l.s4 1934713408
      %v12251 = vunpack.c.0.s8 %v12250
      %v12252 = vlaneseq
      %v12253 = vshrl.u32 %v12252, 7
      %v12254 = vsub.s32 %v12251, %v12253
      %v12255 = vrot.slane %v12241, %v12254
      %v12256 = vcombine.low %v12200, %v12232
      %v12257 = vcombine.high %v12200, %v12232
      %v12258 = vcombine.low %v12207, %v12239
      %v12259 = vcombine.high %v12207, %v12239
      %v12260 = vcombine.low %v12216, %v12248
      %v12261 = vcombine.high %v12216, %v12248
      %v12262 = vcombine.low %v12223, %v12255
      %v12263 = vcombine.high %v12223, %v12255
      %v12264 = vcombine.low %v12083, %v12091
      %v12265 = vcombine.high %v12083, %v12091
      %v12267 = vunpack.c.l.s4 1983009808
      %v12268 = vunpack.c.0.s8 %v12267
      %v12269 = vlaneseq
      %v12270 = vshrl.u32 %v12269, 7
      %v12271 = vsub.s32 %v12268, %v12270
      %v12272 = vrot.slane %v12264, %v12271
      %v12274 = vunpack.c.l.s4 1983009808
      %v12275 = vunpack.c.0.s8 %v12274
      %v12276 = vlaneseq
      %v12277 = vshrl.u32 %v12276, 7
      %v12278 = vsub.s32 %v12275, %v12277
      %v12279 = vrot.slane %v12265, %v12278
      %v12280 = vcombine.low %v12087, %v12095
      %v12281 = vcombine.high %v12087, %v12095
      %v12283 = vunpack.c.l.s4 1983009808
      %v12284 = vunpack.c.0.s8 %v12283
      %v12285 = vlaneseq
      %v12286 = vshrl.u32 %v12285, 7
      %v12287 = vsub.s32 %v12284, %v12286
      %v12288 = vrot.slane %v12280, %v12287
      %v12290 = vunpack.c.l.s4 1983009808
      %v12291 = vunpack.c.0.s8 %v12290
      %v12292 = vlaneseq
      %v12293 = vshrl.u32 %v12292, 7
      %v12294 = vsub.s32 %v12291, %v12293
      %v12295 = vrot.slane %v12281, %v12294
      %v12296 = vcombine.low %v12099, %v12107
      %v12297 = vcombine.high %v12099, %v12107
      %v12299 = vunpack.c.l.s4 1983009808
      %v12300 = vunpack.c.0.s8 %v12299
      %v12301 = vlaneseq
      %v12302 = vshrl.u32 %v12301, 7
      %v12303 = vsub.s32 %v12300, %v12302
      %v12304 = vrot.slane %v12296, %v12303
      %v12306 = vunpack.c.l.s4 1983009808
      %v12307 = vunpack.c.0.s8 %v12306
      %v12308 = vlaneseq
      %v12309 = vshrl.u32 %v12308, 7
      %v12310 = vsub.s32 %v12307, %v12309
      %v12311 = vrot.slane %v12297, %v12310
      %v12312 = vcombine.low %v12103, %v12111
      %v12313 = vcombine.high %v12103, %v12111
      %v12315 = vunpack.c.l.s4 1983009808
      %v12316 = vunpack.c.0.s8 %v12315
      %v12317 = vlaneseq
      %v12318 = vshrl.u32 %v12317, 7
      %v12319 = vsub.s32 %v12316, %v12318
      %v12320 = vrot.slane %v12312, %v12319
      %v12322 = vunpack.c.l.s4 1983009808
      %v12323 = vunpack.c.0.s8 %v12322
      %v12324 = vlaneseq
      %v12325 = vshrl.u32 %v12324, 7
      %v12326 = vsub.s32 %v12323, %v12325
      %v12327 = vrot.slane %v12313, %v12326
      %v12328 = vcombine.low %v12272, %v12288
      %v12329 = vcombine.high %v12272, %v12288
      %v12331 = vunpack.c.l.s4 1934713408
      %v12332 = vunpack.c.0.s8 %v12331
      %v12333 = vlaneseq
      %v12334 = vshrl.u32 %v12333, 7
      %v12335 = vsub.s32 %v12332, %v12334
      %v12336 = vrot.slane %v12328, %v12335
      %v12338 = vunpack.c.l.s4 1934713408
      %v12339 = vunpack.c.0.s8 %v12338
      %v12340 = vlaneseq
      %v12341 = vshrl.u32 %v12340, 7
      %v12342 = vsub.s32 %v12339, %v12341
      %v12343 = vrot.slane %v12329, %v12342
      %v12344 = vcombine.low %v12279, %v12295
      %v12345 = vcombine.high %v12279, %v12295
      %v12347 = vunpack.c.l.s4 1934713408
      %v12348 = vunpack.c.0.s8 %v12347
      %v12349 = vlaneseq
      %v12350 = vshrl.u32 %v12349, 7
      %v12351 = vsub.s32 %v12348, %v12350
      %v12352 = vrot.slane %v12344, %v12351
      %v12354 = vunpack.c.l.s4 1934713408
      %v12355 = vunpack.c.0.s8 %v12354
      %v12356 = vlaneseq
      %v12357 = vshrl.u32 %v12356, 7
      %v12358 = vsub.s32 %v12355, %v12357
      %v12359 = vrot.slane %v12345, %v12358
      %v12360 = vcombine.low %v12304, %v12320
      %v12361 = vcombine.high %v12304, %v12320
      %v12363 = vunpack.c.l.s4 1934713408
      %v12364 = vunpack.c.0.s8 %v12363
      %v12365 = vlaneseq
      %v12366 = vshrl.u32 %v12365, 7
      %v12367 = vsub.s32 %v12364, %v12366
      %v12368 = vrot.slane %v12360, %v12367
      %v12370 = vunpack.c.l.s4 1934713408
      %v12371 = vunpack.c.0.s8 %v12370
      %v12372 = vlaneseq
      %v12373 = vshrl.u32 %v12372, 7
      %v12374 = vsub.s32 %v12371, %v12373
      %v12375 = vrot.slane %v12361, %v12374
      %v12376 = vcombine.low %v12311, %v12327
      %v12377 = vcombine.high %v12311, %v12327
      %v12379 = vunpack.c.l.s4 1934713408
      %v12380 = vunpack.c.0.s8 %v12379
      %v12381 = vlaneseq
      %v12382 = vshrl.u32 %v12381, 7
      %v12383 = vsub.s32 %v12380, %v12382
      %v12384 = vrot.slane %v12376, %v12383
      %v12386 = vunpack.c.l.s4 1934713408
      %v12387 = vunpack.c.0.s8 %v12386
      %v12388 = vlaneseq
      %v12389 = vshrl.u32 %v12388, 7
      %v12390 = vsub.s32 %v12387, %v12389
      %v12391 = vrot.slane %v12377, %v12390
      %v12392 = vcombine.low %v12336, %v12368
      %v12393 = vcombine.high %v12336, %v12368
      %v12394 = vcombine.low %v12343, %v12375
      %v12395 = vcombine.high %v12343, %v12375
      %v12396 = vcombine.low %v12352, %v12384
      %v12397 = vcombine.high %v12352, %v12384
      %v12398 = vcombine.low %v12359, %v12391
      %v12399 = vcombine.high %v12359, %v12391
      %12401 = vrot.lane.b32.xlu0 %v12257, 16
      %v12402 = vpop.permute.xlu0 %12401
      %12405 = vrot.lane.b32.xlu0 %v12258, 32
      %v12406 = vpop.permute.xlu0 %12405
      %12409 = vrot.lane.b32.xlu0 %v12259, 48
      %v12410 = vpop.permute.xlu0 %12409
      %12413 = vrot.lane.b32.xlu0 %v12260, 64
      %v12414 = vpop.permute.xlu0 %12413
      %12417 = vrot.lane.b32.xlu0 %v12261, 80
      %v12418 = vpop.permute.xlu0 %12417
      %12421 = vrot.lane.b32.xlu0 %v12262, 96
      %v12422 = vpop.permute.xlu0 %12421
      %12425 = vrot.lane.b32.xlu0 %v12263, 112
      %v12426 = vpop.permute.xlu0 %12425
      %12429 = vrot.lane.b32.xlu0 %v12393, 16
      %v12430 = vpop.permute.xlu0 %12429
      %12433 = vrot.lane.b32.xlu0 %v12394, 32
      %v12434 = vpop.permute.xlu0 %12433
      %12437 = vrot.lane.b32.xlu0 %v12395, 48
      %v12438 = vpop.permute.xlu0 %12437
      %12441 = vrot.lane.b32.xlu0 %v12396, 64
      %v12442 = vpop.permute.xlu0 %12441
      %12445 = vrot.lane.b32.xlu0 %v12397, 80
      %v12446 = vpop.permute.xlu0 %12445
      %12449 = vrot.lane.b32.xlu0 %v12398, 96
      %v12450 = vpop.permute.xlu0 %12449
      %12453 = vrot.lane.b32.xlu0 %v12399, 112
      %v12454 = vpop.permute.xlu0 %12453
      %v12456 = vsel %vm1182, %v12256, %v12402
      %v12457 = vsel %vm1184, %v12456, %v12406
      %v12458 = vsel %vm1186, %v12457, %v12410
      %v12459 = vsel %vm1188, %v12458, %v12414
      %v12460 = vsel %vm1190, %v12459, %v12418
      %v12461 = vsel %vm1192, %v12460, %v12422
      %v12462 = vsel %vm1194, %v12461, %v12426
      %v12463 = vsel %vm1182, %v12392, %v12430
      %v12464 = vsel %vm1184, %v12463, %v12434
      %v12465 = vsel %vm1186, %v12464, %v12438
      %v12466 = vsel %vm1188, %v12465, %v12442
      %v12467 = vsel %vm1190, %v12466, %v12446
      %v12468 = vsel %vm1192, %v12467, %v12450
      %v12469 = vsel %vm1194, %v12468, %v12454
      %12470 = vst [vmem:[#allocation3 + $0x80] sm:$0xff] %v12462
      %12471 = vst [vmem:[#allocation3 + $0x88] sm:$0xff] %v12469
      %v12472 = vld [vmem:[%s7] sm:$0xff]
      %v12473 = vld [vmem:[#allocation3] sm:$0xff]
      %v12474 = vld [vmem:[#allocation3 + $0x8] sm:$0xff]
      %v12475 = vld [vmem:[#allocation3 + $0x10] sm:$0xff]
      %v12476 = vld [vmem:[#allocation3 + $0x18] sm:$0xff]
      %v12477 = vld [vmem:[#allocation3 + $0x20] sm:$0xff]
      %v12478 = vld [vmem:[#allocation3 + $0x28] sm:$0xff]
      %v12479 = vld [vmem:[#allocation3 + $0x30] sm:$0xff]
      %v12480 = vld [vmem:[#allocation3 + $0x38] sm:$0xff]
      %v12481 = vld [vmem:[#allocation3 + $0x40] sm:$0xff]
      %v12482 = vld [vmem:[#allocation3 + $0x48] sm:$0xff]
      %v12483 = vld [vmem:[#allocation3 + $0x50] sm:$0xff]
      %v12484 = vld [vmem:[#allocation3 + $0x58] sm:$0xff]
      %v12485 = vld [vmem:[#allocation3 + $0x60] sm:$0xff]
      %v12486 = vld [vmem:[#allocation3 + $0x68] sm:$0xff]
      %v12487 = vld [vmem:[#allocation3 + $0x70] sm:$0xff]
      %v12488 = vld [vmem:[#allocation3 + $0x78] sm:$0xff]
      %v12489 = vld [vmem:[#allocation3 + $0x80] sm:$0xff]
      %v12490 = vld [vmem:[#allocation3 + $0x88] sm:$0xff]
      %v12491 = vld [vmem:[%s8] sm:$0xff]
      %12493 = vset.pattern.permute.xlu0 0
      %12494 = vperm.xlu0 %12493, %v12491
      %v12495 = vpop.permute.xlu0 %12494
      %vm12497 = vcmask 588800
      %v12499 = vsel %vm12497, %v12472, 0
      %12501 = vmatprep.subr.mxu0 0.0
      %12502 = vmatpush1.msra.mxu0 0.0
      %12503 = vmatprep.subr.mxu0 0.0
      %12504 = vmatpush1.msra.mxu0 0.0
      %12505 = vmatprep.subr.mxu0 0.0
      %12506 = vmatpush1.msra.mxu0 0.0
      %12507 = vmatprep.subr.mxu0 0.0
      %12508 = vmatpush1.msra.mxu0 0.0
      %12509 = vmatprep.subr.mxu0 0.0
      %12510 = vmatpush1.msra.mxu0 0.0
      %12511 = vmatprep.subr.mxu0 0.0
      %12512 = vmatpush1.msra.mxu0 0.0
      %12513 = vmatprep.subr.mxu0 0.0
      %12514 = vmatpush1.msra.mxu0 0.0
      %12515 = vmatprep.subr.mxu0 %v12490
      %12516 = vmatpush1.msra.mxu0 %v12489
      %12517 = vmatprep.subr.mxu0 %v12488
      %12518 = vmatpush1.msra.mxu0 %v12487
      %12519 = vmatprep.subr.mxu0 %v12486
      %12520 = vmatpush1.msra.mxu0 %v12485
      %12521 = vmatprep.subr.mxu0 %v12484
      %12522 = vmatpush1.msra.mxu0 %v12483
      %12523 = vmatprep.subr.mxu0 %v12482
      %12524 = vmatpush1.msra.mxu0 %v12481
      %12525 = vmatprep.subr.mxu0 %v12480
      %12526 = vmatpush1.msra.mxu0 %v12479
      %12527 = vmatprep.subr.mxu0 %v12478
      %12528 = vmatpush1.msra.mxu0 %v12477
      %12529 = vmatprep.subr.mxu0 %v12476
      %12530 = vmatpush1.msra.mxu0 %v12475
      %12531 = vmatprep.subr.mxu0 %v12474
      %12532 = vmatpush1.msra.mxu0 %v12473
      %12533 = vmatprep.subr.mxu0 0.0
      %12534 = vmatpush2.msra.mxu0 0.0
      %12535 = vmatprep.subr.mxu0 0.0
      %12536 = vmatpush2.msra.mxu0 0.0
      %12537 = vmatprep.subr.mxu0 0.0
      %12538 = vmatpush2.msra.mxu0 0.0
      %12539 = vmatprep.subr.mxu0 0.0
      %12540 = vmatpush2.msra.mxu0 0.0
      %12541 = vmatprep.subr.mxu0 0.0
      %12542 = vmatpush2.msra.mxu0 0.0
      %12543 = vmatprep.subr.mxu0 0.0
      %12544 = vmatpush2.msra.mxu0 0.0
      %12545 = vmatprep.subr.mxu0 0.0
      %12546 = vmatpush2.msra.mxu0 0.0
      %12547 = vmatprep.subr.mxu0 0.0
      %12548 = vmatpush2.msra.mxu0 0.0
      %12549 = vmatprep.subr.mxu0 0.0
      %12550 = vmatpush2.msra.mxu0 0.0
      %12551 = vmatprep.subr.mxu0 0.0
      %12552 = vmatpush2.msra.mxu0 0.0
      %12553 = vmatprep.subr.mxu0 0.0
      %12554 = vmatpush2.msra.mxu0 0.0
      %12555 = vmatprep.subr.mxu0 0.0
      %12556 = vmatpush2.msra.mxu0 0.0
      %12557 = vmatprep.subr.mxu0 0.0
      %12558 = vmatpush2.msra.mxu0 0.0
      %12559 = vmatprep.subr.mxu0 0.0
      %12560 = vmatpush2.msra.mxu0 0.0
      %12561 = vmatprep.subr.mxu0 0.0
      %12562 = vmatpush2.msra.mxu0 0.0
      %12563 = vmatprep.subr.mxu0 0.0
      %12564 = vmatpush2.msra.mxu0 0.0
      %12565 = vmatprep.mubr.f32.mxu0 0.0
      %12566 = vmatmul.mubr.f32.gmra.mxu0 %v12499
      %v12567 = vpop.f32.mrf.mxu0
      %v12568 = vadd.f32 %v12495, %v12567
      %v12569 = vpop.f32.mrf.mxu0
      %v12570 = vadd.f32 %v12495, %v12569
      %12571 = vdwg.mxu0
      %v12572 = vmax.f32 %v12568, 0.0
      %v12573 = vmax.f32 %v12570, 0.0
      %12574 = vst [vmem:[%s332] sm:$0xff] %v497
      %12575 = vst [vmem:[%s332 + $0x8] sm:$0xff] %v498
      %12576 = vst [vmem:[%s332 + $0x10] sm:$0xff] %v4456
      %12577 = vst [vmem:[%s332 + $0x18] sm:$0xff] %v4457
      %12578 = vst [vmem:[%s332 + $0x20] sm:$0xff] %v12572
      %12579 = vst [vmem:[%s332 + $0x28] sm:$0xff] %v12573
      %v12582 = vrot.slane %v501, 4
      %v12583 = vrot.slane %v503, 4
      %v12584 = vsel %vm403, %v12582, %v12583
      %v12585 = vrot.slane %v502, 4
      %v12586 = vrot.slane %v504, 4
      %v12587 = vsel %vm403, %v12585, %v12586
      %12590 = vst [vmem:[%s332 + $0x30] sm:$0xff] %v12584
      %12591 = vst [vmem:[%s332 + $0x38] sm:$0xff] %v12587
      %p12592 = scmp.lt.s32.totalorder %s20, 1
      %s12593 = scalar_select %p12592, %s20, 1
      %s12594 = smul.addr %s12593, 8
      %s12595 = smul.addr %s12594, 8
      %s12596 = scalar_lea.vmem %s9, %s12595
      // Predicated region
      $region57: #{inception_a_forward.1} parent=55 // pred_check
        %p12597 = pneg %p232
      $region58: #{inception_a_forward.1} parent=55 // pred_check_branch
        %12599 = sbr.rel (%p12597) target = $region60
      $region59: #{inception_a_forward.1} parent=55 // pred_region
        _
      $region60: #{inception_a_forward.1} parent=55 // pred_fallthru
        _
    $region56: #{inception_a_forward.1} parent=5 // pred_fallthru
      _
    %p12600 = scmp.le.s32.totalorder 2, %s15
    // Predicated region
    $region61: #{inception_a_forward.1} parent=5 // pred_check
      %p12601 = pneg %p12600
    $region62: #{inception_a_forward.1} parent=5 // pred_check_branch
      %12603 = sbr.rel (%p12601) target = $region64
    $region63: #{inception_a_forward.1} parent=5 // pred_region
      %s12604 = ssub.s32 %s15, 2
      // Predicated region
      $region65: #{inception_a_forward.1} parent=63 // pred_check
        %p12605 = pneg %p238
      $region66: #{inception_a_forward.1} parent=63 // pred_check_branch
        %12607 = sbr.rel (%p12605) target = $region68
      $region67: #{inception_a_forward.1} parent=63 // pred_region
        %p12608 = scmp.lt.s32.totalorder %s21, 1
        %s12609 = scalar_select %p12608, %s21, 1
        %s12610 = smul.addr %s12609, 8
        %s12611 = smul.addr %s12610, 8
        %s12612 = scalar_lea.vmem %s9, %s12611
      $region68: #{inception_a_forward.1} parent=63 // pred_fallthru
        _
    $region64: #{inception_a_forward.1} parent=5 // pred_fallthru
      _
  $region6: #{inception_a_forward.1} parent=0 // loop_footer
    %s19 = sadd.s32 1, %s15
  $region7: #{inception_a_forward.1} parent=0 // loop_footer_branch
    %14 = sbr.rel target = $region3
  $region8: #{inception_a_forward.1} parent=0 // loop_exit
    _

</llo_original>
